<compile_context>
chip_gen: v7x
topology: tpu7x:2x2x1
jax: 0.10.0
libtpu: 0.0.40
codegen_flags: <defaults>
</compile_context>

<pallas_src>
import functools

import jax
import jax.numpy as jnp
from jax.experimental import pallas as pl
from jax.experimental.pallas import tpu as pltpu


# ----------------------------- fused kernel --------------------------------

def fused_resblock_kernel(x_ref, w1_ref, b1_ref, w2_ref, b2_ref, cm_ref,
                          out_ref, pbuf_ref, *, W, pad):
    # x_ref/out_ref : (TB, C, H*W)  f32   (lane-dense: H*W lanes)
    # w*_ref        : (9, C, C)     bf16  (k = ky*3 + kx ; rows = C_out, cols = C_in)
    # b*_ref        : (C, 1)        f32
    # cm_ref        : (3, 1, H*W)   bf16  column-validity masks indexed by kx
    # pbuf_ref      : (C, pad + H*W + pad) bf16 zero-padded staging row (scratch)
    TB, C, HW = x_ref.shape

    # Clear only the two lane-aligned pad strips; the interior is always
    # overwritten before being read (no full-slab memset).
    pbuf_ref[:, 0:pad] = jnp.zeros((C, pad), jnp.bfloat16)
    pbuf_ref[:, pad + HW:pad + HW + pad] = jnp.zeros((C, pad), jnp.bfloat16)

    def conv3x3(w_ref, b_ref):
        # out[co, p] = b[co] + sum_{ky,kx,ci} w[co,ci,ky,kx] * x[ci, p + (ky-1)*W + (kx-1)]
        # Row (ky) overflow is absorbed by the zero pad strips; column (kx)
        # overflow is zeroed by the tiny per-kx masks.  9 accumulating dots,
        # each (C,C)x(C,HW) with N = HW >= 256 (full MXU width).  At these
        # sizes the accumulator (C,HW) f32 is ~16 vregs, so it stays a traced
        # value; switch to a VMEM f32 scratch if strips/tiles get much larger.
        acc = jnp.zeros((C, HW), jnp.float32)
        for ky in range(3):
            for kx in range(3):
                d = (ky - 1) * W + (kx - 1)
                tap = pbuf_ref[:, pad + d:pad + d + HW]          # (C, HW) bf16
                if kx != 1:
                    tap = tap * cm_ref[kx]                       # zero wrapped columns
                acc = acc + jnp.dot(w_ref[ky * 3 + kx], tap,
                                    preferred_element_type=jnp.float32)
        return acc + b_ref[...]                                  # (C, HW) f32

    for tb in range(TB):                                         # static unroll (TB small)
        # conv1 -> ReLU (intermediate never leaves VMEM)
        pbuf_ref[:, pad:pad + HW] = x_ref[tb].astype(jnp.bfloat16)
        h = jnp.maximum(conv3x3(w1_ref, b1_ref), 0.0)
        # conv2 -> + identity (residual in f32, on the un-cast input)
        pbuf_ref[:, pad:pad + HW] = h.astype(jnp.bfloat16)
        y = conv3x3(w2_ref, b2_ref)
        out_ref[tb] = (x_ref[tb] + y).astype(out_ref.dtype)


# ----------------------------- wrapper helpers ------------------------------

def prepare_params(w1_hwio, b1, w2_hwio, b2):
    """Pack/cast weights ONCE: (3,3,Cin,Cout) HWIO -> (9, Cout, Cin) bf16."""
    C = w1_hwio.shape[-1]

    def pack(w):
        return jnp.transpose(w, (0, 1, 3, 2)).reshape(9, C, C).astype(jnp.bfloat16)

    return (pack(w1_hwio), b1.reshape(C, 1).astype(jnp.float32),
            pack(w2_hwio), b2.reshape(C, 1).astype(jnp.float32))


def _make_col_masks(H, W):
    # mask[kx, 0, p] = 0 where the kx tap would wrap across a row boundary.
    j = jnp.arange(H * W) % W
    m_left = (j != 0).astype(jnp.bfloat16)          # kx = 0 (dx = -1)
    m_mid = jnp.ones((H * W,), jnp.bfloat16)        # kx = 1 (dx =  0)
    m_right = (j != W - 1).astype(jnp.bfloat16)     # kx = 2 (dx = +1)
    return jnp.stack([m_left, m_mid, m_right]).reshape(3, 1, H * W)


def _vmem_limit_bytes(kernel_bytes):
    """Scoped-VMEM limit sized to actual need (+ double-buffer headroom), capped per device."""
    cap = 64 << 20                                   # conservative floor-cap (v7x: 64 MiB/TC)
    try:
        cap = pltpu.get_tpu_info().vmem_capacity_bytes // 2
    except Exception:
        pass
    return int(min(max(4 * kernel_bytes, 16 << 20), max(cap, 16 << 20)))


def residual_block_nobn(x_nchw, params, *, block_batch=None):
    """out = x + conv2(relu(conv1(x))), 3x3 convs, stride 1, padding 1 (NCHW in/out)."""
    w1m, b1m, w2m, b2m = params
    B, C, H, W = x_nchw.shape
    HW = H * W
    x = x_nchw.reshape(B, C, HW)                     # free, contiguous view of NCHW

    # Batch tile: pack as many images per grid step as a small VMEM budget allows.
    if block_batch is None:
        per_img = 2 * C * HW * 4                     # x + out block bytes (f32)
        tb = max(1, min(B, (8 << 20) // max(per_img, 1)))
        while B % tb:
            tb -= 1
    else:
        tb = block_batch
    assert B % tb == 0

    pad = ((W + 1 + 127) // 128) * 128               # lane-aligned halo pad, >= W + 1
    P = pad + HW + pad
    cm = _make_col_masks(H, W)

    kernel_bytes = (2 * tb * C * HW * 4              # x + out blocks
                    + C * P * 2                      # bf16 staging row
                    + 2 * 9 * C * C * 2              # packed weights
                    + 2 * C * 4 + 3 * HW * 2)        # biases + masks

    kernel = functools.partial(fused_resblock_kernel, W=W, pad=pad)
    out = pl.pallas_call(
        kernel,
        out_shape=jax.ShapeDtypeStruct((B, C, HW), x.dtype),
        grid_spec=pltpu.PrefetchScalarGridSpec(
            num_scalar_prefetch=0,
            grid=(B // tb,),
            in_specs=[
                pl.BlockSpec((tb, C, HW), lambda b: (b, 0, 0)),    # x (lane-dense)
                pl.BlockSpec((9, C, C), lambda b: (0, 0, 0)),      # w1
                pl.BlockSpec((C, 1), lambda b: (0, 0)),            # b1
                pl.BlockSpec((9, C, C), lambda b: (0, 0, 0)),      # w2
                pl.BlockSpec((C, 1), lambda b: (0, 0)),            # b2
                pl.BlockSpec((3, 1, HW), lambda b: (0, 0, 0)),     # column masks
            ],
            out_specs=pl.BlockSpec((tb, C, HW), lambda b: (b, 0, 0)),
            scratch_shapes=[pltpu.VMEM((C, P), jnp.bfloat16)],
        ),
        compiler_params=pltpu.CompilerParams(
            dimension_semantics=("parallel",),
            vmem_limit_bytes=_vmem_limit_bytes(kernel_bytes),
        ),
    )(x, w1m, b1m, w2m, b2m, cm)
    return out.reshape(B, C, H, W)                   # free reshape back to NCHW


# ----------------------------- parameter init -------------------------------

def init_params(key, nf):
    """Kaiming-normal (fan_in, a=0) scaled by 0.1, zero bias — as in PyTorch."""
    k1, k2 = jax.random.split(key)
    fan_in = nf * 3 * 3
    std = (2.0 / fan_in) ** 0.5
    # weights stored HWIO: (3, 3, C_in, C_out)
    w1 = jax.random.normal(k1, (3, 3, nf, nf), jnp.float32) * std * 0.1
    w2 = jax.random.normal(k2, (3, 3, nf, nf), jnp.float32) * std * 0.1
    b1 = jnp.zeros((nf,), jnp.float32)
    b2 = jnp.zeros((nf,), jnp.float32)
    return w1, b1, w2, b2


# ----------------------------- reference (plain JAX) ------------------------

def ref_forward(x_nchw, w1, b1, w2, b2):
    dn = ("NHWC", "HWIO", "NHWC")
    x = jnp.transpose(x_nchw, (0, 2, 3, 1))
    c1 = jax.lax.conv_general_dilated(x, w1, (1, 1), "SAME",
                                      dimension_numbers=dn) + b1
    c1 = jnp.maximum(c1, 0.0)
    c2 = jax.lax.conv_general_dilated(c1, w2, (1, 1), "SAME",
                                      dimension_numbers=dn) + b2
    return jnp.transpose(x + c2, (0, 3, 1, 2))


# ----------------------------- main ------------------------------------------

if __name__ == "__main__":
    key = jax.random.PRNGKey(0)
    k_x, k_p = jax.random.split(key)

    B, NF, H, W = 2, 64, 16, 16                 # nf=64 as in the module default
    x = jax.random.normal(k_x, (B, NF, H, W), jnp.float32)
    w1, b1, w2, b2 = init_params(k_p, NF)
    params = prepare_params(w1, b1, w2, b2)     # pack/cast weights once

    out = residual_block_nobn(x, params)
    out = jax.block_until_ready(out)

    ref = ref_forward(x, w1, b1, w2, b2)
    assert out.shape == (B, NF, H, W)
    # bf16 MXU operands (f32 accumulation) -> loosened tolerance vs f32 reference.
    assert jnp.allclose(out, ref, atol=2e-2, rtol=2e-2), "mismatch vs JAX reference"

    print("KERNEL_OK")
</pallas_src>

<mosaic_0001>
module attributes {stable_mosaic.version = 11 : i64} {
  func.func @fused_resblock_kernel(%arg0: i32, %arg1: memref<2x64x256xf32, #tpu.memory_space<vmem>>, %arg2: memref<9x64x64xbf16, #tpu.memory_space<vmem>>, %arg3: memref<64x1xf32, #tpu.memory_space<vmem>>, %arg4: memref<9x64x64xbf16, #tpu.memory_space<vmem>>, %arg5: memref<64x1xf32, #tpu.memory_space<vmem>>, %arg6: memref<3x1x256xbf16, #tpu.memory_space<vmem>>, %arg7: memref<2x64x256xf32, #tpu.memory_space<vmem>>, %arg8: memref<64x512xbf16, #tpu.memory_space<vmem>>) attributes {dimension_semantics = [#tpu.dimension_semantics<parallel>], iteration_bounds = array<i64: 1>, scalar_prefetch = 0 : i64, scratch_operands = 1 : i64, tpu.core_type = #tpu.core_type<tc>, window_params = [{transform_indices = @transform_0, window_bounds = array<i64: 2, 64, 256>}, {pipeline_mode = #tpu.pipeline_mode<synchronous>, transform_indices = @transform_1, window_bounds = array<i64: 9, 64, 64>}, {pipeline_mode = #tpu.pipeline_mode<synchronous>, transform_indices = @transform_2, window_bounds = array<i64: 64, 1>}, {pipeline_mode = #tpu.pipeline_mode<synchronous>, transform_indices = @transform_3, window_bounds = array<i64: 9, 64, 64>}, {pipeline_mode = #tpu.pipeline_mode<synchronous>, transform_indices = @transform_4, window_bounds = array<i64: 64, 1>}, {pipeline_mode = #tpu.pipeline_mode<synchronous>, transform_indices = @transform_5, window_bounds = array<i64: 3, 1, 256>}, {transform_indices = @transform_6, window_bounds = array<i64: 2, 64, 256>}]} {
    %cst = arith.constant 0.000000e+00 : bf16
    %0 = vector.broadcast %cst : bf16 to vector<64x128xbf16>
    %c0 = arith.constant 0 : index
    %c0_0 = arith.constant 0 : index
    %1 = vector.load %arg8[%c0, %c0_0] : memref<64x512xbf16, #tpu.memory_space<vmem>>, vector<64x128xbf16>
    tpu.vector_store %arg8[%c0, %c0_0], %0 {strides = array<i32>} : memref<64x512xbf16, #tpu.memory_space<vmem>>, vector<64x128xbf16>,
    %cst_1 = arith.constant 0.000000e+00 : bf16
    %2 = vector.broadcast %cst_1 : bf16 to vector<64x128xbf16>
    %c0_2 = arith.constant 0 : index
    %c384 = arith.constant 384 : index
    %3 = vector.load %arg8[%c0_2, %c384] : memref<64x512xbf16, #tpu.memory_space<vmem>>, vector<64x128xbf16>
    tpu.vector_store %arg8[%c0_2, %c384], %2 {strides = array<i32>} : memref<64x512xbf16, #tpu.memory_space<vmem>>, vector<64x128xbf16>,
    %c0_3 = arith.constant 0 : index
    %c0_4 = arith.constant 0 : index
    %c0_5 = arith.constant 0 : index
    %4 = vector.load %arg1[%c0_3, %c0_4, %c0_5] : memref<2x64x256xf32, #tpu.memory_space<vmem>>, vector<1x64x256xf32>
    %5 = vector.shape_cast %4 : vector<1x64x256xf32> to vector<64x256xf32>
    %6 = arith.truncf %5 : vector<64x256xf32> to vector<64x256xbf16>
    %c0_6 = arith.constant 0 : index
    %c128 = arith.constant 128 : index
    %7 = vector.load %arg8[%c0_6, %c128] : memref<64x512xbf16, #tpu.memory_space<vmem>>, vector<64x256xbf16>
    tpu.vector_store %arg8[%c0_6, %c128], %6 {strides = array<i32>} : memref<64x512xbf16, #tpu.memory_space<vmem>>, vector<64x256xbf16>,
    %cst_7 = arith.constant 0.000000e+00 : f32
    %8 = vector.broadcast %cst_7 : f32 to vector<64x256xf32>
    %c0_8 = arith.constant 0 : index
    %c111 = arith.constant 111 : index
    %9 = vector.load %arg8[%c0_8, %c111] : memref<64x512xbf16, #tpu.memory_space<vmem>>, vector<64x256xbf16>
    %c0_9 = arith.constant 0 : index
    %c0_10 = arith.constant 0 : index
    %c0_11 = arith.constant 0 : index
    %10 = vector.load %arg6[%c0_9, %c0_10, %c0_11] : memref<3x1x256xbf16, #tpu.memory_space<vmem>>, vector<1x1x256xbf16>
    %11 = vector.shape_cast %10 : vector<1x1x256xbf16> to vector<1x256xbf16>
    %12 = vector.broadcast %11 : vector<1x256xbf16> to vector<64x256xbf16>
    %13 = arith.mulf %9, %12 : vector<64x256xbf16>
    %c0_12 = arith.constant 0 : index
    %c0_13 = arith.constant 0 : index
    %c0_14 = arith.constant 0 : index
    %14 = vector.load %arg2[%c0_12, %c0_13, %c0_14] : memref<9x64x64xbf16, #tpu.memory_space<vmem>>, vector<1x64x64xbf16>
    %15 = vector.shape_cast %14 : vector<1x64x64xbf16> to vector<64x64xbf16>
    %cst_15 = arith.constant dense<0.000000e+00> : vector<64x256xf32>
    %16 = tpu.matmul %15, %13, %cst_15 {dimension_numbers = #tpu.dot_dimension_numbers<[1], [0], [0], [1], [0, 0, 1, 1], [], []>} : vector<64x64xbf16>, vector<64x256xbf16>, vector<64x256xf32> -> vector<64x256xf32>
    %17 = arith.addf %8, %16 : vector<64x256xf32>
    %c0_16 = arith.constant 0 : index
    %c112 = arith.constant 112 : index
    %18 = vector.load %arg8[%c0_16, %c112] : memref<64x512xbf16, #tpu.memory_space<vmem>>, vector<64x256xbf16>
    %c1 = arith.constant 1 : index
    %c0_17 = arith.constant 0 : index
    %c0_18 = arith.constant 0 : index
    %19 = vector.load %arg2[%c1, %c0_17, %c0_18] : memref<9x64x64xbf16, #tpu.memory_space<vmem>>, vector<1x64x64xbf16>
    %20 = vector.shape_cast %19 : vector<1x64x64xbf16> to vector<64x64xbf16>
    %cst_19 = arith.constant dense<0.000000e+00> : vector<64x256xf32>
    %21 = tpu.matmul %20, %18, %cst_19 {dimension_numbers = #tpu.dot_dimension_numbers<[1], [0], [0], [1], [0, 0, 1, 1], [], []>} : vector<64x64xbf16>, vector<64x256xbf16>, vector<64x256xf32> -> vector<64x256xf32>
    %22 = arith.addf %17, %21 : vector<64x256xf32>
    %c0_20 = arith.constant 0 : index
    %c113 = arith.constant 113 : index
    %23 = vector.load %arg8[%c0_20, %c113] : memref<64x512xbf16, #tpu.memory_space<vmem>>, vector<64x256xbf16>
    %c2 = arith.constant 2 : index
    %c0_21 = arith.constant 0 : index
    %c0_22 = arith.constant 0 : index
    %24 = vector.load %arg6[%c2, %c0_21, %c0_22] : memref<3x1x256xbf16, #tpu.memory_space<vmem>>, vector<1x1x256xbf16>
    %25 = vector.shape_cast %24 : vector<1x1x256xbf16> to vector<1x256xbf16>
    %26 = vector.broadcast %25 : vector<1x256xbf16> to vector<64x256xbf16>
    %27 = arith.mulf %23, %26 : vector<64x256xbf16>
    %c2_23 = arith.constant 2 : index
    %c0_24 = arith.constant 0 : index
    %c0_25 = arith.constant 0 : index
    %28 = vector.load %arg2[%c2_23, %c0_24, %c0_25] : memref<9x64x64xbf16, #tpu.memory_space<vmem>>, vector<1x64x64xbf16>
    %29 = vector.shape_cast %28 : vector<1x64x64xbf16> to vector<64x64xbf16>
    %cst_26 = arith.constant dense<0.000000e+00> : vector<64x256xf32>
    %30 = tpu.matmul %29, %27, %cst_26 {dimension_numbers = #tpu.dot_dimension_numbers<[1], [0], [0], [1], [0, 0, 1, 1], [], []>} : vector<64x64xbf16>, vector<64x256xbf16>, vector<64x256xf32> -> vector<64x256xf32>
    %31 = arith.addf %22, %30 : vector<64x256xf32>
    %c0_27 = arith.constant 0 : index
    %c127 = arith.constant 127 : index
    %32 = vector.load %arg8[%c0_27, %c127] : memref<64x512xbf16, #tpu.memory_space<vmem>>, vector<64x256xbf16>
    %c0_28 = arith.constant 0 : index
    %c0_29 = arith.constant 0 : index
    %c0_30 = arith.constant 0 : index
    %33 = vector.load %arg6[%c0_28, %c0_29, %c0_30] : memref<3x1x256xbf16, #tpu.memory_space<vmem>>, vector<1x1x256xbf16>
    %34 = vector.shape_cast %33 : vector<1x1x256xbf16> to vector<1x256xbf16>
    %35 = vector.broadcast %34 : vector<1x256xbf16> to vector<64x256xbf16>
    %36 = arith.mulf %32, %35 : vector<64x256xbf16>
    %c3 = arith.constant 3 : index
    %c0_31 = arith.constant 0 : index
    %c0_32 = arith.constant 0 : index
    %37 = vector.load %arg2[%c3, %c0_31, %c0_32] : memref<9x64x64xbf16, #tpu.memory_space<vmem>>, vector<1x64x64xbf16>
    %38 = vector.shape_cast %37 : vector<1x64x64xbf16> to vector<64x64xbf16>
    %cst_33 = arith.constant dense<0.000000e+00> : vector<64x256xf32>
    %39 = tpu.matmul %38, %36, %cst_33 {dimension_numbers = #tpu.dot_dimension_numbers<[1], [0], [0], [1], [0, 0, 1, 1], [], []>} : vector<64x64xbf16>, vector<64x256xbf16>, vector<64x256xf32> -> vector<64x256xf32>
    %40 = arith.addf %31, %39 : vector<64x256xf32>
    %c0_34 = arith.constant 0 : index
    %c128_35 = arith.constant 128 : index
    %41 = vector.load %arg8[%c0_34, %c128_35] : memref<64x512xbf16, #tpu.memory_space<vmem>>, vector<64x256xbf16>
    %c4 = arith.constant 4 : index
    %c0_36 = arith.constant 0 : index
    %c0_37 = arith.constant 0 : index
    %42 = vector.load %arg2[%c4, %c0_36, %c0_37] : memref<9x64x64xbf16, #tpu.memory_space<vmem>>, vector<1x64x64xbf16>
    %43 = vector.shape_cast %42 : vector<1x64x64xbf16> to vector<64x64xbf16>
    %cst_38 = arith.constant dense<0.000000e+00> : vector<64x256xf32>
    %44 = tpu.matmul %43, %41, %cst_38 {dimension_numbers = #tpu.dot_dimension_numbers<[1], [0], [0], [1], [0, 0, 1, 1], [], []>} : vector<64x64xbf16>, vector<64x256xbf16>, vector<64x256xf32> -> vector<64x256xf32>
    %45 = arith.addf %40, %44 : vector<64x256xf32>
    %c0_39 = arith.constant 0 : index
    %c129 = arith.constant 129 : index
    %46 = vector.load %arg8[%c0_39, %c129] : memref<64x512xbf16, #tpu.memory_space<vmem>>, vector<64x256xbf16>
    %c2_40 = arith.constant 2 : index
    %c0_41 = arith.constant 0 : index
    %c0_42 = arith.constant 0 : index
    %47 = vector.load %arg6[%c2_40, %c0_41, %c0_42] : memref<3x1x256xbf16, #tpu.memory_space<vmem>>, vector<1x1x256xbf16>
    %48 = vector.shape_cast %47 : vector<1x1x256xbf16> to vector<1x256xbf16>
    %49 = vector.broadcast %48 : vector<1x256xbf16> to vector<64x256xbf16>
    %50 = arith.mulf %46, %49 : vector<64x256xbf16>
    %c5 = arith.constant 5 : index
    %c0_43 = arith.constant 0 : index
    %c0_44 = arith.constant 0 : index
    %51 = vector.load %arg2[%c5, %c0_43, %c0_44] : memref<9x64x64xbf16, #tpu.memory_space<vmem>>, vector<1x64x64xbf16>
    %52 = vector.shape_cast %51 : vector<1x64x64xbf16> to vector<64x64xbf16>
    %cst_45 = arith.constant dense<0.000000e+00> : vector<64x256xf32>
    %53 = tpu.matmul %52, %50, %cst_45 {dimension_numbers = #tpu.dot_dimension_numbers<[1], [0], [0], [1], [0, 0, 1, 1], [], []>} : vector<64x64xbf16>, vector<64x256xbf16>, vector<64x256xf32> -> vector<64x256xf32>
    %54 = arith.addf %45, %53 : vector<64x256xf32>
    %c0_46 = arith.constant 0 : index
    %c143 = arith.constant 143 : index
    %55 = vector.load %arg8[%c0_46, %c143] : memref<64x512xbf16, #tpu.memory_space<vmem>>, vector<64x256xbf16>
    %c0_47 = arith.constant 0 : index
    %c0_48 = arith.constant 0 : index
    %c0_49 = arith.constant 0 : index
    %56 = vector.load %arg6[%c0_47, %c0_48, %c0_49] : memref<3x1x256xbf16, #tpu.memory_space<vmem>>, vector<1x1x256xbf16>
    %57 = vector.shape_cast %56 : vector<1x1x256xbf16> to vector<1x256xbf16>
    %58 = vector.broadcast %57 : vector<1x256xbf16> to vector<64x256xbf16>
    %59 = arith.mulf %55, %58 : vector<64x256xbf16>
    %c6 = arith.constant 6 : index
    %c0_50 = arith.constant 0 : index
    %c0_51 = arith.constant 0 : index
    %60 = vector.load %arg2[%c6, %c0_50, %c0_51] : memref<9x64x64xbf16, #tpu.memory_space<vmem>>, vector<1x64x64xbf16>
    %61 = vector.shape_cast %60 : vector<1x64x64xbf16> to vector<64x64xbf16>
    %cst_52 = arith.constant dense<0.000000e+00> : vector<64x256xf32>
    %62 = tpu.matmul %61, %59, %cst_52 {dimension_numbers = #tpu.dot_dimension_numbers<[1], [0], [0], [1], [0, 0, 1, 1], [], []>} : vector<64x64xbf16>, vector<64x256xbf16>, vector<64x256xf32> -> vector<64x256xf32>
    %63 = arith.addf %54, %62 : vector<64x256xf32>
    %c0_53 = arith.constant 0 : index
    %c144 = arith.constant 144 : index
    %64 = vector.load %arg8[%c0_53, %c144] : memref<64x512xbf16, #tpu.memory_space<vmem>>, vector<64x256xbf16>
    %c7 = arith.constant 7 : index
    %c0_54 = arith.constant 0 : index
    %c0_55 = arith.constant 0 : index
    %65 = vector.load %arg2[%c7, %c0_54, %c0_55] : memref<9x64x64xbf16, #tpu.memory_space<vmem>>, vector<1x64x64xbf16>
    %66 = vector.shape_cast %65 : vector<1x64x64xbf16> to vector<64x64xbf16>
    %cst_56 = arith.constant dense<0.000000e+00> : vector<64x256xf32>
    %67 = tpu.matmul %66, %64, %cst_56 {dimension_numbers = #tpu.dot_dimension_numbers<[1], [0], [0], [1], [0, 0, 1, 1], [], []>} : vector<64x64xbf16>, vector<64x256xbf16>, vector<64x256xf32> -> vector<64x256xf32>
    %68 = arith.addf %63, %67 : vector<64x256xf32>
    %c0_57 = arith.constant 0 : index
    %c145 = arith.constant 145 : index
    %69 = vector.load %arg8[%c0_57, %c145] : memref<64x512xbf16, #tpu.memory_space<vmem>>, vector<64x256xbf16>
    %c2_58 = arith.constant 2 : index
    %c0_59 = arith.constant 0 : index
    %c0_60 = arith.constant 0 : index
    %70 = vector.load %arg6[%c2_58, %c0_59, %c0_60] : memref<3x1x256xbf16, #tpu.memory_space<vmem>>, vector<1x1x256xbf16>
    %71 = vector.shape_cast %70 : vector<1x1x256xbf16> to vector<1x256xbf16>
    %72 = vector.broadcast %71 : vector<1x256xbf16> to vector<64x256xbf16>
    %73 = arith.mulf %69, %72 : vector<64x256xbf16>
    %c8 = arith.constant 8 : index
    %c0_61 = arith.constant 0 : index
    %c0_62 = arith.constant 0 : index
    %74 = vector.load %arg2[%c8, %c0_61, %c0_62] : memref<9x64x64xbf16, #tpu.memory_space<vmem>>, vector<1x64x64xbf16>
    %75 = vector.shape_cast %74 : vector<1x64x64xbf16> to vector<64x64xbf16>
    %cst_63 = arith.constant dense<0.000000e+00> : vector<64x256xf32>
    %76 = tpu.matmul %75, %73, %cst_63 {dimension_numbers = #tpu.dot_dimension_numbers<[1], [0], [0], [1], [0, 0, 1, 1], [], []>} : vector<64x64xbf16>, vector<64x256xbf16>, vector<64x256xf32> -> vector<64x256xf32>
    %77 = arith.addf %68, %76 : vector<64x256xf32>
    %c0_64 = arith.constant 0 : index
    %c0_65 = arith.constant 0 : index
    %78 = vector.load %arg3[%c0_64, %c0_65] : memref<64x1xf32, #tpu.memory_space<vmem>>, vector<64x1xf32>
    %79 = vector.broadcast %78 : vector<64x1xf32> to vector<64x256xf32>
    %80 = arith.addf %77, %79 : vector<64x256xf32>
    %cst_66 = arith.constant 0.000000e+00 : f32
    %81 = vector.broadcast %cst_66 : f32 to vector<64x256xf32>
    %82 = arith.maximumf %80, %81 : vector<64x256xf32>
    %83 = arith.truncf %82 : vector<64x256xf32> to vector<64x256xbf16>
    %c0_67 = arith.constant 0 : index
    %c128_68 = arith.constant 128 : index
    %84 = vector.load %arg8[%c0_67, %c128_68] : memref<64x512xbf16, #tpu.memory_space<vmem>>, vector<64x256xbf16>
    tpu.vector_store %arg8[%c0_67, %c128_68], %83 {strides = array<i32>} : memref<64x512xbf16, #tpu.memory_space<vmem>>, vector<64x256xbf16>,
    %cst_69 = arith.constant 0.000000e+00 : f32
    %85 = vector.broadcast %cst_69 : f32 to vector<64x256xf32>
    %c0_70 = arith.constant 0 : index
    %c111_71 = arith.constant 111 : index
    %86 = vector.load %arg8[%c0_70, %c111_71] : memref<64x512xbf16, #tpu.memory_space<vmem>>, vector<64x256xbf16>
    %c0_72 = arith.constant 0 : index
    %c0_73 = arith.constant 0 : index
    %c0_74 = arith.constant 0 : index
    %87 = vector.load %arg6[%c0_72, %c0_73, %c0_74] : memref<3x1x256xbf16, #tpu.memory_space<vmem>>, vector<1x1x256xbf16>
    %88 = vector.shape_cast %87 : vector<1x1x256xbf16> to vector<1x256xbf16>
    %89 = vector.broadcast %88 : vector<1x256xbf16> to vector<64x256xbf16>
    %90 = arith.mulf %86, %89 : vector<64x256xbf16>
    %c0_75 = arith.constant 0 : index
    %c0_76 = arith.constant 0 : index
    %c0_77 = arith.constant 0 : index
    %91 = vector.load %arg4[%c0_75, %c0_76, %c0_77] : memref<9x64x64xbf16, #tpu.memory_space<vmem>>, vector<1x64x64xbf16>
    %92 = vector.shape_cast %91 : vector<1x64x64xbf16> to vector<64x64xbf16>
    %cst_78 = arith.constant dense<0.000000e+00> : vector<64x256xf32>
    %93 = tpu.matmul %92, %90, %cst_78 {dimension_numbers = #tpu.dot_dimension_numbers<[1], [0], [0], [1], [0, 0, 1, 1], [], []>} : vector<64x64xbf16>, vector<64x256xbf16>, vector<64x256xf32> -> vector<64x256xf32>
    %94 = arith.addf %85, %93 : vector<64x256xf32>
    %c0_79 = arith.constant 0 : index
    %c112_80 = arith.constant 112 : index
    %95 = vector.load %arg8[%c0_79, %c112_80] : memref<64x512xbf16, #tpu.memory_space<vmem>>, vector<64x256xbf16>
    %c1_81 = arith.constant 1 : index
    %c0_82 = arith.constant 0 : index
    %c0_83 = arith.constant 0 : index
    %96 = vector.load %arg4[%c1_81, %c0_82, %c0_83] : memref<9x64x64xbf16, #tpu.memory_space<vmem>>, vector<1x64x64xbf16>
    %97 = vector.shape_cast %96 : vector<1x64x64xbf16> to vector<64x64xbf16>
    %cst_84 = arith.constant dense<0.000000e+00> : vector<64x256xf32>
    %98 = tpu.matmul %97, %95, %cst_84 {dimension_numbers = #tpu.dot_dimension_numbers<[1], [0], [0], [1], [0, 0, 1, 1], [], []>} : vector<64x64xbf16>, vector<64x256xbf16>, vector<64x256xf32> -> vector<64x256xf32>
    %99 = arith.addf %94, %98 : vector<64x256xf32>
    %c0_85 = arith.constant 0 : index
    %c113_86 = arith.constant 113 : index
    %100 = vector.load %arg8[%c0_85, %c113_86] : memref<64x512xbf16, #tpu.memory_space<vmem>>, vector<64x256xbf16>
    %c2_87 = arith.constant 2 : index
    %c0_88 = arith.constant 0 : index
    %c0_89 = arith.constant 0 : index
    %101 = vector.load %arg6[%c2_87, %c0_88, %c0_89] : memref<3x1x256xbf16, #tpu.memory_space<vmem>>, vector<1x1x256xbf16>
    %102 = vector.shape_cast %101 : vector<1x1x256xbf16> to vector<1x256xbf16>
    %103 = vector.broadcast %102 : vector<1x256xbf16> to vector<64x256xbf16>
    %104 = arith.mulf %100, %103 : vector<64x256xbf16>
    %c2_90 = arith.constant 2 : index
    %c0_91 = arith.constant 0 : index
    %c0_92 = arith.constant 0 : index
    %105 = vector.load %arg4[%c2_90, %c0_91, %c0_92] : memref<9x64x64xbf16, #tpu.memory_space<vmem>>, vector<1x64x64xbf16>
    %106 = vector.shape_cast %105 : vector<1x64x64xbf16> to vector<64x64xbf16>
    %cst_93 = arith.constant dense<0.000000e+00> : vector<64x256xf32>
    %107 = tpu.matmul %106, %104, %cst_93 {dimension_numbers = #tpu.dot_dimension_numbers<[1], [0], [0], [1], [0, 0, 1, 1], [], []>} : vector<64x64xbf16>, vector<64x256xbf16>, vector<64x256xf32> -> vector<64x256xf32>
    %108 = arith.addf %99, %107 : vector<64x256xf32>
    %c0_94 = arith.constant 0 : index
    %c127_95 = arith.constant 127 : index
    %109 = vector.load %arg8[%c0_94, %c127_95] : memref<64x512xbf16, #tpu.memory_space<vmem>>, vector<64x256xbf16>
    %c0_96 = arith.constant 0 : index
    %c0_97 = arith.constant 0 : index
    %c0_98 = arith.constant 0 : index
    %110 = vector.load %arg6[%c0_96, %c0_97, %c0_98] : memref<3x1x256xbf16, #tpu.memory_space<vmem>>, vector<1x1x256xbf16>
    %111 = vector.shape_cast %110 : vector<1x1x256xbf16> to vector<1x256xbf16>
    %112 = vector.broadcast %111 : vector<1x256xbf16> to vector<64x256xbf16>
    %113 = arith.mulf %109, %112 : vector<64x256xbf16>
    %c3_99 = arith.constant 3 : index
    %c0_100 = arith.constant 0 : index
    %c0_101 = arith.constant 0 : index
    %114 = vector.load %arg4[%c3_99, %c0_100, %c0_101] : memref<9x64x64xbf16, #tpu.memory_space<vmem>>, vector<1x64x64xbf16>
    %115 = vector.shape_cast %114 : vector<1x64x64xbf16> to vector<64x64xbf16>
    %cst_102 = arith.constant dense<0.000000e+00> : vector<64x256xf32>
    %116 = tpu.matmul %115, %113, %cst_102 {dimension_numbers = #tpu.dot_dimension_numbers<[1], [0], [0], [1], [0, 0, 1, 1], [], []>} : vector<64x64xbf16>, vector<64x256xbf16>, vector<64x256xf32> -> vector<64x256xf32>
    %117 = arith.addf %108, %116 : vector<64x256xf32>
    %c0_103 = arith.constant 0 : index
    %c128_104 = arith.constant 128 : index
    %118 = vector.load %arg8[%c0_103, %c128_104] : memref<64x512xbf16, #tpu.memory_space<vmem>>, vector<64x256xbf16>
    %c4_105 = arith.constant 4 : index
    %c0_106 = arith.constant 0 : index
    %c0_107 = arith.constant 0 : index
    %119 = vector.load %arg4[%c4_105, %c0_106, %c0_107] : memref<9x64x64xbf16, #tpu.memory_space<vmem>>, vector<1x64x64xbf16>
    %120 = vector.shape_cast %119 : vector<1x64x64xbf16> to vector<64x64xbf16>
    %cst_108 = arith.constant dense<0.000000e+00> : vector<64x256xf32>
    %121 = tpu.matmul %120, %118, %cst_108 {dimension_numbers = #tpu.dot_dimension_numbers<[1], [0], [0], [1], [0, 0, 1, 1], [], []>} : vector<64x64xbf16>, vector<64x256xbf16>, vector<64x256xf32> -> vector<64x256xf32>
    %122 = arith.addf %117, %121 : vector<64x256xf32>
    %c0_109 = arith.constant 0 : index
    %c129_110 = arith.constant 129 : index
    %123 = vector.load %arg8[%c0_109, %c129_110] : memref<64x512xbf16, #tpu.memory_space<vmem>>, vector<64x256xbf16>
    %c2_111 = arith.constant 2 : index
    %c0_112 = arith.constant 0 : index
    %c0_113 = arith.constant 0 : index
    %124 = vector.load %arg6[%c2_111, %c0_112, %c0_113] : memref<3x1x256xbf16, #tpu.memory_space<vmem>>, vector<1x1x256xbf16>
    %125 = vector.shape_cast %124 : vector<1x1x256xbf16> to vector<1x256xbf16>
    %126 = vector.broadcast %125 : vector<1x256xbf16> to vector<64x256xbf16>
    %127 = arith.mulf %123, %126 : vector<64x256xbf16>
    %c5_114 = arith.constant 5 : index
    %c0_115 = arith.constant 0 : index
    %c0_116 = arith.constant 0 : index
    %128 = vector.load %arg4[%c5_114, %c0_115, %c0_116] : memref<9x64x64xbf16, #tpu.memory_space<vmem>>, vector<1x64x64xbf16>
    %129 = vector.shape_cast %128 : vector<1x64x64xbf16> to vector<64x64xbf16>
    %cst_117 = arith.constant dense<0.000000e+00> : vector<64x256xf32>
    %130 = tpu.matmul %129, %127, %cst_117 {dimension_numbers = #tpu.dot_dimension_numbers<[1], [0], [0], [1], [0, 0, 1, 1], [], []>} : vector<64x64xbf16>, vector<64x256xbf16>, vector<64x256xf32> -> vector<64x256xf32>
    %131 = arith.addf %122, %130 : vector<64x256xf32>
    %c0_118 = arith.constant 0 : index
    %c143_119 = arith.constant 143 : index
    %132 = vector.load %arg8[%c0_118, %c143_119] : memref<64x512xbf16, #tpu.memory_space<vmem>>, vector<64x256xbf16>
    %c0_120 = arith.constant 0 : index
    %c0_121 = arith.constant 0 : index
    %c0_122 = arith.constant 0 : index
    %133 = vector.load %arg6[%c0_120, %c0_121, %c0_122] : memref<3x1x256xbf16, #tpu.memory_space<vmem>>, vector<1x1x256xbf16>
    %134 = vector.shape_cast %133 : vector<1x1x256xbf16> to vector<1x256xbf16>
    %135 = vector.broadcast %134 : vector<1x256xbf16> to vector<64x256xbf16>
    %136 = arith.mulf %132, %135 : vector<64x256xbf16>
    %c6_123 = arith.constant 6 : index
    %c0_124 = arith.constant 0 : index
    %c0_125 = arith.constant 0 : index
    %137 = vector.load %arg4[%c6_123, %c0_124, %c0_125] : memref<9x64x64xbf16, #tpu.memory_space<vmem>>, vector<1x64x64xbf16>
    %138 = vector.shape_cast %137 : vector<1x64x64xbf16> to vector<64x64xbf16>
    %cst_126 = arith.constant dense<0.000000e+00> : vector<64x256xf32>
    %139 = tpu.matmul %138, %136, %cst_126 {dimension_numbers = #tpu.dot_dimension_numbers<[1], [0], [0], [1], [0, 0, 1, 1], [], []>} : vector<64x64xbf16>, vector<64x256xbf16>, vector<64x256xf32> -> vector<64x256xf32>
    %140 = arith.addf %131, %139 : vector<64x256xf32>
    %c0_127 = arith.constant 0 : index
    %c144_128 = arith.constant 144 : index
    %141 = vector.load %arg8[%c0_127, %c144_128] : memref<64x512xbf16, #tpu.memory_space<vmem>>, vector<64x256xbf16>
    %c7_129 = arith.constant 7 : index
    %c0_130 = arith.constant 0 : index
    %c0_131 = arith.constant 0 : index
    %142 = vector.load %arg4[%c7_129, %c0_130, %c0_131] : memref<9x64x64xbf16, #tpu.memory_space<vmem>>, vector<1x64x64xbf16>
    %143 = vector.shape_cast %142 : vector<1x64x64xbf16> to vector<64x64xbf16>
    %cst_132 = arith.constant dense<0.000000e+00> : vector<64x256xf32>
    %144 = tpu.matmul %143, %141, %cst_132 {dimension_numbers = #tpu.dot_dimension_numbers<[1], [0], [0], [1], [0, 0, 1, 1], [], []>} : vector<64x64xbf16>, vector<64x256xbf16>, vector<64x256xf32> -> vector<64x256xf32>
    %145 = arith.addf %140, %144 : vector<64x256xf32>
    %c0_133 = arith.constant 0 : index
    %c145_134 = arith.constant 145 : index
    %146 = vector.load %arg8[%c0_133, %c145_134] : memref<64x512xbf16, #tpu.memory_space<vmem>>, vector<64x256xbf16>
    %c2_135 = arith.constant 2 : index
    %c0_136 = arith.constant 0 : index
    %c0_137 = arith.constant 0 : index
    %147 = vector.load %arg6[%c2_135, %c0_136, %c0_137] : memref<3x1x256xbf16, #tpu.memory_space<vmem>>, vector<1x1x256xbf16>
    %148 = vector.shape_cast %147 : vector<1x1x256xbf16> to vector<1x256xbf16>
    %149 = vector.broadcast %148 : vector<1x256xbf16> to vector<64x256xbf16>
    %150 = arith.mulf %146, %149 : vector<64x256xbf16>
    %c8_138 = arith.constant 8 : index
    %c0_139 = arith.constant 0 : index
    %c0_140 = arith.constant 0 : index
    %151 = vector.load %arg4[%c8_138, %c0_139, %c0_140] : memref<9x64x64xbf16, #tpu.memory_space<vmem>>, vector<1x64x64xbf16>
    %152 = vector.shape_cast %151 : vector<1x64x64xbf16> to vector<64x64xbf16>
    %cst_141 = arith.constant dense<0.000000e+00> : vector<64x256xf32>
    %153 = tpu.matmul %152, %150, %cst_141 {dimension_numbers = #tpu.dot_dimension_numbers<[1], [0], [0], [1], [0, 0, 1, 1], [], []>} : vector<64x64xbf16>, vector<64x256xbf16>, vector<64x256xf32> -> vector<64x256xf32>
    %154 = arith.addf %145, %153 : vector<64x256xf32>
    %c0_142 = arith.constant 0 : index
    %c0_143 = arith.constant 0 : index
    %155 = vector.load %arg5[%c0_142, %c0_143] : memref<64x1xf32, #tpu.memory_space<vmem>>, vector<64x1xf32>
    %156 = vector.broadcast %155 : vector<64x1xf32> to vector<64x256xf32>
    %157 = arith.addf %154, %156 : vector<64x256xf32>
    %c0_144 = arith.constant 0 : index
    %c0_145 = arith.constant 0 : index
    %c0_146 = arith.constant 0 : index
    %158 = vector.load %arg1[%c0_144, %c0_145, %c0_146] : memref<2x64x256xf32, #tpu.memory_space<vmem>>, vector<1x64x256xf32>
    %159 = vector.shape_cast %158 : vector<1x64x256xf32> to vector<64x256xf32>
    %160 = arith.addf %159, %157 : vector<64x256xf32>
    %c0_147 = arith.constant 0 : index
    %c0_148 = arith.constant 0 : index
    %c0_149 = arith.constant 0 : index
    %161 = vector.load %arg7[%c0_147, %c0_148, %c0_149] : memref<2x64x256xf32, #tpu.memory_space<vmem>>, vector<1x64x256xf32>
    %162 = vector.shape_cast %161 : vector<1x64x256xf32> to vector<64x256xf32>
    %163 = vector.shape_cast %160 : vector<64x256xf32> to vector<1x64x256xf32>
    tpu.vector_store %arg7[%c0_147, %c0_148, %c0_149], %163 {strides = array<i32>} : memref<2x64x256xf32, #tpu.memory_space<vmem>>, vector<1x64x256xf32>,
    %c1_150 = arith.constant 1 : index
    %c0_151 = arith.constant 0 : index
    %c0_152 = arith.constant 0 : index
    %164 = vector.load %arg1[%c1_150, %c0_151, %c0_152] : memref<2x64x256xf32, #tpu.memory_space<vmem>>, vector<1x64x256xf32>
    %165 = vector.shape_cast %164 : vector<1x64x256xf32> to vector<64x256xf32>
    %166 = arith.truncf %165 : vector<64x256xf32> to vector<64x256xbf16>
    %c0_153 = arith.constant 0 : index
    %c128_154 = arith.constant 128 : index
    %167 = vector.load %arg8[%c0_153, %c128_154] : memref<64x512xbf16, #tpu.memory_space<vmem>>, vector<64x256xbf16>
    tpu.vector_store %arg8[%c0_153, %c128_154], %166 {strides = array<i32>} : memref<64x512xbf16, #tpu.memory_space<vmem>>, vector<64x256xbf16>,
    %cst_155 = arith.constant 0.000000e+00 : f32
    %168 = vector.broadcast %cst_155 : f32 to vector<64x256xf32>
    %c0_156 = arith.constant 0 : index
    %c111_157 = arith.constant 111 : index
    %169 = vector.load %arg8[%c0_156, %c111_157] : memref<64x512xbf16, #tpu.memory_space<vmem>>, vector<64x256xbf16>
    %c0_158 = arith.constant 0 : index
    %c0_159 = arith.constant 0 : index
    %c0_160 = arith.constant 0 : index
    %170 = vector.load %arg6[%c0_158, %c0_159, %c0_160] : memref<3x1x256xbf16, #tpu.memory_space<vmem>>, vector<1x1x256xbf16>
    %171 = vector.shape_cast %170 : vector<1x1x256xbf16> to vector<1x256xbf16>
    %172 = vector.broadcast %171 : vector<1x256xbf16> to vector<64x256xbf16>
    %173 = arith.mulf %169, %172 : vector<64x256xbf16>
    %c0_161 = arith.constant 0 : index
    %c0_162 = arith.constant 0 : index
    %c0_163 = arith.constant 0 : index
    %174 = vector.load %arg2[%c0_161, %c0_162, %c0_163] : memref<9x64x64xbf16, #tpu.memory_space<vmem>>, vector<1x64x64xbf16>
    %175 = vector.shape_cast %174 : vector<1x64x64xbf16> to vector<64x64xbf16>
    %cst_164 = arith.constant dense<0.000000e+00> : vector<64x256xf32>
    %176 = tpu.matmul %175, %173, %cst_164 {dimension_numbers = #tpu.dot_dimension_numbers<[1], [0], [0], [1], [0, 0, 1, 1], [], []>} : vector<64x64xbf16>, vector<64x256xbf16>, vector<64x256xf32> -> vector<64x256xf32>
    %177 = arith.addf %168, %176 : vector<64x256xf32>
    %c0_165 = arith.constant 0 : index
    %c112_166 = arith.constant 112 : index
    %178 = vector.load %arg8[%c0_165, %c112_166] : memref<64x512xbf16, #tpu.memory_space<vmem>>, vector<64x256xbf16>
    %c1_167 = arith.constant 1 : index
    %c0_168 = arith.constant 0 : index
    %c0_169 = arith.constant 0 : index
    %179 = vector.load %arg2[%c1_167, %c0_168, %c0_169] : memref<9x64x64xbf16, #tpu.memory_space<vmem>>, vector<1x64x64xbf16>
    %180 = vector.shape_cast %179 : vector<1x64x64xbf16> to vector<64x64xbf16>
    %cst_170 = arith.constant dense<0.000000e+00> : vector<64x256xf32>
    %181 = tpu.matmul %180, %178, %cst_170 {dimension_numbers = #tpu.dot_dimension_numbers<[1], [0], [0], [1], [0, 0, 1, 1], [], []>} : vector<64x64xbf16>, vector<64x256xbf16>, vector<64x256xf32> -> vector<64x256xf32>
    %182 = arith.addf %177, %181 : vector<64x256xf32>
    %c0_171 = arith.constant 0 : index
    %c113_172 = arith.constant 113 : index
    %183 = vector.load %arg8[%c0_171, %c113_172] : memref<64x512xbf16, #tpu.memory_space<vmem>>, vector<64x256xbf16>
    %c2_173 = arith.constant 2 : index
    %c0_174 = arith.constant 0 : index
    %c0_175 = arith.constant 0 : index
    %184 = vector.load %arg6[%c2_173, %c0_174, %c0_175] : memref<3x1x256xbf16, #tpu.memory_space<vmem>>, vector<1x1x256xbf16>
    %185 = vector.shape_cast %184 : vector<1x1x256xbf16> to vector<1x256xbf16>
    %186 = vector.broadcast %185 : vector<1x256xbf16> to vector<64x256xbf16>
    %187 = arith.mulf %183, %186 : vector<64x256xbf16>
    %c2_176 = arith.constant 2 : index
    %c0_177 = arith.constant 0 : index
    %c0_178 = arith.constant 0 : index
    %188 = vector.load %arg2[%c2_176, %c0_177, %c0_178] : memref<9x64x64xbf16, #tpu.memory_space<vmem>>, vector<1x64x64xbf16>
    %189 = vector.shape_cast %188 : vector<1x64x64xbf16> to vector<64x64xbf16>
    %cst_179 = arith.constant dense<0.000000e+00> : vector<64x256xf32>
    %190 = tpu.matmul %189, %187, %cst_179 {dimension_numbers = #tpu.dot_dimension_numbers<[1], [0], [0], [1], [0, 0, 1, 1], [], []>} : vector<64x64xbf16>, vector<64x256xbf16>, vector<64x256xf32> -> vector<64x256xf32>
    %191 = arith.addf %182, %190 : vector<64x256xf32>
    %c0_180 = arith.constant 0 : index
    %c127_181 = arith.constant 127 : index
    %192 = vector.load %arg8[%c0_180, %c127_181] : memref<64x512xbf16, #tpu.memory_space<vmem>>, vector<64x256xbf16>
    %c0_182 = arith.constant 0 : index
    %c0_183 = arith.constant 0 : index
    %c0_184 = arith.constant 0 : index
    %193 = vector.load %arg6[%c0_182, %c0_183, %c0_184] : memref<3x1x256xbf16, #tpu.memory_space<vmem>>, vector<1x1x256xbf16>
    %194 = vector.shape_cast %193 : vector<1x1x256xbf16> to vector<1x256xbf16>
    %195 = vector.broadcast %194 : vector<1x256xbf16> to vector<64x256xbf16>
    %196 = arith.mulf %192, %195 : vector<64x256xbf16>
    %c3_185 = arith.constant 3 : index
    %c0_186 = arith.constant 0 : index
    %c0_187 = arith.constant 0 : index
    %197 = vector.load %arg2[%c3_185, %c0_186, %c0_187] : memref<9x64x64xbf16, #tpu.memory_space<vmem>>, vector<1x64x64xbf16>
    %198 = vector.shape_cast %197 : vector<1x64x64xbf16> to vector<64x64xbf16>
    %cst_188 = arith.constant dense<0.000000e+00> : vector<64x256xf32>
    %199 = tpu.matmul %198, %196, %cst_188 {dimension_numbers = #tpu.dot_dimension_numbers<[1], [0], [0], [1], [0, 0, 1, 1], [], []>} : vector<64x64xbf16>, vector<64x256xbf16>, vector<64x256xf32> -> vector<64x256xf32>
    %200 = arith.addf %191, %199 : vector<64x256xf32>
    %c0_189 = arith.constant 0 : index
    %c128_190 = arith.constant 128 : index
    %201 = vector.load %arg8[%c0_189, %c128_190] : memref<64x512xbf16, #tpu.memory_space<vmem>>, vector<64x256xbf16>
    %c4_191 = arith.constant 4 : index
    %c0_192 = arith.constant 0 : index
    %c0_193 = arith.constant 0 : index
    %202 = vector.load %arg2[%c4_191, %c0_192, %c0_193] : memref<9x64x64xbf16, #tpu.memory_space<vmem>>, vector<1x64x64xbf16>
    %203 = vector.shape_cast %202 : vector<1x64x64xbf16> to vector<64x64xbf16>
    %cst_194 = arith.constant dense<0.000000e+00> : vector<64x256xf32>
    %204 = tpu.matmul %203, %201, %cst_194 {dimension_numbers = #tpu.dot_dimension_numbers<[1], [0], [0], [1], [0, 0, 1, 1], [], []>} : vector<64x64xbf16>, vector<64x256xbf16>, vector<64x256xf32> -> vector<64x256xf32>
    %205 = arith.addf %200, %204 : vector<64x256xf32>
    %c0_195 = arith.constant 0 : index
    %c129_196 = arith.constant 129 : index
    %206 = vector.load %arg8[%c0_195, %c129_196] : memref<64x512xbf16, #tpu.memory_space<vmem>>, vector<64x256xbf16>
    %c2_197 = arith.constant 2 : index
    %c0_198 = arith.constant 0 : index
    %c0_199 = arith.constant 0 : index
    %207 = vector.load %arg6[%c2_197, %c0_198, %c0_199] : memref<3x1x256xbf16, #tpu.memory_space<vmem>>, vector<1x1x256xbf16>
    %208 = vector.shape_cast %207 : vector<1x1x256xbf16> to vector<1x256xbf16>
    %209 = vector.broadcast %208 : vector<1x256xbf16> to vector<64x256xbf16>
    %210 = arith.mulf %206, %209 : vector<64x256xbf16>
    %c5_200 = arith.constant 5 : index
    %c0_201 = arith.constant 0 : index
    %c0_202 = arith.constant 0 : index
    %211 = vector.load %arg2[%c5_200, %c0_201, %c0_202] : memref<9x64x64xbf16, #tpu.memory_space<vmem>>, vector<1x64x64xbf16>
    %212 = vector.shape_cast %211 : vector<1x64x64xbf16> to vector<64x64xbf16>
    %cst_203 = arith.constant dense<0.000000e+00> : vector<64x256xf32>
    %213 = tpu.matmul %212, %210, %cst_203 {dimension_numbers = #tpu.dot_dimension_numbers<[1], [0], [0], [1], [0, 0, 1, 1], [], []>} : vector<64x64xbf16>, vector<64x256xbf16>, vector<64x256xf32> -> vector<64x256xf32>
    %214 = arith.addf %205, %213 : vector<64x256xf32>
    %c0_204 = arith.constant 0 : index
    %c143_205 = arith.constant 143 : index
    %215 = vector.load %arg8[%c0_204, %c143_205] : memref<64x512xbf16, #tpu.memory_space<vmem>>, vector<64x256xbf16>
    %c0_206 = arith.constant 0 : index
    %c0_207 = arith.constant 0 : index
    %c0_208 = arith.constant 0 : index
    %216 = vector.load %arg6[%c0_206, %c0_207, %c0_208] : memref<3x1x256xbf16, #tpu.memory_space<vmem>>, vector<1x1x256xbf16>
    %217 = vector.shape_cast %216 : vector<1x1x256xbf16> to vector<1x256xbf16>
    %218 = vector.broadcast %217 : vector<1x256xbf16> to vector<64x256xbf16>
    %219 = arith.mulf %215, %218 : vector<64x256xbf16>
    %c6_209 = arith.constant 6 : index
    %c0_210 = arith.constant 0 : index
    %c0_211 = arith.constant 0 : index
    %220 = vector.load %arg2[%c6_209, %c0_210, %c0_211] : memref<9x64x64xbf16, #tpu.memory_space<vmem>>, vector<1x64x64xbf16>
    %221 = vector.shape_cast %220 : vector<1x64x64xbf16> to vector<64x64xbf16>
    %cst_212 = arith.constant dense<0.000000e+00> : vector<64x256xf32>
    %222 = tpu.matmul %221, %219, %cst_212 {dimension_numbers = #tpu.dot_dimension_numbers<[1], [0], [0], [1], [0, 0, 1, 1], [], []>} : vector<64x64xbf16>, vector<64x256xbf16>, vector<64x256xf32> -> vector<64x256xf32>
    %223 = arith.addf %214, %222 : vector<64x256xf32>
    %c0_213 = arith.constant 0 : index
    %c144_214 = arith.constant 144 : index
    %224 = vector.load %arg8[%c0_213, %c144_214] : memref<64x512xbf16, #tpu.memory_space<vmem>>, vector<64x256xbf16>
    %c7_215 = arith.constant 7 : index
    %c0_216 = arith.constant 0 : index
    %c0_217 = arith.constant 0 : index
    %225 = vector.load %arg2[%c7_215, %c0_216, %c0_217] : memref<9x64x64xbf16, #tpu.memory_space<vmem>>, vector<1x64x64xbf16>
    %226 = vector.shape_cast %225 : vector<1x64x64xbf16> to vector<64x64xbf16>
    %cst_218 = arith.constant dense<0.000000e+00> : vector<64x256xf32>
    %227 = tpu.matmul %226, %224, %cst_218 {dimension_numbers = #tpu.dot_dimension_numbers<[1], [0], [0], [1], [0, 0, 1, 1], [], []>} : vector<64x64xbf16>, vector<64x256xbf16>, vector<64x256xf32> -> vector<64x256xf32>
    %228 = arith.addf %223, %227 : vector<64x256xf32>
    %c0_219 = arith.constant 0 : index
    %c145_220 = arith.constant 145 : index
    %229 = vector.load %arg8[%c0_219, %c145_220] : memref<64x512xbf16, #tpu.memory_space<vmem>>, vector<64x256xbf16>
    %c2_221 = arith.constant 2 : index
    %c0_222 = arith.constant 0 : index
    %c0_223 = arith.constant 0 : index
    %230 = vector.load %arg6[%c2_221, %c0_222, %c0_223] : memref<3x1x256xbf16, #tpu.memory_space<vmem>>, vector<1x1x256xbf16>
    %231 = vector.shape_cast %230 : vector<1x1x256xbf16> to vector<1x256xbf16>
    %232 = vector.broadcast %231 : vector<1x256xbf16> to vector<64x256xbf16>
    %233 = arith.mulf %229, %232 : vector<64x256xbf16>
    %c8_224 = arith.constant 8 : index
    %c0_225 = arith.constant 0 : index
    %c0_226 = arith.constant 0 : index
    %234 = vector.load %arg2[%c8_224, %c0_225, %c0_226] : memref<9x64x64xbf16, #tpu.memory_space<vmem>>, vector<1x64x64xbf16>
    %235 = vector.shape_cast %234 : vector<1x64x64xbf16> to vector<64x64xbf16>
    %cst_227 = arith.constant dense<0.000000e+00> : vector<64x256xf32>
    %236 = tpu.matmul %235, %233, %cst_227 {dimension_numbers = #tpu.dot_dimension_numbers<[1], [0], [0], [1], [0, 0, 1, 1], [], []>} : vector<64x64xbf16>, vector<64x256xbf16>, vector<64x256xf32> -> vector<64x256xf32>
    %237 = arith.addf %228, %236 : vector<64x256xf32>
    %c0_228 = arith.constant 0 : index
    %c0_229 = arith.constant 0 : index
    %238 = vector.load %arg3[%c0_228, %c0_229] : memref<64x1xf32, #tpu.memory_space<vmem>>, vector<64x1xf32>
    %239 = vector.broadcast %238 : vector<64x1xf32> to vector<64x256xf32>
    %240 = arith.addf %237, %239 : vector<64x256xf32>
    %cst_230 = arith.constant 0.000000e+00 : f32
    %241 = vector.broadcast %cst_230 : f32 to vector<64x256xf32>
    %242 = arith.maximumf %240, %241 : vector<64x256xf32>
    %243 = arith.truncf %242 : vector<64x256xf32> to vector<64x256xbf16>
    %c0_231 = arith.constant 0 : index
    %c128_232 = arith.constant 128 : index
    %244 = vector.load %arg8[%c0_231, %c128_232] : memref<64x512xbf16, #tpu.memory_space<vmem>>, vector<64x256xbf16>
    tpu.vector_store %arg8[%c0_231, %c128_232], %243 {strides = array<i32>} : memref<64x512xbf16, #tpu.memory_space<vmem>>, vector<64x256xbf16>,
    %cst_233 = arith.constant 0.000000e+00 : f32
    %245 = vector.broadcast %cst_233 : f32 to vector<64x256xf32>
    %c0_234 = arith.constant 0 : index
    %c111_235 = arith.constant 111 : index
    %246 = vector.load %arg8[%c0_234, %c111_235] : memref<64x512xbf16, #tpu.memory_space<vmem>>, vector<64x256xbf16>
    %c0_236 = arith.constant 0 : index
    %c0_237 = arith.constant 0 : index
    %c0_238 = arith.constant 0 : index
    %247 = vector.load %arg6[%c0_236, %c0_237, %c0_238] : memref<3x1x256xbf16, #tpu.memory_space<vmem>>, vector<1x1x256xbf16>
    %248 = vector.shape_cast %247 : vector<1x1x256xbf16> to vector<1x256xbf16>
    %249 = vector.broadcast %248 : vector<1x256xbf16> to vector<64x256xbf16>
    %250 = arith.mulf %246, %249 : vector<64x256xbf16>
    %c0_239 = arith.constant 0 : index
    %c0_240 = arith.constant 0 : index
    %c0_241 = arith.constant 0 : index
    %251 = vector.load %arg4[%c0_239, %c0_240, %c0_241] : memref<9x64x64xbf16, #tpu.memory_space<vmem>>, vector<1x64x64xbf16>
    %252 = vector.shape_cast %251 : vector<1x64x64xbf16> to vector<64x64xbf16>
    %cst_242 = arith.constant dense<0.000000e+00> : vector<64x256xf32>
    %253 = tpu.matmul %252, %250, %cst_242 {dimension_numbers = #tpu.dot_dimension_numbers<[1], [0], [0], [1], [0, 0, 1, 1], [], []>} : vector<64x64xbf16>, vector<64x256xbf16>, vector<64x256xf32> -> vector<64x256xf32>
    %254 = arith.addf %245, %253 : vector<64x256xf32>
    %c0_243 = arith.constant 0 : index
    %c112_244 = arith.constant 112 : index
    %255 = vector.load %arg8[%c0_243, %c112_244] : memref<64x512xbf16, #tpu.memory_space<vmem>>, vector<64x256xbf16>
    %c1_245 = arith.constant 1 : index
    %c0_246 = arith.constant 0 : index
    %c0_247 = arith.constant 0 : index
    %256 = vector.load %arg4[%c1_245, %c0_246, %c0_247] : memref<9x64x64xbf16, #tpu.memory_space<vmem>>, vector<1x64x64xbf16>
    %257 = vector.shape_cast %256 : vector<1x64x64xbf16> to vector<64x64xbf16>
    %cst_248 = arith.constant dense<0.000000e+00> : vector<64x256xf32>
    %258 = tpu.matmul %257, %255, %cst_248 {dimension_numbers = #tpu.dot_dimension_numbers<[1], [0], [0], [1], [0, 0, 1, 1], [], []>} : vector<64x64xbf16>, vector<64x256xbf16>, vector<64x256xf32> -> vector<64x256xf32>
    %259 = arith.addf %254, %258 : vector<64x256xf32>
    %c0_249 = arith.constant 0 : index
    %c113_250 = arith.constant 113 : index
    %260 = vector.load %arg8[%c0_249, %c113_250] : memref<64x512xbf16, #tpu.memory_space<vmem>>, vector<64x256xbf16>
    %c2_251 = arith.constant 2 : index
    %c0_252 = arith.constant 0 : index
    %c0_253 = arith.constant 0 : index
    %261 = vector.load %arg6[%c2_251, %c0_252, %c0_253] : memref<3x1x256xbf16, #tpu.memory_space<vmem>>, vector<1x1x256xbf16>
    %262 = vector.shape_cast %261 : vector<1x1x256xbf16> to vector<1x256xbf16>
    %263 = vector.broadcast %262 : vector<1x256xbf16> to vector<64x256xbf16>
    %264 = arith.mulf %260, %263 : vector<64x256xbf16>
    %c2_254 = arith.constant 2 : index
    %c0_255 = arith.constant 0 : index
    %c0_256 = arith.constant 0 : index
    %265 = vector.load %arg4[%c2_254, %c0_255, %c0_256] : memref<9x64x64xbf16, #tpu.memory_space<vmem>>, vector<1x64x64xbf16>
    %266 = vector.shape_cast %265 : vector<1x64x64xbf16> to vector<64x64xbf16>
    %cst_257 = arith.constant dense<0.000000e+00> : vector<64x256xf32>
    %267 = tpu.matmul %266, %264, %cst_257 {dimension_numbers = #tpu.dot_dimension_numbers<[1], [0], [0], [1], [0, 0, 1, 1], [], []>} : vector<64x64xbf16>, vector<64x256xbf16>, vector<64x256xf32> -> vector<64x256xf32>
    %268 = arith.addf %259, %267 : vector<64x256xf32>
    %c0_258 = arith.constant 0 : index
    %c127_259 = arith.constant 127 : index
    %269 = vector.load %arg8[%c0_258, %c127_259] : memref<64x512xbf16, #tpu.memory_space<vmem>>, vector<64x256xbf16>
    %c0_260 = arith.constant 0 : index
    %c0_261 = arith.constant 0 : index
    %c0_262 = arith.constant 0 : index
    %270 = vector.load %arg6[%c0_260, %c0_261, %c0_262] : memref<3x1x256xbf16, #tpu.memory_space<vmem>>, vector<1x1x256xbf16>
    %271 = vector.shape_cast %270 : vector<1x1x256xbf16> to vector<1x256xbf16>
    %272 = vector.broadcast %271 : vector<1x256xbf16> to vector<64x256xbf16>
    %273 = arith.mulf %269, %272 : vector<64x256xbf16>
    %c3_263 = arith.constant 3 : index
    %c0_264 = arith.constant 0 : index
    %c0_265 = arith.constant 0 : index
    %274 = vector.load %arg4[%c3_263, %c0_264, %c0_265] : memref<9x64x64xbf16, #tpu.memory_space<vmem>>, vector<1x64x64xbf16>
    %275 = vector.shape_cast %274 : vector<1x64x64xbf16> to vector<64x64xbf16>
    %cst_266 = arith.constant dense<0.000000e+00> : vector<64x256xf32>
    %276 = tpu.matmul %275, %273, %cst_266 {dimension_numbers = #tpu.dot_dimension_numbers<[1], [0], [0], [1], [0, 0, 1, 1], [], []>} : vector<64x64xbf16>, vector<64x256xbf16>, vector<64x256xf32> -> vector<64x256xf32>
    %277 = arith.addf %268, %276 : vector<64x256xf32>
    %c0_267 = arith.constant 0 : index
    %c128_268 = arith.constant 128 : index
    %278 = vector.load %arg8[%c0_267, %c128_268] : memref<64x512xbf16, #tpu.memory_space<vmem>>, vector<64x256xbf16>
    %c4_269 = arith.constant 4 : index
    %c0_270 = arith.constant 0 : index
    %c0_271 = arith.constant 0 : index
    %279 = vector.load %arg4[%c4_269, %c0_270, %c0_271] : memref<9x64x64xbf16, #tpu.memory_space<vmem>>, vector<1x64x64xbf16>
    %280 = vector.shape_cast %279 : vector<1x64x64xbf16> to vector<64x64xbf16>
    %cst_272 = arith.constant dense<0.000000e+00> : vector<64x256xf32>
    %281 = tpu.matmul %280, %278, %cst_272 {dimension_numbers = #tpu.dot_dimension_numbers<[1], [0], [0], [1], [0, 0, 1, 1], [], []>} : vector<64x64xbf16>, vector<64x256xbf16>, vector<64x256xf32> -> vector<64x256xf32>
    %282 = arith.addf %277, %281 : vector<64x256xf32>
    %c0_273 = arith.constant 0 : index
    %c129_274 = arith.constant 129 : index
    %283 = vector.load %arg8[%c0_273, %c129_274] : memref<64x512xbf16, #tpu.memory_space<vmem>>, vector<64x256xbf16>
    %c2_275 = arith.constant 2 : index
    %c0_276 = arith.constant 0 : index
    %c0_277 = arith.constant 0 : index
    %284 = vector.load %arg6[%c2_275, %c0_276, %c0_277] : memref<3x1x256xbf16, #tpu.memory_space<vmem>>, vector<1x1x256xbf16>
    %285 = vector.shape_cast %284 : vector<1x1x256xbf16> to vector<1x256xbf16>
    %286 = vector.broadcast %285 : vector<1x256xbf16> to vector<64x256xbf16>
    %287 = arith.mulf %283, %286 : vector<64x256xbf16>
    %c5_278 = arith.constant 5 : index
    %c0_279 = arith.constant 0 : index
    %c0_280 = arith.constant 0 : index
    %288 = vector.load %arg4[%c5_278, %c0_279, %c0_280] : memref<9x64x64xbf16, #tpu.memory_space<vmem>>, vector<1x64x64xbf16>
    %289 = vector.shape_cast %288 : vector<1x64x64xbf16> to vector<64x64xbf16>
    %cst_281 = arith.constant dense<0.000000e+00> : vector<64x256xf32>
    %290 = tpu.matmul %289, %287, %cst_281 {dimension_numbers = #tpu.dot_dimension_numbers<[1], [0], [0], [1], [0, 0, 1, 1], [], []>} : vector<64x64xbf16>, vector<64x256xbf16>, vector<64x256xf32> -> vector<64x256xf32>
    %291 = arith.addf %282, %290 : vector<64x256xf32>
    %c0_282 = arith.constant 0 : index
    %c143_283 = arith.constant 143 : index
    %292 = vector.load %arg8[%c0_282, %c143_283] : memref<64x512xbf16, #tpu.memory_space<vmem>>, vector<64x256xbf16>
    %c0_284 = arith.constant 0 : index
    %c0_285 = arith.constant 0 : index
    %c0_286 = arith.constant 0 : index
    %293 = vector.load %arg6[%c0_284, %c0_285, %c0_286] : memref<3x1x256xbf16, #tpu.memory_space<vmem>>, vector<1x1x256xbf16>
    %294 = vector.shape_cast %293 : vector<1x1x256xbf16> to vector<1x256xbf16>
    %295 = vector.broadcast %294 : vector<1x256xbf16> to vector<64x256xbf16>
    %296 = arith.mulf %292, %295 : vector<64x256xbf16>
    %c6_287 = arith.constant 6 : index
    %c0_288 = arith.constant 0 : index
    %c0_289 = arith.constant 0 : index
    %297 = vector.load %arg4[%c6_287, %c0_288, %c0_289] : memref<9x64x64xbf16, #tpu.memory_space<vmem>>, vector<1x64x64xbf16>
    %298 = vector.shape_cast %297 : vector<1x64x64xbf16> to vector<64x64xbf16>
    %cst_290 = arith.constant dense<0.000000e+00> : vector<64x256xf32>
    %299 = tpu.matmul %298, %296, %cst_290 {dimension_numbers = #tpu.dot_dimension_numbers<[1], [0], [0], [1], [0, 0, 1, 1], [], []>} : vector<64x64xbf16>, vector<64x256xbf16>, vector<64x256xf32> -> vector<64x256xf32>
    %300 = arith.addf %291, %299 : vector<64x256xf32>
    %c0_291 = arith.constant 0 : index
    %c144_292 = arith.constant 144 : index
    %301 = vector.load %arg8[%c0_291, %c144_292] : memref<64x512xbf16, #tpu.memory_space<vmem>>, vector<64x256xbf16>
    %c7_293 = arith.constant 7 : index
    %c0_294 = arith.constant 0 : index
    %c0_295 = arith.constant 0 : index
    %302 = vector.load %arg4[%c7_293, %c0_294, %c0_295] : memref<9x64x64xbf16, #tpu.memory_space<vmem>>, vector<1x64x64xbf16>
    %303 = vector.shape_cast %302 : vector<1x64x64xbf16> to vector<64x64xbf16>
    %cst_296 = arith.constant dense<0.000000e+00> : vector<64x256xf32>
    %304 = tpu.matmul %303, %301, %cst_296 {dimension_numbers = #tpu.dot_dimension_numbers<[1], [0], [0], [1], [0, 0, 1, 1], [], []>} : vector<64x64xbf16>, vector<64x256xbf16>, vector<64x256xf32> -> vector<64x256xf32>
    %305 = arith.addf %300, %304 : vector<64x256xf32>
    %c0_297 = arith.constant 0 : index
    %c145_298 = arith.constant 145 : index
    %306 = vector.load %arg8[%c0_297, %c145_298] : memref<64x512xbf16, #tpu.memory_space<vmem>>, vector<64x256xbf16>
    %c2_299 = arith.constant 2 : index
    %c0_300 = arith.constant 0 : index
    %c0_301 = arith.constant 0 : index
    %307 = vector.load %arg6[%c2_299, %c0_300, %c0_301] : memref<3x1x256xbf16, #tpu.memory_space<vmem>>, vector<1x1x256xbf16>
    %308 = vector.shape_cast %307 : vector<1x1x256xbf16> to vector<1x256xbf16>
    %309 = vector.broadcast %308 : vector<1x256xbf16> to vector<64x256xbf16>
    %310 = arith.mulf %306, %309 : vector<64x256xbf16>
    %c8_302 = arith.constant 8 : index
    %c0_303 = arith.constant 0 : index
    %c0_304 = arith.constant 0 : index
    %311 = vector.load %arg4[%c8_302, %c0_303, %c0_304] : memref<9x64x64xbf16, #tpu.memory_space<vmem>>, vector<1x64x64xbf16>
    %312 = vector.shape_cast %311 : vector<1x64x64xbf16> to vector<64x64xbf16>
    %cst_305 = arith.constant dense<0.000000e+00> : vector<64x256xf32>
    %313 = tpu.matmul %312, %310, %cst_305 {dimension_numbers = #tpu.dot_dimension_numbers<[1], [0], [0], [1], [0, 0, 1, 1], [], []>} : vector<64x64xbf16>, vector<64x256xbf16>, vector<64x256xf32> -> vector<64x256xf32>
    %314 = arith.addf %305, %313 : vector<64x256xf32>
    %c0_306 = arith.constant 0 : index
    %c0_307 = arith.constant 0 : index
    %315 = vector.load %arg5[%c0_306, %c0_307] : memref<64x1xf32, #tpu.memory_space<vmem>>, vector<64x1xf32>
    %316 = vector.broadcast %315 : vector<64x1xf32> to vector<64x256xf32>
    %317 = arith.addf %314, %316 : vector<64x256xf32>
    %c1_308 = arith.constant 1 : index
    %c0_309 = arith.constant 0 : index
    %c0_310 = arith.constant 0 : index
    %318 = vector.load %arg1[%c1_308, %c0_309, %c0_310] : memref<2x64x256xf32, #tpu.memory_space<vmem>>, vector<1x64x256xf32>
    %319 = vector.shape_cast %318 : vector<1x64x256xf32> to vector<64x256xf32>
    %320 = arith.addf %319, %317 : vector<64x256xf32>
    %c1_311 = arith.constant 1 : index
    %c0_312 = arith.constant 0 : index
    %c0_313 = arith.constant 0 : index
    %321 = vector.load %arg7[%c1_311, %c0_312, %c0_313] : memref<2x64x256xf32, #tpu.memory_space<vmem>>, vector<1x64x256xf32>
    %322 = vector.shape_cast %321 : vector<1x64x256xf32> to vector<64x256xf32>
    %323 = vector.shape_cast %320 : vector<64x256xf32> to vector<1x64x256xf32>
    tpu.vector_store %arg7[%c1_311, %c0_312, %c0_313], %323 {strides = array<i32>} : memref<2x64x256xf32, #tpu.memory_space<vmem>>, vector<1x64x256xf32>,
    return
  }
  func.func @transform_0(%arg0: i32) -> (i32, i32, i32) {
    %c0_i32 = arith.constant 0 : i32
    %c0_i32_0 = arith.constant 0 : i32
    %c0_i32_1 = arith.constant 0 : i32
    return %arg0, %c0_i32, %c0_i32_0 : i32, i32, i32
  }
  func.func @transform_1(%arg0: i32) -> (i32, i32, i32) {
    %c0_i32 = arith.constant 0 : i32
    %c0_i32_0 = arith.constant 0 : i32
    %c0_i32_1 = arith.constant 0 : i32
    %c0_i32_2 = arith.constant 0 : i32
    return %c0_i32, %c0_i32_0, %c0_i32_1 : i32, i32, i32
  }
  func.func @transform_2(%arg0: i32) -> (i32, i32) {
    %c0_i32 = arith.constant 0 : i32
    %c0_i32_0 = arith.constant 0 : i32
    %c0_i32_1 = arith.constant 0 : i32
    return %c0_i32, %c0_i32_0 : i32, i32
  }
  func.func @transform_3(%arg0: i32) -> (i32, i32, i32) {
    %c0_i32 = arith.constant 0 : i32
    %c0_i32_0 = arith.constant 0 : i32
    %c0_i32_1 = arith.constant 0 : i32
    %c0_i32_2 = arith.constant 0 : i32
    return %c0_i32, %c0_i32_0, %c0_i32_1 : i32, i32, i32
  }
  func.func @transform_4(%arg0: i32) -> (i32, i32) {
    %c0_i32 = arith.constant 0 : i32
    %c0_i32_0 = arith.constant 0 : i32
    %c0_i32_1 = arith.constant 0 : i32
    return %c0_i32, %c0_i32_0 : i32, i32
  }
  func.func @transform_5(%arg0: i32) -> (i32, i32, i32) {
    %c0_i32 = arith.constant 0 : i32
    %c0_i32_0 = arith.constant 0 : i32
    %c0_i32_1 = arith.constant 0 : i32
    %c0_i32_2 = arith.constant 0 : i32
    return %c0_i32, %c0_i32_0, %c0_i32_1 : i32, i32, i32
  }
  func.func @transform_6(%arg0: i32) -> (i32, i32, i32) {
    %c0_i32 = arith.constant 0 : i32
    %c0_i32_0 = arith.constant 0 : i32
    %c0_i32_1 = arith.constant 0 : i32
    return %arg0, %c0_i32, %c0_i32_0 : i32, i32, i32
  }
}

</mosaic_0001>

<llo_original>
// kernel: tpu_custom_call.1
$region0: #{tpu_custom_call.1}
  #allocation0 [shape = 'u32[]', space=smem, size = 0x4, offset = 0x4, fixed_abs, tag = 'smem constant byte address 0x4 - core index']
  #allocation1 [shape = 'u32[144,128]{1,0:T(1,128)}', space=vmem, size = 0x12000, scoped, tag = 'internal scratch']
  #allocation2 [shape = 'bf16[64,512]{1,0:T(16,128)(2,1)}', space=vmem, size = 0x10000, scoped, tag = 'scratch operand']
  %s0 = inlined_call_operand.hbm [shape: f32[2,64,256], index: 0, kind: input, shape index: {}]
  %s1 = inlined_call_operand.hbm [shape: bf16[9,64,64], index: 1, kind: input, shape index: {}]
  %s2 = inlined_call_operand.vmem [shape: f32[64,1], index: 2, kind: input, shape index: {}]
  %s3 = inlined_call_operand.hbm [shape: bf16[9,64,64], index: 3, kind: input, shape index: {}]
  %s4 = inlined_call_operand.vmem [shape: f32[64,1], index: 4, kind: input, shape index: {}]
  %s5 = inlined_call_operand.vmem [shape: bf16[3,1,256], index: 5, kind: input, shape index: {}]
  %s6 = inlined_call_operand.hbm [shape: f32[2,64,256], index: 6, kind: output, shape index: {}]
  %s7 = sld [smem:[#allocation0]]
  $region46: #{tpu_custom_call.1} parent=0
    _
  %s9 = ssub.s32 1, %s7
  %s10 = scalar_select 0, %s9, %s7
  $region1: #{tpu_custom_call.1} parent=0
    #allocation3 [shape = 'u8[131072]{0}', space=vmem, size = 0x20000, scoped, tag = 'input window, operand 0, single buffered']
    #allocation4 [shape = 's32[1]{0}', space=sflag, size = 0x4, scoped, tag = 'scoped memory for tpu_custom_call.1']
    #allocation5 [shape = 's32[1]{0}', space=sflag, size = 0x4, scoped, tag = 'scoped memory for tpu_custom_call.1']
    #allocation6 [shape = 'u8[147456]{0}', space=vmem, size = 0x24000, scoped, tag = 'input window, operand 1, single buffered']
    #allocation7 [shape = 's32[1]{0}', space=sflag, size = 0x4, scoped, tag = 'scoped memory for tpu_custom_call.1']
    #allocation8 [shape = 'u8[147456]{0}', space=vmem, size = 0x24000, scoped, tag = 'input window, operand 3, single buffered']
    #allocation9 [shape = 'u8[131072]{0}', space=vmem, size = 0x20000, scoped, tag = 'output window, operand 0, single buffered']
    %11 = vsyncpa [#allocation4], 0
    %12 = vsyncpa [#allocation7], 0
    %13 = vsyncpa [#allocation5], 0
    // Predicated region
    $region2: #{tpu_custom_call.1} parent=1 // pred_check
      _
    $region3: #{tpu_custom_call.1} parent=1 // pred_check_branch
      %15 = sbr.rel (0) target = $region5
    $region4: #{tpu_custom_call.1} parent=1 // pred_region
      %s17 = ssub.s32 4096, 4096
      %18 = vsyncadd [#allocation4], %s17
      %s19 = sshll.u32 [#allocation3], 4
      %s20 = int_to_ptr.vmem [resolvable:$true] %s19
      %25 = dma.hbm_to_vmem [thread:$0]  %s0, 4096, %s20, [#allocation4], 256, 256, 16
    $region5: #{tpu_custom_call.1} parent=1 // pred_fallthru
      _
    // Predicated region
    $region6: #{tpu_custom_call.1} parent=1 // pred_check
      _
    $region7: #{tpu_custom_call.1} parent=1 // pred_check_branch
      %27 = sbr.rel (0) target = $region9
    $region8: #{tpu_custom_call.1} parent=1 // pred_region
      %s29 = ssub.s32 4608, 4608
      %30 = vsyncadd [#allocation7], %s29
      %s31 = sshll.u32 [#allocation6], 4
      %s32 = int_to_ptr.vmem [resolvable:$true] %s31
      %37 = dma.hbm_to_vmem [thread:$0]  %s1, 4608, %s32, [#allocation7], 64, 64, 4
    $region9: #{tpu_custom_call.1} parent=1 // pred_fallthru
      _
    // Predicated region
    $region10: #{tpu_custom_call.1} parent=1 // pred_check
      _
    $region11: #{tpu_custom_call.1} parent=1 // pred_check_branch
      %39 = sbr.rel (0) target = $region13
    $region12: #{tpu_custom_call.1} parent=1 // pred_region
      _
    $region13: #{tpu_custom_call.1} parent=1 // pred_fallthru
      _
    // Predicated region
    $region14: #{tpu_custom_call.1} parent=1 // pred_check
      _
    $region15: #{tpu_custom_call.1} parent=1 // pred_check_branch
      %41 = sbr.rel (0) target = $region17
    $region16: #{tpu_custom_call.1} parent=1 // pred_region
      %s43 = ssub.s32 4608, 4608
      %44 = vsyncadd [#allocation7], %s43
      %s45 = sshll.u32 [#allocation8], 4
      %s46 = int_to_ptr.vmem [resolvable:$true] %s45
      %51 = dma.hbm_to_vmem [thread:$0]  %s3, 4608, %s46, [#allocation7], 64, 64, 4
    $region17: #{tpu_custom_call.1} parent=1 // pred_fallthru
      _
    // Predicated region
    $region18: #{tpu_custom_call.1} parent=1 // pred_check
      _
    $region19: #{tpu_custom_call.1} parent=1 // pred_check_branch
      %53 = sbr.rel (0) target = $region21
    $region20: #{tpu_custom_call.1} parent=1 // pred_region
      _
    $region21: #{tpu_custom_call.1} parent=1 // pred_fallthru
      _
    // Predicated region
    $region22: #{tpu_custom_call.1} parent=1 // pred_check
      _
    $region23: #{tpu_custom_call.1} parent=1 // pred_check_branch
      %55 = sbr.rel (0) target = $region25
    $region24: #{tpu_custom_call.1} parent=1 // pred_region
      _
    $region25: #{tpu_custom_call.1} parent=1 // pred_fallthru
      _
    // Predicated region
    $region26: #{tpu_custom_call.1} parent=1 // pred_check
      _
    $region27: #{tpu_custom_call.1} parent=1 // pred_check_branch
      %57 = sbr.rel (0) target = $region29
    $region28: #{tpu_custom_call.1} parent=1 // pred_region
      %58 = dma.done [#allocation4], 4096
    $region29: #{tpu_custom_call.1} parent=1 // pred_fallthru
      _
    // Predicated region
    $region30: #{tpu_custom_call.1} parent=1 // pred_check
      _
    $region31: #{tpu_custom_call.1} parent=1 // pred_check_branch
      %60 = sbr.rel (0) target = $region33
    $region32: #{tpu_custom_call.1} parent=1 // pred_region
      %61 = dma.done [#allocation7], 4608
    $region33: #{tpu_custom_call.1} parent=1 // pred_fallthru
      _
    // Predicated region
    $region34: #{tpu_custom_call.1} parent=1 // pred_check
      _
    $region35: #{tpu_custom_call.1} parent=1 // pred_check_branch
      %63 = sbr.rel (0) target = $region37
    $region36: #{tpu_custom_call.1} parent=1 // pred_region
      %64 = dma.done [#allocation7], 4608
    $region37: #{tpu_custom_call.1} parent=1 // pred_fallthru
      _
    %66 = vst [vmem:[#allocation2] sm:$0xff] 0
    %67 = vst [vmem:[#allocation2 + $0x20] sm:$0xff] 0
    %68 = vst [vmem:[#allocation2 + $0x40] sm:$0xff] 0
    %69 = vst [vmem:[#allocation2 + $0x60] sm:$0xff] 0
    %70 = vst [vmem:[#allocation2 + $0x18] sm:$0xff] 0
    %71 = vst [vmem:[#allocation2 + $0x38] sm:$0xff] 0
    %72 = vst [vmem:[#allocation2 + $0x58] sm:$0xff] 0
    %73 = vst [vmem:[#allocation2 + $0x78] sm:$0xff] 0
    %v74 = vld [vmem:[#allocation3] sm:$0xff]
    %v75 = vld [vmem:[#allocation3 + $0x8] sm:$0xff]
    %v76 = vld [vmem:[#allocation3 + $0x10] sm:$0xff]
    %v77 = vld [vmem:[#allocation3 + $0x18] sm:$0xff]
    %v78 = vld [vmem:[#allocation3 + $0x20] sm:$0xff]
    %v79 = vld [vmem:[#allocation3 + $0x28] sm:$0xff]
    %v80 = vld [vmem:[#allocation3 + $0x30] sm:$0xff]
    %v81 = vld [vmem:[#allocation3 + $0x38] sm:$0xff]
    %v82 = vld [vmem:[#allocation3 + $0x40] sm:$0xff]
    %v83 = vld [vmem:[#allocation3 + $0x48] sm:$0xff]
    %v84 = vld [vmem:[#allocation3 + $0x50] sm:$0xff]
    %v85 = vld [vmem:[#allocation3 + $0x58] sm:$0xff]
    %v86 = vld [vmem:[#allocation3 + $0x60] sm:$0xff]
    %v87 = vld [vmem:[#allocation3 + $0x68] sm:$0xff]
    %v88 = vld [vmem:[#allocation3 + $0x70] sm:$0xff]
    %v89 = vld [vmem:[#allocation3 + $0x78] sm:$0xff]
    %v90 = vpack.c.bf16 %v76, %v74
    %v91 = vpack.c.bf16 %v77, %v75
    %v92 = vpack.c.bf16 %v80, %v78
    %v93 = vpack.c.bf16 %v81, %v79
    %v94 = vpack.c.bf16 %v84, %v82
    %v95 = vpack.c.bf16 %v85, %v83
    %v96 = vpack.c.bf16 %v88, %v86
    %v97 = vpack.c.bf16 %v89, %v87
    %98 = vst [vmem:[#allocation2 + $0x8] sm:$0xff] %v90
    %99 = vst [vmem:[#allocation2 + $0x10] sm:$0xff] %v91
    %100 = vst [vmem:[#allocation2 + $0x28] sm:$0xff] %v92
    %101 = vst [vmem:[#allocation2 + $0x30] sm:$0xff] %v93
    %102 = vst [vmem:[#allocation2 + $0x48] sm:$0xff] %v94
    %103 = vst [vmem:[#allocation2 + $0x50] sm:$0xff] %v95
    %104 = vst [vmem:[#allocation2 + $0x68] sm:$0xff] %v96
    %105 = vst [vmem:[#allocation2 + $0x70] sm:$0xff] %v97
    %v106 = vld [vmem:[#allocation2] sm:$0xff]
    %v107 = vld [vmem:[#allocation2 + $0x8] sm:$0xff]
    %v108 = vld [vmem:[#allocation2 + $0x10] sm:$0xff]
    %v109 = vld [vmem:[#allocation2 + $0x20] sm:$0xff]
    %v110 = vld [vmem:[#allocation2 + $0x28] sm:$0xff]
    %v111 = vld [vmem:[#allocation2 + $0x30] sm:$0xff]
    %v112 = vld [vmem:[#allocation2 + $0x40] sm:$0xff]
    %v113 = vld [vmem:[#allocation2 + $0x48] sm:$0xff]
    %v114 = vld [vmem:[#allocation2 + $0x50] sm:$0xff]
    %v115 = vld [vmem:[#allocation2 + $0x60] sm:$0xff]
    %v116 = vld [vmem:[#allocation2 + $0x68] sm:$0xff]
    %v117 = vld [vmem:[#allocation2 + $0x70] sm:$0xff]
    %v118 = vld [vmem:[%s5] sm:$0x3]
    %v121 = vunpack.c.l.s4 1966171168
    %v122 = vunpack.c.0.s8 %v121
    %v123 = vlaneseq
    %v124 = vshrl.u32 %v123, 7
    %v125 = vsub.s32 %v122, %v124
    %v126 = vrot.slane %v118, %v125
    %v127 = vcombine.high %v126, %v126
    %v129 = vunpack.c.l.s4 1966171168
    %v130 = vunpack.c.0.s8 %v129
    %v131 = vlaneseq
    %v132 = vshrl.u32 %v131, 7
    %v133 = vsub.s32 %v130, %v132
    %v134 = vrot.slane %v126, %v133
    %v136 = vunpack.c.l.s4 1966171168
    %v137 = vunpack.c.0.s8 %v136
    %v138 = vlaneseq
    %v139 = vshrl.u32 %v138, 7
    %v140 = vsub.s32 %v137, %v139
    %v141 = vrot.slane %v127, %v140
    %v143 = vpack.i.b16 %v134, %v134
    %v145 = vlaneseq
    %v146 = vshrl.u32 %v145, 7
    %v147 = vsub.s32 0, %v146
    %v148 = vrot.slane %v143, %v147
    %v150 = vpack.i.b16 %v141, %v141
    %v152 = vlaneseq
    %v153 = vshrl.u32 %v152, 7
    %v154 = vsub.s32 0, %v153
    %v155 = vrot.slane %v150, %v154
    %158 = vrot.lane.b32.xlu0 %v148, 111
    %v159 = vpop.permute.xlu0 %158
    %160 = vrot.lane.b32.xlu0 %v155, 111
    %v161 = vpop.permute.xlu0 %160
    %vm162 = vcmask 908288
    %v163 = vsel %vm162, %v159, %v161
    %v167 = vmul.bf16 %v106, %v159
    %v168 = vmul.bf16 %v107, %v163
    %v169 = vmul.bf16 %v108, %v161
    %v170 = vmul.bf16 %v109, %v159
    %v171 = vmul.bf16 %v110, %v163
    %v172 = vmul.bf16 %v111, %v161
    %v173 = vmul.bf16 %v112, %v159
    %v174 = vmul.bf16 %v113, %v163
    %v175 = vmul.bf16 %v114, %v161
    %v176 = vmul.bf16 %v115, %v159
    %v177 = vmul.bf16 %v116, %v163
    %v178 = vmul.bf16 %v117, %v161
    %v179 = vld [vmem:[#allocation6] sm:$0xf]
    %v180 = vld [vmem:[#allocation6 + $0x4] sm:$0xf]
    %v181 = vld [vmem:[#allocation6 + $0x8] sm:$0xf]
    %v182 = vld [vmem:[#allocation6 + $0xc] sm:$0xf]
    %v183 = vld [vmem:[#allocation6 + $0x10] sm:$0xf]
    %v184 = vld [vmem:[#allocation6 + $0x14] sm:$0xf]
    %v185 = vld [vmem:[#allocation6 + $0x18] sm:$0xf]
    %v186 = vld [vmem:[#allocation6 + $0x1c] sm:$0xf]
    %s187 = scalar_lea.vmem [#allocation6], 32
    %v188 = vld [vmem:[%s187] sm:$0xf]
    %v189 = vld [vmem:[%s187 + $0x4] sm:$0xf]
    %v190 = vld [vmem:[%s187 + $0x8] sm:$0xf]
    %v191 = vld [vmem:[%s187 + $0xc] sm:$0xf]
    %v192 = vld [vmem:[%s187 + $0x10] sm:$0xf]
    %v193 = vld [vmem:[%s187 + $0x14] sm:$0xf]
    %v194 = vld [vmem:[%s187 + $0x18] sm:$0xf]
    %v195 = vld [vmem:[%s187 + $0x1c] sm:$0xf]
    %v204 = vunpack.c.l.b16 %v188
    %v205 = vunpack.c.l.b16 %v189
    %v206 = vunpack.c.l.b16 %v190
    %v207 = vunpack.c.l.b16 %v191
    %v208 = vunpack.c.l.b16 %v192
    %v209 = vunpack.c.l.b16 %v193
    %v210 = vunpack.c.l.b16 %v194
    %v211 = vunpack.c.l.b16 %v195
    %v212 = vpack.c.b16 %v205, %v204
    %v213 = vpack.c.b16 %v207, %v206
    %v214 = vpack.c.b16 %v209, %v208
    %v215 = vpack.c.b16 %v211, %v210
    %228 = vrot.lane.b32.xlu0 %v106, 16
    %v229 = vpop.permute.xlu0 %228
    %230 = vrot.lane.b32.xlu0 %v107, 16
    %v231 = vpop.permute.xlu0 %230
    %232 = vrot.lane.b32.xlu0 %v108, 16
    %v233 = vpop.permute.xlu0 %232
    %234 = vrot.lane.b32.xlu0 %v109, 16
    %v235 = vpop.permute.xlu0 %234
    %236 = vrot.lane.b32.xlu0 %v110, 16
    %v237 = vpop.permute.xlu0 %236
    %238 = vrot.lane.b32.xlu0 %v111, 16
    %v239 = vpop.permute.xlu0 %238
    %240 = vrot.lane.b32.xlu0 %v112, 16
    %v241 = vpop.permute.xlu0 %240
    %242 = vrot.lane.b32.xlu0 %v113, 16
    %v243 = vpop.permute.xlu0 %242
    %244 = vrot.lane.b32.xlu0 %v114, 16
    %v245 = vpop.permute.xlu0 %244
    %246 = vrot.lane.b32.xlu0 %v115, 16
    %v247 = vpop.permute.xlu0 %246
    %248 = vrot.lane.b32.xlu0 %v116, 16
    %v249 = vpop.permute.xlu0 %248
    %250 = vrot.lane.b32.xlu0 %v117, 16
    %v251 = vpop.permute.xlu0 %250
    %vm252 = vcmask 130048
    %v253 = vsel %vm252, %v229, %v231
    %v254 = vsel %vm252, %v231, %v233
    %v255 = vsel %vm252, %v235, %v237
    %v256 = vsel %vm252, %v237, %v239
    %v257 = vsel %vm252, %v241, %v243
    %v258 = vsel %vm252, %v243, %v245
    %v259 = vsel %vm252, %v247, %v249
    %v260 = vsel %vm252, %v249, %v251
    %vm269 = vcmask 523264
    %v271 = vsel %vm269, %v212, 0
    %v274 = vsel %vm269, %v213, 0
    %v277 = vsel %vm269, %v214, 0
    %v280 = vsel %vm269, %v215, 0
    %282 = vmatprep.subr.bf16.mxu0 %v254
    %283 = vmatpush1.bf16.msra.mxu0 %v253
    %284 = vmatprep.subr.bf16.mxu0 %v256
    %285 = vmatpush1.bf16.msra.mxu0 %v255
    %286 = vmatprep.subr.bf16.mxu0 %v258
    %287 = vmatpush1.bf16.msra.mxu0 %v257
    %288 = vmatprep.subr.bf16.mxu0 %v260
    %289 = vmatpush1.bf16.msra.mxu0 %v259
    %290 = vmatprep.subr.bf16.mxu0 0
    %291 = vmatpush1.bf16.msra.mxu0 0
    %292 = vmatprep.subr.bf16.mxu0 0
    %293 = vmatpush1.bf16.msra.mxu0 0
    %294 = vmatprep.subr.bf16.mxu0 0
    %295 = vmatpush1.bf16.msra.mxu0 0
    %296 = vmatprep.subr.bf16.mxu0 0
    %297 = vmatpush1.bf16.msra.mxu0 0
    %298 = vmatprep.subr.bf16.mxu0 0
    %299 = vmatpush1.bf16.msra.mxu0 0
    %300 = vmatprep.subr.bf16.mxu0 0
    %301 = vmatpush1.bf16.msra.mxu0 0
    %302 = vmatprep.subr.bf16.mxu0 0
    %303 = vmatpush1.bf16.msra.mxu0 0
    %304 = vmatprep.subr.bf16.mxu0 0
    %305 = vmatpush1.bf16.msra.mxu0 0
    %306 = vmatprep.subr.bf16.mxu0 0
    %307 = vmatpush1.bf16.msra.mxu0 0
    %308 = vmatprep.subr.bf16.mxu0 0
    %309 = vmatpush1.bf16.msra.mxu0 0
    %310 = vmatprep.subr.bf16.mxu0 0
    %311 = vmatpush1.bf16.msra.mxu0 0
    %312 = vmatprep.subr.bf16.mxu0 0
    %313 = vmatpush1.bf16.msra.mxu0 0
    %314 = vmatprep.mubr.bf16.mxu0 0
    %315 = vmatmul.mubr.bf16.gmra.mrb[0].mxu0 %v271
    %v316 = vpop.f32.mrb[0].mxu0
    %v317 = vadd.f32 0.0, %v316
    %v318 = vpop.f32.mrb[0].mxu0
    %v319 = vadd.f32 0.0, %v318
    %v320 = vpop.f32.mrb[0].mxu0
    %v321 = vadd.f32 0.0, %v320
    %v322 = vpop.f32.mrb[0].mxu0
    %v323 = vadd.f32 0.0, %v322
    %324 = vmatprep.mubr.bf16.mxu0 0
    %325 = vmatmul.mubr.bf16.gmra.mrb[0].mxu0 %v274
    %v326 = vpop.f32.mrb[0].mxu0
    %v327 = vadd.f32 0.0, %v326
    %v328 = vpop.f32.mrb[0].mxu0
    %v329 = vadd.f32 0.0, %v328
    %v330 = vpop.f32.mrb[0].mxu0
    %v331 = vadd.f32 0.0, %v330
    %v332 = vpop.f32.mrb[0].mxu0
    %v333 = vadd.f32 0.0, %v332
    %334 = vmatprep.mubr.bf16.mxu0 0
    %335 = vmatmul.mubr.bf16.gmra.mrb[0].mxu0 %v277
    %v336 = vpop.f32.mrb[0].mxu0
    %v337 = vadd.f32 0.0, %v336
    %v338 = vpop.f32.mrb[0].mxu0
    %v339 = vadd.f32 0.0, %v338
    %v340 = vpop.f32.mrb[0].mxu0
    %v341 = vadd.f32 0.0, %v340
    %v342 = vpop.f32.mrb[0].mxu0
    %v343 = vadd.f32 0.0, %v342
    %344 = vmatprep.mubr.bf16.mxu0 0
    %345 = vmatmul.mubr.bf16.gmra.mrb[0].mxu0 %v280
    %v346 = vpop.f32.mrb[0].mxu0
    %v347 = vadd.f32 0.0, %v346
    %v348 = vpop.f32.mrb[0].mxu0
    %v349 = vadd.f32 0.0, %v348
    %v350 = vpop.f32.mrb[0].mxu0
    %v351 = vadd.f32 0.0, %v350
    %v352 = vpop.f32.mrb[0].mxu0
    %v353 = vadd.f32 0.0, %v352
    %354 = vdwg.mxu0
    %v363 = vunpack.c.l.b16 %v179
    %v364 = vunpack.c.l.b16 %v180
    %v365 = vunpack.c.l.b16 %v181
    %v366 = vunpack.c.l.b16 %v182
    %v367 = vunpack.c.l.b16 %v183
    %v368 = vunpack.c.l.b16 %v184
    %v369 = vunpack.c.l.b16 %v185
    %v370 = vunpack.c.l.b16 %v186
    %v371 = vpack.c.b16 %v364, %v363
    %v372 = vpack.c.b16 %v366, %v365
    %v373 = vpack.c.b16 %v368, %v367
    %v374 = vpack.c.b16 %v370, %v369
    %387 = vrot.lane.b32.xlu0 %v167, 17
    %v388 = vpop.permute.xlu0 %387
    %389 = vrot.lane.b32.xlu0 %v168, 17
    %v390 = vpop.permute.xlu0 %389
    %391 = vrot.lane.b32.xlu0 %v169, 17
    %v392 = vpop.permute.xlu0 %391
    %393 = vrot.lane.b32.xlu0 %v170, 17
    %v394 = vpop.permute.xlu0 %393
    %395 = vrot.lane.b32.xlu0 %v171, 17
    %v396 = vpop.permute.xlu0 %395
    %397 = vrot.lane.b32.xlu0 %v172, 17
    %v398 = vpop.permute.xlu0 %397
    %399 = vrot.lane.b32.xlu0 %v173, 17
    %v400 = vpop.permute.xlu0 %399
    %401 = vrot.lane.b32.xlu0 %v174, 17
    %v402 = vpop.permute.xlu0 %401
    %403 = vrot.lane.b32.xlu0 %v175, 17
    %v404 = vpop.permute.xlu0 %403
    %405 = vrot.lane.b32.xlu0 %v176, 17
    %v406 = vpop.permute.xlu0 %405
    %407 = vrot.lane.b32.xlu0 %v177, 17
    %v408 = vpop.permute.xlu0 %407
    %409 = vrot.lane.b32.xlu0 %v178, 17
    %v410 = vpop.permute.xlu0 %409
    %vm411 = vcmask 138240
    %v412 = vsel %vm411, %v388, %v390
    %v413 = vsel %vm411, %v390, %v392
    %v414 = vsel %vm411, %v394, %v396
    %v415 = vsel %vm411, %v396, %v398
    %v416 = vsel %vm411, %v400, %v402
    %v417 = vsel %vm411, %v402, %v404
    %v418 = vsel %vm411, %v406, %v408
    %v419 = vsel %vm411, %v408, %v410
    %v429 = vsel %vm269, %v371, 0
    %v432 = vsel %vm269, %v372, 0
    %v435 = vsel %vm269, %v373, 0
    %v438 = vsel %vm269, %v374, 0
    %440 = vmatprep.subr.bf16.mxu0 %v413
    %441 = vmatpush1.bf16.msra.mxu0 %v412
    %442 = vmatprep.subr.bf16.mxu0 %v415
    %443 = vmatpush1.bf16.msra.mxu0 %v414
    %444 = vmatprep.subr.bf16.mxu0 %v417
    %445 = vmatpush1.bf16.msra.mxu0 %v416
    %446 = vmatprep.subr.bf16.mxu0 %v419
    %447 = vmatpush1.bf16.msra.mxu0 %v418
    %448 = vmatprep.subr.bf16.mxu0 0
    %449 = vmatpush1.bf16.msra.mxu0 0
    %450 = vmatprep.subr.bf16.mxu0 0
    %451 = vmatpush1.bf16.msra.mxu0 0
    %452 = vmatprep.subr.bf16.mxu0 0
    %453 = vmatpush1.bf16.msra.mxu0 0
    %454 = vmatprep.subr.bf16.mxu0 0
    %455 = vmatpush1.bf16.msra.mxu0 0
    %456 = vmatprep.subr.bf16.mxu0 0
    %457 = vmatpush1.bf16.msra.mxu0 0
    %458 = vmatprep.subr.bf16.mxu0 0
    %459 = vmatpush1.bf16.msra.mxu0 0
    %460 = vmatprep.subr.bf16.mxu0 0
    %461 = vmatpush1.bf16.msra.mxu0 0
    %462 = vmatprep.subr.bf16.mxu0 0
    %463 = vmatpush1.bf16.msra.mxu0 0
    %464 = vmatprep.subr.bf16.mxu0 0
    %465 = vmatpush1.bf16.msra.mxu0 0
    %466 = vmatprep.subr.bf16.mxu0 0
    %467 = vmatpush1.bf16.msra.mxu0 0
    %468 = vmatprep.subr.bf16.mxu0 0
    %469 = vmatpush1.bf16.msra.mxu0 0
    %470 = vmatprep.subr.bf16.mxu0 0
    %471 = vmatpush1.bf16.msra.mxu0 0
    %472 = vmatprep.mubr.bf16.mxu0 0
    %473 = vmatmul.mubr.bf16.gmra.mrb[0].mxu0 %v429
    %v474 = vpop.f32.mrb[0].mxu0
    %v475 = vadd.f32 %v317, %v474
    %v476 = vpop.f32.mrb[0].mxu0
    %v477 = vadd.f32 %v319, %v476
    %v478 = vpop.f32.mrb[0].mxu0
    %v479 = vadd.f32 %v321, %v478
    %v480 = vpop.f32.mrb[0].mxu0
    %v481 = vadd.f32 %v323, %v480
    %482 = vmatprep.mubr.bf16.mxu0 0
    %483 = vmatmul.mubr.bf16.gmra.mrb[0].mxu0 %v432
    %v484 = vpop.f32.mrb[0].mxu0
    %v485 = vadd.f32 %v327, %v484
    %v486 = vpop.f32.mrb[0].mxu0
    %v487 = vadd.f32 %v329, %v486
    %v488 = vpop.f32.mrb[0].mxu0
    %v489 = vadd.f32 %v331, %v488
    %v490 = vpop.f32.mrb[0].mxu0
    %v491 = vadd.f32 %v333, %v490
    %492 = vmatprep.mubr.bf16.mxu0 0
    %493 = vmatmul.mubr.bf16.gmra.mrb[0].mxu0 %v435
    %v494 = vpop.f32.mrb[0].mxu0
    %v495 = vadd.f32 %v337, %v494
    %v496 = vpop.f32.mrb[0].mxu0
    %v497 = vadd.f32 %v339, %v496
    %v498 = vpop.f32.mrb[0].mxu0
    %v499 = vadd.f32 %v341, %v498
    %v500 = vpop.f32.mrb[0].mxu0
    %v501 = vadd.f32 %v343, %v500
    %502 = vmatprep.mubr.bf16.mxu0 0
    %503 = vmatmul.mubr.bf16.gmra.mrb[0].mxu0 %v438
    %v504 = vpop.f32.mrb[0].mxu0
    %v505 = vadd.f32 %v347, %v504
    %v506 = vpop.f32.mrb[0].mxu0
    %v507 = vadd.f32 %v349, %v506
    %v508 = vpop.f32.mrb[0].mxu0
    %v509 = vadd.f32 %v351, %v508
    %v510 = vpop.f32.mrb[0].mxu0
    %v511 = vadd.f32 %v353, %v510
    %512 = vdwg.mxu0
    %s513 = scalar_lea.vmem %s5, 4
    %v514 = vld [vmem:[%s513] sm:$0x3]
    %v517 = vunpack.c.l.s4 1966171168
    %v518 = vunpack.c.0.s8 %v517
    %v519 = vlaneseq
    %v520 = vshrl.u32 %v519, 7
    %v521 = vsub.s32 %v518, %v520
    %v522 = vrot.slane %v514, %v521
    %v523 = vcombine.high %v522, %v522
    %v525 = vunpack.c.l.s4 1966171168
    %v526 = vunpack.c.0.s8 %v525
    %v527 = vlaneseq
    %v528 = vshrl.u32 %v527, 7
    %v529 = vsub.s32 %v526, %v528
    %v530 = vrot.slane %v522, %v529
    %v532 = vunpack.c.l.s4 1966171168
    %v533 = vunpack.c.0.s8 %v532
    %v534 = vlaneseq
    %v535 = vshrl.u32 %v534, 7
    %v536 = vsub.s32 %v533, %v535
    %v537 = vrot.slane %v523, %v536
    %v539 = vpack.i.b16 %v530, %v530
    %v541 = vlaneseq
    %v542 = vshrl.u32 %v541, 7
    %v543 = vsub.s32 0, %v542
    %v544 = vrot.slane %v539, %v543
    %v546 = vpack.i.b16 %v537, %v537
    %v548 = vlaneseq
    %v549 = vshrl.u32 %v548, 7
    %v550 = vsub.s32 0, %v549
    %v551 = vrot.slane %v546, %v550
    %554 = vrot.lane.b32.xlu0 %v544, 113
    %v555 = vpop.permute.xlu0 %554
    %556 = vrot.lane.b32.xlu0 %v551, 113
    %v557 = vpop.permute.xlu0 %556
    %vm558 = vcmask 924672
    %v559 = vsel %vm558, %v555, %v557
    %v563 = vmul.bf16 %v106, %v555
    %v564 = vmul.bf16 %v107, %v559
    %v565 = vmul.bf16 %v108, %v557
    %v566 = vmul.bf16 %v109, %v555
    %v567 = vmul.bf16 %v110, %v559
    %v568 = vmul.bf16 %v111, %v557
    %v569 = vmul.bf16 %v112, %v555
    %v570 = vmul.bf16 %v113, %v559
    %v571 = vmul.bf16 %v114, %v557
    %v572 = vmul.bf16 %v115, %v555
    %v573 = vmul.bf16 %v116, %v559
    %v574 = vmul.bf16 %v117, %v557
    %s575 = scalar_lea.vmem [#allocation6], 64
    %v576 = vld [vmem:[%s575] sm:$0xf]
    %v577 = vld [vmem:[%s575 + $0x4] sm:$0xf]
    %v578 = vld [vmem:[%s575 + $0x8] sm:$0xf]
    %v579 = vld [vmem:[%s575 + $0xc] sm:$0xf]
    %v580 = vld [vmem:[%s575 + $0x10] sm:$0xf]
    %v581 = vld [vmem:[%s575 + $0x14] sm:$0xf]
    %v582 = vld [vmem:[%s575 + $0x18] sm:$0xf]
    %v583 = vld [vmem:[%s575 + $0x1c] sm:$0xf]
    %v592 = vunpack.c.l.b16 %v576
    %v593 = vunpack.c.l.b16 %v577
    %v594 = vunpack.c.l.b16 %v578
    %v595 = vunpack.c.l.b16 %v579
    %v596 = vunpack.c.l.b16 %v580
    %v597 = vunpack.c.l.b16 %v581
    %v598 = vunpack.c.l.b16 %v582
    %v599 = vunpack.c.l.b16 %v583
    %v600 = vpack.c.b16 %v593, %v592
    %v601 = vpack.c.b16 %v595, %v594
    %v602 = vpack.c.b16 %v597, %v596
    %v603 = vpack.c.b16 %v599, %v598
    %616 = vrot.lane.b32.xlu0 %v563, 15
    %v617 = vpop.permute.xlu0 %616
    %618 = vrot.lane.b32.xlu0 %v564, 15
    %v619 = vpop.permute.xlu0 %618
    %620 = vrot.lane.b32.xlu0 %v565, 15
    %v621 = vpop.permute.xlu0 %620
    %622 = vrot.lane.b32.xlu0 %v566, 15
    %v623 = vpop.permute.xlu0 %622
    %624 = vrot.lane.b32.xlu0 %v567, 15
    %v625 = vpop.permute.xlu0 %624
    %626 = vrot.lane.b32.xlu0 %v568, 15
    %v627 = vpop.permute.xlu0 %626
    %628 = vrot.lane.b32.xlu0 %v569, 15
    %v629 = vpop.permute.xlu0 %628
    %630 = vrot.lane.b32.xlu0 %v570, 15
    %v631 = vpop.permute.xlu0 %630
    %632 = vrot.lane.b32.xlu0 %v571, 15
    %v633 = vpop.permute.xlu0 %632
    %634 = vrot.lane.b32.xlu0 %v572, 15
    %v635 = vpop.permute.xlu0 %634
    %636 = vrot.lane.b32.xlu0 %v573, 15
    %v637 = vpop.permute.xlu0 %636
    %638 = vrot.lane.b32.xlu0 %v574, 15
    %v639 = vpop.permute.xlu0 %638
    %vm640 = vcmask 121856
    %v641 = vsel %vm640, %v617, %v619
    %v642 = vsel %vm640, %v619, %v621
    %v643 = vsel %vm640, %v623, %v625
    %v644 = vsel %vm640, %v625, %v627
    %v645 = vsel %vm640, %v629, %v631
    %v646 = vsel %vm640, %v631, %v633
    %v647 = vsel %vm640, %v635, %v637
    %v648 = vsel %vm640, %v637, %v639
    %v658 = vsel %vm269, %v600, 0
    %v661 = vsel %vm269, %v601, 0
    %v664 = vsel %vm269, %v602, 0
    %v667 = vsel %vm269, %v603, 0
    %669 = vmatprep.subr.bf16.mxu0 %v642
    %670 = vmatpush1.bf16.msra.mxu0 %v641
    %671 = vmatprep.subr.bf16.mxu0 %v644
    %672 = vmatpush1.bf16.msra.mxu0 %v643
    %673 = vmatprep.subr.bf16.mxu0 %v646
    %674 = vmatpush1.bf16.msra.mxu0 %v645
    %675 = vmatprep.subr.bf16.mxu0 %v648
    %676 = vmatpush1.bf16.msra.mxu0 %v647
    %677 = vmatprep.subr.bf16.mxu0 0
    %678 = vmatpush1.bf16.msra.mxu0 0
    %679 = vmatprep.subr.bf16.mxu0 0
    %680 = vmatpush1.bf16.msra.mxu0 0
    %681 = vmatprep.subr.bf16.mxu0 0
    %682 = vmatpush1.bf16.msra.mxu0 0
    %683 = vmatprep.subr.bf16.mxu0 0
    %684 = vmatpush1.bf16.msra.mxu0 0
    %685 = vmatprep.subr.bf16.mxu0 0
    %686 = vmatpush1.bf16.msra.mxu0 0
    %687 = vmatprep.subr.bf16.mxu0 0
    %688 = vmatpush1.bf16.msra.mxu0 0
    %689 = vmatprep.subr.bf16.mxu0 0
    %690 = vmatpush1.bf16.msra.mxu0 0
    %691 = vmatprep.subr.bf16.mxu0 0
    %692 = vmatpush1.bf16.msra.mxu0 0
    %693 = vmatprep.subr.bf16.mxu0 0
    %694 = vmatpush1.bf16.msra.mxu0 0
    %695 = vmatprep.subr.bf16.mxu0 0
    %696 = vmatpush1.bf16.msra.mxu0 0
    %697 = vmatprep.subr.bf16.mxu0 0
    %698 = vmatpush1.bf16.msra.mxu0 0
    %699 = vmatprep.subr.bf16.mxu0 0
    %700 = vmatpush1.bf16.msra.mxu0 0
    %701 = vmatprep.mubr.bf16.mxu0 0
    %702 = vmatmul.mubr.bf16.gmra.mrb[0].mxu0 %v658
    %v703 = vpop.f32.mrb[0].mxu0
    %v704 = vadd.f32 0.0, %v703
    %v705 = vpop.f32.mrb[0].mxu0
    %v706 = vadd.f32 0.0, %v705
    %v707 = vpop.f32.mrb[0].mxu0
    %v708 = vadd.f32 0.0, %v707
    %v709 = vpop.f32.mrb[0].mxu0
    %v710 = vadd.f32 0.0, %v709
    %711 = vmatprep.mubr.bf16.mxu0 0
    %712 = vmatmul.mubr.bf16.gmra.mrb[0].mxu0 %v661
    %v713 = vpop.f32.mrb[0].mxu0
    %v714 = vadd.f32 0.0, %v713
    %v715 = vpop.f32.mrb[0].mxu0
    %v716 = vadd.f32 0.0, %v715
    %v717 = vpop.f32.mrb[0].mxu0
    %v718 = vadd.f32 0.0, %v717
    %v719 = vpop.f32.mrb[0].mxu0
    %v720 = vadd.f32 0.0, %v719
    %721 = vmatprep.mubr.bf16.mxu0 0
    %722 = vmatmul.mubr.bf16.gmra.mrb[0].mxu0 %v664
    %v723 = vpop.f32.mrb[0].mxu0
    %v724 = vadd.f32 0.0, %v723
    %v725 = vpop.f32.mrb[0].mxu0
    %v726 = vadd.f32 0.0, %v725
    %v727 = vpop.f32.mrb[0].mxu0
    %v728 = vadd.f32 0.0, %v727
    %v729 = vpop.f32.mrb[0].mxu0
    %v730 = vadd.f32 0.0, %v729
    %731 = vmatprep.mubr.bf16.mxu0 0
    %732 = vmatmul.mubr.bf16.gmra.mrb[0].mxu0 %v667
    %v733 = vpop.f32.mrb[0].mxu0
    %v734 = vadd.f32 0.0, %v733
    %v735 = vpop.f32.mrb[0].mxu0
    %v736 = vadd.f32 0.0, %v735
    %v737 = vpop.f32.mrb[0].mxu0
    %v738 = vadd.f32 0.0, %v737
    %v739 = vpop.f32.mrb[0].mxu0
    %v740 = vadd.f32 0.0, %v739
    %741 = vdwg.mxu0
    %v742 = vadd.f32 %v475, %v704
    %v743 = vadd.f32 %v477, %v706
    %v744 = vadd.f32 %v479, %v708
    %v745 = vadd.f32 %v481, %v710
    %v746 = vadd.f32 %v485, %v714
    %v747 = vadd.f32 %v487, %v716
    %v748 = vadd.f32 %v489, %v718
    %v749 = vadd.f32 %v491, %v720
    %v750 = vadd.f32 %v495, %v724
    %v751 = vadd.f32 %v497, %v726
    %v752 = vadd.f32 %v499, %v728
    %v753 = vadd.f32 %v501, %v730
    %v754 = vadd.f32 %v505, %v734
    %v755 = vadd.f32 %v507, %v736
    %v756 = vadd.f32 %v509, %v738
    %v757 = vadd.f32 %v511, %v740
    %v758 = vld [vmem:[#allocation2] sm:$0xff]
    %v759 = vld [vmem:[#allocation2 + $0x8] sm:$0xff]
    %v760 = vld [vmem:[#allocation2 + $0x10] sm:$0xff]
    %v761 = vld [vmem:[#allocation2 + $0x20] sm:$0xff]
    %v762 = vld [vmem:[#allocation2 + $0x28] sm:$0xff]
    %v763 = vld [vmem:[#allocation2 + $0x30] sm:$0xff]
    %v764 = vld [vmem:[#allocation2 + $0x40] sm:$0xff]
    %v765 = vld [vmem:[#allocation2 + $0x48] sm:$0xff]
    %v766 = vld [vmem:[#allocation2 + $0x50] sm:$0xff]
    %v767 = vld [vmem:[#allocation2 + $0x60] sm:$0xff]
    %v768 = vld [vmem:[#allocation2 + $0x68] sm:$0xff]
    %v769 = vld [vmem:[#allocation2 + $0x70] sm:$0xff]
    %770 = vrot.lane.b32.xlu0 %v148, 127
    %v771 = vpop.permute.xlu0 %770
    %772 = vrot.lane.b32.xlu0 %v155, 127
    %v773 = vpop.permute.xlu0 %772
    %vm774 = vcmask 1039360
    %v775 = vsel %vm774, %v771, %v773
    %v779 = vmul.bf16 %v758, %v771
    %v780 = vmul.bf16 %v759, %v775
    %v781 = vmul.bf16 %v760, %v773
    %v782 = vmul.bf16 %v761, %v771
    %v783 = vmul.bf16 %v762, %v775
    %v784 = vmul.bf16 %v763, %v773
    %v785 = vmul.bf16 %v764, %v771
    %v786 = vmul.bf16 %v765, %v775
    %v787 = vmul.bf16 %v766, %v773
    %v788 = vmul.bf16 %v767, %v771
    %v789 = vmul.bf16 %v768, %v775
    %v790 = vmul.bf16 %v769, %v773
    %s791 = scalar_lea.vmem [#allocation6], 96
    %v792 = vld [vmem:[%s791] sm:$0xf]
    %v793 = vld [vmem:[%s791 + $0x4] sm:$0xf]
    %v794 = vld [vmem:[%s791 + $0x8] sm:$0xf]
    %v795 = vld [vmem:[%s791 + $0xc] sm:$0xf]
    %v796 = vld [vmem:[%s791 + $0x10] sm:$0xf]
    %v797 = vld [vmem:[%s791 + $0x14] sm:$0xf]
    %v798 = vld [vmem:[%s791 + $0x18] sm:$0xf]
    %v799 = vld [vmem:[%s791 + $0x1c] sm:$0xf]
    %v808 = vunpack.c.l.b16 %v792
    %v809 = vunpack.c.l.b16 %v793
    %v810 = vunpack.c.l.b16 %v794
    %v811 = vunpack.c.l.b16 %v795
    %v812 = vunpack.c.l.b16 %v796
    %v813 = vunpack.c.l.b16 %v797
    %v814 = vunpack.c.l.b16 %v798
    %v815 = vunpack.c.l.b16 %v799
    %v816 = vpack.c.b16 %v809, %v808
    %v817 = vpack.c.b16 %v811, %v810
    %v818 = vpack.c.b16 %v813, %v812
    %v819 = vpack.c.b16 %v815, %v814
    %832 = vrot.lane.b32.xlu0 %v779, 1
    %v833 = vpop.permute.xlu0 %832
    %834 = vrot.lane.b32.xlu0 %v780, 1
    %v835 = vpop.permute.xlu0 %834
    %836 = vrot.lane.b32.xlu0 %v781, 1
    %v837 = vpop.permute.xlu0 %836
    %838 = vrot.lane.b32.xlu0 %v782, 1
    %v839 = vpop.permute.xlu0 %838
    %840 = vrot.lane.b32.xlu0 %v783, 1
    %v841 = vpop.permute.xlu0 %840
    %842 = vrot.lane.b32.xlu0 %v784, 1
    %v843 = vpop.permute.xlu0 %842
    %844 = vrot.lane.b32.xlu0 %v785, 1
    %v845 = vpop.permute.xlu0 %844
    %846 = vrot.lane.b32.xlu0 %v786, 1
    %v847 = vpop.permute.xlu0 %846
    %848 = vrot.lane.b32.xlu0 %v787, 1
    %v849 = vpop.permute.xlu0 %848
    %850 = vrot.lane.b32.xlu0 %v788, 1
    %v851 = vpop.permute.xlu0 %850
    %852 = vrot.lane.b32.xlu0 %v789, 1
    %v853 = vpop.permute.xlu0 %852
    %854 = vrot.lane.b32.xlu0 %v790, 1
    %v855 = vpop.permute.xlu0 %854
    %vm856 = vcmask 7168
    %v857 = vsel %vm856, %v833, %v835
    %v858 = vsel %vm856, %v835, %v837
    %v859 = vsel %vm856, %v839, %v841
    %v860 = vsel %vm856, %v841, %v843
    %v861 = vsel %vm856, %v845, %v847
    %v862 = vsel %vm856, %v847, %v849
    %v863 = vsel %vm856, %v851, %v853
    %v864 = vsel %vm856, %v853, %v855
    %v874 = vsel %vm269, %v816, 0
    %v877 = vsel %vm269, %v817, 0
    %v880 = vsel %vm269, %v818, 0
    %v883 = vsel %vm269, %v819, 0
    %885 = vmatprep.subr.bf16.mxu0 %v858
    %886 = vmatpush1.bf16.msra.mxu0 %v857
    %887 = vmatprep.subr.bf16.mxu0 %v860
    %888 = vmatpush1.bf16.msra.mxu0 %v859
    %889 = vmatprep.subr.bf16.mxu0 %v862
    %890 = vmatpush1.bf16.msra.mxu0 %v861
    %891 = vmatprep.subr.bf16.mxu0 %v864
    %892 = vmatpush1.bf16.msra.mxu0 %v863
    %893 = vmatprep.subr.bf16.mxu0 0
    %894 = vmatpush1.bf16.msra.mxu0 0
    %895 = vmatprep.subr.bf16.mxu0 0
    %896 = vmatpush1.bf16.msra.mxu0 0
    %897 = vmatprep.subr.bf16.mxu0 0
    %898 = vmatpush1.bf16.msra.mxu0 0
    %899 = vmatprep.subr.bf16.mxu0 0
    %900 = vmatpush1.bf16.msra.mxu0 0
    %901 = vmatprep.subr.bf16.mxu0 0
    %902 = vmatpush1.bf16.msra.mxu0 0
    %903 = vmatprep.subr.bf16.mxu0 0
    %904 = vmatpush1.bf16.msra.mxu0 0
    %905 = vmatprep.subr.bf16.mxu0 0
    %906 = vmatpush1.bf16.msra.mxu0 0
    %907 = vmatprep.subr.bf16.mxu0 0
    %908 = vmatpush1.bf16.msra.mxu0 0
    %909 = vmatprep.subr.bf16.mxu0 0
    %910 = vmatpush1.bf16.msra.mxu0 0
    %911 = vmatprep.subr.bf16.mxu0 0
    %912 = vmatpush1.bf16.msra.mxu0 0
    %913 = vmatprep.subr.bf16.mxu0 0
    %914 = vmatpush1.bf16.msra.mxu0 0
    %915 = vmatprep.subr.bf16.mxu0 0
    %916 = vmatpush1.bf16.msra.mxu0 0
    %917 = vmatprep.mubr.bf16.mxu0 0
    %918 = vmatmul.mubr.bf16.gmra.mrb[0].mxu0 %v874
    %v919 = vpop.f32.mrb[0].mxu0
    %v920 = vadd.f32 0.0, %v919
    %v921 = vpop.f32.mrb[0].mxu0
    %v922 = vadd.f32 0.0, %v921
    %v923 = vpop.f32.mrb[0].mxu0
    %v924 = vadd.f32 0.0, %v923
    %v925 = vpop.f32.mrb[0].mxu0
    %v926 = vadd.f32 0.0, %v925
    %927 = vmatprep.mubr.bf16.mxu0 0
    %928 = vmatmul.mubr.bf16.gmra.mrb[0].mxu0 %v877
    %v929 = vpop.f32.mrb[0].mxu0
    %v930 = vadd.f32 0.0, %v929
    %v931 = vpop.f32.mrb[0].mxu0
    %v932 = vadd.f32 0.0, %v931
    %v933 = vpop.f32.mrb[0].mxu0
    %v934 = vadd.f32 0.0, %v933
    %v935 = vpop.f32.mrb[0].mxu0
    %v936 = vadd.f32 0.0, %v935
    %937 = vmatprep.mubr.bf16.mxu0 0
    %938 = vmatmul.mubr.bf16.gmra.mrb[0].mxu0 %v880
    %v939 = vpop.f32.mrb[0].mxu0
    %v940 = vadd.f32 0.0, %v939
    %v941 = vpop.f32.mrb[0].mxu0
    %v942 = vadd.f32 0.0, %v941
    %v943 = vpop.f32.mrb[0].mxu0
    %v944 = vadd.f32 0.0, %v943
    %v945 = vpop.f32.mrb[0].mxu0
    %v946 = vadd.f32 0.0, %v945
    %947 = vmatprep.mubr.bf16.mxu0 0
    %948 = vmatmul.mubr.bf16.gmra.mrb[0].mxu0 %v883
    %v949 = vpop.f32.mrb[0].mxu0
    %v950 = vadd.f32 0.0, %v949
    %v951 = vpop.f32.mrb[0].mxu0
    %v952 = vadd.f32 0.0, %v951
    %v953 = vpop.f32.mrb[0].mxu0
    %v954 = vadd.f32 0.0, %v953
    %v955 = vpop.f32.mrb[0].mxu0
    %v956 = vadd.f32 0.0, %v955
    %957 = vdwg.mxu0
    %v958 = vadd.f32 %v742, %v920
    %v959 = vadd.f32 %v743, %v922
    %v960 = vadd.f32 %v744, %v924
    %v961 = vadd.f32 %v745, %v926
    %v962 = vadd.f32 %v746, %v930
    %v963 = vadd.f32 %v747, %v932
    %v964 = vadd.f32 %v748, %v934
    %v965 = vadd.f32 %v749, %v936
    %v966 = vadd.f32 %v750, %v940
    %v967 = vadd.f32 %v751, %v942
    %v968 = vadd.f32 %v752, %v944
    %v969 = vadd.f32 %v753, %v946
    %v970 = vadd.f32 %v754, %v950
    %v971 = vadd.f32 %v755, %v952
    %v972 = vadd.f32 %v756, %v954
    %v973 = vadd.f32 %v757, %v956
    %s974 = scalar_lea.vmem [#allocation6], 128
    %v975 = vld [vmem:[%s974] sm:$0xf]
    %v976 = vld [vmem:[%s974 + $0x4] sm:$0xf]
    %v977 = vld [vmem:[%s974 + $0x8] sm:$0xf]
    %v978 = vld [vmem:[%s974 + $0xc] sm:$0xf]
    %v979 = vld [vmem:[%s974 + $0x10] sm:$0xf]
    %v980 = vld [vmem:[%s974 + $0x14] sm:$0xf]
    %v981 = vld [vmem:[%s974 + $0x18] sm:$0xf]
    %v982 = vld [vmem:[%s974 + $0x1c] sm:$0xf]
    %v991 = vunpack.c.l.b16 %v975
    %v992 = vunpack.c.l.b16 %v976
    %v993 = vunpack.c.l.b16 %v977
    %v994 = vunpack.c.l.b16 %v978
    %v995 = vunpack.c.l.b16 %v979
    %v996 = vunpack.c.l.b16 %v980
    %v997 = vunpack.c.l.b16 %v981
    %v998 = vunpack.c.l.b16 %v982
    %v999 = vpack.c.b16 %v992, %v991
    %v1000 = vpack.c.b16 %v994, %v993
    %v1001 = vpack.c.b16 %v996, %v995
    %v1002 = vpack.c.b16 %v998, %v997
    %v1004 = vsel %vm269, %v999, 0
    %v1007 = vsel %vm269, %v1000, 0
    %v1010 = vsel %vm269, %v1001, 0
    %v1013 = vsel %vm269, %v1002, 0
    %1015 = vmatprep.subr.bf16.mxu0 %v760
    %1016 = vmatpush1.bf16.msra.mxu0 %v759
    %1017 = vmatprep.subr.bf16.mxu0 %v763
    %1018 = vmatpush1.bf16.msra.mxu0 %v762
    %1019 = vmatprep.subr.bf16.mxu0 %v766
    %1020 = vmatpush1.bf16.msra.mxu0 %v765
    %1021 = vmatprep.subr.bf16.mxu0 %v769
    %1022 = vmatpush1.bf16.msra.mxu0 %v768
    %1023 = vmatprep.subr.bf16.mxu0 0
    %1024 = vmatpush1.bf16.msra.mxu0 0
    %1025 = vmatprep.subr.bf16.mxu0 0
    %1026 = vmatpush1.bf16.msra.mxu0 0
    %1027 = vmatprep.subr.bf16.mxu0 0
    %1028 = vmatpush1.bf16.msra.mxu0 0
    %1029 = vmatprep.subr.bf16.mxu0 0
    %1030 = vmatpush1.bf16.msra.mxu0 0
    %1031 = vmatprep.subr.bf16.mxu0 0
    %1032 = vmatpush1.bf16.msra.mxu0 0
    %1033 = vmatprep.subr.bf16.mxu0 0
    %1034 = vmatpush1.bf16.msra.mxu0 0
    %1035 = vmatprep.subr.bf16.mxu0 0
    %1036 = vmatpush1.bf16.msra.mxu0 0
    %1037 = vmatprep.subr.bf16.mxu0 0
    %1038 = vmatpush1.bf16.msra.mxu0 0
    %1039 = vmatprep.subr.bf16.mxu0 0
    %1040 = vmatpush1.bf16.msra.mxu0 0
    %1041 = vmatprep.subr.bf16.mxu0 0
    %1042 = vmatpush1.bf16.msra.mxu0 0
    %1043 = vmatprep.subr.bf16.mxu0 0
    %1044 = vmatpush1.bf16.msra.mxu0 0
    %1045 = vmatprep.subr.bf16.mxu0 0
    %1046 = vmatpush1.bf16.msra.mxu0 0
    %1047 = vmatprep.mubr.bf16.mxu0 0
    %1048 = vmatmul.mubr.bf16.gmra.mrb[0].mxu0 %v1004
    %v1049 = vpop.f32.mrb[0].mxu0
    %v1050 = vadd.f32 0.0, %v1049
    %v1051 = vpop.f32.mrb[0].mxu0
    %v1052 = vadd.f32 0.0, %v1051
    %v1053 = vpop.f32.mrb[0].mxu0
    %v1054 = vadd.f32 0.0, %v1053
    %v1055 = vpop.f32.mrb[0].mxu0
    %v1056 = vadd.f32 0.0, %v1055
    %1057 = vmatprep.mubr.bf16.mxu0 0
    %1058 = vmatmul.mubr.bf16.gmra.mrb[0].mxu0 %v1007
    %v1059 = vpop.f32.mrb[0].mxu0
    %v1060 = vadd.f32 0.0, %v1059
    %v1061 = vpop.f32.mrb[0].mxu0
    %v1062 = vadd.f32 0.0, %v1061
    %v1063 = vpop.f32.mrb[0].mxu0
    %v1064 = vadd.f32 0.0, %v1063
    %v1065 = vpop.f32.mrb[0].mxu0
    %v1066 = vadd.f32 0.0, %v1065
    %1067 = vmatprep.mubr.bf16.mxu0 0
    %1068 = vmatmul.mubr.bf16.gmra.mrb[0].mxu0 %v1010
    %v1069 = vpop.f32.mrb[0].mxu0
    %v1070 = vadd.f32 0.0, %v1069
    %v1071 = vpop.f32.mrb[0].mxu0
    %v1072 = vadd.f32 0.0, %v1071
    %v1073 = vpop.f32.mrb[0].mxu0
    %v1074 = vadd.f32 0.0, %v1073
    %v1075 = vpop.f32.mrb[0].mxu0
    %v1076 = vadd.f32 0.0, %v1075
    %1077 = vmatprep.mubr.bf16.mxu0 0
    %1078 = vmatmul.mubr.bf16.gmra.mrb[0].mxu0 %v1013
    %v1079 = vpop.f32.mrb[0].mxu0
    %v1080 = vadd.f32 0.0, %v1079
    %v1081 = vpop.f32.mrb[0].mxu0
    %v1082 = vadd.f32 0.0, %v1081
    %v1083 = vpop.f32.mrb[0].mxu0
    %v1084 = vadd.f32 0.0, %v1083
    %v1085 = vpop.f32.mrb[0].mxu0
    %v1086 = vadd.f32 0.0, %v1085
    %1087 = vdwg.mxu0
    %v1088 = vadd.f32 %v958, %v1050
    %v1089 = vadd.f32 %v959, %v1052
    %v1090 = vadd.f32 %v960, %v1054
    %v1091 = vadd.f32 %v961, %v1056
    %v1092 = vadd.f32 %v962, %v1060
    %v1093 = vadd.f32 %v963, %v1062
    %v1094 = vadd.f32 %v964, %v1064
    %v1095 = vadd.f32 %v965, %v1066
    %v1096 = vadd.f32 %v966, %v1070
    %v1097 = vadd.f32 %v967, %v1072
    %v1098 = vadd.f32 %v968, %v1074
    %v1099 = vadd.f32 %v969, %v1076
    %v1100 = vadd.f32 %v970, %v1080
    %v1101 = vadd.f32 %v971, %v1082
    %v1102 = vadd.f32 %v972, %v1084
    %v1103 = vadd.f32 %v973, %v1086
    %v1104 = vld [vmem:[#allocation2 + $0x8] sm:$0xff]
    %v1105 = vld [vmem:[#allocation2 + $0x10] sm:$0xff]
    %v1106 = vld [vmem:[#allocation2 + $0x18] sm:$0xff]
    %v1107 = vld [vmem:[#allocation2 + $0x28] sm:$0xff]
    %v1108 = vld [vmem:[#allocation2 + $0x30] sm:$0xff]
    %v1109 = vld [vmem:[#allocation2 + $0x38] sm:$0xff]
    %v1110 = vld [vmem:[#allocation2 + $0x48] sm:$0xff]
    %v1111 = vld [vmem:[#allocation2 + $0x50] sm:$0xff]
    %v1112 = vld [vmem:[#allocation2 + $0x58] sm:$0xff]
    %v1113 = vld [vmem:[#allocation2 + $0x68] sm:$0xff]
    %v1114 = vld [vmem:[#allocation2 + $0x70] sm:$0xff]
    %v1115 = vld [vmem:[#allocation2 + $0x78] sm:$0xff]
    %1116 = vrot.lane.b32.xlu0 %v544, 1
    %v1117 = vpop.permute.xlu0 %1116
    %1118 = vrot.lane.b32.xlu0 %v551, 1
    %v1119 = vpop.permute.xlu0 %1118
    %v1120 = vsel %vm856, %v1117, %v1119
    %v1124 = vmul.bf16 %v1104, %v1117
    %v1125 = vmul.bf16 %v1105, %v1120
    %v1126 = vmul.bf16 %v1106, %v1119
    %v1127 = vmul.bf16 %v1107, %v1117
    %v1128 = vmul.bf16 %v1108, %v1120
    %v1129 = vmul.bf16 %v1109, %v1119
    %v1130 = vmul.bf16 %v1110, %v1117
    %v1131 = vmul.bf16 %v1111, %v1120
    %v1132 = vmul.bf16 %v1112, %v1119
    %v1133 = vmul.bf16 %v1113, %v1117
    %v1134 = vmul.bf16 %v1114, %v1120
    %v1135 = vmul.bf16 %v1115, %v1119
    %s1136 = scalar_lea.vmem [#allocation6], 160
    %v1137 = vld [vmem:[%s1136] sm:$0xf]
    %v1138 = vld [vmem:[%s1136 + $0x4] sm:$0xf]
    %v1139 = vld [vmem:[%s1136 + $0x8] sm:$0xf]
    %v1140 = vld [vmem:[%s1136 + $0xc] sm:$0xf]
    %v1141 = vld [vmem:[%s1136 + $0x10] sm:$0xf]
    %v1142 = vld [vmem:[%s1136 + $0x14] sm:$0xf]
    %v1143 = vld [vmem:[%s1136 + $0x18] sm:$0xf]
    %v1144 = vld [vmem:[%s1136 + $0x1c] sm:$0xf]
    %v1153 = vunpack.c.l.b16 %v1137
    %v1154 = vunpack.c.l.b16 %v1138
    %v1155 = vunpack.c.l.b16 %v1139
    %v1156 = vunpack.c.l.b16 %v1140
    %v1157 = vunpack.c.l.b16 %v1141
    %v1158 = vunpack.c.l.b16 %v1142
    %v1159 = vunpack.c.l.b16 %v1143
    %v1160 = vunpack.c.l.b16 %v1144
    %v1161 = vpack.c.b16 %v1154, %v1153
    %v1162 = vpack.c.b16 %v1156, %v1155
    %v1163 = vpack.c.b16 %v1158, %v1157
    %v1164 = vpack.c.b16 %v1160, %v1159
    %1177 = vrot.lane.b32.xlu0 %v1124, 127
    %v1178 = vpop.permute.xlu0 %1177
    %1179 = vrot.lane.b32.xlu0 %v1125, 127
    %v1180 = vpop.permute.xlu0 %1179
    %1181 = vrot.lane.b32.xlu0 %v1126, 127
    %v1182 = vpop.permute.xlu0 %1181
    %1183 = vrot.lane.b32.xlu0 %v1127, 127
    %v1184 = vpop.permute.xlu0 %1183
    %1185 = vrot.lane.b32.xlu0 %v1128, 127
    %v1186 = vpop.permute.xlu0 %1185
    %1187 = vrot.lane.b32.xlu0 %v1129, 127
    %v1188 = vpop.permute.xlu0 %1187
    %1189 = vrot.lane.b32.xlu0 %v1130, 127
    %v1190 = vpop.permute.xlu0 %1189
    %1191 = vrot.lane.b32.xlu0 %v1131, 127
    %v1192 = vpop.permute.xlu0 %1191
    %1193 = vrot.lane.b32.xlu0 %v1132, 127
    %v1194 = vpop.permute.xlu0 %1193
    %1195 = vrot.lane.b32.xlu0 %v1133, 127
    %v1196 = vpop.permute.xlu0 %1195
    %1197 = vrot.lane.b32.xlu0 %v1134, 127
    %v1198 = vpop.permute.xlu0 %1197
    %1199 = vrot.lane.b32.xlu0 %v1135, 127
    %v1200 = vpop.permute.xlu0 %1199
    %v1201 = vsel %vm774, %v1178, %v1180
    %v1202 = vsel %vm774, %v1180, %v1182
    %v1203 = vsel %vm774, %v1184, %v1186
    %v1204 = vsel %vm774, %v1186, %v1188
    %v1205 = vsel %vm774, %v1190, %v1192
    %v1206 = vsel %vm774, %v1192, %v1194
    %v1207 = vsel %vm774, %v1196, %v1198
    %v1208 = vsel %vm774, %v1198, %v1200
    %v1218 = vsel %vm269, %v1161, 0
    %v1221 = vsel %vm269, %v1162, 0
    %v1224 = vsel %vm269, %v1163, 0
    %v1227 = vsel %vm269, %v1164, 0
    %1229 = vmatprep.subr.bf16.mxu0 %v1202
    %1230 = vmatpush1.bf16.msra.mxu0 %v1201
    %1231 = vmatprep.subr.bf16.mxu0 %v1204
    %1232 = vmatpush1.bf16.msra.mxu0 %v1203
    %1233 = vmatprep.subr.bf16.mxu0 %v1206
    %1234 = vmatpush1.bf16.msra.mxu0 %v1205
    %1235 = vmatprep.subr.bf16.mxu0 %v1208
    %1236 = vmatpush1.bf16.msra.mxu0 %v1207
    %1237 = vmatprep.subr.bf16.mxu0 0
    %1238 = vmatpush1.bf16.msra.mxu0 0
    %1239 = vmatprep.subr.bf16.mxu0 0
    %1240 = vmatpush1.bf16.msra.mxu0 0
    %1241 = vmatprep.subr.bf16.mxu0 0
    %1242 = vmatpush1.bf16.msra.mxu0 0
    %1243 = vmatprep.subr.bf16.mxu0 0
    %1244 = vmatpush1.bf16.msra.mxu0 0
    %1245 = vmatprep.subr.bf16.mxu0 0
    %1246 = vmatpush1.bf16.msra.mxu0 0
    %1247 = vmatprep.subr.bf16.mxu0 0
    %1248 = vmatpush1.bf16.msra.mxu0 0
    %1249 = vmatprep.subr.bf16.mxu0 0
    %1250 = vmatpush1.bf16.msra.mxu0 0
    %1251 = vmatprep.subr.bf16.mxu0 0
    %1252 = vmatpush1.bf16.msra.mxu0 0
    %1253 = vmatprep.subr.bf16.mxu0 0
    %1254 = vmatpush1.bf16.msra.mxu0 0
    %1255 = vmatprep.subr.bf16.mxu0 0
    %1256 = vmatpush1.bf16.msra.mxu0 0
    %1257 = vmatprep.subr.bf16.mxu0 0
    %1258 = vmatpush1.bf16.msra.mxu0 0
    %1259 = vmatprep.subr.bf16.mxu0 0
    %1260 = vmatpush1.bf16.msra.mxu0 0
    %1261 = vmatprep.mubr.bf16.mxu0 0
    %1262 = vmatmul.mubr.bf16.gmra.mrb[0].mxu0 %v1218
    %v1263 = vpop.f32.mrb[0].mxu0
    %v1264 = vadd.f32 0.0, %v1263
    %v1265 = vpop.f32.mrb[0].mxu0
    %v1266 = vadd.f32 0.0, %v1265
    %v1267 = vpop.f32.mrb[0].mxu0
    %v1268 = vadd.f32 0.0, %v1267
    %v1269 = vpop.f32.mrb[0].mxu0
    %v1270 = vadd.f32 0.0, %v1269
    %1271 = vmatprep.mubr.bf16.mxu0 0
    %1272 = vmatmul.mubr.bf16.gmra.mrb[0].mxu0 %v1221
    %v1273 = vpop.f32.mrb[0].mxu0
    %v1274 = vadd.f32 0.0, %v1273
    %v1275 = vpop.f32.mrb[0].mxu0
    %v1276 = vadd.f32 0.0, %v1275
    %v1277 = vpop.f32.mrb[0].mxu0
    %v1278 = vadd.f32 0.0, %v1277
    %v1279 = vpop.f32.mrb[0].mxu0
    %v1280 = vadd.f32 0.0, %v1279
    %1281 = vmatprep.mubr.bf16.mxu0 0
    %1282 = vmatmul.mubr.bf16.gmra.mrb[0].mxu0 %v1224
    %v1283 = vpop.f32.mrb[0].mxu0
    %v1284 = vadd.f32 0.0, %v1283
    %v1285 = vpop.f32.mrb[0].mxu0
    %v1286 = vadd.f32 0.0, %v1285
    %v1287 = vpop.f32.mrb[0].mxu0
    %v1288 = vadd.f32 0.0, %v1287
    %v1289 = vpop.f32.mrb[0].mxu0
    %v1290 = vadd.f32 0.0, %v1289
    %1291 = vmatprep.mubr.bf16.mxu0 0
    %1292 = vmatmul.mubr.bf16.gmra.mrb[0].mxu0 %v1227
    %v1293 = vpop.f32.mrb[0].mxu0
    %v1294 = vadd.f32 0.0, %v1293
    %v1295 = vpop.f32.mrb[0].mxu0
    %v1296 = vadd.f32 0.0, %v1295
    %v1297 = vpop.f32.mrb[0].mxu0
    %v1298 = vadd.f32 0.0, %v1297
    %v1299 = vpop.f32.mrb[0].mxu0
    %v1300 = vadd.f32 0.0, %v1299
    %1301 = vdwg.mxu0
    %v1302 = vadd.f32 %v1088, %v1264
    %v1303 = vadd.f32 %v1089, %v1266
    %v1304 = vadd.f32 %v1090, %v1268
    %v1305 = vadd.f32 %v1091, %v1270
    %v1306 = vadd.f32 %v1092, %v1274
    %v1307 = vadd.f32 %v1093, %v1276
    %v1308 = vadd.f32 %v1094, %v1278
    %v1309 = vadd.f32 %v1095, %v1280
    %v1310 = vadd.f32 %v1096, %v1284
    %v1311 = vadd.f32 %v1097, %v1286
    %v1312 = vadd.f32 %v1098, %v1288
    %v1313 = vadd.f32 %v1099, %v1290
    %v1314 = vadd.f32 %v1100, %v1294
    %v1315 = vadd.f32 %v1101, %v1296
    %v1316 = vadd.f32 %v1102, %v1298
    %v1317 = vadd.f32 %v1103, %v1300
    %1318 = vrot.lane.b32.xlu0 %v148, 15
    %v1319 = vpop.permute.xlu0 %1318
    %1320 = vrot.lane.b32.xlu0 %v155, 15
    %v1321 = vpop.permute.xlu0 %1320
    %v1322 = vsel %vm640, %v1319, %v1321
    %v1326 = vmul.bf16 %v1104, %v1319
    %v1327 = vmul.bf16 %v1105, %v1322
    %v1328 = vmul.bf16 %v1106, %v1321
    %v1329 = vmul.bf16 %v1107, %v1319
    %v1330 = vmul.bf16 %v1108, %v1322
    %v1331 = vmul.bf16 %v1109, %v1321
    %v1332 = vmul.bf16 %v1110, %v1319
    %v1333 = vmul.bf16 %v1111, %v1322
    %v1334 = vmul.bf16 %v1112, %v1321
    %v1335 = vmul.bf16 %v1113, %v1319
    %v1336 = vmul.bf16 %v1114, %v1322
    %v1337 = vmul.bf16 %v1115, %v1321
    %s1338 = scalar_lea.vmem [#allocation6], 192
    %v1339 = vld [vmem:[%s1338] sm:$0xf]
    %v1340 = vld [vmem:[%s1338 + $0x4] sm:$0xf]
    %v1341 = vld [vmem:[%s1338 + $0x8] sm:$0xf]
    %v1342 = vld [vmem:[%s1338 + $0xc] sm:$0xf]
    %v1343 = vld [vmem:[%s1338 + $0x10] sm:$0xf]
    %v1344 = vld [vmem:[%s1338 + $0x14] sm:$0xf]
    %v1345 = vld [vmem:[%s1338 + $0x18] sm:$0xf]
    %v1346 = vld [vmem:[%s1338 + $0x1c] sm:$0xf]
    %v1355 = vunpack.c.l.b16 %v1339
    %v1356 = vunpack.c.l.b16 %v1340
    %v1357 = vunpack.c.l.b16 %v1341
    %v1358 = vunpack.c.l.b16 %v1342
    %v1359 = vunpack.c.l.b16 %v1343
    %v1360 = vunpack.c.l.b16 %v1344
    %v1361 = vunpack.c.l.b16 %v1345
    %v1362 = vunpack.c.l.b16 %v1346
    %v1363 = vpack.c.b16 %v1356, %v1355
    %v1364 = vpack.c.b16 %v1358, %v1357
    %v1365 = vpack.c.b16 %v1360, %v1359
    %v1366 = vpack.c.b16 %v1362, %v1361
    %1379 = vrot.lane.b32.xlu0 %v1326, 113
    %v1380 = vpop.permute.xlu0 %1379
    %1381 = vrot.lane.b32.xlu0 %v1327, 113
    %v1382 = vpop.permute.xlu0 %1381
    %1383 = vrot.lane.b32.xlu0 %v1328, 113
    %v1384 = vpop.permute.xlu0 %1383
    %1385 = vrot.lane.b32.xlu0 %v1329, 113
    %v1386 = vpop.permute.xlu0 %1385
    %1387 = vrot.lane.b32.xlu0 %v1330, 113
    %v1388 = vpop.permute.xlu0 %1387
    %1389 = vrot.lane.b32.xlu0 %v1331, 113
    %v1390 = vpop.permute.xlu0 %1389
    %1391 = vrot.lane.b32.xlu0 %v1332, 113
    %v1392 = vpop.permute.xlu0 %1391
    %1393 = vrot.lane.b32.xlu0 %v1333, 113
    %v1394 = vpop.permute.xlu0 %1393
    %1395 = vrot.lane.b32.xlu0 %v1334, 113
    %v1396 = vpop.permute.xlu0 %1395
    %1397 = vrot.lane.b32.xlu0 %v1335, 113
    %v1398 = vpop.permute.xlu0 %1397
    %1399 = vrot.lane.b32.xlu0 %v1336, 113
    %v1400 = vpop.permute.xlu0 %1399
    %1401 = vrot.lane.b32.xlu0 %v1337, 113
    %v1402 = vpop.permute.xlu0 %1401
    %v1403 = vsel %vm558, %v1380, %v1382
    %v1404 = vsel %vm558, %v1382, %v1384
    %v1405 = vsel %vm558, %v1386, %v1388
    %v1406 = vsel %vm558, %v1388, %v1390
    %v1407 = vsel %vm558, %v1392, %v1394
    %v1408 = vsel %vm558, %v1394, %v1396
    %v1409 = vsel %vm558, %v1398, %v1400
    %v1410 = vsel %vm558, %v1400, %v1402
    %v1420 = vsel %vm269, %v1363, 0
    %v1423 = vsel %vm269, %v1364, 0
    %v1426 = vsel %vm269, %v1365, 0
    %v1429 = vsel %vm269, %v1366, 0
    %1431 = vmatprep.subr.bf16.mxu0 %v1404
    %1432 = vmatpush1.bf16.msra.mxu0 %v1403
    %1433 = vmatprep.subr.bf16.mxu0 %v1406
    %1434 = vmatpush1.bf16.msra.mxu0 %v1405
    %1435 = vmatprep.subr.bf16.mxu0 %v1408
    %1436 = vmatpush1.bf16.msra.mxu0 %v1407
    %1437 = vmatprep.subr.bf16.mxu0 %v1410
    %1438 = vmatpush1.bf16.msra.mxu0 %v1409
    %1439 = vmatprep.subr.bf16.mxu0 0
    %1440 = vmatpush1.bf16.msra.mxu0 0
    %1441 = vmatprep.subr.bf16.mxu0 0
    %1442 = vmatpush1.bf16.msra.mxu0 0
    %1443 = vmatprep.subr.bf16.mxu0 0
    %1444 = vmatpush1.bf16.msra.mxu0 0
    %1445 = vmatprep.subr.bf16.mxu0 0
    %1446 = vmatpush1.bf16.msra.mxu0 0
    %1447 = vmatprep.subr.bf16.mxu0 0
    %1448 = vmatpush1.bf16.msra.mxu0 0
    %1449 = vmatprep.subr.bf16.mxu0 0
    %1450 = vmatpush1.bf16.msra.mxu0 0
    %1451 = vmatprep.subr.bf16.mxu0 0
    %1452 = vmatpush1.bf16.msra.mxu0 0
    %1453 = vmatprep.subr.bf16.mxu0 0
    %1454 = vmatpush1.bf16.msra.mxu0 0
    %1455 = vmatprep.subr.bf16.mxu0 0
    %1456 = vmatpush1.bf16.msra.mxu0 0
    %1457 = vmatprep.subr.bf16.mxu0 0
    %1458 = vmatpush1.bf16.msra.mxu0 0
    %1459 = vmatprep.subr.bf16.mxu0 0
    %1460 = vmatpush1.bf16.msra.mxu0 0
    %1461 = vmatprep.subr.bf16.mxu0 0
    %1462 = vmatpush1.bf16.msra.mxu0 0
    %1463 = vmatprep.mubr.bf16.mxu0 0
    %1464 = vmatmul.mubr.bf16.gmra.mrb[0].mxu0 %v1420
    %v1465 = vpop.f32.mrb[0].mxu0
    %v1466 = vadd.f32 0.0, %v1465
    %v1467 = vpop.f32.mrb[0].mxu0
    %v1468 = vadd.f32 0.0, %v1467
    %v1469 = vpop.f32.mrb[0].mxu0
    %v1470 = vadd.f32 0.0, %v1469
    %v1471 = vpop.f32.mrb[0].mxu0
    %v1472 = vadd.f32 0.0, %v1471
    %1473 = vmatprep.mubr.bf16.mxu0 0
    %1474 = vmatmul.mubr.bf16.gmra.mrb[0].mxu0 %v1423
    %v1475 = vpop.f32.mrb[0].mxu0
    %v1476 = vadd.f32 0.0, %v1475
    %v1477 = vpop.f32.mrb[0].mxu0
    %v1478 = vadd.f32 0.0, %v1477
    %v1479 = vpop.f32.mrb[0].mxu0
    %v1480 = vadd.f32 0.0, %v1479
    %v1481 = vpop.f32.mrb[0].mxu0
    %v1482 = vadd.f32 0.0, %v1481
    %1483 = vmatprep.mubr.bf16.mxu0 0
    %1484 = vmatmul.mubr.bf16.gmra.mrb[0].mxu0 %v1426
    %v1485 = vpop.f32.mrb[0].mxu0
    %v1486 = vadd.f32 0.0, %v1485
    %v1487 = vpop.f32.mrb[0].mxu0
    %v1488 = vadd.f32 0.0, %v1487
    %v1489 = vpop.f32.mrb[0].mxu0
    %v1490 = vadd.f32 0.0, %v1489
    %v1491 = vpop.f32.mrb[0].mxu0
    %v1492 = vadd.f32 0.0, %v1491
    %1493 = vmatprep.mubr.bf16.mxu0 0
    %1494 = vmatmul.mubr.bf16.gmra.mrb[0].mxu0 %v1429
    %v1495 = vpop.f32.mrb[0].mxu0
    %v1496 = vadd.f32 0.0, %v1495
    %v1497 = vpop.f32.mrb[0].mxu0
    %v1498 = vadd.f32 0.0, %v1497
    %v1499 = vpop.f32.mrb[0].mxu0
    %v1500 = vadd.f32 0.0, %v1499
    %v1501 = vpop.f32.mrb[0].mxu0
    %v1502 = vadd.f32 0.0, %v1501
    %1503 = vdwg.mxu0
    %v1504 = vadd.f32 %v1302, %v1466
    %v1505 = vadd.f32 %v1303, %v1468
    %v1506 = vadd.f32 %v1304, %v1470
    %v1507 = vadd.f32 %v1305, %v1472
    %v1508 = vadd.f32 %v1306, %v1476
    %v1509 = vadd.f32 %v1307, %v1478
    %v1510 = vadd.f32 %v1308, %v1480
    %v1511 = vadd.f32 %v1309, %v1482
    %v1512 = vadd.f32 %v1310, %v1486
    %v1513 = vadd.f32 %v1311, %v1488
    %v1514 = vadd.f32 %v1312, %v1490
    %v1515 = vadd.f32 %v1313, %v1492
    %v1516 = vadd.f32 %v1314, %v1496
    %v1517 = vadd.f32 %v1315, %v1498
    %v1518 = vadd.f32 %v1316, %v1500
    %v1519 = vadd.f32 %v1317, %v1502
    %s1520 = scalar_lea.vmem [#allocation6], 224
    %v1521 = vld [vmem:[%s1520] sm:$0xf]
    %v1522 = vld [vmem:[%s1520 + $0x4] sm:$0xf]
    %v1523 = vld [vmem:[%s1520 + $0x8] sm:$0xf]
    %v1524 = vld [vmem:[%s1520 + $0xc] sm:$0xf]
    %v1525 = vld [vmem:[%s1520 + $0x10] sm:$0xf]
    %v1526 = vld [vmem:[%s1520 + $0x14] sm:$0xf]
    %v1527 = vld [vmem:[%s1520 + $0x18] sm:$0xf]
    %v1528 = vld [vmem:[%s1520 + $0x1c] sm:$0xf]
    %v1537 = vunpack.c.l.b16 %v1521
    %v1538 = vunpack.c.l.b16 %v1522
    %v1539 = vunpack.c.l.b16 %v1523
    %v1540 = vunpack.c.l.b16 %v1524
    %v1541 = vunpack.c.l.b16 %v1525
    %v1542 = vunpack.c.l.b16 %v1526
    %v1543 = vunpack.c.l.b16 %v1527
    %v1544 = vunpack.c.l.b16 %v1528
    %v1545 = vpack.c.b16 %v1538, %v1537
    %v1546 = vpack.c.b16 %v1540, %v1539
    %v1547 = vpack.c.b16 %v1542, %v1541
    %v1548 = vpack.c.b16 %v1544, %v1543
    %1561 = vrot.lane.b32.xlu0 %v1104, 112
    %v1562 = vpop.permute.xlu0 %1561
    %1563 = vrot.lane.b32.xlu0 %v1105, 112
    %v1564 = vpop.permute.xlu0 %1563
    %1565 = vrot.lane.b32.xlu0 %v1106, 112
    %v1566 = vpop.permute.xlu0 %1565
    %1567 = vrot.lane.b32.xlu0 %v1107, 112
    %v1568 = vpop.permute.xlu0 %1567
    %1569 = vrot.lane.b32.xlu0 %v1108, 112
    %v1570 = vpop.permute.xlu0 %1569
    %1571 = vrot.lane.b32.xlu0 %v1109, 112
    %v1572 = vpop.permute.xlu0 %1571
    %1573 = vrot.lane.b32.xlu0 %v1110, 112
    %v1574 = vpop.permute.xlu0 %1573
    %1575 = vrot.lane.b32.xlu0 %v1111, 112
    %v1576 = vpop.permute.xlu0 %1575
    %1577 = vrot.lane.b32.xlu0 %v1112, 112
    %v1578 = vpop.permute.xlu0 %1577
    %1579 = vrot.lane.b32.xlu0 %v1113, 112
    %v1580 = vpop.permute.xlu0 %1579
    %1581 = vrot.lane.b32.xlu0 %v1114, 112
    %v1582 = vpop.permute.xlu0 %1581
    %1583 = vrot.lane.b32.xlu0 %v1115, 112
    %v1584 = vpop.permute.xlu0 %1583
    %vm1585 = vcmask 916480
    %v1586 = vsel %vm1585, %v1562, %v1564
    %v1587 = vsel %vm1585, %v1564, %v1566
    %v1588 = vsel %vm1585, %v1568, %v1570
    %v1589 = vsel %vm1585, %v1570, %v1572
    %v1590 = vsel %vm1585, %v1574, %v1576
    %v1591 = vsel %vm1585, %v1576, %v1578
    %v1592 = vsel %vm1585, %v1580, %v1582
    %v1593 = vsel %vm1585, %v1582, %v1584
    %v1603 = vsel %vm269, %v1545, 0
    %v1606 = vsel %vm269, %v1546, 0
    %v1609 = vsel %vm269, %v1547, 0
    %v1612 = vsel %vm269, %v1548, 0
    %1614 = vmatprep.subr.bf16.mxu0 %v1587
    %1615 = vmatpush1.bf16.msra.mxu0 %v1586
    %1616 = vmatprep.subr.bf16.mxu0 %v1589
    %1617 = vmatpush1.bf16.msra.mxu0 %v1588
    %1618 = vmatprep.subr.bf16.mxu0 %v1591
    %1619 = vmatpush1.bf16.msra.mxu0 %v1590
    %1620 = vmatprep.subr.bf16.mxu0 %v1593
    %1621 = vmatpush1.bf16.msra.mxu0 %v1592
    %1622 = vmatprep.subr.bf16.mxu0 0
    %1623 = vmatpush1.bf16.msra.mxu0 0
    %1624 = vmatprep.subr.bf16.mxu0 0
    %1625 = vmatpush1.bf16.msra.mxu0 0
    %1626 = vmatprep.subr.bf16.mxu0 0
    %1627 = vmatpush1.bf16.msra.mxu0 0
    %1628 = vmatprep.subr.bf16.mxu0 0
    %1629 = vmatpush1.bf16.msra.mxu0 0
    %1630 = vmatprep.subr.bf16.mxu0 0
    %1631 = vmatpush1.bf16.msra.mxu0 0
    %1632 = vmatprep.subr.bf16.mxu0 0
    %1633 = vmatpush1.bf16.msra.mxu0 0
    %1634 = vmatprep.subr.bf16.mxu0 0
    %1635 = vmatpush1.bf16.msra.mxu0 0
    %1636 = vmatprep.subr.bf16.mxu0 0
    %1637 = vmatpush1.bf16.msra.mxu0 0
    %1638 = vmatprep.subr.bf16.mxu0 0
    %1639 = vmatpush1.bf16.msra.mxu0 0
    %1640 = vmatprep.subr.bf16.mxu0 0
    %1641 = vmatpush1.bf16.msra.mxu0 0
    %1642 = vmatprep.subr.bf16.mxu0 0
    %1643 = vmatpush1.bf16.msra.mxu0 0
    %1644 = vmatprep.subr.bf16.mxu0 0
    %1645 = vmatpush1.bf16.msra.mxu0 0
    %1646 = vmatprep.mubr.bf16.mxu0 0
    %1647 = vmatmul.mubr.bf16.gmra.mrb[0].mxu0 %v1603
    %v1648 = vpop.f32.mrb[0].mxu0
    %v1649 = vadd.f32 0.0, %v1648
    %v1650 = vpop.f32.mrb[0].mxu0
    %v1651 = vadd.f32 0.0, %v1650
    %v1652 = vpop.f32.mrb[0].mxu0
    %v1653 = vadd.f32 0.0, %v1652
    %v1654 = vpop.f32.mrb[0].mxu0
    %v1655 = vadd.f32 0.0, %v1654
    %1656 = vmatprep.mubr.bf16.mxu0 0
    %1657 = vmatmul.mubr.bf16.gmra.mrb[0].mxu0 %v1606
    %v1658 = vpop.f32.mrb[0].mxu0
    %v1659 = vadd.f32 0.0, %v1658
    %v1660 = vpop.f32.mrb[0].mxu0
    %v1661 = vadd.f32 0.0, %v1660
    %v1662 = vpop.f32.mrb[0].mxu0
    %v1663 = vadd.f32 0.0, %v1662
    %v1664 = vpop.f32.mrb[0].mxu0
    %v1665 = vadd.f32 0.0, %v1664
    %1666 = vmatprep.mubr.bf16.mxu0 0
    %1667 = vmatmul.mubr.bf16.gmra.mrb[0].mxu0 %v1609
    %v1668 = vpop.f32.mrb[0].mxu0
    %v1669 = vadd.f32 0.0, %v1668
    %v1670 = vpop.f32.mrb[0].mxu0
    %v1671 = vadd.f32 0.0, %v1670
    %v1672 = vpop.f32.mrb[0].mxu0
    %v1673 = vadd.f32 0.0, %v1672
    %v1674 = vpop.f32.mrb[0].mxu0
    %v1675 = vadd.f32 0.0, %v1674
    %1676 = vmatprep.mubr.bf16.mxu0 0
    %1677 = vmatmul.mubr.bf16.gmra.mrb[0].mxu0 %v1612
    %v1678 = vpop.f32.mrb[0].mxu0
    %v1679 = vadd.f32 0.0, %v1678
    %v1680 = vpop.f32.mrb[0].mxu0
    %v1681 = vadd.f32 0.0, %v1680
    %v1682 = vpop.f32.mrb[0].mxu0
    %v1683 = vadd.f32 0.0, %v1682
    %v1684 = vpop.f32.mrb[0].mxu0
    %v1685 = vadd.f32 0.0, %v1684
    %1686 = vdwg.mxu0
    %v1687 = vadd.f32 %v1504, %v1649
    %v1688 = vadd.f32 %v1505, %v1651
    %v1689 = vadd.f32 %v1506, %v1653
    %v1690 = vadd.f32 %v1507, %v1655
    %v1691 = vadd.f32 %v1508, %v1659
    %v1692 = vadd.f32 %v1509, %v1661
    %v1693 = vadd.f32 %v1510, %v1663
    %v1694 = vadd.f32 %v1511, %v1665
    %v1695 = vadd.f32 %v1512, %v1669
    %v1696 = vadd.f32 %v1513, %v1671
    %v1697 = vadd.f32 %v1514, %v1673
    %v1698 = vadd.f32 %v1515, %v1675
    %v1699 = vadd.f32 %v1516, %v1679
    %v1700 = vadd.f32 %v1517, %v1681
    %v1701 = vadd.f32 %v1518, %v1683
    %v1702 = vadd.f32 %v1519, %v1685
    %1703 = vrot.lane.b32.xlu0 %v544, 17
    %v1704 = vpop.permute.xlu0 %1703
    %1705 = vrot.lane.b32.xlu0 %v551, 17
    %v1706 = vpop.permute.xlu0 %1705
    %v1707 = vsel %vm411, %v1704, %v1706
    %v1711 = vmul.bf16 %v1104, %v1704
    %v1712 = vmul.bf16 %v1105, %v1707
    %v1713 = vmul.bf16 %v1106, %v1706
    %v1714 = vmul.bf16 %v1107, %v1704
    %v1715 = vmul.bf16 %v1108, %v1707
    %v1716 = vmul.bf16 %v1109, %v1706
    %v1717 = vmul.bf16 %v1110, %v1704
    %v1718 = vmul.bf16 %v1111, %v1707
    %v1719 = vmul.bf16 %v1112, %v1706
    %v1720 = vmul.bf16 %v1113, %v1704
    %v1721 = vmul.bf16 %v1114, %v1707
    %v1722 = vmul.bf16 %v1115, %v1706
    %s1723 = scalar_lea.vmem [#allocation6], 256
    %v1724 = vld [vmem:[%s1723] sm:$0xf]
    %v1725 = vld [vmem:[%s1723 + $0x4] sm:$0xf]
    %v1726 = vld [vmem:[%s1723 + $0x8] sm:$0xf]
    %v1727 = vld [vmem:[%s1723 + $0xc] sm:$0xf]
    %v1728 = vld [vmem:[%s1723 + $0x10] sm:$0xf]
    %v1729 = vld [vmem:[%s1723 + $0x14] sm:$0xf]
    %v1730 = vld [vmem:[%s1723 + $0x18] sm:$0xf]
    %v1731 = vld [vmem:[%s1723 + $0x1c] sm:$0xf]
    %v1740 = vunpack.c.l.b16 %v1724
    %v1741 = vunpack.c.l.b16 %v1725
    %v1742 = vunpack.c.l.b16 %v1726
    %v1743 = vunpack.c.l.b16 %v1727
    %v1744 = vunpack.c.l.b16 %v1728
    %v1745 = vunpack.c.l.b16 %v1729
    %v1746 = vunpack.c.l.b16 %v1730
    %v1747 = vunpack.c.l.b16 %v1731
    %v1748 = vpack.c.b16 %v1741, %v1740
    %v1749 = vpack.c.b16 %v1743, %v1742
    %v1750 = vpack.c.b16 %v1745, %v1744
    %v1751 = vpack.c.b16 %v1747, %v1746
    %1764 = vrot.lane.b32.xlu0 %v1711, 111
    %v1765 = vpop.permute.xlu0 %1764
    %1766 = vrot.lane.b32.xlu0 %v1712, 111
    %v1767 = vpop.permute.xlu0 %1766
    %1768 = vrot.lane.b32.xlu0 %v1713, 111
    %v1769 = vpop.permute.xlu0 %1768
    %1770 = vrot.lane.b32.xlu0 %v1714, 111
    %v1771 = vpop.permute.xlu0 %1770
    %1772 = vrot.lane.b32.xlu0 %v1715, 111
    %v1773 = vpop.permute.xlu0 %1772
    %1774 = vrot.lane.b32.xlu0 %v1716, 111
    %v1775 = vpop.permute.xlu0 %1774
    %1776 = vrot.lane.b32.xlu0 %v1717, 111
    %v1777 = vpop.permute.xlu0 %1776
    %1778 = vrot.lane.b32.xlu0 %v1718, 111
    %v1779 = vpop.permute.xlu0 %1778
    %1780 = vrot.lane.b32.xlu0 %v1719, 111
    %v1781 = vpop.permute.xlu0 %1780
    %1782 = vrot.lane.b32.xlu0 %v1720, 111
    %v1783 = vpop.permute.xlu0 %1782
    %1784 = vrot.lane.b32.xlu0 %v1721, 111
    %v1785 = vpop.permute.xlu0 %1784
    %1786 = vrot.lane.b32.xlu0 %v1722, 111
    %v1787 = vpop.permute.xlu0 %1786
    %v1788 = vsel %vm162, %v1765, %v1767
    %v1789 = vsel %vm162, %v1767, %v1769
    %v1790 = vsel %vm162, %v1771, %v1773
    %v1791 = vsel %vm162, %v1773, %v1775
    %v1792 = vsel %vm162, %v1777, %v1779
    %v1793 = vsel %vm162, %v1779, %v1781
    %v1794 = vsel %vm162, %v1783, %v1785
    %v1795 = vsel %vm162, %v1785, %v1787
    %v1805 = vsel %vm269, %v1748, 0
    %v1808 = vsel %vm269, %v1749, 0
    %v1811 = vsel %vm269, %v1750, 0
    %v1814 = vsel %vm269, %v1751, 0
    %1816 = vmatprep.subr.bf16.mxu0 %v1789
    %1817 = vmatpush1.bf16.msra.mxu0 %v1788
    %1818 = vmatprep.subr.bf16.mxu0 %v1791
    %1819 = vmatpush1.bf16.msra.mxu0 %v1790
    %1820 = vmatprep.subr.bf16.mxu0 %v1793
    %1821 = vmatpush1.bf16.msra.mxu0 %v1792
    %1822 = vmatprep.subr.bf16.mxu0 %v1795
    %1823 = vmatpush1.bf16.msra.mxu0 %v1794
    %1824 = vmatprep.subr.bf16.mxu0 0
    %1825 = vmatpush1.bf16.msra.mxu0 0
    %1826 = vmatprep.subr.bf16.mxu0 0
    %1827 = vmatpush1.bf16.msra.mxu0 0
    %1828 = vmatprep.subr.bf16.mxu0 0
    %1829 = vmatpush1.bf16.msra.mxu0 0
    %1830 = vmatprep.subr.bf16.mxu0 0
    %1831 = vmatpush1.bf16.msra.mxu0 0
    %1832 = vmatprep.subr.bf16.mxu0 0
    %1833 = vmatpush1.bf16.msra.mxu0 0
    %1834 = vmatprep.subr.bf16.mxu0 0
    %1835 = vmatpush1.bf16.msra.mxu0 0
    %1836 = vmatprep.subr.bf16.mxu0 0
    %1837 = vmatpush1.bf16.msra.mxu0 0
    %1838 = vmatprep.subr.bf16.mxu0 0
    %1839 = vmatpush1.bf16.msra.mxu0 0
    %1840 = vmatprep.subr.bf16.mxu0 0
    %1841 = vmatpush1.bf16.msra.mxu0 0
    %1842 = vmatprep.subr.bf16.mxu0 0
    %1843 = vmatpush1.bf16.msra.mxu0 0
    %1844 = vmatprep.subr.bf16.mxu0 0
    %1845 = vmatpush1.bf16.msra.mxu0 0
    %1846 = vmatprep.subr.bf16.mxu0 0
    %1847 = vmatpush1.bf16.msra.mxu0 0
    %1848 = vmatprep.mubr.bf16.mxu0 0
    %1849 = vmatmul.mubr.bf16.gmra.mrb[0].mxu0 %v1805
    %v1850 = vpop.f32.mrb[0].mxu0
    %v1851 = vadd.f32 0.0, %v1850
    %v1852 = vpop.f32.mrb[0].mxu0
    %v1853 = vadd.f32 0.0, %v1852
    %v1854 = vpop.f32.mrb[0].mxu0
    %v1855 = vadd.f32 0.0, %v1854
    %v1856 = vpop.f32.mrb[0].mxu0
    %v1857 = vadd.f32 0.0, %v1856
    %1858 = vmatprep.mubr.bf16.mxu0 0
    %1859 = vmatmul.mubr.bf16.gmra.mrb[0].mxu0 %v1808
    %v1860 = vpop.f32.mrb[0].mxu0
    %v1861 = vadd.f32 0.0, %v1860
    %v1862 = vpop.f32.mrb[0].mxu0
    %v1863 = vadd.f32 0.0, %v1862
    %v1864 = vpop.f32.mrb[0].mxu0
    %v1865 = vadd.f32 0.0, %v1864
    %v1866 = vpop.f32.mrb[0].mxu0
    %v1867 = vadd.f32 0.0, %v1866
    %1868 = vmatprep.mubr.bf16.mxu0 0
    %1869 = vmatmul.mubr.bf16.gmra.mrb[0].mxu0 %v1811
    %v1870 = vpop.f32.mrb[0].mxu0
    %v1871 = vadd.f32 0.0, %v1870
    %v1872 = vpop.f32.mrb[0].mxu0
    %v1873 = vadd.f32 0.0, %v1872
    %v1874 = vpop.f32.mrb[0].mxu0
    %v1875 = vadd.f32 0.0, %v1874
    %v1876 = vpop.f32.mrb[0].mxu0
    %v1877 = vadd.f32 0.0, %v1876
    %1878 = vmatprep.mubr.bf16.mxu0 0
    %1879 = vmatmul.mubr.bf16.gmra.mrb[0].mxu0 %v1814
    %v1880 = vpop.f32.mrb[0].mxu0
    %v1881 = vadd.f32 0.0, %v1880
    %v1882 = vpop.f32.mrb[0].mxu0
    %v1883 = vadd.f32 0.0, %v1882
    %v1884 = vpop.f32.mrb[0].mxu0
    %v1885 = vadd.f32 0.0, %v1884
    %v1886 = vpop.f32.mrb[0].mxu0
    %v1887 = vadd.f32 0.0, %v1886
    %1888 = vdwg.mxu0
    %v1889 = vadd.f32 %v1687, %v1851
    %v1890 = vadd.f32 %v1688, %v1853
    %v1891 = vadd.f32 %v1689, %v1855
    %v1892 = vadd.f32 %v1690, %v1857
    %v1893 = vadd.f32 %v1691, %v1861
    %v1894 = vadd.f32 %v1692, %v1863
    %v1895 = vadd.f32 %v1693, %v1865
    %v1896 = vadd.f32 %v1694, %v1867
    %v1897 = vadd.f32 %v1695, %v1871
    %v1898 = vadd.f32 %v1696, %v1873
    %v1899 = vadd.f32 %v1697, %v1875
    %v1900 = vadd.f32 %v1698, %v1877
    %v1901 = vadd.f32 %v1699, %v1881
    %v1902 = vadd.f32 %v1700, %v1883
    %v1903 = vadd.f32 %v1701, %v1885
    %v1904 = vadd.f32 %v1702, %v1887
    %v1905 = vld [vmem:[%s2] sm:$0xff]
    %v1906 = vld [vmem:[%s2 + $0x8] sm:$0xff]
    %v1907 = vld [vmem:[%s2 + $0x10] sm:$0xff]
    %v1908 = vld [vmem:[%s2 + $0x18] sm:$0xff]
    %v1909 = vld [vmem:[%s2 + $0x20] sm:$0xff]
    %v1910 = vld [vmem:[%s2 + $0x28] sm:$0xff]
    %v1911 = vld [vmem:[%s2 + $0x30] sm:$0xff]
    %v1912 = vld [vmem:[%s2 + $0x38] sm:$0xff]
    %1914 = vset.pattern.permute.xlu0 0
    %1915 = vperm.xlu0 %1914, %v1905
    %v1916 = vpop.permute.xlu0 %1915
    %1919 = vset.pattern.permute.xlu0 0
    %1920 = vperm.xlu0 %1919, %v1906
    %v1921 = vpop.permute.xlu0 %1920
    %1924 = vset.pattern.permute.xlu0 0
    %1925 = vperm.xlu0 %1924, %v1907
    %v1926 = vpop.permute.xlu0 %1925
    %1929 = vset.pattern.permute.xlu0 0
    %1930 = vperm.xlu0 %1929, %v1908
    %v1931 = vpop.permute.xlu0 %1930
    %1934 = vset.pattern.permute.xlu0 0
    %1935 = vperm.xlu0 %1934, %v1909
    %v1936 = vpop.permute.xlu0 %1935
    %1939 = vset.pattern.permute.xlu0 0
    %1940 = vperm.xlu0 %1939, %v1910
    %v1941 = vpop.permute.xlu0 %1940
    %1944 = vset.pattern.permute.xlu0 0
    %1945 = vperm.xlu0 %1944, %v1911
    %v1946 = vpop.permute.xlu0 %1945
    %1949 = vset.pattern.permute.xlu0 0
    %1950 = vperm.xlu0 %1949, %v1912
    %v1951 = vpop.permute.xlu0 %1950
    %v1953 = vadd.f32 %v1889, %v1916
    %v1954 = vadd.f32 %v1890, %v1916
    %v1955 = vadd.f32 %v1891, %v1921
    %v1956 = vadd.f32 %v1892, %v1921
    %v1957 = vadd.f32 %v1893, %v1926
    %v1958 = vadd.f32 %v1894, %v1926
    %v1959 = vadd.f32 %v1895, %v1931
    %v1960 = vadd.f32 %v1896, %v1931
    %v1961 = vadd.f32 %v1897, %v1936
    %v1962 = vadd.f32 %v1898, %v1936
    %v1963 = vadd.f32 %v1899, %v1941
    %v1964 = vadd.f32 %v1900, %v1941
    %v1965 = vadd.f32 %v1901, %v1946
    %v1966 = vadd.f32 %v1902, %v1946
    %v1967 = vadd.f32 %v1903, %v1951
    %v1968 = vadd.f32 %v1904, %v1951
    %v1969 = vmax.f32 %v1953, 0.0
    %v1970 = vmax.f32 %v1954, 0.0
    %v1971 = vmax.f32 %v1955, 0.0
    %v1972 = vmax.f32 %v1956, 0.0
    %v1973 = vmax.f32 %v1957, 0.0
    %v1974 = vmax.f32 %v1958, 0.0
    %v1975 = vmax.f32 %v1959, 0.0
    %v1976 = vmax.f32 %v1960, 0.0
    %v1977 = vmax.f32 %v1961, 0.0
    %v1978 = vmax.f32 %v1962, 0.0
    %v1979 = vmax.f32 %v1963, 0.0
    %v1980 = vmax.f32 %v1964, 0.0
    %v1981 = vmax.f32 %v1965, 0.0
    %v1982 = vmax.f32 %v1966, 0.0
    %v1983 = vmax.f32 %v1967, 0.0
    %v1984 = vmax.f32 %v1968, 0.0
    %v1985 = vpack.c.bf16 %v1971, %v1969
    %v1986 = vpack.c.bf16 %v1972, %v1970
    %v1987 = vpack.c.bf16 %v1975, %v1973
    %v1988 = vpack.c.bf16 %v1976, %v1974
    %v1989 = vpack.c.bf16 %v1979, %v1977
    %v1990 = vpack.c.bf16 %v1980, %v1978
    %v1991 = vpack.c.bf16 %v1983, %v1981
    %v1992 = vpack.c.bf16 %v1984, %v1982
    %1993 = vst [vmem:[#allocation2 + $0x8] sm:$0xff] %v1985
    %1994 = vst [vmem:[#allocation2 + $0x10] sm:$0xff] %v1986
    %1995 = vst [vmem:[#allocation2 + $0x28] sm:$0xff] %v1987
    %1996 = vst [vmem:[#allocation2 + $0x30] sm:$0xff] %v1988
    %1997 = vst [vmem:[#allocation2 + $0x48] sm:$0xff] %v1989
    %1998 = vst [vmem:[#allocation2 + $0x50] sm:$0xff] %v1990
    %1999 = vst [vmem:[#allocation2 + $0x68] sm:$0xff] %v1991
    %2000 = vst [vmem:[#allocation2 + $0x70] sm:$0xff] %v1992
    %v2001 = vld [vmem:[#allocation2] sm:$0xff]
    %v2002 = vld [vmem:[#allocation2 + $0x8] sm:$0xff]
    %v2003 = vld [vmem:[#allocation2 + $0x10] sm:$0xff]
    %v2004 = vld [vmem:[#allocation2 + $0x20] sm:$0xff]
    %v2005 = vld [vmem:[#allocation2 + $0x28] sm:$0xff]
    %v2006 = vld [vmem:[#allocation2 + $0x30] sm:$0xff]
    %v2007 = vld [vmem:[#allocation2 + $0x40] sm:$0xff]
    %v2008 = vld [vmem:[#allocation2 + $0x48] sm:$0xff]
    %v2009 = vld [vmem:[#allocation2 + $0x50] sm:$0xff]
    %v2010 = vld [vmem:[#allocation2 + $0x60] sm:$0xff]
    %v2011 = vld [vmem:[#allocation2 + $0x68] sm:$0xff]
    %v2012 = vld [vmem:[#allocation2 + $0x70] sm:$0xff]
    %v2013 = vld [vmem:[%s5] sm:$0x3]
    %v2016 = vunpack.c.l.s4 1966171168
    %v2017 = vunpack.c.0.s8 %v2016
    %v2018 = vlaneseq
    %v2019 = vshrl.u32 %v2018, 7
    %v2020 = vsub.s32 %v2017, %v2019
    %v2021 = vrot.slane %v2013, %v2020
    %v2022 = vcombine.high %v2021, %v2021
    %v2024 = vunpack.c.l.s4 1966171168
    %v2025 = vunpack.c.0.s8 %v2024
    %v2026 = vlaneseq
    %v2027 = vshrl.u32 %v2026, 7
    %v2028 = vsub.s32 %v2025, %v2027
    %v2029 = vrot.slane %v2021, %v2028
    %v2031 = vunpack.c.l.s4 1966171168
    %v2032 = vunpack.c.0.s8 %v2031
    %v2033 = vlaneseq
    %v2034 = vshrl.u32 %v2033, 7
    %v2035 = vsub.s32 %v2032, %v2034
    %v2036 = vrot.slane %v2022, %v2035
    %v2038 = vpack.i.b16 %v2029, %v2029
    %v2040 = vlaneseq
    %v2041 = vshrl.u32 %v2040, 7
    %v2042 = vsub.s32 0, %v2041
    %v2043 = vrot.slane %v2038, %v2042
    %v2045 = vpack.i.b16 %v2036, %v2036
    %v2047 = vlaneseq
    %v2048 = vshrl.u32 %v2047, 7
    %v2049 = vsub.s32 0, %v2048
    %v2050 = vrot.slane %v2045, %v2049
    %2053 = vrot.lane.b32.xlu0 %v2043, 111
    %v2054 = vpop.permute.xlu0 %2053
    %2055 = vrot.lane.b32.xlu0 %v2050, 111
    %v2056 = vpop.permute.xlu0 %2055
    %v2057 = vsel %vm162, %v2054, %v2056
    %v2061 = vmul.bf16 %v2001, %v2054
    %v2062 = vmul.bf16 %v2002, %v2057
    %v2063 = vmul.bf16 %v2003, %v2056
    %v2064 = vmul.bf16 %v2004, %v2054
    %v2065 = vmul.bf16 %v2005, %v2057
    %v2066 = vmul.bf16 %v2006, %v2056
    %v2067 = vmul.bf16 %v2007, %v2054
    %v2068 = vmul.bf16 %v2008, %v2057
    %v2069 = vmul.bf16 %v2009, %v2056
    %v2070 = vmul.bf16 %v2010, %v2054
    %v2071 = vmul.bf16 %v2011, %v2057
    %v2072 = vmul.bf16 %v2012, %v2056
    %v2073 = vld [vmem:[#allocation8] sm:$0xf]
    %v2074 = vld [vmem:[#allocation8 + $0x4] sm:$0xf]
    %v2075 = vld [vmem:[#allocation8 + $0x8] sm:$0xf]
    %v2076 = vld [vmem:[#allocation8 + $0xc] sm:$0xf]
    %v2077 = vld [vmem:[#allocation8 + $0x10] sm:$0xf]
    %v2078 = vld [vmem:[#allocation8 + $0x14] sm:$0xf]
    %v2079 = vld [vmem:[#allocation8 + $0x18] sm:$0xf]
    %v2080 = vld [vmem:[#allocation8 + $0x1c] sm:$0xf]
    %s2081 = scalar_lea.vmem [#allocation8], 32
    %v2082 = vld [vmem:[%s2081] sm:$0xf]
    %v2083 = vld [vmem:[%s2081 + $0x4] sm:$0xf]
    %v2084 = vld [vmem:[%s2081 + $0x8] sm:$0xf]
    %v2085 = vld [vmem:[%s2081 + $0xc] sm:$0xf]
    %v2086 = vld [vmem:[%s2081 + $0x10] sm:$0xf]
    %v2087 = vld [vmem:[%s2081 + $0x14] sm:$0xf]
    %v2088 = vld [vmem:[%s2081 + $0x18] sm:$0xf]
    %v2089 = vld [vmem:[%s2081 + $0x1c] sm:$0xf]
    %v2098 = vunpack.c.l.b16 %v2082
    %v2099 = vunpack.c.l.b16 %v2083
    %v2100 = vunpack.c.l.b16 %v2084
    %v2101 = vunpack.c.l.b16 %v2085
    %v2102 = vunpack.c.l.b16 %v2086
    %v2103 = vunpack.c.l.b16 %v2087
    %v2104 = vunpack.c.l.b16 %v2088
    %v2105 = vunpack.c.l.b16 %v2089
    %v2106 = vpack.c.b16 %v2099, %v2098
    %v2107 = vpack.c.b16 %v2101, %v2100
    %v2108 = vpack.c.b16 %v2103, %v2102
    %v2109 = vpack.c.b16 %v2105, %v2104
    %2122 = vrot.lane.b32.xlu0 %v2001, 16
    %v2123 = vpop.permute.xlu0 %2122
    %2124 = vrot.lane.b32.xlu0 %v2002, 16
    %v2125 = vpop.permute.xlu0 %2124
    %2126 = vrot.lane.b32.xlu0 %v2003, 16
    %v2127 = vpop.permute.xlu0 %2126
    %2128 = vrot.lane.b32.xlu0 %v2004, 16
    %v2129 = vpop.permute.xlu0 %2128
    %2130 = vrot.lane.b32.xlu0 %v2005, 16
    %v2131 = vpop.permute.xlu0 %2130
    %2132 = vrot.lane.b32.xlu0 %v2006, 16
    %v2133 = vpop.permute.xlu0 %2132
    %2134 = vrot.lane.b32.xlu0 %v2007, 16
    %v2135 = vpop.permute.xlu0 %2134
    %2136 = vrot.lane.b32.xlu0 %v2008, 16
    %v2137 = vpop.permute.xlu0 %2136
    %2138 = vrot.lane.b32.xlu0 %v2009, 16
    %v2139 = vpop.permute.xlu0 %2138
    %2140 = vrot.lane.b32.xlu0 %v2010, 16
    %v2141 = vpop.permute.xlu0 %2140
    %2142 = vrot.lane.b32.xlu0 %v2011, 16
    %v2143 = vpop.permute.xlu0 %2142
    %2144 = vrot.lane.b32.xlu0 %v2012, 16
    %v2145 = vpop.permute.xlu0 %2144
    %v2146 = vsel %vm252, %v2123, %v2125
    %v2147 = vsel %vm252, %v2125, %v2127
    %v2148 = vsel %vm252, %v2129, %v2131
    %v2149 = vsel %vm252, %v2131, %v2133
    %v2150 = vsel %vm252, %v2135, %v2137
    %v2151 = vsel %vm252, %v2137, %v2139
    %v2152 = vsel %vm252, %v2141, %v2143
    %v2153 = vsel %vm252, %v2143, %v2145
    %v2163 = vsel %vm269, %v2106, 0
    %v2166 = vsel %vm269, %v2107, 0
    %v2169 = vsel %vm269, %v2108, 0
    %v2172 = vsel %vm269, %v2109, 0
    %2174 = vmatprep.subr.bf16.mxu0 %v2147
    %2175 = vmatpush1.bf16.msra.mxu0 %v2146
    %2176 = vmatprep.subr.bf16.mxu0 %v2149
    %2177 = vmatpush1.bf16.msra.mxu0 %v2148
    %2178 = vmatprep.subr.bf16.mxu0 %v2151
    %2179 = vmatpush1.bf16.msra.mxu0 %v2150
    %2180 = vmatprep.subr.bf16.mxu0 %v2153
    %2181 = vmatpush1.bf16.msra.mxu0 %v2152
    %2182 = vmatprep.subr.bf16.mxu0 0
    %2183 = vmatpush1.bf16.msra.mxu0 0
    %2184 = vmatprep.subr.bf16.mxu0 0
    %2185 = vmatpush1.bf16.msra.mxu0 0
    %2186 = vmatprep.subr.bf16.mxu0 0
    %2187 = vmatpush1.bf16.msra.mxu0 0
    %2188 = vmatprep.subr.bf16.mxu0 0
    %2189 = vmatpush1.bf16.msra.mxu0 0
    %2190 = vmatprep.subr.bf16.mxu0 0
    %2191 = vmatpush1.bf16.msra.mxu0 0
    %2192 = vmatprep.subr.bf16.mxu0 0
    %2193 = vmatpush1.bf16.msra.mxu0 0
    %2194 = vmatprep.subr.bf16.mxu0 0
    %2195 = vmatpush1.bf16.msra.mxu0 0
    %2196 = vmatprep.subr.bf16.mxu0 0
    %2197 = vmatpush1.bf16.msra.mxu0 0
    %2198 = vmatprep.subr.bf16.mxu0 0
    %2199 = vmatpush1.bf16.msra.mxu0 0
    %2200 = vmatprep.subr.bf16.mxu0 0
    %2201 = vmatpush1.bf16.msra.mxu0 0
    %2202 = vmatprep.subr.bf16.mxu0 0
    %2203 = vmatpush1.bf16.msra.mxu0 0
    %2204 = vmatprep.subr.bf16.mxu0 0
    %2205 = vmatpush1.bf16.msra.mxu0 0
    %2206 = vmatprep.mubr.bf16.mxu0 0
    %2207 = vmatmul.mubr.bf16.gmra.mrb[0].mxu0 %v2163
    %v2208 = vpop.f32.mrb[0].mxu0
    %v2209 = vadd.f32 0.0, %v2208
    %v2210 = vpop.f32.mrb[0].mxu0
    %v2211 = vadd.f32 0.0, %v2210
    %v2212 = vpop.f32.mrb[0].mxu0
    %v2213 = vadd.f32 0.0, %v2212
    %v2214 = vpop.f32.mrb[0].mxu0
    %v2215 = vadd.f32 0.0, %v2214
    %2216 = vmatprep.mubr.bf16.mxu0 0
    %2217 = vmatmul.mubr.bf16.gmra.mrb[0].mxu0 %v2166
    %v2218 = vpop.f32.mrb[0].mxu0
    %v2219 = vadd.f32 0.0, %v2218
    %v2220 = vpop.f32.mrb[0].mxu0
    %v2221 = vadd.f32 0.0, %v2220
    %v2222 = vpop.f32.mrb[0].mxu0
    %v2223 = vadd.f32 0.0, %v2222
    %v2224 = vpop.f32.mrb[0].mxu0
    %v2225 = vadd.f32 0.0, %v2224
    %2226 = vmatprep.mubr.bf16.mxu0 0
    %2227 = vmatmul.mubr.bf16.gmra.mrb[0].mxu0 %v2169
    %v2228 = vpop.f32.mrb[0].mxu0
    %v2229 = vadd.f32 0.0, %v2228
    %v2230 = vpop.f32.mrb[0].mxu0
    %v2231 = vadd.f32 0.0, %v2230
    %v2232 = vpop.f32.mrb[0].mxu0
    %v2233 = vadd.f32 0.0, %v2232
    %v2234 = vpop.f32.mrb[0].mxu0
    %v2235 = vadd.f32 0.0, %v2234
    %2236 = vmatprep.mubr.bf16.mxu0 0
    %2237 = vmatmul.mubr.bf16.gmra.mrb[0].mxu0 %v2172
    %v2238 = vpop.f32.mrb[0].mxu0
    %v2239 = vadd.f32 0.0, %v2238
    %v2240 = vpop.f32.mrb[0].mxu0
    %v2241 = vadd.f32 0.0, %v2240
    %v2242 = vpop.f32.mrb[0].mxu0
    %v2243 = vadd.f32 0.0, %v2242
    %v2244 = vpop.f32.mrb[0].mxu0
    %v2245 = vadd.f32 0.0, %v2244
    %2246 = vdwg.mxu0
    %v2255 = vunpack.c.l.b16 %v2073
    %v2256 = vunpack.c.l.b16 %v2074
    %v2257 = vunpack.c.l.b16 %v2075
    %v2258 = vunpack.c.l.b16 %v2076
    %v2259 = vunpack.c.l.b16 %v2077
    %v2260 = vunpack.c.l.b16 %v2078
    %v2261 = vunpack.c.l.b16 %v2079
    %v2262 = vunpack.c.l.b16 %v2080
    %v2263 = vpack.c.b16 %v2256, %v2255
    %v2264 = vpack.c.b16 %v2258, %v2257
    %v2265 = vpack.c.b16 %v2260, %v2259
    %v2266 = vpack.c.b16 %v2262, %v2261
    %2279 = vrot.lane.b32.xlu0 %v2061, 17
    %v2280 = vpop.permute.xlu0 %2279
    %2281 = vrot.lane.b32.xlu0 %v2062, 17
    %v2282 = vpop.permute.xlu0 %2281
    %2283 = vrot.lane.b32.xlu0 %v2063, 17
    %v2284 = vpop.permute.xlu0 %2283
    %2285 = vrot.lane.b32.xlu0 %v2064, 17
    %v2286 = vpop.permute.xlu0 %2285
    %2287 = vrot.lane.b32.xlu0 %v2065, 17
    %v2288 = vpop.permute.xlu0 %2287
    %2289 = vrot.lane.b32.xlu0 %v2066, 17
    %v2290 = vpop.permute.xlu0 %2289
    %2291 = vrot.lane.b32.xlu0 %v2067, 17
    %v2292 = vpop.permute.xlu0 %2291
    %2293 = vrot.lane.b32.xlu0 %v2068, 17
    %v2294 = vpop.permute.xlu0 %2293
    %2295 = vrot.lane.b32.xlu0 %v2069, 17
    %v2296 = vpop.permute.xlu0 %2295
    %2297 = vrot.lane.b32.xlu0 %v2070, 17
    %v2298 = vpop.permute.xlu0 %2297
    %2299 = vrot.lane.b32.xlu0 %v2071, 17
    %v2300 = vpop.permute.xlu0 %2299
    %2301 = vrot.lane.b32.xlu0 %v2072, 17
    %v2302 = vpop.permute.xlu0 %2301
    %v2303 = vsel %vm411, %v2280, %v2282
    %v2304 = vsel %vm411, %v2282, %v2284
    %v2305 = vsel %vm411, %v2286, %v2288
    %v2306 = vsel %vm411, %v2288, %v2290
    %v2307 = vsel %vm411, %v2292, %v2294
    %v2308 = vsel %vm411, %v2294, %v2296
    %v2309 = vsel %vm411, %v2298, %v2300
    %v2310 = vsel %vm411, %v2300, %v2302
    %v2320 = vsel %vm269, %v2263, 0
    %v2323 = vsel %vm269, %v2264, 0
    %v2326 = vsel %vm269, %v2265, 0
    %v2329 = vsel %vm269, %v2266, 0
    %2331 = vmatprep.subr.bf16.mxu0 %v2304
    %2332 = vmatpush1.bf16.msra.mxu0 %v2303
    %2333 = vmatprep.subr.bf16.mxu0 %v2306
    %2334 = vmatpush1.bf16.msra.mxu0 %v2305
    %2335 = vmatprep.subr.bf16.mxu0 %v2308
    %2336 = vmatpush1.bf16.msra.mxu0 %v2307
    %2337 = vmatprep.subr.bf16.mxu0 %v2310
    %2338 = vmatpush1.bf16.msra.mxu0 %v2309
    %2339 = vmatprep.subr.bf16.mxu0 0
    %2340 = vmatpush1.bf16.msra.mxu0 0
    %2341 = vmatprep.subr.bf16.mxu0 0
    %2342 = vmatpush1.bf16.msra.mxu0 0
    %2343 = vmatprep.subr.bf16.mxu0 0
    %2344 = vmatpush1.bf16.msra.mxu0 0
    %2345 = vmatprep.subr.bf16.mxu0 0
    %2346 = vmatpush1.bf16.msra.mxu0 0
    %2347 = vmatprep.subr.bf16.mxu0 0
    %2348 = vmatpush1.bf16.msra.mxu0 0
    %2349 = vmatprep.subr.bf16.mxu0 0
    %2350 = vmatpush1.bf16.msra.mxu0 0
    %2351 = vmatprep.subr.bf16.mxu0 0
    %2352 = vmatpush1.bf16.msra.mxu0 0
    %2353 = vmatprep.subr.bf16.mxu0 0
    %2354 = vmatpush1.bf16.msra.mxu0 0
    %2355 = vmatprep.subr.bf16.mxu0 0
    %2356 = vmatpush1.bf16.msra.mxu0 0
    %2357 = vmatprep.subr.bf16.mxu0 0
    %2358 = vmatpush1.bf16.msra.mxu0 0
    %2359 = vmatprep.subr.bf16.mxu0 0
    %2360 = vmatpush1.bf16.msra.mxu0 0
    %2361 = vmatprep.subr.bf16.mxu0 0
    %2362 = vmatpush1.bf16.msra.mxu0 0
    %2363 = vmatprep.mubr.bf16.mxu0 0
    %2364 = vmatmul.mubr.bf16.gmra.mrb[0].mxu0 %v2320
    %v2365 = vpop.f32.mrb[0].mxu0
    %v2366 = vadd.f32 %v2209, %v2365
    %v2367 = vpop.f32.mrb[0].mxu0
    %v2368 = vadd.f32 %v2211, %v2367
    %v2369 = vpop.f32.mrb[0].mxu0
    %v2370 = vadd.f32 %v2213, %v2369
    %v2371 = vpop.f32.mrb[0].mxu0
    %v2372 = vadd.f32 %v2215, %v2371
    %2373 = vmatprep.mubr.bf16.mxu0 0
    %2374 = vmatmul.mubr.bf16.gmra.mrb[0].mxu0 %v2323
    %v2375 = vpop.f32.mrb[0].mxu0
    %v2376 = vadd.f32 %v2219, %v2375
    %v2377 = vpop.f32.mrb[0].mxu0
    %v2378 = vadd.f32 %v2221, %v2377
    %v2379 = vpop.f32.mrb[0].mxu0
    %v2380 = vadd.f32 %v2223, %v2379
    %v2381 = vpop.f32.mrb[0].mxu0
    %v2382 = vadd.f32 %v2225, %v2381
    %2383 = vmatprep.mubr.bf16.mxu0 0
    %2384 = vmatmul.mubr.bf16.gmra.mrb[0].mxu0 %v2326
    %v2385 = vpop.f32.mrb[0].mxu0
    %v2386 = vadd.f32 %v2229, %v2385
    %v2387 = vpop.f32.mrb[0].mxu0
    %v2388 = vadd.f32 %v2231, %v2387
    %v2389 = vpop.f32.mrb[0].mxu0
    %v2390 = vadd.f32 %v2233, %v2389
    %v2391 = vpop.f32.mrb[0].mxu0
    %v2392 = vadd.f32 %v2235, %v2391
    %2393 = vmatprep.mubr.bf16.mxu0 0
    %2394 = vmatmul.mubr.bf16.gmra.mrb[0].mxu0 %v2329
    %v2395 = vpop.f32.mrb[0].mxu0
    %v2396 = vadd.f32 %v2239, %v2395
    %v2397 = vpop.f32.mrb[0].mxu0
    %v2398 = vadd.f32 %v2241, %v2397
    %v2399 = vpop.f32.mrb[0].mxu0
    %v2400 = vadd.f32 %v2243, %v2399
    %v2401 = vpop.f32.mrb[0].mxu0
    %v2402 = vadd.f32 %v2245, %v2401
    %2403 = vdwg.mxu0
    %v2404 = vld [vmem:[%s513] sm:$0x3]
    %v2407 = vunpack.c.l.s4 1966171168
    %v2408 = vunpack.c.0.s8 %v2407
    %v2409 = vlaneseq
    %v2410 = vshrl.u32 %v2409, 7
    %v2411 = vsub.s32 %v2408, %v2410
    %v2412 = vrot.slane %v2404, %v2411
    %v2413 = vcombine.high %v2412, %v2412
    %v2415 = vunpack.c.l.s4 1966171168
    %v2416 = vunpack.c.0.s8 %v2415
    %v2417 = vlaneseq
    %v2418 = vshrl.u32 %v2417, 7
    %v2419 = vsub.s32 %v2416, %v2418
    %v2420 = vrot.slane %v2412, %v2419
    %v2422 = vunpack.c.l.s4 1966171168
    %v2423 = vunpack.c.0.s8 %v2422
    %v2424 = vlaneseq
    %v2425 = vshrl.u32 %v2424, 7
    %v2426 = vsub.s32 %v2423, %v2425
    %v2427 = vrot.slane %v2413, %v2426
    %v2429 = vpack.i.b16 %v2420, %v2420
    %v2431 = vlaneseq
    %v2432 = vshrl.u32 %v2431, 7
    %v2433 = vsub.s32 0, %v2432
    %v2434 = vrot.slane %v2429, %v2433
    %v2436 = vpack.i.b16 %v2427, %v2427
    %v2438 = vlaneseq
    %v2439 = vshrl.u32 %v2438, 7
    %v2440 = vsub.s32 0, %v2439
    %v2441 = vrot.slane %v2436, %v2440
    %2444 = vrot.lane.b32.xlu0 %v2434, 113
    %v2445 = vpop.permute.xlu0 %2444
    %2446 = vrot.lane.b32.xlu0 %v2441, 113
    %v2447 = vpop.permute.xlu0 %2446
    %v2448 = vsel %vm558, %v2445, %v2447
    %v2452 = vmul.bf16 %v2001, %v2445
    %v2453 = vmul.bf16 %v2002, %v2448
    %v2454 = vmul.bf16 %v2003, %v2447
    %v2455 = vmul.bf16 %v2004, %v2445
    %v2456 = vmul.bf16 %v2005, %v2448
    %v2457 = vmul.bf16 %v2006, %v2447
    %v2458 = vmul.bf16 %v2007, %v2445
    %v2459 = vmul.bf16 %v2008, %v2448
    %v2460 = vmul.bf16 %v2009, %v2447
    %v2461 = vmul.bf16 %v2010, %v2445
    %v2462 = vmul.bf16 %v2011, %v2448
    %v2463 = vmul.bf16 %v2012, %v2447
    %s2464 = scalar_lea.vmem [#allocation8], 64
    %v2465 = vld [vmem:[%s2464] sm:$0xf]
    %v2466 = vld [vmem:[%s2464 + $0x4] sm:$0xf]
    %v2467 = vld [vmem:[%s2464 + $0x8] sm:$0xf]
    %v2468 = vld [vmem:[%s2464 + $0xc] sm:$0xf]
    %v2469 = vld [vmem:[%s2464 + $0x10] sm:$0xf]
    %v2470 = vld [vmem:[%s2464 + $0x14] sm:$0xf]
    %v2471 = vld [vmem:[%s2464 + $0x18] sm:$0xf]
    %v2472 = vld [vmem:[%s2464 + $0x1c] sm:$0xf]
    %v2481 = vunpack.c.l.b16 %v2465
    %v2482 = vunpack.c.l.b16 %v2466
    %v2483 = vunpack.c.l.b16 %v2467
    %v2484 = vunpack.c.l.b16 %v2468
    %v2485 = vunpack.c.l.b16 %v2469
    %v2486 = vunpack.c.l.b16 %v2470
    %v2487 = vunpack.c.l.b16 %v2471
    %v2488 = vunpack.c.l.b16 %v2472
    %v2489 = vpack.c.b16 %v2482, %v2481
    %v2490 = vpack.c.b16 %v2484, %v2483
    %v2491 = vpack.c.b16 %v2486, %v2485
    %v2492 = vpack.c.b16 %v2488, %v2487
    %2505 = vrot.lane.b32.xlu0 %v2452, 15
    %v2506 = vpop.permute.xlu0 %2505
    %2507 = vrot.lane.b32.xlu0 %v2453, 15
    %v2508 = vpop.permute.xlu0 %2507
    %2509 = vrot.lane.b32.xlu0 %v2454, 15
    %v2510 = vpop.permute.xlu0 %2509
    %2511 = vrot.lane.b32.xlu0 %v2455, 15
    %v2512 = vpop.permute.xlu0 %2511
    %2513 = vrot.lane.b32.xlu0 %v2456, 15
    %v2514 = vpop.permute.xlu0 %2513
    %2515 = vrot.lane.b32.xlu0 %v2457, 15
    %v2516 = vpop.permute.xlu0 %2515
    %2517 = vrot.lane.b32.xlu0 %v2458, 15
    %v2518 = vpop.permute.xlu0 %2517
    %2519 = vrot.lane.b32.xlu0 %v2459, 15
    %v2520 = vpop.permute.xlu0 %2519
    %2521 = vrot.lane.b32.xlu0 %v2460, 15
    %v2522 = vpop.permute.xlu0 %2521
    %2523 = vrot.lane.b32.xlu0 %v2461, 15
    %v2524 = vpop.permute.xlu0 %2523
    %2525 = vrot.lane.b32.xlu0 %v2462, 15
    %v2526 = vpop.permute.xlu0 %2525
    %2527 = vrot.lane.b32.xlu0 %v2463, 15
    %v2528 = vpop.permute.xlu0 %2527
    %v2529 = vsel %vm640, %v2506, %v2508
    %v2530 = vsel %vm640, %v2508, %v2510
    %v2531 = vsel %vm640, %v2512, %v2514
    %v2532 = vsel %vm640, %v2514, %v2516
    %v2533 = vsel %vm640, %v2518, %v2520
    %v2534 = vsel %vm640, %v2520, %v2522
    %v2535 = vsel %vm640, %v2524, %v2526
    %v2536 = vsel %vm640, %v2526, %v2528
    %v2546 = vsel %vm269, %v2489, 0
    %v2549 = vsel %vm269, %v2490, 0
    %v2552 = vsel %vm269, %v2491, 0
    %v2555 = vsel %vm269, %v2492, 0
    %2557 = vmatprep.subr.bf16.mxu0 %v2530
    %2558 = vmatpush1.bf16.msra.mxu0 %v2529
    %2559 = vmatprep.subr.bf16.mxu0 %v2532
    %2560 = vmatpush1.bf16.msra.mxu0 %v2531
    %2561 = vmatprep.subr.bf16.mxu0 %v2534
    %2562 = vmatpush1.bf16.msra.mxu0 %v2533
    %2563 = vmatprep.subr.bf16.mxu0 %v2536
    %2564 = vmatpush1.bf16.msra.mxu0 %v2535
    %2565 = vmatprep.subr.bf16.mxu0 0
    %2566 = vmatpush1.bf16.msra.mxu0 0
    %2567 = vmatprep.subr.bf16.mxu0 0
    %2568 = vmatpush1.bf16.msra.mxu0 0
    %2569 = vmatprep.subr.bf16.mxu0 0
    %2570 = vmatpush1.bf16.msra.mxu0 0
    %2571 = vmatprep.subr.bf16.mxu0 0
    %2572 = vmatpush1.bf16.msra.mxu0 0
    %2573 = vmatprep.subr.bf16.mxu0 0
    %2574 = vmatpush1.bf16.msra.mxu0 0
    %2575 = vmatprep.subr.bf16.mxu0 0
    %2576 = vmatpush1.bf16.msra.mxu0 0
    %2577 = vmatprep.subr.bf16.mxu0 0
    %2578 = vmatpush1.bf16.msra.mxu0 0
    %2579 = vmatprep.subr.bf16.mxu0 0
    %2580 = vmatpush1.bf16.msra.mxu0 0
    %2581 = vmatprep.subr.bf16.mxu0 0
    %2582 = vmatpush1.bf16.msra.mxu0 0
    %2583 = vmatprep.subr.bf16.mxu0 0
    %2584 = vmatpush1.bf16.msra.mxu0 0
    %2585 = vmatprep.subr.bf16.mxu0 0
    %2586 = vmatpush1.bf16.msra.mxu0 0
    %2587 = vmatprep.subr.bf16.mxu0 0
    %2588 = vmatpush1.bf16.msra.mxu0 0
    %2589 = vmatprep.mubr.bf16.mxu0 0
    %2590 = vmatmul.mubr.bf16.gmra.mrb[0].mxu0 %v2546
    %v2591 = vpop.f32.mrb[0].mxu0
    %v2592 = vadd.f32 0.0, %v2591
    %v2593 = vpop.f32.mrb[0].mxu0
    %v2594 = vadd.f32 0.0, %v2593
    %v2595 = vpop.f32.mrb[0].mxu0
    %v2596 = vadd.f32 0.0, %v2595
    %v2597 = vpop.f32.mrb[0].mxu0
    %v2598 = vadd.f32 0.0, %v2597
    %2599 = vmatprep.mubr.bf16.mxu0 0
    %2600 = vmatmul.mubr.bf16.gmra.mrb[0].mxu0 %v2549
    %v2601 = vpop.f32.mrb[0].mxu0
    %v2602 = vadd.f32 0.0, %v2601
    %v2603 = vpop.f32.mrb[0].mxu0
    %v2604 = vadd.f32 0.0, %v2603
    %v2605 = vpop.f32.mrb[0].mxu0
    %v2606 = vadd.f32 0.0, %v2605
    %v2607 = vpop.f32.mrb[0].mxu0
    %v2608 = vadd.f32 0.0, %v2607
    %2609 = vmatprep.mubr.bf16.mxu0 0
    %2610 = vmatmul.mubr.bf16.gmra.mrb[0].mxu0 %v2552
    %v2611 = vpop.f32.mrb[0].mxu0
    %v2612 = vadd.f32 0.0, %v2611
    %v2613 = vpop.f32.mrb[0].mxu0
    %v2614 = vadd.f32 0.0, %v2613
    %v2615 = vpop.f32.mrb[0].mxu0
    %v2616 = vadd.f32 0.0, %v2615
    %v2617 = vpop.f32.mrb[0].mxu0
    %v2618 = vadd.f32 0.0, %v2617
    %2619 = vmatprep.mubr.bf16.mxu0 0
    %2620 = vmatmul.mubr.bf16.gmra.mrb[0].mxu0 %v2555
    %v2621 = vpop.f32.mrb[0].mxu0
    %v2622 = vadd.f32 0.0, %v2621
    %v2623 = vpop.f32.mrb[0].mxu0
    %v2624 = vadd.f32 0.0, %v2623
    %v2625 = vpop.f32.mrb[0].mxu0
    %v2626 = vadd.f32 0.0, %v2625
    %v2627 = vpop.f32.mrb[0].mxu0
    %v2628 = vadd.f32 0.0, %v2627
    %2629 = vdwg.mxu0
    %v2630 = vadd.f32 %v2366, %v2592
    %v2631 = vadd.f32 %v2368, %v2594
    %v2632 = vadd.f32 %v2370, %v2596
    %v2633 = vadd.f32 %v2372, %v2598
    %v2634 = vadd.f32 %v2376, %v2602
    %v2635 = vadd.f32 %v2378, %v2604
    %v2636 = vadd.f32 %v2380, %v2606
    %v2637 = vadd.f32 %v2382, %v2608
    %v2638 = vadd.f32 %v2386, %v2612
    %v2639 = vadd.f32 %v2388, %v2614
    %v2640 = vadd.f32 %v2390, %v2616
    %v2641 = vadd.f32 %v2392, %v2618
    %v2642 = vadd.f32 %v2396, %v2622
    %v2643 = vadd.f32 %v2398, %v2624
    %v2644 = vadd.f32 %v2400, %v2626
    %v2645 = vadd.f32 %v2402, %v2628
    %v2646 = vld [vmem:[#allocation2] sm:$0xff]
    %v2647 = vld [vmem:[#allocation2 + $0x8] sm:$0xff]
    %v2648 = vld [vmem:[#allocation2 + $0x10] sm:$0xff]
    %v2649 = vld [vmem:[#allocation2 + $0x20] sm:$0xff]
    %v2650 = vld [vmem:[#allocation2 + $0x28] sm:$0xff]
    %v2651 = vld [vmem:[#allocation2 + $0x30] sm:$0xff]
    %v2652 = vld [vmem:[#allocation2 + $0x40] sm:$0xff]
    %v2653 = vld [vmem:[#allocation2 + $0x48] sm:$0xff]
    %v2654 = vld [vmem:[#allocation2 + $0x50] sm:$0xff]
    %v2655 = vld [vmem:[#allocation2 + $0x60] sm:$0xff]
    %v2656 = vld [vmem:[#allocation2 + $0x68] sm:$0xff]
    %v2657 = vld [vmem:[#allocation2 + $0x70] sm:$0xff]
    %2658 = vrot.lane.b32.xlu0 %v2043, 127
    %v2659 = vpop.permute.xlu0 %2658
    %2660 = vrot.lane.b32.xlu0 %v2050, 127
    %v2661 = vpop.permute.xlu0 %2660
    %v2662 = vsel %vm774, %v2659, %v2661
    %v2666 = vmul.bf16 %v2646, %v2659
    %v2667 = vmul.bf16 %v2647, %v2662
    %v2668 = vmul.bf16 %v2648, %v2661
    %v2669 = vmul.bf16 %v2649, %v2659
    %v2670 = vmul.bf16 %v2650, %v2662
    %v2671 = vmul.bf16 %v2651, %v2661
    %v2672 = vmul.bf16 %v2652, %v2659
    %v2673 = vmul.bf16 %v2653, %v2662
    %v2674 = vmul.bf16 %v2654, %v2661
    %v2675 = vmul.bf16 %v2655, %v2659
    %v2676 = vmul.bf16 %v2656, %v2662
    %v2677 = vmul.bf16 %v2657, %v2661
    %s2678 = scalar_lea.vmem [#allocation8], 96
    %v2679 = vld [vmem:[%s2678] sm:$0xf]
    %v2680 = vld [vmem:[%s2678 + $0x4] sm:$0xf]
    %v2681 = vld [vmem:[%s2678 + $0x8] sm:$0xf]
    %v2682 = vld [vmem:[%s2678 + $0xc] sm:$0xf]
    %v2683 = vld [vmem:[%s2678 + $0x10] sm:$0xf]
    %v2684 = vld [vmem:[%s2678 + $0x14] sm:$0xf]
    %v2685 = vld [vmem:[%s2678 + $0x18] sm:$0xf]
    %v2686 = vld [vmem:[%s2678 + $0x1c] sm:$0xf]
    %v2695 = vunpack.c.l.b16 %v2679
    %v2696 = vunpack.c.l.b16 %v2680
    %v2697 = vunpack.c.l.b16 %v2681
    %v2698 = vunpack.c.l.b16 %v2682
    %v2699 = vunpack.c.l.b16 %v2683
    %v2700 = vunpack.c.l.b16 %v2684
    %v2701 = vunpack.c.l.b16 %v2685
    %v2702 = vunpack.c.l.b16 %v2686
    %v2703 = vpack.c.b16 %v2696, %v2695
    %v2704 = vpack.c.b16 %v2698, %v2697
    %v2705 = vpack.c.b16 %v2700, %v2699
    %v2706 = vpack.c.b16 %v2702, %v2701
    %2719 = vrot.lane.b32.xlu0 %v2666, 1
    %v2720 = vpop.permute.xlu0 %2719
    %2721 = vrot.lane.b32.xlu0 %v2667, 1
    %v2722 = vpop.permute.xlu0 %2721
    %2723 = vrot.lane.b32.xlu0 %v2668, 1
    %v2724 = vpop.permute.xlu0 %2723
    %2725 = vrot.lane.b32.xlu0 %v2669, 1
    %v2726 = vpop.permute.xlu0 %2725
    %2727 = vrot.lane.b32.xlu0 %v2670, 1
    %v2728 = vpop.permute.xlu0 %2727
    %2729 = vrot.lane.b32.xlu0 %v2671, 1
    %v2730 = vpop.permute.xlu0 %2729
    %2731 = vrot.lane.b32.xlu0 %v2672, 1
    %v2732 = vpop.permute.xlu0 %2731
    %2733 = vrot.lane.b32.xlu0 %v2673, 1
    %v2734 = vpop.permute.xlu0 %2733
    %2735 = vrot.lane.b32.xlu0 %v2674, 1
    %v2736 = vpop.permute.xlu0 %2735
    %2737 = vrot.lane.b32.xlu0 %v2675, 1
    %v2738 = vpop.permute.xlu0 %2737
    %2739 = vrot.lane.b32.xlu0 %v2676, 1
    %v2740 = vpop.permute.xlu0 %2739
    %2741 = vrot.lane.b32.xlu0 %v2677, 1
    %v2742 = vpop.permute.xlu0 %2741
    %v2743 = vsel %vm856, %v2720, %v2722
    %v2744 = vsel %vm856, %v2722, %v2724
    %v2745 = vsel %vm856, %v2726, %v2728
    %v2746 = vsel %vm856, %v2728, %v2730
    %v2747 = vsel %vm856, %v2732, %v2734
    %v2748 = vsel %vm856, %v2734, %v2736
    %v2749 = vsel %vm856, %v2738, %v2740
    %v2750 = vsel %vm856, %v2740, %v2742
    %v2760 = vsel %vm269, %v2703, 0
    %v2763 = vsel %vm269, %v2704, 0
    %v2766 = vsel %vm269, %v2705, 0
    %v2769 = vsel %vm269, %v2706, 0
    %2771 = vmatprep.subr.bf16.mxu0 %v2744
    %2772 = vmatpush1.bf16.msra.mxu0 %v2743
    %2773 = vmatprep.subr.bf16.mxu0 %v2746
    %2774 = vmatpush1.bf16.msra.mxu0 %v2745
    %2775 = vmatprep.subr.bf16.mxu0 %v2748
    %2776 = vmatpush1.bf16.msra.mxu0 %v2747
    %2777 = vmatprep.subr.bf16.mxu0 %v2750
    %2778 = vmatpush1.bf16.msra.mxu0 %v2749
    %2779 = vmatprep.subr.bf16.mxu0 0
    %2780 = vmatpush1.bf16.msra.mxu0 0
    %2781 = vmatprep.subr.bf16.mxu0 0
    %2782 = vmatpush1.bf16.msra.mxu0 0
    %2783 = vmatprep.subr.bf16.mxu0 0
    %2784 = vmatpush1.bf16.msra.mxu0 0
    %2785 = vmatprep.subr.bf16.mxu0 0
    %2786 = vmatpush1.bf16.msra.mxu0 0
    %2787 = vmatprep.subr.bf16.mxu0 0
    %2788 = vmatpush1.bf16.msra.mxu0 0
    %2789 = vmatprep.subr.bf16.mxu0 0
    %2790 = vmatpush1.bf16.msra.mxu0 0
    %2791 = vmatprep.subr.bf16.mxu0 0
    %2792 = vmatpush1.bf16.msra.mxu0 0
    %2793 = vmatprep.subr.bf16.mxu0 0
    %2794 = vmatpush1.bf16.msra.mxu0 0
    %2795 = vmatprep.subr.bf16.mxu0 0
    %2796 = vmatpush1.bf16.msra.mxu0 0
    %2797 = vmatprep.subr.bf16.mxu0 0
    %2798 = vmatpush1.bf16.msra.mxu0 0
    %2799 = vmatprep.subr.bf16.mxu0 0
    %2800 = vmatpush1.bf16.msra.mxu0 0
    %2801 = vmatprep.subr.bf16.mxu0 0
    %2802 = vmatpush1.bf16.msra.mxu0 0
    %2803 = vmatprep.mubr.bf16.mxu0 0
    %2804 = vmatmul.mubr.bf16.gmra.mrb[0].mxu0 %v2760
    %v2805 = vpop.f32.mrb[0].mxu0
    %v2806 = vadd.f32 0.0, %v2805
    %v2807 = vpop.f32.mrb[0].mxu0
    %v2808 = vadd.f32 0.0, %v2807
    %v2809 = vpop.f32.mrb[0].mxu0
    %v2810 = vadd.f32 0.0, %v2809
    %v2811 = vpop.f32.mrb[0].mxu0
    %v2812 = vadd.f32 0.0, %v2811
    %2813 = vmatprep.mubr.bf16.mxu0 0
    %2814 = vmatmul.mubr.bf16.gmra.mrb[0].mxu0 %v2763
    %v2815 = vpop.f32.mrb[0].mxu0
    %v2816 = vadd.f32 0.0, %v2815
    %v2817 = vpop.f32.mrb[0].mxu0
    %v2818 = vadd.f32 0.0, %v2817
    %v2819 = vpop.f32.mrb[0].mxu0
    %v2820 = vadd.f32 0.0, %v2819
    %v2821 = vpop.f32.mrb[0].mxu0
    %v2822 = vadd.f32 0.0, %v2821
    %2823 = vmatprep.mubr.bf16.mxu0 0
    %2824 = vmatmul.mubr.bf16.gmra.mrb[0].mxu0 %v2766
    %v2825 = vpop.f32.mrb[0].mxu0
    %v2826 = vadd.f32 0.0, %v2825
    %v2827 = vpop.f32.mrb[0].mxu0
    %v2828 = vadd.f32 0.0, %v2827
    %v2829 = vpop.f32.mrb[0].mxu0
    %v2830 = vadd.f32 0.0, %v2829
    %v2831 = vpop.f32.mrb[0].mxu0
    %v2832 = vadd.f32 0.0, %v2831
    %2833 = vmatprep.mubr.bf16.mxu0 0
    %2834 = vmatmul.mubr.bf16.gmra.mrb[0].mxu0 %v2769
    %v2835 = vpop.f32.mrb[0].mxu0
    %v2836 = vadd.f32 0.0, %v2835
    %v2837 = vpop.f32.mrb[0].mxu0
    %v2838 = vadd.f32 0.0, %v2837
    %v2839 = vpop.f32.mrb[0].mxu0
    %v2840 = vadd.f32 0.0, %v2839
    %v2841 = vpop.f32.mrb[0].mxu0
    %v2842 = vadd.f32 0.0, %v2841
    %2843 = vdwg.mxu0
    %v2844 = vadd.f32 %v2630, %v2806
    %v2845 = vadd.f32 %v2631, %v2808
    %v2846 = vadd.f32 %v2632, %v2810
    %v2847 = vadd.f32 %v2633, %v2812
    %v2848 = vadd.f32 %v2634, %v2816
    %v2849 = vadd.f32 %v2635, %v2818
    %v2850 = vadd.f32 %v2636, %v2820
    %v2851 = vadd.f32 %v2637, %v2822
    %v2852 = vadd.f32 %v2638, %v2826
    %v2853 = vadd.f32 %v2639, %v2828
    %v2854 = vadd.f32 %v2640, %v2830
    %v2855 = vadd.f32 %v2641, %v2832
    %v2856 = vadd.f32 %v2642, %v2836
    %v2857 = vadd.f32 %v2643, %v2838
    %v2858 = vadd.f32 %v2644, %v2840
    %v2859 = vadd.f32 %v2645, %v2842
    %s2860 = scalar_lea.vmem [#allocation8], 128
    %v2861 = vld [vmem:[%s2860] sm:$0xf]
    %v2862 = vld [vmem:[%s2860 + $0x4] sm:$0xf]
    %v2863 = vld [vmem:[%s2860 + $0x8] sm:$0xf]
    %v2864 = vld [vmem:[%s2860 + $0xc] sm:$0xf]
    %v2865 = vld [vmem:[%s2860 + $0x10] sm:$0xf]
    %v2866 = vld [vmem:[%s2860 + $0x14] sm:$0xf]
    %v2867 = vld [vmem:[%s2860 + $0x18] sm:$0xf]
    %v2868 = vld [vmem:[%s2860 + $0x1c] sm:$0xf]
    %v2877 = vunpack.c.l.b16 %v2861
    %v2878 = vunpack.c.l.b16 %v2862
    %v2879 = vunpack.c.l.b16 %v2863
    %v2880 = vunpack.c.l.b16 %v2864
    %v2881 = vunpack.c.l.b16 %v2865
    %v2882 = vunpack.c.l.b16 %v2866
    %v2883 = vunpack.c.l.b16 %v2867
    %v2884 = vunpack.c.l.b16 %v2868
    %v2885 = vpack.c.b16 %v2878, %v2877
    %v2886 = vpack.c.b16 %v2880, %v2879
    %v2887 = vpack.c.b16 %v2882, %v2881
    %v2888 = vpack.c.b16 %v2884, %v2883
    %v2890 = vsel %vm269, %v2885, 0
    %v2893 = vsel %vm269, %v2886, 0
    %v2896 = vsel %vm269, %v2887, 0
    %v2899 = vsel %vm269, %v2888, 0
    %2901 = vmatprep.subr.bf16.mxu0 %v2648
    %2902 = vmatpush1.bf16.msra.mxu0 %v2647
    %2903 = vmatprep.subr.bf16.mxu0 %v2651
    %2904 = vmatpush1.bf16.msra.mxu0 %v2650
    %2905 = vmatprep.subr.bf16.mxu0 %v2654
    %2906 = vmatpush1.bf16.msra.mxu0 %v2653
    %2907 = vmatprep.subr.bf16.mxu0 %v2657
    %2908 = vmatpush1.bf16.msra.mxu0 %v2656
    %2909 = vmatprep.subr.bf16.mxu0 0
    %2910 = vmatpush1.bf16.msra.mxu0 0
    %2911 = vmatprep.subr.bf16.mxu0 0
    %2912 = vmatpush1.bf16.msra.mxu0 0
    %2913 = vmatprep.subr.bf16.mxu0 0
    %2914 = vmatpush1.bf16.msra.mxu0 0
    %2915 = vmatprep.subr.bf16.mxu0 0
    %2916 = vmatpush1.bf16.msra.mxu0 0
    %2917 = vmatprep.subr.bf16.mxu0 0
    %2918 = vmatpush1.bf16.msra.mxu0 0
    %2919 = vmatprep.subr.bf16.mxu0 0
    %2920 = vmatpush1.bf16.msra.mxu0 0
    %2921 = vmatprep.subr.bf16.mxu0 0
    %2922 = vmatpush1.bf16.msra.mxu0 0
    %2923 = vmatprep.subr.bf16.mxu0 0
    %2924 = vmatpush1.bf16.msra.mxu0 0
    %2925 = vmatprep.subr.bf16.mxu0 0
    %2926 = vmatpush1.bf16.msra.mxu0 0
    %2927 = vmatprep.subr.bf16.mxu0 0
    %2928 = vmatpush1.bf16.msra.mxu0 0
    %2929 = vmatprep.subr.bf16.mxu0 0
    %2930 = vmatpush1.bf16.msra.mxu0 0
    %2931 = vmatprep.subr.bf16.mxu0 0
    %2932 = vmatpush1.bf16.msra.mxu0 0
    %2933 = vmatprep.mubr.bf16.mxu0 0
    %2934 = vmatmul.mubr.bf16.gmra.mrb[0].mxu0 %v2890
    %v2935 = vpop.f32.mrb[0].mxu0
    %v2936 = vadd.f32 0.0, %v2935
    %v2937 = vpop.f32.mrb[0].mxu0
    %v2938 = vadd.f32 0.0, %v2937
    %v2939 = vpop.f32.mrb[0].mxu0
    %v2940 = vadd.f32 0.0, %v2939
    %v2941 = vpop.f32.mrb[0].mxu0
    %v2942 = vadd.f32 0.0, %v2941
    %2943 = vmatprep.mubr.bf16.mxu0 0
    %2944 = vmatmul.mubr.bf16.gmra.mrb[0].mxu0 %v2893
    %v2945 = vpop.f32.mrb[0].mxu0
    %v2946 = vadd.f32 0.0, %v2945
    %v2947 = vpop.f32.mrb[0].mxu0
    %v2948 = vadd.f32 0.0, %v2947
    %v2949 = vpop.f32.mrb[0].mxu0
    %v2950 = vadd.f32 0.0, %v2949
    %v2951 = vpop.f32.mrb[0].mxu0
    %v2952 = vadd.f32 0.0, %v2951
    %2953 = vmatprep.mubr.bf16.mxu0 0
    %2954 = vmatmul.mubr.bf16.gmra.mrb[0].mxu0 %v2896
    %v2955 = vpop.f32.mrb[0].mxu0
    %v2956 = vadd.f32 0.0, %v2955
    %v2957 = vpop.f32.mrb[0].mxu0
    %v2958 = vadd.f32 0.0, %v2957
    %v2959 = vpop.f32.mrb[0].mxu0
    %v2960 = vadd.f32 0.0, %v2959
    %v2961 = vpop.f32.mrb[0].mxu0
    %v2962 = vadd.f32 0.0, %v2961
    %2963 = vmatprep.mubr.bf16.mxu0 0
    %2964 = vmatmul.mubr.bf16.gmra.mrb[0].mxu0 %v2899
    %v2965 = vpop.f32.mrb[0].mxu0
    %v2966 = vadd.f32 0.0, %v2965
    %v2967 = vpop.f32.mrb[0].mxu0
    %v2968 = vadd.f32 0.0, %v2967
    %v2969 = vpop.f32.mrb[0].mxu0
    %v2970 = vadd.f32 0.0, %v2969
    %v2971 = vpop.f32.mrb[0].mxu0
    %v2972 = vadd.f32 0.0, %v2971
    %2973 = vdwg.mxu0
    %v2974 = vadd.f32 %v2844, %v2936
    %v2975 = vadd.f32 %v2845, %v2938
    %v2976 = vadd.f32 %v2846, %v2940
    %v2977 = vadd.f32 %v2847, %v2942
    %v2978 = vadd.f32 %v2848, %v2946
    %v2979 = vadd.f32 %v2849, %v2948
    %v2980 = vadd.f32 %v2850, %v2950
    %v2981 = vadd.f32 %v2851, %v2952
    %v2982 = vadd.f32 %v2852, %v2956
    %v2983 = vadd.f32 %v2853, %v2958
    %v2984 = vadd.f32 %v2854, %v2960
    %v2985 = vadd.f32 %v2855, %v2962
    %v2986 = vadd.f32 %v2856, %v2966
    %v2987 = vadd.f32 %v2857, %v2968
    %v2988 = vadd.f32 %v2858, %v2970
    %v2989 = vadd.f32 %v2859, %v2972
    %v2990 = vld [vmem:[#allocation2 + $0x8] sm:$0xff]
    %v2991 = vld [vmem:[#allocation2 + $0x10] sm:$0xff]
    %v2992 = vld [vmem:[#allocation2 + $0x18] sm:$0xff]
    %v2993 = vld [vmem:[#allocation2 + $0x28] sm:$0xff]
    %v2994 = vld [vmem:[#allocation2 + $0x30] sm:$0xff]
    %v2995 = vld [vmem:[#allocation2 + $0x38] sm:$0xff]
    %v2996 = vld [vmem:[#allocation2 + $0x48] sm:$0xff]
    %v2997 = vld [vmem:[#allocation2 + $0x50] sm:$0xff]
    %v2998 = vld [vmem:[#allocation2 + $0x58] sm:$0xff]
    %v2999 = vld [vmem:[#allocation2 + $0x68] sm:$0xff]
    %v3000 = vld [vmem:[#allocation2 + $0x70] sm:$0xff]
    %v3001 = vld [vmem:[#allocation2 + $0x78] sm:$0xff]
    %3002 = vrot.lane.b32.xlu0 %v2434, 1
    %v3003 = vpop.permute.xlu0 %3002
    %3004 = vrot.lane.b32.xlu0 %v2441, 1
    %v3005 = vpop.permute.xlu0 %3004
    %v3006 = vsel %vm856, %v3003, %v3005
    %v3010 = vmul.bf16 %v2990, %v3003
    %v3011 = vmul.bf16 %v2991, %v3006
    %v3012 = vmul.bf16 %v2992, %v3005
    %v3013 = vmul.bf16 %v2993, %v3003
    %v3014 = vmul.bf16 %v2994, %v3006
    %v3015 = vmul.bf16 %v2995, %v3005
    %v3016 = vmul.bf16 %v2996, %v3003
    %v3017 = vmul.bf16 %v2997, %v3006
    %v3018 = vmul.bf16 %v2998, %v3005
    %v3019 = vmul.bf16 %v2999, %v3003
    %v3020 = vmul.bf16 %v3000, %v3006
    %v3021 = vmul.bf16 %v3001, %v3005
    %s3022 = scalar_lea.vmem [#allocation8], 160
    %v3023 = vld [vmem:[%s3022] sm:$0xf]
    %v3024 = vld [vmem:[%s3022 + $0x4] sm:$0xf]
    %v3025 = vld [vmem:[%s3022 + $0x8] sm:$0xf]
    %v3026 = vld [vmem:[%s3022 + $0xc] sm:$0xf]
    %v3027 = vld [vmem:[%s3022 + $0x10] sm:$0xf]
    %v3028 = vld [vmem:[%s3022 + $0x14] sm:$0xf]
    %v3029 = vld [vmem:[%s3022 + $0x18] sm:$0xf]
    %v3030 = vld [vmem:[%s3022 + $0x1c] sm:$0xf]
    %v3039 = vunpack.c.l.b16 %v3023
    %v3040 = vunpack.c.l.b16 %v3024
    %v3041 = vunpack.c.l.b16 %v3025
    %v3042 = vunpack.c.l.b16 %v3026
    %v3043 = vunpack.c.l.b16 %v3027
    %v3044 = vunpack.c.l.b16 %v3028
    %v3045 = vunpack.c.l.b16 %v3029
    %v3046 = vunpack.c.l.b16 %v3030
    %v3047 = vpack.c.b16 %v3040, %v3039
    %v3048 = vpack.c.b16 %v3042, %v3041
    %v3049 = vpack.c.b16 %v3044, %v3043
    %v3050 = vpack.c.b16 %v3046, %v3045
    %3063 = vrot.lane.b32.xlu0 %v3010, 127
    %v3064 = vpop.permute.xlu0 %3063
    %3065 = vrot.lane.b32.xlu0 %v3011, 127
    %v3066 = vpop.permute.xlu0 %3065
    %3067 = vrot.lane.b32.xlu0 %v3012, 127
    %v3068 = vpop.permute.xlu0 %3067
    %3069 = vrot.lane.b32.xlu0 %v3013, 127
    %v3070 = vpop.permute.xlu0 %3069
    %3071 = vrot.lane.b32.xlu0 %v3014, 127
    %v3072 = vpop.permute.xlu0 %3071
    %3073 = vrot.lane.b32.xlu0 %v3015, 127
    %v3074 = vpop.permute.xlu0 %3073
    %3075 = vrot.lane.b32.xlu0 %v3016, 127
    %v3076 = vpop.permute.xlu0 %3075
    %3077 = vrot.lane.b32.xlu0 %v3017, 127
    %v3078 = vpop.permute.xlu0 %3077
    %3079 = vrot.lane.b32.xlu0 %v3018, 127
    %v3080 = vpop.permute.xlu0 %3079
    %3081 = vrot.lane.b32.xlu0 %v3019, 127
    %v3082 = vpop.permute.xlu0 %3081
    %3083 = vrot.lane.b32.xlu0 %v3020, 127
    %v3084 = vpop.permute.xlu0 %3083
    %3085 = vrot.lane.b32.xlu0 %v3021, 127
    %v3086 = vpop.permute.xlu0 %3085
    %v3087 = vsel %vm774, %v3064, %v3066
    %v3088 = vsel %vm774, %v3066, %v3068
    %v3089 = vsel %vm774, %v3070, %v3072
    %v3090 = vsel %vm774, %v3072, %v3074
    %v3091 = vsel %vm774, %v3076, %v3078
    %v3092 = vsel %vm774, %v3078, %v3080
    %v3093 = vsel %vm774, %v3082, %v3084
    %v3094 = vsel %vm774, %v3084, %v3086
    %v3104 = vsel %vm269, %v3047, 0
    %v3107 = vsel %vm269, %v3048, 0
    %v3110 = vsel %vm269, %v3049, 0
    %v3113 = vsel %vm269, %v3050, 0
    %3115 = vmatprep.subr.bf16.mxu0 %v3088
    %3116 = vmatpush1.bf16.msra.mxu0 %v3087
    %3117 = vmatprep.subr.bf16.mxu0 %v3090
    %3118 = vmatpush1.bf16.msra.mxu0 %v3089
    %3119 = vmatprep.subr.bf16.mxu0 %v3092
    %3120 = vmatpush1.bf16.msra.mxu0 %v3091
    %3121 = vmatprep.subr.bf16.mxu0 %v3094
    %3122 = vmatpush1.bf16.msra.mxu0 %v3093
    %3123 = vmatprep.subr.bf16.mxu0 0
    %3124 = vmatpush1.bf16.msra.mxu0 0
    %3125 = vmatprep.subr.bf16.mxu0 0
    %3126 = vmatpush1.bf16.msra.mxu0 0
    %3127 = vmatprep.subr.bf16.mxu0 0
    %3128 = vmatpush1.bf16.msra.mxu0 0
    %3129 = vmatprep.subr.bf16.mxu0 0
    %3130 = vmatpush1.bf16.msra.mxu0 0
    %3131 = vmatprep.subr.bf16.mxu0 0
    %3132 = vmatpush1.bf16.msra.mxu0 0
    %3133 = vmatprep.subr.bf16.mxu0 0
    %3134 = vmatpush1.bf16.msra.mxu0 0
    %3135 = vmatprep.subr.bf16.mxu0 0
    %3136 = vmatpush1.bf16.msra.mxu0 0
    %3137 = vmatprep.subr.bf16.mxu0 0
    %3138 = vmatpush1.bf16.msra.mxu0 0
    %3139 = vmatprep.subr.bf16.mxu0 0
    %3140 = vmatpush1.bf16.msra.mxu0 0
    %3141 = vmatprep.subr.bf16.mxu0 0
    %3142 = vmatpush1.bf16.msra.mxu0 0
    %3143 = vmatprep.subr.bf16.mxu0 0
    %3144 = vmatpush1.bf16.msra.mxu0 0
    %3145 = vmatprep.subr.bf16.mxu0 0
    %3146 = vmatpush1.bf16.msra.mxu0 0
    %3147 = vmatprep.mubr.bf16.mxu0 0
    %3148 = vmatmul.mubr.bf16.gmra.mrb[0].mxu0 %v3104
    %v3149 = vpop.f32.mrb[0].mxu0
    %v3150 = vadd.f32 0.0, %v3149
    %v3151 = vpop.f32.mrb[0].mxu0
    %v3152 = vadd.f32 0.0, %v3151
    %v3153 = vpop.f32.mrb[0].mxu0
    %v3154 = vadd.f32 0.0, %v3153
    %v3155 = vpop.f32.mrb[0].mxu0
    %v3156 = vadd.f32 0.0, %v3155
    %3157 = vmatprep.mubr.bf16.mxu0 0
    %3158 = vmatmul.mubr.bf16.gmra.mrb[0].mxu0 %v3107
    %v3159 = vpop.f32.mrb[0].mxu0
    %v3160 = vadd.f32 0.0, %v3159
    %v3161 = vpop.f32.mrb[0].mxu0
    %v3162 = vadd.f32 0.0, %v3161
    %v3163 = vpop.f32.mrb[0].mxu0
    %v3164 = vadd.f32 0.0, %v3163
    %v3165 = vpop.f32.mrb[0].mxu0
    %v3166 = vadd.f32 0.0, %v3165
    %3167 = vmatprep.mubr.bf16.mxu0 0
    %3168 = vmatmul.mubr.bf16.gmra.mrb[0].mxu0 %v3110
    %v3169 = vpop.f32.mrb[0].mxu0
    %v3170 = vadd.f32 0.0, %v3169
    %v3171 = vpop.f32.mrb[0].mxu0
    %v3172 = vadd.f32 0.0, %v3171
    %v3173 = vpop.f32.mrb[0].mxu0
    %v3174 = vadd.f32 0.0, %v3173
    %v3175 = vpop.f32.mrb[0].mxu0
    %v3176 = vadd.f32 0.0, %v3175
    %3177 = vmatprep.mubr.bf16.mxu0 0
    %3178 = vmatmul.mubr.bf16.gmra.mrb[0].mxu0 %v3113
    %v3179 = vpop.f32.mrb[0].mxu0
    %v3180 = vadd.f32 0.0, %v3179
    %v3181 = vpop.f32.mrb[0].mxu0
    %v3182 = vadd.f32 0.0, %v3181
    %v3183 = vpop.f32.mrb[0].mxu0
    %v3184 = vadd.f32 0.0, %v3183
    %v3185 = vpop.f32.mrb[0].mxu0
    %v3186 = vadd.f32 0.0, %v3185
    %3187 = vdwg.mxu0
    %v3188 = vadd.f32 %v2974, %v3150
    %v3189 = vadd.f32 %v2975, %v3152
    %v3190 = vadd.f32 %v2976, %v3154
    %v3191 = vadd.f32 %v2977, %v3156
    %v3192 = vadd.f32 %v2978, %v3160
    %v3193 = vadd.f32 %v2979, %v3162
    %v3194 = vadd.f32 %v2980, %v3164
    %v3195 = vadd.f32 %v2981, %v3166
    %v3196 = vadd.f32 %v2982, %v3170
    %v3197 = vadd.f32 %v2983, %v3172
    %v3198 = vadd.f32 %v2984, %v3174
    %v3199 = vadd.f32 %v2985, %v3176
    %v3200 = vadd.f32 %v2986, %v3180
    %v3201 = vadd.f32 %v2987, %v3182
    %v3202 = vadd.f32 %v2988, %v3184
    %v3203 = vadd.f32 %v2989, %v3186
    %3204 = vrot.lane.b32.xlu0 %v2043, 15
    %v3205 = vpop.permute.xlu0 %3204
    %3206 = vrot.lane.b32.xlu0 %v2050, 15
    %v3207 = vpop.permute.xlu0 %3206
    %v3208 = vsel %vm640, %v3205, %v3207
    %v3212 = vmul.bf16 %v2990, %v3205
    %v3213 = vmul.bf16 %v2991, %v3208
    %v3214 = vmul.bf16 %v2992, %v3207
    %v3215 = vmul.bf16 %v2993, %v3205
    %v3216 = vmul.bf16 %v2994, %v3208
    %v3217 = vmul.bf16 %v2995, %v3207
    %v3218 = vmul.bf16 %v2996, %v3205
    %v3219 = vmul.bf16 %v2997, %v3208
    %v3220 = vmul.bf16 %v2998, %v3207
    %v3221 = vmul.bf16 %v2999, %v3205
    %v3222 = vmul.bf16 %v3000, %v3208
    %v3223 = vmul.bf16 %v3001, %v3207
    %s3224 = scalar_lea.vmem [#allocation8], 192
    %v3225 = vld [vmem:[%s3224] sm:$0xf]
    %v3226 = vld [vmem:[%s3224 + $0x4] sm:$0xf]
    %v3227 = vld [vmem:[%s3224 + $0x8] sm:$0xf]
    %v3228 = vld [vmem:[%s3224 + $0xc] sm:$0xf]
    %v3229 = vld [vmem:[%s3224 + $0x10] sm:$0xf]
    %v3230 = vld [vmem:[%s3224 + $0x14] sm:$0xf]
    %v3231 = vld [vmem:[%s3224 + $0x18] sm:$0xf]
    %v3232 = vld [vmem:[%s3224 + $0x1c] sm:$0xf]
    %v3241 = vunpack.c.l.b16 %v3225
    %v3242 = vunpack.c.l.b16 %v3226
    %v3243 = vunpack.c.l.b16 %v3227
    %v3244 = vunpack.c.l.b16 %v3228
    %v3245 = vunpack.c.l.b16 %v3229
    %v3246 = vunpack.c.l.b16 %v3230
    %v3247 = vunpack.c.l.b16 %v3231
    %v3248 = vunpack.c.l.b16 %v3232
    %v3249 = vpack.c.b16 %v3242, %v3241
    %v3250 = vpack.c.b16 %v3244, %v3243
    %v3251 = vpack.c.b16 %v3246, %v3245
    %v3252 = vpack.c.b16 %v3248, %v3247
    %3265 = vrot.lane.b32.xlu0 %v3212, 113
    %v3266 = vpop.permute.xlu0 %3265
    %3267 = vrot.lane.b32.xlu0 %v3213, 113
    %v3268 = vpop.permute.xlu0 %3267
    %3269 = vrot.lane.b32.xlu0 %v3214, 113
    %v3270 = vpop.permute.xlu0 %3269
    %3271 = vrot.lane.b32.xlu0 %v3215, 113
    %v3272 = vpop.permute.xlu0 %3271
    %3273 = vrot.lane.b32.xlu0 %v3216, 113
    %v3274 = vpop.permute.xlu0 %3273
    %3275 = vrot.lane.b32.xlu0 %v3217, 113
    %v3276 = vpop.permute.xlu0 %3275
    %3277 = vrot.lane.b32.xlu0 %v3218, 113
    %v3278 = vpop.permute.xlu0 %3277
    %3279 = vrot.lane.b32.xlu0 %v3219, 113
    %v3280 = vpop.permute.xlu0 %3279
    %3281 = vrot.lane.b32.xlu0 %v3220, 113
    %v3282 = vpop.permute.xlu0 %3281
    %3283 = vrot.lane.b32.xlu0 %v3221, 113
    %v3284 = vpop.permute.xlu0 %3283
    %3285 = vrot.lane.b32.xlu0 %v3222, 113
    %v3286 = vpop.permute.xlu0 %3285
    %3287 = vrot.lane.b32.xlu0 %v3223, 113
    %v3288 = vpop.permute.xlu0 %3287
    %v3289 = vsel %vm558, %v3266, %v3268
    %v3290 = vsel %vm558, %v3268, %v3270
    %v3291 = vsel %vm558, %v3272, %v3274
    %v3292 = vsel %vm558, %v3274, %v3276
    %v3293 = vsel %vm558, %v3278, %v3280
    %v3294 = vsel %vm558, %v3280, %v3282
    %v3295 = vsel %vm558, %v3284, %v3286
    %v3296 = vsel %vm558, %v3286, %v3288
    %v3306 = vsel %vm269, %v3249, 0
    %v3309 = vsel %vm269, %v3250, 0
    %v3312 = vsel %vm269, %v3251, 0
    %v3315 = vsel %vm269, %v3252, 0
    %3317 = vmatprep.subr.bf16.mxu0 %v3290
    %3318 = vmatpush1.bf16.msra.mxu0 %v3289
    %3319 = vmatprep.subr.bf16.mxu0 %v3292
    %3320 = vmatpush1.bf16.msra.mxu0 %v3291
    %3321 = vmatprep.subr.bf16.mxu0 %v3294
    %3322 = vmatpush1.bf16.msra.mxu0 %v3293
    %3323 = vmatprep.subr.bf16.mxu0 %v3296
    %3324 = vmatpush1.bf16.msra.mxu0 %v3295
    %3325 = vmatprep.subr.bf16.mxu0 0
    %3326 = vmatpush1.bf16.msra.mxu0 0
    %3327 = vmatprep.subr.bf16.mxu0 0
    %3328 = vmatpush1.bf16.msra.mxu0 0
    %3329 = vmatprep.subr.bf16.mxu0 0
    %3330 = vmatpush1.bf16.msra.mxu0 0
    %3331 = vmatprep.subr.bf16.mxu0 0
    %3332 = vmatpush1.bf16.msra.mxu0 0
    %3333 = vmatprep.subr.bf16.mxu0 0
    %3334 = vmatpush1.bf16.msra.mxu0 0
    %3335 = vmatprep.subr.bf16.mxu0 0
    %3336 = vmatpush1.bf16.msra.mxu0 0
    %3337 = vmatprep.subr.bf16.mxu0 0
    %3338 = vmatpush1.bf16.msra.mxu0 0
    %3339 = vmatprep.subr.bf16.mxu0 0
    %3340 = vmatpush1.bf16.msra.mxu0 0
    %3341 = vmatprep.subr.bf16.mxu0 0
    %3342 = vmatpush1.bf16.msra.mxu0 0
    %3343 = vmatprep.subr.bf16.mxu0 0
    %3344 = vmatpush1.bf16.msra.mxu0 0
    %3345 = vmatprep.subr.bf16.mxu0 0
    %3346 = vmatpush1.bf16.msra.mxu0 0
    %3347 = vmatprep.subr.bf16.mxu0 0
    %3348 = vmatpush1.bf16.msra.mxu0 0
    %3349 = vmatprep.mubr.bf16.mxu0 0
    %3350 = vmatmul.mubr.bf16.gmra.mrb[0].mxu0 %v3306
    %v3351 = vpop.f32.mrb[0].mxu0
    %v3352 = vadd.f32 0.0, %v3351
    %v3353 = vpop.f32.mrb[0].mxu0
    %v3354 = vadd.f32 0.0, %v3353
    %v3355 = vpop.f32.mrb[0].mxu0
    %v3356 = vadd.f32 0.0, %v3355
    %v3357 = vpop.f32.mrb[0].mxu0
    %v3358 = vadd.f32 0.0, %v3357
    %3359 = vmatprep.mubr.bf16.mxu0 0
    %3360 = vmatmul.mubr.bf16.gmra.mrb[0].mxu0 %v3309
    %v3361 = vpop.f32.mrb[0].mxu0
    %v3362 = vadd.f32 0.0, %v3361
    %v3363 = vpop.f32.mrb[0].mxu0
    %v3364 = vadd.f32 0.0, %v3363
    %v3365 = vpop.f32.mrb[0].mxu0
    %v3366 = vadd.f32 0.0, %v3365
    %v3367 = vpop.f32.mrb[0].mxu0
    %v3368 = vadd.f32 0.0, %v3367
    %3369 = vmatprep.mubr.bf16.mxu0 0
    %3370 = vmatmul.mubr.bf16.gmra.mrb[0].mxu0 %v3312
    %v3371 = vpop.f32.mrb[0].mxu0
    %v3372 = vadd.f32 0.0, %v3371
    %v3373 = vpop.f32.mrb[0].mxu0
    %v3374 = vadd.f32 0.0, %v3373
    %v3375 = vpop.f32.mrb[0].mxu0
    %v3376 = vadd.f32 0.0, %v3375
    %v3377 = vpop.f32.mrb[0].mxu0
    %v3378 = vadd.f32 0.0, %v3377
    %3379 = vmatprep.mubr.bf16.mxu0 0
    %3380 = vmatmul.mubr.bf16.gmra.mrb[0].mxu0 %v3315
    %v3381 = vpop.f32.mrb[0].mxu0
    %v3382 = vadd.f32 0.0, %v3381
    %v3383 = vpop.f32.mrb[0].mxu0
    %v3384 = vadd.f32 0.0, %v3383
    %v3385 = vpop.f32.mrb[0].mxu0
    %v3386 = vadd.f32 0.0, %v3385
    %v3387 = vpop.f32.mrb[0].mxu0
    %v3388 = vadd.f32 0.0, %v3387
    %3389 = vdwg.mxu0
    %v3390 = vadd.f32 %v3188, %v3352
    %v3391 = vadd.f32 %v3189, %v3354
    %v3392 = vadd.f32 %v3190, %v3356
    %v3393 = vadd.f32 %v3191, %v3358
    %v3394 = vadd.f32 %v3192, %v3362
    %v3395 = vadd.f32 %v3193, %v3364
    %v3396 = vadd.f32 %v3194, %v3366
    %v3397 = vadd.f32 %v3195, %v3368
    %v3398 = vadd.f32 %v3196, %v3372
    %v3399 = vadd.f32 %v3197, %v3374
    %v3400 = vadd.f32 %v3198, %v3376
    %v3401 = vadd.f32 %v3199, %v3378
    %v3402 = vadd.f32 %v3200, %v3382
    %v3403 = vadd.f32 %v3201, %v3384
    %v3404 = vadd.f32 %v3202, %v3386
    %v3405 = vadd.f32 %v3203, %v3388
    %s3406 = scalar_lea.vmem [#allocation8], 224
    %v3407 = vld [vmem:[%s3406] sm:$0xf]
    %v3408 = vld [vmem:[%s3406 + $0x4] sm:$0xf]
    %v3409 = vld [vmem:[%s3406 + $0x8] sm:$0xf]
    %v3410 = vld [vmem:[%s3406 + $0xc] sm:$0xf]
    %v3411 = vld [vmem:[%s3406 + $0x10] sm:$0xf]
    %v3412 = vld [vmem:[%s3406 + $0x14] sm:$0xf]
    %v3413 = vld [vmem:[%s3406 + $0x18] sm:$0xf]
    %v3414 = vld [vmem:[%s3406 + $0x1c] sm:$0xf]
    %v3423 = vunpack.c.l.b16 %v3407
    %v3424 = vunpack.c.l.b16 %v3408
    %v3425 = vunpack.c.l.b16 %v3409
    %v3426 = vunpack.c.l.b16 %v3410
    %v3427 = vunpack.c.l.b16 %v3411
    %v3428 = vunpack.c.l.b16 %v3412
    %v3429 = vunpack.c.l.b16 %v3413
    %v3430 = vunpack.c.l.b16 %v3414
    %v3431 = vpack.c.b16 %v3424, %v3423
    %v3432 = vpack.c.b16 %v3426, %v3425
    %v3433 = vpack.c.b16 %v3428, %v3427
    %v3434 = vpack.c.b16 %v3430, %v3429
    %3447 = vrot.lane.b32.xlu0 %v2990, 112
    %v3448 = vpop.permute.xlu0 %3447
    %3449 = vrot.lane.b32.xlu0 %v2991, 112
    %v3450 = vpop.permute.xlu0 %3449
    %3451 = vrot.lane.b32.xlu0 %v2992, 112
    %v3452 = vpop.permute.xlu0 %3451
    %3453 = vrot.lane.b32.xlu0 %v2993, 112
    %v3454 = vpop.permute.xlu0 %3453
    %3455 = vrot.lane.b32.xlu0 %v2994, 112
    %v3456 = vpop.permute.xlu0 %3455
    %3457 = vrot.lane.b32.xlu0 %v2995, 112
    %v3458 = vpop.permute.xlu0 %3457
    %3459 = vrot.lane.b32.xlu0 %v2996, 112
    %v3460 = vpop.permute.xlu0 %3459
    %3461 = vrot.lane.b32.xlu0 %v2997, 112
    %v3462 = vpop.permute.xlu0 %3461
    %3463 = vrot.lane.b32.xlu0 %v2998, 112
    %v3464 = vpop.permute.xlu0 %3463
    %3465 = vrot.lane.b32.xlu0 %v2999, 112
    %v3466 = vpop.permute.xlu0 %3465
    %3467 = vrot.lane.b32.xlu0 %v3000, 112
    %v3468 = vpop.permute.xlu0 %3467
    %3469 = vrot.lane.b32.xlu0 %v3001, 112
    %v3470 = vpop.permute.xlu0 %3469
    %v3471 = vsel %vm1585, %v3448, %v3450
    %v3472 = vsel %vm1585, %v3450, %v3452
    %v3473 = vsel %vm1585, %v3454, %v3456
    %v3474 = vsel %vm1585, %v3456, %v3458
    %v3475 = vsel %vm1585, %v3460, %v3462
    %v3476 = vsel %vm1585, %v3462, %v3464
    %v3477 = vsel %vm1585, %v3466, %v3468
    %v3478 = vsel %vm1585, %v3468, %v3470
    %v3488 = vsel %vm269, %v3431, 0
    %v3491 = vsel %vm269, %v3432, 0
    %v3494 = vsel %vm269, %v3433, 0
    %v3497 = vsel %vm269, %v3434, 0
    %3499 = vmatprep.subr.bf16.mxu0 %v3472
    %3500 = vmatpush1.bf16.msra.mxu0 %v3471
    %3501 = vmatprep.subr.bf16.mxu0 %v3474
    %3502 = vmatpush1.bf16.msra.mxu0 %v3473
    %3503 = vmatprep.subr.bf16.mxu0 %v3476
    %3504 = vmatpush1.bf16.msra.mxu0 %v3475
    %3505 = vmatprep.subr.bf16.mxu0 %v3478
    %3506 = vmatpush1.bf16.msra.mxu0 %v3477
    %3507 = vmatprep.subr.bf16.mxu0 0
    %3508 = vmatpush1.bf16.msra.mxu0 0
    %3509 = vmatprep.subr.bf16.mxu0 0
    %3510 = vmatpush1.bf16.msra.mxu0 0
    %3511 = vmatprep.subr.bf16.mxu0 0
    %3512 = vmatpush1.bf16.msra.mxu0 0
    %3513 = vmatprep.subr.bf16.mxu0 0
    %3514 = vmatpush1.bf16.msra.mxu0 0
    %3515 = vmatprep.subr.bf16.mxu0 0
    %3516 = vmatpush1.bf16.msra.mxu0 0
    %3517 = vmatprep.subr.bf16.mxu0 0
    %3518 = vmatpush1.bf16.msra.mxu0 0
    %3519 = vmatprep.subr.bf16.mxu0 0
    %3520 = vmatpush1.bf16.msra.mxu0 0
    %3521 = vmatprep.subr.bf16.mxu0 0
    %3522 = vmatpush1.bf16.msra.mxu0 0
    %3523 = vmatprep.subr.bf16.mxu0 0
    %3524 = vmatpush1.bf16.msra.mxu0 0
    %3525 = vmatprep.subr.bf16.mxu0 0
    %3526 = vmatpush1.bf16.msra.mxu0 0
    %3527 = vmatprep.subr.bf16.mxu0 0
    %3528 = vmatpush1.bf16.msra.mxu0 0
    %3529 = vmatprep.subr.bf16.mxu0 0
    %3530 = vmatpush1.bf16.msra.mxu0 0
    %3531 = vmatprep.mubr.bf16.mxu0 0
    %3532 = vmatmul.mubr.bf16.gmra.mrb[0].mxu0 %v3488
    %v3533 = vpop.f32.mrb[0].mxu0
    %v3534 = vadd.f32 0.0, %v3533
    %v3535 = vpop.f32.mrb[0].mxu0
    %v3536 = vadd.f32 0.0, %v3535
    %v3537 = vpop.f32.mrb[0].mxu0
    %v3538 = vadd.f32 0.0, %v3537
    %v3539 = vpop.f32.mrb[0].mxu0
    %v3540 = vadd.f32 0.0, %v3539
    %3541 = vmatprep.mubr.bf16.mxu0 0
    %3542 = vmatmul.mubr.bf16.gmra.mrb[0].mxu0 %v3491
    %v3543 = vpop.f32.mrb[0].mxu0
    %v3544 = vadd.f32 0.0, %v3543
    %v3545 = vpop.f32.mrb[0].mxu0
    %v3546 = vadd.f32 0.0, %v3545
    %v3547 = vpop.f32.mrb[0].mxu0
    %v3548 = vadd.f32 0.0, %v3547
    %v3549 = vpop.f32.mrb[0].mxu0
    %v3550 = vadd.f32 0.0, %v3549
    %3551 = vmatprep.mubr.bf16.mxu0 0
    %3552 = vmatmul.mubr.bf16.gmra.mrb[0].mxu0 %v3494
    %v3553 = vpop.f32.mrb[0].mxu0
    %v3554 = vadd.f32 0.0, %v3553
    %v3555 = vpop.f32.mrb[0].mxu0
    %v3556 = vadd.f32 0.0, %v3555
    %v3557 = vpop.f32.mrb[0].mxu0
    %v3558 = vadd.f32 0.0, %v3557
    %v3559 = vpop.f32.mrb[0].mxu0
    %v3560 = vadd.f32 0.0, %v3559
    %3561 = vmatprep.mubr.bf16.mxu0 0
    %3562 = vmatmul.mubr.bf16.gmra.mrb[0].mxu0 %v3497
    %v3563 = vpop.f32.mrb[0].mxu0
    %v3564 = vadd.f32 0.0, %v3563
    %v3565 = vpop.f32.mrb[0].mxu0
    %v3566 = vadd.f32 0.0, %v3565
    %v3567 = vpop.f32.mrb[0].mxu0
    %v3568 = vadd.f32 0.0, %v3567
    %v3569 = vpop.f32.mrb[0].mxu0
    %v3570 = vadd.f32 0.0, %v3569
    %3571 = vdwg.mxu0
    %v3572 = vadd.f32 %v3390, %v3534
    %v3573 = vadd.f32 %v3391, %v3536
    %v3574 = vadd.f32 %v3392, %v3538
    %v3575 = vadd.f32 %v3393, %v3540
    %v3576 = vadd.f32 %v3394, %v3544
    %v3577 = vadd.f32 %v3395, %v3546
    %v3578 = vadd.f32 %v3396, %v3548
    %v3579 = vadd.f32 %v3397, %v3550
    %v3580 = vadd.f32 %v3398, %v3554
    %v3581 = vadd.f32 %v3399, %v3556
    %v3582 = vadd.f32 %v3400, %v3558
    %v3583 = vadd.f32 %v3401, %v3560
    %v3584 = vadd.f32 %v3402, %v3564
    %v3585 = vadd.f32 %v3403, %v3566
    %v3586 = vadd.f32 %v3404, %v3568
    %v3587 = vadd.f32 %v3405, %v3570
    %3588 = vrot.lane.b32.xlu0 %v2434, 17
    %v3589 = vpop.permute.xlu0 %3588
    %3590 = vrot.lane.b32.xlu0 %v2441, 17
    %v3591 = vpop.permute.xlu0 %3590
    %v3592 = vsel %vm411, %v3589, %v3591
    %v3596 = vmul.bf16 %v2990, %v3589
    %v3597 = vmul.bf16 %v2991, %v3592
    %v3598 = vmul.bf16 %v2992, %v3591
    %v3599 = vmul.bf16 %v2993, %v3589
    %v3600 = vmul.bf16 %v2994, %v3592
    %v3601 = vmul.bf16 %v2995, %v3591
    %v3602 = vmul.bf16 %v2996, %v3589
    %v3603 = vmul.bf16 %v2997, %v3592
    %v3604 = vmul.bf16 %v2998, %v3591
    %v3605 = vmul.bf16 %v2999, %v3589
    %v3606 = vmul.bf16 %v3000, %v3592
    %v3607 = vmul.bf16 %v3001, %v3591
    %s3608 = scalar_lea.vmem [#allocation8], 256
    %v3609 = vld [vmem:[%s3608] sm:$0xf]
    %v3610 = vld [vmem:[%s3608 + $0x4] sm:$0xf]
    %v3611 = vld [vmem:[%s3608 + $0x8] sm:$0xf]
    %v3612 = vld [vmem:[%s3608 + $0xc] sm:$0xf]
    %v3613 = vld [vmem:[%s3608 + $0x10] sm:$0xf]
    %v3614 = vld [vmem:[%s3608 + $0x14] sm:$0xf]
    %v3615 = vld [vmem:[%s3608 + $0x18] sm:$0xf]
    %v3616 = vld [vmem:[%s3608 + $0x1c] sm:$0xf]
    %v3625 = vunpack.c.l.b16 %v3609
    %v3626 = vunpack.c.l.b16 %v3610
    %v3627 = vunpack.c.l.b16 %v3611
    %v3628 = vunpack.c.l.b16 %v3612
    %v3629 = vunpack.c.l.b16 %v3613
    %v3630 = vunpack.c.l.b16 %v3614
    %v3631 = vunpack.c.l.b16 %v3615
    %v3632 = vunpack.c.l.b16 %v3616
    %v3633 = vpack.c.b16 %v3626, %v3625
    %v3634 = vpack.c.b16 %v3628, %v3627
    %v3635 = vpack.c.b16 %v3630, %v3629
    %v3636 = vpack.c.b16 %v3632, %v3631
    %3649 = vrot.lane.b32.xlu0 %v3596, 111
    %v3650 = vpop.permute.xlu0 %3649
    %3651 = vrot.lane.b32.xlu0 %v3597, 111
    %v3652 = vpop.permute.xlu0 %3651
    %3653 = vrot.lane.b32.xlu0 %v3598, 111
    %v3654 = vpop.permute.xlu0 %3653
    %3655 = vrot.lane.b32.xlu0 %v3599, 111
    %v3656 = vpop.permute.xlu0 %3655
    %3657 = vrot.lane.b32.xlu0 %v3600, 111
    %v3658 = vpop.permute.xlu0 %3657
    %3659 = vrot.lane.b32.xlu0 %v3601, 111
    %v3660 = vpop.permute.xlu0 %3659
    %3661 = vrot.lane.b32.xlu0 %v3602, 111
    %v3662 = vpop.permute.xlu0 %3661
    %3663 = vrot.lane.b32.xlu0 %v3603, 111
    %v3664 = vpop.permute.xlu0 %3663
    %3665 = vrot.lane.b32.xlu0 %v3604, 111
    %v3666 = vpop.permute.xlu0 %3665
    %3667 = vrot.lane.b32.xlu0 %v3605, 111
    %v3668 = vpop.permute.xlu0 %3667
    %3669 = vrot.lane.b32.xlu0 %v3606, 111
    %v3670 = vpop.permute.xlu0 %3669
    %3671 = vrot.lane.b32.xlu0 %v3607, 111
    %v3672 = vpop.permute.xlu0 %3671
    %v3673 = vsel %vm162, %v3650, %v3652
    %v3674 = vsel %vm162, %v3652, %v3654
    %v3675 = vsel %vm162, %v3656, %v3658
    %v3676 = vsel %vm162, %v3658, %v3660
    %v3677 = vsel %vm162, %v3662, %v3664
    %v3678 = vsel %vm162, %v3664, %v3666
    %v3679 = vsel %vm162, %v3668, %v3670
    %v3680 = vsel %vm162, %v3670, %v3672
    %v3690 = vsel %vm269, %v3633, 0
    %v3693 = vsel %vm269, %v3634, 0
    %v3696 = vsel %vm269, %v3635, 0
    %v3699 = vsel %vm269, %v3636, 0
    %3701 = vmatprep.subr.bf16.mxu0 %v3674
    %3702 = vmatpush1.bf16.msra.mxu0 %v3673
    %3703 = vmatprep.subr.bf16.mxu0 %v3676
    %3704 = vmatpush1.bf16.msra.mxu0 %v3675
    %3705 = vmatprep.subr.bf16.mxu0 %v3678
    %3706 = vmatpush1.bf16.msra.mxu0 %v3677
    %3707 = vmatprep.subr.bf16.mxu0 %v3680
    %3708 = vmatpush1.bf16.msra.mxu0 %v3679
    %3709 = vmatprep.subr.bf16.mxu0 0
    %3710 = vmatpush1.bf16.msra.mxu0 0
    %3711 = vmatprep.subr.bf16.mxu0 0
    %3712 = vmatpush1.bf16.msra.mxu0 0
    %3713 = vmatprep.subr.bf16.mxu0 0
    %3714 = vmatpush1.bf16.msra.mxu0 0
    %3715 = vmatprep.subr.bf16.mxu0 0
    %3716 = vmatpush1.bf16.msra.mxu0 0
    %3717 = vmatprep.subr.bf16.mxu0 0
    %3718 = vmatpush1.bf16.msra.mxu0 0
    %3719 = vmatprep.subr.bf16.mxu0 0
    %3720 = vmatpush1.bf16.msra.mxu0 0
    %3721 = vmatprep.subr.bf16.mxu0 0
    %3722 = vmatpush1.bf16.msra.mxu0 0
    %3723 = vmatprep.subr.bf16.mxu0 0
    %3724 = vmatpush1.bf16.msra.mxu0 0
    %3725 = vmatprep.subr.bf16.mxu0 0
    %3726 = vmatpush1.bf16.msra.mxu0 0
    %3727 = vmatprep.subr.bf16.mxu0 0
    %3728 = vmatpush1.bf16.msra.mxu0 0
    %3729 = vmatprep.subr.bf16.mxu0 0
    %3730 = vmatpush1.bf16.msra.mxu0 0
    %3731 = vmatprep.subr.bf16.mxu0 0
    %3732 = vmatpush1.bf16.msra.mxu0 0
    %3733 = vmatprep.mubr.bf16.mxu0 0
    %3734 = vmatmul.mubr.bf16.gmra.mrb[0].mxu0 %v3690
    %v3735 = vpop.f32.mrb[0].mxu0
    %v3736 = vadd.f32 0.0, %v3735
    %v3737 = vpop.f32.mrb[0].mxu0
    %v3738 = vadd.f32 0.0, %v3737
    %v3739 = vpop.f32.mrb[0].mxu0
    %v3740 = vadd.f32 0.0, %v3739
    %v3741 = vpop.f32.mrb[0].mxu0
    %v3742 = vadd.f32 0.0, %v3741
    %3743 = vmatprep.mubr.bf16.mxu0 0
    %3744 = vmatmul.mubr.bf16.gmra.mrb[0].mxu0 %v3693
    %v3745 = vpop.f32.mrb[0].mxu0
    %v3746 = vadd.f32 0.0, %v3745
    %v3747 = vpop.f32.mrb[0].mxu0
    %v3748 = vadd.f32 0.0, %v3747
    %v3749 = vpop.f32.mrb[0].mxu0
    %v3750 = vadd.f32 0.0, %v3749
    %v3751 = vpop.f32.mrb[0].mxu0
    %v3752 = vadd.f32 0.0, %v3751
    %3753 = vmatprep.mubr.bf16.mxu0 0
    %3754 = vmatmul.mubr.bf16.gmra.mrb[0].mxu0 %v3696
    %v3755 = vpop.f32.mrb[0].mxu0
    %v3756 = vadd.f32 0.0, %v3755
    %v3757 = vpop.f32.mrb[0].mxu0
    %v3758 = vadd.f32 0.0, %v3757
    %v3759 = vpop.f32.mrb[0].mxu0
    %v3760 = vadd.f32 0.0, %v3759
    %v3761 = vpop.f32.mrb[0].mxu0
    %v3762 = vadd.f32 0.0, %v3761
    %3763 = vmatprep.mubr.bf16.mxu0 0
    %3764 = vmatmul.mubr.bf16.gmra.mrb[0].mxu0 %v3699
    %v3765 = vpop.f32.mrb[0].mxu0
    %v3766 = vadd.f32 0.0, %v3765
    %v3767 = vpop.f32.mrb[0].mxu0
    %v3768 = vadd.f32 0.0, %v3767
    %v3769 = vpop.f32.mrb[0].mxu0
    %v3770 = vadd.f32 0.0, %v3769
    %v3771 = vpop.f32.mrb[0].mxu0
    %v3772 = vadd.f32 0.0, %v3771
    %3773 = vdwg.mxu0
    %v3774 = vadd.f32 %v3572, %v3736
    %v3775 = vadd.f32 %v3573, %v3738
    %v3776 = vadd.f32 %v3574, %v3740
    %v3777 = vadd.f32 %v3575, %v3742
    %v3778 = vadd.f32 %v3576, %v3746
    %v3779 = vadd.f32 %v3577, %v3748
    %v3780 = vadd.f32 %v3578, %v3750
    %v3781 = vadd.f32 %v3579, %v3752
    %v3782 = vadd.f32 %v3580, %v3756
    %v3783 = vadd.f32 %v3581, %v3758
    %v3784 = vadd.f32 %v3582, %v3760
    %v3785 = vadd.f32 %v3583, %v3762
    %v3786 = vadd.f32 %v3584, %v3766
    %v3787 = vadd.f32 %v3585, %v3768
    %v3788 = vadd.f32 %v3586, %v3770
    %v3789 = vadd.f32 %v3587, %v3772
    %v3790 = vld [vmem:[%s4] sm:$0xff]
    %v3791 = vld [vmem:[%s4 + $0x8] sm:$0xff]
    %v3792 = vld [vmem:[%s4 + $0x10] sm:$0xff]
    %v3793 = vld [vmem:[%s4 + $0x18] sm:$0xff]
    %v3794 = vld [vmem:[%s4 + $0x20] sm:$0xff]
    %v3795 = vld [vmem:[%s4 + $0x28] sm:$0xff]
    %v3796 = vld [vmem:[%s4 + $0x30] sm:$0xff]
    %v3797 = vld [vmem:[%s4 + $0x38] sm:$0xff]
    %3799 = vset.pattern.permute.xlu0 0
    %3800 = vperm.xlu0 %3799, %v3790
    %v3801 = vpop.permute.xlu0 %3800
    %3804 = vset.pattern.permute.xlu0 0
    %3805 = vperm.xlu0 %3804, %v3791
    %v3806 = vpop.permute.xlu0 %3805
    %3809 = vset.pattern.permute.xlu0 0
    %3810 = vperm.xlu0 %3809, %v3792
    %v3811 = vpop.permute.xlu0 %3810
    %3814 = vset.pattern.permute.xlu0 0
    %3815 = vperm.xlu0 %3814, %v3793
    %v3816 = vpop.permute.xlu0 %3815
    %3819 = vset.pattern.permute.xlu0 0
    %3820 = vperm.xlu0 %3819, %v3794
    %v3821 = vpop.permute.xlu0 %3820
    %3824 = vset.pattern.permute.xlu0 0
    %3825 = vperm.xlu0 %3824, %v3795
    %v3826 = vpop.permute.xlu0 %3825
    %3829 = vset.pattern.permute.xlu0 0
    %3830 = vperm.xlu0 %3829, %v3796
    %v3831 = vpop.permute.xlu0 %3830
    %3834 = vset.pattern.permute.xlu0 0
    %3835 = vperm.xlu0 %3834, %v3797
    %v3836 = vpop.permute.xlu0 %3835
    %v3838 = vadd.f32 %v3774, %v3801
    %v3839 = vadd.f32 %v3775, %v3801
    %v3840 = vadd.f32 %v3776, %v3806
    %v3841 = vadd.f32 %v3777, %v3806
    %v3842 = vadd.f32 %v3778, %v3811
    %v3843 = vadd.f32 %v3779, %v3811
    %v3844 = vadd.f32 %v3780, %v3816
    %v3845 = vadd.f32 %v3781, %v3816
    %v3846 = vadd.f32 %v3782, %v3821
    %v3847 = vadd.f32 %v3783, %v3821
    %v3848 = vadd.f32 %v3784, %v3826
    %v3849 = vadd.f32 %v3785, %v3826
    %v3850 = vadd.f32 %v3786, %v3831
    %v3851 = vadd.f32 %v3787, %v3831
    %v3852 = vadd.f32 %v3788, %v3836
    %v3853 = vadd.f32 %v3789, %v3836
    %v3854 = vld [vmem:[#allocation3] sm:$0xff]
    %v3855 = vld [vmem:[#allocation3 + $0x8] sm:$0xff]
    %v3856 = vld [vmem:[#allocation3 + $0x10] sm:$0xff]
    %v3857 = vld [vmem:[#allocation3 + $0x18] sm:$0xff]
    %v3858 = vld [vmem:[#allocation3 + $0x20] sm:$0xff]
    %v3859 = vld [vmem:[#allocation3 + $0x28] sm:$0xff]
    %v3860 = vld [vmem:[#allocation3 + $0x30] sm:$0xff]
    %v3861 = vld [vmem:[#allocation3 + $0x38] sm:$0xff]
    %v3862 = vld [vmem:[#allocation3 + $0x40] sm:$0xff]
    %v3863 = vld [vmem:[#allocation3 + $0x48] sm:$0xff]
    %v3864 = vld [vmem:[#allocation3 + $0x50] sm:$0xff]
    %v3865 = vld [vmem:[#allocation3 + $0x58] sm:$0xff]
    %v3866 = vld [vmem:[#allocation3 + $0x60] sm:$0xff]
    %v3867 = vld [vmem:[#allocation3 + $0x68] sm:$0xff]
    %v3868 = vld [vmem:[#allocation3 + $0x70] sm:$0xff]
    %v3869 = vld [vmem:[#allocation3 + $0x78] sm:$0xff]
    %v3870 = vadd.f32 %v3854, %v3838
    %v3871 = vadd.f32 %v3855, %v3839
    %v3872 = vadd.f32 %v3856, %v3840
    %v3873 = vadd.f32 %v3857, %v3841
    %v3874 = vadd.f32 %v3858, %v3842
    %v3875 = vadd.f32 %v3859, %v3843
    %v3876 = vadd.f32 %v3860, %v3844
    %v3877 = vadd.f32 %v3861, %v3845
    %v3878 = vadd.f32 %v3862, %v3846
    %v3879 = vadd.f32 %v3863, %v3847
    %v3880 = vadd.f32 %v3864, %v3848
    %v3881 = vadd.f32 %v3865, %v3849
    %v3882 = vadd.f32 %v3866, %v3850
    %v3883 = vadd.f32 %v3867, %v3851
    %v3884 = vadd.f32 %v3868, %v3852
    %v3885 = vadd.f32 %v3869, %v3853
    %3886 = vst [vmem:[#allocation9] sm:$0xff] %v3870
    %3887 = vst [vmem:[#allocation9 + $0x8] sm:$0xff] %v3871
    %3888 = vst [vmem:[#allocation9 + $0x10] sm:$0xff] %v3872
    %3889 = vst [vmem:[#allocation9 + $0x18] sm:$0xff] %v3873
    %3890 = vst [vmem:[#allocation9 + $0x20] sm:$0xff] %v3874
    %3891 = vst [vmem:[#allocation9 + $0x28] sm:$0xff] %v3875
    %3892 = vst [vmem:[#allocation9 + $0x30] sm:$0xff] %v3876
    %3893 = vst [vmem:[#allocation9 + $0x38] sm:$0xff] %v3877
    %3894 = vst [vmem:[#allocation9 + $0x40] sm:$0xff] %v3878
    %3895 = vst [vmem:[#allocation9 + $0x48] sm:$0xff] %v3879
    %3896 = vst [vmem:[#allocation9 + $0x50] sm:$0xff] %v3880
    %3897 = vst [vmem:[#allocation9 + $0x58] sm:$0xff] %v3881
    %3898 = vst [vmem:[#allocation9 + $0x60] sm:$0xff] %v3882
    %3899 = vst [vmem:[#allocation9 + $0x68] sm:$0xff] %v3883
    %3900 = vst [vmem:[#allocation9 + $0x70] sm:$0xff] %v3884
    %3901 = vst [vmem:[#allocation9 + $0x78] sm:$0xff] %v3885
    %s3902 = scalar_lea.vmem [#allocation3], 128
    %v3903 = vld [vmem:[%s3902] sm:$0xff]
    %v3904 = vld [vmem:[%s3902 + $0x8] sm:$0xff]
    %v3905 = vld [vmem:[%s3902 + $0x10] sm:$0xff]
    %v3906 = vld [vmem:[%s3902 + $0x18] sm:$0xff]
    %v3907 = vld [vmem:[%s3902 + $0x20] sm:$0xff]
    %v3908 = vld [vmem:[%s3902 + $0x28] sm:$0xff]
    %v3909 = vld [vmem:[%s3902 + $0x30] sm:$0xff]
    %v3910 = vld [vmem:[%s3902 + $0x38] sm:$0xff]
    %v3911 = vld [vmem:[%s3902 + $0x40] sm:$0xff]
    %v3912 = vld [vmem:[%s3902 + $0x48] sm:$0xff]
    %v3913 = vld [vmem:[%s3902 + $0x50] sm:$0xff]
    %v3914 = vld [vmem:[%s3902 + $0x58] sm:$0xff]
    %v3915 = vld [vmem:[%s3902 + $0x60] sm:$0xff]
    %v3916 = vld [vmem:[%s3902 + $0x68] sm:$0xff]
    %v3917 = vld [vmem:[%s3902 + $0x70] sm:$0xff]
    %v3918 = vld [vmem:[%s3902 + $0x78] sm:$0xff]
    %v3919 = vpack.c.bf16 %v3905, %v3903
    %v3920 = vpack.c.bf16 %v3906, %v3904
    %v3921 = vpack.c.bf16 %v3909, %v3907
    %v3922 = vpack.c.bf16 %v3910, %v3908
    %v3923 = vpack.c.bf16 %v3913, %v3911
    %v3924 = vpack.c.bf16 %v3914, %v3912
    %v3925 = vpack.c.bf16 %v3917, %v3915
    %v3926 = vpack.c.bf16 %v3918, %v3916
    %3927 = vst [vmem:[#allocation2 + $0x8] sm:$0xff] %v3919
    %3928 = vst [vmem:[#allocation2 + $0x10] sm:$0xff] %v3920
    %3929 = vst [vmem:[#allocation2 + $0x28] sm:$0xff] %v3921
    %3930 = vst [vmem:[#allocation2 + $0x30] sm:$0xff] %v3922
    %3931 = vst [vmem:[#allocation2 + $0x48] sm:$0xff] %v3923
    %3932 = vst [vmem:[#allocation2 + $0x50] sm:$0xff] %v3924
    %3933 = vst [vmem:[#allocation2 + $0x68] sm:$0xff] %v3925
    %3934 = vst [vmem:[#allocation2 + $0x70] sm:$0xff] %v3926
    %v3935 = vld [vmem:[#allocation2] sm:$0xff]
    %v3936 = vld [vmem:[#allocation2 + $0x8] sm:$0xff]
    %v3937 = vld [vmem:[#allocation2 + $0x10] sm:$0xff]
    %v3938 = vld [vmem:[#allocation2 + $0x20] sm:$0xff]
    %v3939 = vld [vmem:[#allocation2 + $0x28] sm:$0xff]
    %v3940 = vld [vmem:[#allocation2 + $0x30] sm:$0xff]
    %v3941 = vld [vmem:[#allocation2 + $0x40] sm:$0xff]
    %v3942 = vld [vmem:[#allocation2 + $0x48] sm:$0xff]
    %v3943 = vld [vmem:[#allocation2 + $0x50] sm:$0xff]
    %v3944 = vld [vmem:[#allocation2 + $0x60] sm:$0xff]
    %v3945 = vld [vmem:[#allocation2 + $0x68] sm:$0xff]
    %v3946 = vld [vmem:[#allocation2 + $0x70] sm:$0xff]
    %v3947 = vld [vmem:[%s5] sm:$0x3]
    %v3950 = vunpack.c.l.s4 1966171168
    %v3951 = vunpack.c.0.s8 %v3950
    %v3952 = vlaneseq
    %v3953 = vshrl.u32 %v3952, 7
    %v3954 = vsub.s32 %v3951, %v3953
    %v3955 = vrot.slane %v3947, %v3954
    %v3956 = vcombine.high %v3955, %v3955
    %v3958 = vunpack.c.l.s4 1966171168
    %v3959 = vunpack.c.0.s8 %v3958
    %v3960 = vlaneseq
    %v3961 = vshrl.u32 %v3960, 7
    %v3962 = vsub.s32 %v3959, %v3961
    %v3963 = vrot.slane %v3955, %v3962
    %v3965 = vunpack.c.l.s4 1966171168
    %v3966 = vunpack.c.0.s8 %v3965
    %v3967 = vlaneseq
    %v3968 = vshrl.u32 %v3967, 7
    %v3969 = vsub.s32 %v3966, %v3968
    %v3970 = vrot.slane %v3956, %v3969
    %v3972 = vpack.i.b16 %v3963, %v3963
    %v3974 = vlaneseq
    %v3975 = vshrl.u32 %v3974, 7
    %v3976 = vsub.s32 0, %v3975
    %v3977 = vrot.slane %v3972, %v3976
    %v3979 = vpack.i.b16 %v3970, %v3970
    %v3981 = vlaneseq
    %v3982 = vshrl.u32 %v3981, 7
    %v3983 = vsub.s32 0, %v3982
    %v3984 = vrot.slane %v3979, %v3983
    %3987 = vrot.lane.b32.xlu0 %v3977, 111
    %v3988 = vpop.permute.xlu0 %3987
    %3989 = vrot.lane.b32.xlu0 %v3984, 111
    %v3990 = vpop.permute.xlu0 %3989
    %v3991 = vsel %vm162, %v3988, %v3990
    %v3995 = vmul.bf16 %v3935, %v3988
    %v3996 = vmul.bf16 %v3936, %v3991
    %v3997 = vmul.bf16 %v3937, %v3990
    %v3998 = vmul.bf16 %v3938, %v3988
    %v3999 = vmul.bf16 %v3939, %v3991
    %v4000 = vmul.bf16 %v3940, %v3990
    %v4001 = vmul.bf16 %v3941, %v3988
    %v4002 = vmul.bf16 %v3942, %v3991
    %v4003 = vmul.bf16 %v3943, %v3990
    %v4004 = vmul.bf16 %v3944, %v3988
    %v4005 = vmul.bf16 %v3945, %v3991
    %v4006 = vmul.bf16 %v3946, %v3990
    %v4007 = vld [vmem:[#allocation6] sm:$0xf]
    %v4008 = vld [vmem:[#allocation6 + $0x4] sm:$0xf]
    %v4009 = vld [vmem:[#allocation6 + $0x8] sm:$0xf]
    %v4010 = vld [vmem:[#allocation6 + $0xc] sm:$0xf]
    %v4011 = vld [vmem:[#allocation6 + $0x10] sm:$0xf]
    %v4012 = vld [vmem:[#allocation6 + $0x14] sm:$0xf]
    %v4013 = vld [vmem:[#allocation6 + $0x18] sm:$0xf]
    %v4014 = vld [vmem:[#allocation6 + $0x1c] sm:$0xf]
    %v4015 = vld [vmem:[%s187] sm:$0xf]
    %v4016 = vld [vmem:[%s187 + $0x4] sm:$0xf]
    %v4017 = vld [vmem:[%s187 + $0x8] sm:$0xf]
    %v4018 = vld [vmem:[%s187 + $0xc] sm:$0xf]
    %v4019 = vld [vmem:[%s187 + $0x10] sm:$0xf]
    %v4020 = vld [vmem:[%s187 + $0x14] sm:$0xf]
    %v4021 = vld [vmem:[%s187 + $0x18] sm:$0xf]
    %v4022 = vld [vmem:[%s187 + $0x1c] sm:$0xf]
    %v4031 = vunpack.c.l.b16 %v4015
    %v4032 = vunpack.c.l.b16 %v4016
    %v4033 = vunpack.c.l.b16 %v4017
    %v4034 = vunpack.c.l.b16 %v4018
    %v4035 = vunpack.c.l.b16 %v4019
    %v4036 = vunpack.c.l.b16 %v4020
    %v4037 = vunpack.c.l.b16 %v4021
    %v4038 = vunpack.c.l.b16 %v4022
    %v4039 = vpack.c.b16 %v4032, %v4031
    %v4040 = vpack.c.b16 %v4034, %v4033
    %v4041 = vpack.c.b16 %v4036, %v4035
    %v4042 = vpack.c.b16 %v4038, %v4037
    %4055 = vrot.lane.b32.xlu0 %v3935, 16
    %v4056 = vpop.permute.xlu0 %4055
    %4057 = vrot.lane.b32.xlu0 %v3936, 16
    %v4058 = vpop.permute.xlu0 %4057
    %4059 = vrot.lane.b32.xlu0 %v3937, 16
    %v4060 = vpop.permute.xlu0 %4059
    %4061 = vrot.lane.b32.xlu0 %v3938, 16
    %v4062 = vpop.permute.xlu0 %4061
    %4063 = vrot.lane.b32.xlu0 %v3939, 16
    %v4064 = vpop.permute.xlu0 %4063
    %4065 = vrot.lane.b32.xlu0 %v3940, 16
    %v4066 = vpop.permute.xlu0 %4065
    %4067 = vrot.lane.b32.xlu0 %v3941, 16
    %v4068 = vpop.permute.xlu0 %4067
    %4069 = vrot.lane.b32.xlu0 %v3942, 16
    %v4070 = vpop.permute.xlu0 %4069
    %4071 = vrot.lane.b32.xlu0 %v3943, 16
    %v4072 = vpop.permute.xlu0 %4071
    %4073 = vrot.lane.b32.xlu0 %v3944, 16
    %v4074 = vpop.permute.xlu0 %4073
    %4075 = vrot.lane.b32.xlu0 %v3945, 16
    %v4076 = vpop.permute.xlu0 %4075
    %4077 = vrot.lane.b32.xlu0 %v3946, 16
    %v4078 = vpop.permute.xlu0 %4077
    %v4079 = vsel %vm252, %v4056, %v4058
    %v4080 = vsel %vm252, %v4058, %v4060
    %v4081 = vsel %vm252, %v4062, %v4064
    %v4082 = vsel %vm252, %v4064, %v4066
    %v4083 = vsel %vm252, %v4068, %v4070
    %v4084 = vsel %vm252, %v4070, %v4072
    %v4085 = vsel %vm252, %v4074, %v4076
    %v4086 = vsel %vm252, %v4076, %v4078
    %v4096 = vsel %vm269, %v4039, 0
    %v4099 = vsel %vm269, %v4040, 0
    %v4102 = vsel %vm269, %v4041, 0
    %v4105 = vsel %vm269, %v4042, 0
    %4107 = vmatprep.subr.bf16.mxu0 %v4080
    %4108 = vmatpush1.bf16.msra.mxu0 %v4079
    %4109 = vmatprep.subr.bf16.mxu0 %v4082
    %4110 = vmatpush1.bf16.msra.mxu0 %v4081
    %4111 = vmatprep.subr.bf16.mxu0 %v4084
    %4112 = vmatpush1.bf16.msra.mxu0 %v4083
    %4113 = vmatprep.subr.bf16.mxu0 %v4086
    %4114 = vmatpush1.bf16.msra.mxu0 %v4085
    %4115 = vmatprep.subr.bf16.mxu0 0
    %4116 = vmatpush1.bf16.msra.mxu0 0
    %4117 = vmatprep.subr.bf16.mxu0 0
    %4118 = vmatpush1.bf16.msra.mxu0 0
    %4119 = vmatprep.subr.bf16.mxu0 0
    %4120 = vmatpush1.bf16.msra.mxu0 0
    %4121 = vmatprep.subr.bf16.mxu0 0
    %4122 = vmatpush1.bf16.msra.mxu0 0
    %4123 = vmatprep.subr.bf16.mxu0 0
    %4124 = vmatpush1.bf16.msra.mxu0 0
    %4125 = vmatprep.subr.bf16.mxu0 0
    %4126 = vmatpush1.bf16.msra.mxu0 0
    %4127 = vmatprep.subr.bf16.mxu0 0
    %4128 = vmatpush1.bf16.msra.mxu0 0
    %4129 = vmatprep.subr.bf16.mxu0 0
    %4130 = vmatpush1.bf16.msra.mxu0 0
    %4131 = vmatprep.subr.bf16.mxu0 0
    %4132 = vmatpush1.bf16.msra.mxu0 0
    %4133 = vmatprep.subr.bf16.mxu0 0
    %4134 = vmatpush1.bf16.msra.mxu0 0
    %4135 = vmatprep.subr.bf16.mxu0 0
    %4136 = vmatpush1.bf16.msra.mxu0 0
    %4137 = vmatprep.subr.bf16.mxu0 0
    %4138 = vmatpush1.bf16.msra.mxu0 0
    %4139 = vmatprep.mubr.bf16.mxu0 0
    %4140 = vmatmul.mubr.bf16.gmra.mrb[0].mxu0 %v4096
    %v4141 = vpop.f32.mrb[0].mxu0
    %v4142 = vadd.f32 0.0, %v4141
    %v4143 = vpop.f32.mrb[0].mxu0
    %v4144 = vadd.f32 0.0, %v4143
    %v4145 = vpop.f32.mrb[0].mxu0
    %v4146 = vadd.f32 0.0, %v4145
    %v4147 = vpop.f32.mrb[0].mxu0
    %v4148 = vadd.f32 0.0, %v4147
    %4149 = vmatprep.mubr.bf16.mxu0 0
    %4150 = vmatmul.mubr.bf16.gmra.mrb[0].mxu0 %v4099
    %v4151 = vpop.f32.mrb[0].mxu0
    %v4152 = vadd.f32 0.0, %v4151
    %v4153 = vpop.f32.mrb[0].mxu0
    %v4154 = vadd.f32 0.0, %v4153
    %v4155 = vpop.f32.mrb[0].mxu0
    %v4156 = vadd.f32 0.0, %v4155
    %v4157 = vpop.f32.mrb[0].mxu0
    %v4158 = vadd.f32 0.0, %v4157
    %4159 = vmatprep.mubr.bf16.mxu0 0
    %4160 = vmatmul.mubr.bf16.gmra.mrb[0].mxu0 %v4102
    %v4161 = vpop.f32.mrb[0].mxu0
    %v4162 = vadd.f32 0.0, %v4161
    %v4163 = vpop.f32.mrb[0].mxu0
    %v4164 = vadd.f32 0.0, %v4163
    %v4165 = vpop.f32.mrb[0].mxu0
    %v4166 = vadd.f32 0.0, %v4165
    %v4167 = vpop.f32.mrb[0].mxu0
    %v4168 = vadd.f32 0.0, %v4167
    %4169 = vmatprep.mubr.bf16.mxu0 0
    %4170 = vmatmul.mubr.bf16.gmra.mrb[0].mxu0 %v4105
    %v4171 = vpop.f32.mrb[0].mxu0
    %v4172 = vadd.f32 0.0, %v4171
    %v4173 = vpop.f32.mrb[0].mxu0
    %v4174 = vadd.f32 0.0, %v4173
    %v4175 = vpop.f32.mrb[0].mxu0
    %v4176 = vadd.f32 0.0, %v4175
    %v4177 = vpop.f32.mrb[0].mxu0
    %v4178 = vadd.f32 0.0, %v4177
    %4179 = vdwg.mxu0
    %v4188 = vunpack.c.l.b16 %v4007
    %v4189 = vunpack.c.l.b16 %v4008
    %v4190 = vunpack.c.l.b16 %v4009
    %v4191 = vunpack.c.l.b16 %v4010
    %v4192 = vunpack.c.l.b16 %v4011
    %v4193 = vunpack.c.l.b16 %v4012
    %v4194 = vunpack.c.l.b16 %v4013
    %v4195 = vunpack.c.l.b16 %v4014
    %v4196 = vpack.c.b16 %v4189, %v4188
    %v4197 = vpack.c.b16 %v4191, %v4190
    %v4198 = vpack.c.b16 %v4193, %v4192
    %v4199 = vpack.c.b16 %v4195, %v4194
    %4212 = vrot.lane.b32.xlu0 %v3995, 17
    %v4213 = vpop.permute.xlu0 %4212
    %4214 = vrot.lane.b32.xlu0 %v3996, 17
    %v4215 = vpop.permute.xlu0 %4214
    %4216 = vrot.lane.b32.xlu0 %v3997, 17
    %v4217 = vpop.permute.xlu0 %4216
    %4218 = vrot.lane.b32.xlu0 %v3998, 17
    %v4219 = vpop.permute.xlu0 %4218
    %4220 = vrot.lane.b32.xlu0 %v3999, 17
    %v4221 = vpop.permute.xlu0 %4220
    %4222 = vrot.lane.b32.xlu0 %v4000, 17
    %v4223 = vpop.permute.xlu0 %4222
    %4224 = vrot.lane.b32.xlu0 %v4001, 17
    %v4225 = vpop.permute.xlu0 %4224
    %4226 = vrot.lane.b32.xlu0 %v4002, 17
    %v4227 = vpop.permute.xlu0 %4226
    %4228 = vrot.lane.b32.xlu0 %v4003, 17
    %v4229 = vpop.permute.xlu0 %4228
    %4230 = vrot.lane.b32.xlu0 %v4004, 17
    %v4231 = vpop.permute.xlu0 %4230
    %4232 = vrot.lane.b32.xlu0 %v4005, 17
    %v4233 = vpop.permute.xlu0 %4232
    %4234 = vrot.lane.b32.xlu0 %v4006, 17
    %v4235 = vpop.permute.xlu0 %4234
    %v4236 = vsel %vm411, %v4213, %v4215
    %v4237 = vsel %vm411, %v4215, %v4217
    %v4238 = vsel %vm411, %v4219, %v4221
    %v4239 = vsel %vm411, %v4221, %v4223
    %v4240 = vsel %vm411, %v4225, %v4227
    %v4241 = vsel %vm411, %v4227, %v4229
    %v4242 = vsel %vm411, %v4231, %v4233
    %v4243 = vsel %vm411, %v4233, %v4235
    %v4253 = vsel %vm269, %v4196, 0
    %v4256 = vsel %vm269, %v4197, 0
    %v4259 = vsel %vm269, %v4198, 0
    %v4262 = vsel %vm269, %v4199, 0
    %4264 = vmatprep.subr.bf16.mxu0 %v4237
    %4265 = vmatpush1.bf16.msra.mxu0 %v4236
    %4266 = vmatprep.subr.bf16.mxu0 %v4239
    %4267 = vmatpush1.bf16.msra.mxu0 %v4238
    %4268 = vmatprep.subr.bf16.mxu0 %v4241
    %4269 = vmatpush1.bf16.msra.mxu0 %v4240
    %4270 = vmatprep.subr.bf16.mxu0 %v4243
    %4271 = vmatpush1.bf16.msra.mxu0 %v4242
    %4272 = vmatprep.subr.bf16.mxu0 0
    %4273 = vmatpush1.bf16.msra.mxu0 0
    %4274 = vmatprep.subr.bf16.mxu0 0
    %4275 = vmatpush1.bf16.msra.mxu0 0
    %4276 = vmatprep.subr.bf16.mxu0 0
    %4277 = vmatpush1.bf16.msra.mxu0 0
    %4278 = vmatprep.subr.bf16.mxu0 0
    %4279 = vmatpush1.bf16.msra.mxu0 0
    %4280 = vmatprep.subr.bf16.mxu0 0
    %4281 = vmatpush1.bf16.msra.mxu0 0
    %4282 = vmatprep.subr.bf16.mxu0 0
    %4283 = vmatpush1.bf16.msra.mxu0 0
    %4284 = vmatprep.subr.bf16.mxu0 0
    %4285 = vmatpush1.bf16.msra.mxu0 0
    %4286 = vmatprep.subr.bf16.mxu0 0
    %4287 = vmatpush1.bf16.msra.mxu0 0
    %4288 = vmatprep.subr.bf16.mxu0 0
    %4289 = vmatpush1.bf16.msra.mxu0 0
    %4290 = vmatprep.subr.bf16.mxu0 0
    %4291 = vmatpush1.bf16.msra.mxu0 0
    %4292 = vmatprep.subr.bf16.mxu0 0
    %4293 = vmatpush1.bf16.msra.mxu0 0
    %4294 = vmatprep.subr.bf16.mxu0 0
    %4295 = vmatpush1.bf16.msra.mxu0 0
    %4296 = vmatprep.mubr.bf16.mxu0 0
    %4297 = vmatmul.mubr.bf16.gmra.mrb[0].mxu0 %v4253
    %v4298 = vpop.f32.mrb[0].mxu0
    %v4299 = vadd.f32 %v4142, %v4298
    %v4300 = vpop.f32.mrb[0].mxu0
    %v4301 = vadd.f32 %v4144, %v4300
    %v4302 = vpop.f32.mrb[0].mxu0
    %v4303 = vadd.f32 %v4146, %v4302
    %v4304 = vpop.f32.mrb[0].mxu0
    %v4305 = vadd.f32 %v4148, %v4304
    %4306 = vmatprep.mubr.bf16.mxu0 0
    %4307 = vmatmul.mubr.bf16.gmra.mrb[0].mxu0 %v4256
    %v4308 = vpop.f32.mrb[0].mxu0
    %v4309 = vadd.f32 %v4152, %v4308
    %v4310 = vpop.f32.mrb[0].mxu0
    %v4311 = vadd.f32 %v4154, %v4310
    %v4312 = vpop.f32.mrb[0].mxu0
    %v4313 = vadd.f32 %v4156, %v4312
    %v4314 = vpop.f32.mrb[0].mxu0
    %v4315 = vadd.f32 %v4158, %v4314
    %4316 = vmatprep.mubr.bf16.mxu0 0
    %4317 = vmatmul.mubr.bf16.gmra.mrb[0].mxu0 %v4259
    %v4318 = vpop.f32.mrb[0].mxu0
    %v4319 = vadd.f32 %v4162, %v4318
    %v4320 = vpop.f32.mrb[0].mxu0
    %v4321 = vadd.f32 %v4164, %v4320
    %v4322 = vpop.f32.mrb[0].mxu0
    %v4323 = vadd.f32 %v4166, %v4322
    %v4324 = vpop.f32.mrb[0].mxu0
    %v4325 = vadd.f32 %v4168, %v4324
    %4326 = vmatprep.mubr.bf16.mxu0 0
    %4327 = vmatmul.mubr.bf16.gmra.mrb[0].mxu0 %v4262
    %v4328 = vpop.f32.mrb[0].mxu0
    %v4329 = vadd.f32 %v4172, %v4328
    %v4330 = vpop.f32.mrb[0].mxu0
    %v4331 = vadd.f32 %v4174, %v4330
    %v4332 = vpop.f32.mrb[0].mxu0
    %v4333 = vadd.f32 %v4176, %v4332
    %v4334 = vpop.f32.mrb[0].mxu0
    %v4335 = vadd.f32 %v4178, %v4334
    %4336 = vdwg.mxu0
    %v4337 = vld [vmem:[%s513] sm:$0x3]
    %v4340 = vunpack.c.l.s4 1966171168
    %v4341 = vunpack.c.0.s8 %v4340
    %v4342 = vlaneseq
    %v4343 = vshrl.u32 %v4342, 7
    %v4344 = vsub.s32 %v4341, %v4343
    %v4345 = vrot.slane %v4337, %v4344
    %v4346 = vcombine.high %v4345, %v4345
    %v4348 = vunpack.c.l.s4 1966171168
    %v4349 = vunpack.c.0.s8 %v4348
    %v4350 = vlaneseq
    %v4351 = vshrl.u32 %v4350, 7
    %v4352 = vsub.s32 %v4349, %v4351
    %v4353 = vrot.slane %v4345, %v4352
    %v4355 = vunpack.c.l.s4 1966171168
    %v4356 = vunpack.c.0.s8 %v4355
    %v4357 = vlaneseq
    %v4358 = vshrl.u32 %v4357, 7
    %v4359 = vsub.s32 %v4356, %v4358
    %v4360 = vrot.slane %v4346, %v4359
    %v4362 = vpack.i.b16 %v4353, %v4353
    %v4364 = vlaneseq
    %v4365 = vshrl.u32 %v4364, 7
    %v4366 = vsub.s32 0, %v4365
    %v4367 = vrot.slane %v4362, %v4366
    %v4369 = vpack.i.b16 %v4360, %v4360
    %v4371 = vlaneseq
    %v4372 = vshrl.u32 %v4371, 7
    %v4373 = vsub.s32 0, %v4372
    %v4374 = vrot.slane %v4369, %v4373
    %4377 = vrot.lane.b32.xlu0 %v4367, 113
    %v4378 = vpop.permute.xlu0 %4377
    %4379 = vrot.lane.b32.xlu0 %v4374, 113
    %v4380 = vpop.permute.xlu0 %4379
    %v4381 = vsel %vm558, %v4378, %v4380
    %v4385 = vmul.bf16 %v3935, %v4378
    %v4386 = vmul.bf16 %v3936, %v4381
    %v4387 = vmul.bf16 %v3937, %v4380
    %v4388 = vmul.bf16 %v3938, %v4378
    %v4389 = vmul.bf16 %v3939, %v4381
    %v4390 = vmul.bf16 %v3940, %v4380
    %v4391 = vmul.bf16 %v3941, %v4378
    %v4392 = vmul.bf16 %v3942, %v4381
    %v4393 = vmul.bf16 %v3943, %v4380
    %v4394 = vmul.bf16 %v3944, %v4378
    %v4395 = vmul.bf16 %v3945, %v4381
    %v4396 = vmul.bf16 %v3946, %v4380
    %v4397 = vld [vmem:[%s575] sm:$0xf]
    %v4398 = vld [vmem:[%s575 + $0x4] sm:$0xf]
    %v4399 = vld [vmem:[%s575 + $0x8] sm:$0xf]
    %v4400 = vld [vmem:[%s575 + $0xc] sm:$0xf]
    %v4401 = vld [vmem:[%s575 + $0x10] sm:$0xf]
    %v4402 = vld [vmem:[%s575 + $0x14] sm:$0xf]
    %v4403 = vld [vmem:[%s575 + $0x18] sm:$0xf]
    %v4404 = vld [vmem:[%s575 + $0x1c] sm:$0xf]
    %v4413 = vunpack.c.l.b16 %v4397
    %v4414 = vunpack.c.l.b16 %v4398
    %v4415 = vunpack.c.l.b16 %v4399
    %v4416 = vunpack.c.l.b16 %v4400
    %v4417 = vunpack.c.l.b16 %v4401
    %v4418 = vunpack.c.l.b16 %v4402
    %v4419 = vunpack.c.l.b16 %v4403
    %v4420 = vunpack.c.l.b16 %v4404
    %v4421 = vpack.c.b16 %v4414, %v4413
    %v4422 = vpack.c.b16 %v4416, %v4415
    %v4423 = vpack.c.b16 %v4418, %v4417
    %v4424 = vpack.c.b16 %v4420, %v4419
    %4437 = vrot.lane.b32.xlu0 %v4385, 15
    %v4438 = vpop.permute.xlu0 %4437
    %4439 = vrot.lane.b32.xlu0 %v4386, 15
    %v4440 = vpop.permute.xlu0 %4439
    %4441 = vrot.lane.b32.xlu0 %v4387, 15
    %v4442 = vpop.permute.xlu0 %4441
    %4443 = vrot.lane.b32.xlu0 %v4388, 15
    %v4444 = vpop.permute.xlu0 %4443
    %4445 = vrot.lane.b32.xlu0 %v4389, 15
    %v4446 = vpop.permute.xlu0 %4445
    %4447 = vrot.lane.b32.xlu0 %v4390, 15
    %v4448 = vpop.permute.xlu0 %4447
    %4449 = vrot.lane.b32.xlu0 %v4391, 15
    %v4450 = vpop.permute.xlu0 %4449
    %4451 = vrot.lane.b32.xlu0 %v4392, 15
    %v4452 = vpop.permute.xlu0 %4451
    %4453 = vrot.lane.b32.xlu0 %v4393, 15
    %v4454 = vpop.permute.xlu0 %4453
    %4455 = vrot.lane.b32.xlu0 %v4394, 15
    %v4456 = vpop.permute.xlu0 %4455
    %4457 = vrot.lane.b32.xlu0 %v4395, 15
    %v4458 = vpop.permute.xlu0 %4457
    %4459 = vrot.lane.b32.xlu0 %v4396, 15
    %v4460 = vpop.permute.xlu0 %4459
    %v4461 = vsel %vm640, %v4438, %v4440
    %v4462 = vsel %vm640, %v4440, %v4442
    %v4463 = vsel %vm640, %v4444, %v4446
    %v4464 = vsel %vm640, %v4446, %v4448
    %v4465 = vsel %vm640, %v4450, %v4452
    %v4466 = vsel %vm640, %v4452, %v4454
    %v4467 = vsel %vm640, %v4456, %v4458
    %v4468 = vsel %vm640, %v4458, %v4460
    %v4478 = vsel %vm269, %v4421, 0
    %v4481 = vsel %vm269, %v4422, 0
    %v4484 = vsel %vm269, %v4423, 0
    %v4487 = vsel %vm269, %v4424, 0
    %4489 = vmatprep.subr.bf16.mxu0 %v4462
    %4490 = vmatpush1.bf16.msra.mxu0 %v4461
    %4491 = vmatprep.subr.bf16.mxu0 %v4464
    %4492 = vmatpush1.bf16.msra.mxu0 %v4463
    %4493 = vmatprep.subr.bf16.mxu0 %v4466
    %4494 = vmatpush1.bf16.msra.mxu0 %v4465
    %4495 = vmatprep.subr.bf16.mxu0 %v4468
    %4496 = vmatpush1.bf16.msra.mxu0 %v4467
    %4497 = vmatprep.subr.bf16.mxu0 0
    %4498 = vmatpush1.bf16.msra.mxu0 0
    %4499 = vmatprep.subr.bf16.mxu0 0
    %4500 = vmatpush1.bf16.msra.mxu0 0
    %4501 = vmatprep.subr.bf16.mxu0 0
    %4502 = vmatpush1.bf16.msra.mxu0 0
    %4503 = vmatprep.subr.bf16.mxu0 0
    %4504 = vmatpush1.bf16.msra.mxu0 0
    %4505 = vmatprep.subr.bf16.mxu0 0
    %4506 = vmatpush1.bf16.msra.mxu0 0
    %4507 = vmatprep.subr.bf16.mxu0 0
    %4508 = vmatpush1.bf16.msra.mxu0 0
    %4509 = vmatprep.subr.bf16.mxu0 0
    %4510 = vmatpush1.bf16.msra.mxu0 0
    %4511 = vmatprep.subr.bf16.mxu0 0
    %4512 = vmatpush1.bf16.msra.mxu0 0
    %4513 = vmatprep.subr.bf16.mxu0 0
    %4514 = vmatpush1.bf16.msra.mxu0 0
    %4515 = vmatprep.subr.bf16.mxu0 0
    %4516 = vmatpush1.bf16.msra.mxu0 0
    %4517 = vmatprep.subr.bf16.mxu0 0
    %4518 = vmatpush1.bf16.msra.mxu0 0
    %4519 = vmatprep.subr.bf16.mxu0 0
    %4520 = vmatpush1.bf16.msra.mxu0 0
    %4521 = vmatprep.mubr.bf16.mxu0 0
    %4522 = vmatmul.mubr.bf16.gmra.mrb[0].mxu0 %v4478
    %v4523 = vpop.f32.mrb[0].mxu0
    %v4524 = vadd.f32 0.0, %v4523
    %v4525 = vpop.f32.mrb[0].mxu0
    %v4526 = vadd.f32 0.0, %v4525
    %v4527 = vpop.f32.mrb[0].mxu0
    %v4528 = vadd.f32 0.0, %v4527
    %v4529 = vpop.f32.mrb[0].mxu0
    %v4530 = vadd.f32 0.0, %v4529
    %4531 = vmatprep.mubr.bf16.mxu0 0
    %4532 = vmatmul.mubr.bf16.gmra.mrb[0].mxu0 %v4481
    %v4533 = vpop.f32.mrb[0].mxu0
    %v4534 = vadd.f32 0.0, %v4533
    %v4535 = vpop.f32.mrb[0].mxu0
    %v4536 = vadd.f32 0.0, %v4535
    %v4537 = vpop.f32.mrb[0].mxu0
    %v4538 = vadd.f32 0.0, %v4537
    %v4539 = vpop.f32.mrb[0].mxu0
    %v4540 = vadd.f32 0.0, %v4539
    %4541 = vmatprep.mubr.bf16.mxu0 0
    %4542 = vmatmul.mubr.bf16.gmra.mrb[0].mxu0 %v4484
    %v4543 = vpop.f32.mrb[0].mxu0
    %v4544 = vadd.f32 0.0, %v4543
    %v4545 = vpop.f32.mrb[0].mxu0
    %v4546 = vadd.f32 0.0, %v4545
    %v4547 = vpop.f32.mrb[0].mxu0
    %v4548 = vadd.f32 0.0, %v4547
    %v4549 = vpop.f32.mrb[0].mxu0
    %v4550 = vadd.f32 0.0, %v4549
    %4551 = vmatprep.mubr.bf16.mxu0 0
    %4552 = vmatmul.mubr.bf16.gmra.mrb[0].mxu0 %v4487
    %v4553 = vpop.f32.mrb[0].mxu0
    %v4554 = vadd.f32 0.0, %v4553
    %v4555 = vpop.f32.mrb[0].mxu0
    %v4556 = vadd.f32 0.0, %v4555
    %v4557 = vpop.f32.mrb[0].mxu0
    %v4558 = vadd.f32 0.0, %v4557
    %v4559 = vpop.f32.mrb[0].mxu0
    %v4560 = vadd.f32 0.0, %v4559
    %4561 = vdwg.mxu0
    %v4562 = vadd.f32 %v4299, %v4524
    %v4563 = vadd.f32 %v4301, %v4526
    %v4564 = vadd.f32 %v4303, %v4528
    %v4565 = vadd.f32 %v4305, %v4530
    %v4566 = vadd.f32 %v4309, %v4534
    %v4567 = vadd.f32 %v4311, %v4536
    %v4568 = vadd.f32 %v4313, %v4538
    %v4569 = vadd.f32 %v4315, %v4540
    %v4570 = vadd.f32 %v4319, %v4544
    %v4571 = vadd.f32 %v4321, %v4546
    %v4572 = vadd.f32 %v4323, %v4548
    %v4573 = vadd.f32 %v4325, %v4550
    %v4574 = vadd.f32 %v4329, %v4554
    %v4575 = vadd.f32 %v4331, %v4556
    %v4576 = vadd.f32 %v4333, %v4558
    %v4577 = vadd.f32 %v4335, %v4560
    %v4578 = vld [vmem:[#allocation2] sm:$0xff]
    %v4579 = vld [vmem:[#allocation2 + $0x8] sm:$0xff]
    %v4580 = vld [vmem:[#allocation2 + $0x10] sm:$0xff]
    %v4581 = vld [vmem:[#allocation2 + $0x20] sm:$0xff]
    %v4582 = vld [vmem:[#allocation2 + $0x28] sm:$0xff]
    %v4583 = vld [vmem:[#allocation2 + $0x30] sm:$0xff]
    %v4584 = vld [vmem:[#allocation2 + $0x40] sm:$0xff]
    %v4585 = vld [vmem:[#allocation2 + $0x48] sm:$0xff]
    %v4586 = vld [vmem:[#allocation2 + $0x50] sm:$0xff]
    %v4587 = vld [vmem:[#allocation2 + $0x60] sm:$0xff]
    %v4588 = vld [vmem:[#allocation2 + $0x68] sm:$0xff]
    %v4589 = vld [vmem:[#allocation2 + $0x70] sm:$0xff]
    %4590 = vrot.lane.b32.xlu0 %v3977, 127
    %v4591 = vpop.permute.xlu0 %4590
    %4592 = vrot.lane.b32.xlu0 %v3984, 127
    %v4593 = vpop.permute.xlu0 %4592
    %v4594 = vsel %vm774, %v4591, %v4593
    %v4598 = vmul.bf16 %v4578, %v4591
    %v4599 = vmul.bf16 %v4579, %v4594
    %v4600 = vmul.bf16 %v4580, %v4593
    %v4601 = vmul.bf16 %v4581, %v4591
    %v4602 = vmul.bf16 %v4582, %v4594
    %v4603 = vmul.bf16 %v4583, %v4593
    %v4604 = vmul.bf16 %v4584, %v4591
    %v4605 = vmul.bf16 %v4585, %v4594
    %v4606 = vmul.bf16 %v4586, %v4593
    %v4607 = vmul.bf16 %v4587, %v4591
    %v4608 = vmul.bf16 %v4588, %v4594
    %v4609 = vmul.bf16 %v4589, %v4593
    %v4610 = vld [vmem:[%s791] sm:$0xf]
    %v4611 = vld [vmem:[%s791 + $0x4] sm:$0xf]
    %v4612 = vld [vmem:[%s791 + $0x8] sm:$0xf]
    %v4613 = vld [vmem:[%s791 + $0xc] sm:$0xf]
    %v4614 = vld [vmem:[%s791 + $0x10] sm:$0xf]
    %v4615 = vld [vmem:[%s791 + $0x14] sm:$0xf]
    %v4616 = vld [vmem:[%s791 + $0x18] sm:$0xf]
    %v4617 = vld [vmem:[%s791 + $0x1c] sm:$0xf]
    %v4626 = vunpack.c.l.b16 %v4610
    %v4627 = vunpack.c.l.b16 %v4611
    %v4628 = vunpack.c.l.b16 %v4612
    %v4629 = vunpack.c.l.b16 %v4613
    %v4630 = vunpack.c.l.b16 %v4614
    %v4631 = vunpack.c.l.b16 %v4615
    %v4632 = vunpack.c.l.b16 %v4616
    %v4633 = vunpack.c.l.b16 %v4617
    %v4634 = vpack.c.b16 %v4627, %v4626
    %v4635 = vpack.c.b16 %v4629, %v4628
    %v4636 = vpack.c.b16 %v4631, %v4630
    %v4637 = vpack.c.b16 %v4633, %v4632
    %4650 = vrot.lane.b32.xlu0 %v4598, 1
    %v4651 = vpop.permute.xlu0 %4650
    %4652 = vrot.lane.b32.xlu0 %v4599, 1
    %v4653 = vpop.permute.xlu0 %4652
    %4654 = vrot.lane.b32.xlu0 %v4600, 1
    %v4655 = vpop.permute.xlu0 %4654
    %4656 = vrot.lane.b32.xlu0 %v4601, 1
    %v4657 = vpop.permute.xlu0 %4656
    %4658 = vrot.lane.b32.xlu0 %v4602, 1
    %v4659 = vpop.permute.xlu0 %4658
    %4660 = vrot.lane.b32.xlu0 %v4603, 1
    %v4661 = vpop.permute.xlu0 %4660
    %4662 = vrot.lane.b32.xlu0 %v4604, 1
    %v4663 = vpop.permute.xlu0 %4662
    %4664 = vrot.lane.b32.xlu0 %v4605, 1
    %v4665 = vpop.permute.xlu0 %4664
    %4666 = vrot.lane.b32.xlu0 %v4606, 1
    %v4667 = vpop.permute.xlu0 %4666
    %4668 = vrot.lane.b32.xlu0 %v4607, 1
    %v4669 = vpop.permute.xlu0 %4668
    %4670 = vrot.lane.b32.xlu0 %v4608, 1
    %v4671 = vpop.permute.xlu0 %4670
    %4672 = vrot.lane.b32.xlu0 %v4609, 1
    %v4673 = vpop.permute.xlu0 %4672
    %v4674 = vsel %vm856, %v4651, %v4653
    %v4675 = vsel %vm856, %v4653, %v4655
    %v4676 = vsel %vm856, %v4657, %v4659
    %v4677 = vsel %vm856, %v4659, %v4661
    %v4678 = vsel %vm856, %v4663, %v4665
    %v4679 = vsel %vm856, %v4665, %v4667
    %v4680 = vsel %vm856, %v4669, %v4671
    %v4681 = vsel %vm856, %v4671, %v4673
    %v4691 = vsel %vm269, %v4634, 0
    %v4694 = vsel %vm269, %v4635, 0
    %v4697 = vsel %vm269, %v4636, 0
    %v4700 = vsel %vm269, %v4637, 0
    %4702 = vmatprep.subr.bf16.mxu0 %v4675
    %4703 = vmatpush1.bf16.msra.mxu0 %v4674
    %4704 = vmatprep.subr.bf16.mxu0 %v4677
    %4705 = vmatpush1.bf16.msra.mxu0 %v4676
    %4706 = vmatprep.subr.bf16.mxu0 %v4679
    %4707 = vmatpush1.bf16.msra.mxu0 %v4678
    %4708 = vmatprep.subr.bf16.mxu0 %v4681
    %4709 = vmatpush1.bf16.msra.mxu0 %v4680
    %4710 = vmatprep.subr.bf16.mxu0 0
    %4711 = vmatpush1.bf16.msra.mxu0 0
    %4712 = vmatprep.subr.bf16.mxu0 0
    %4713 = vmatpush1.bf16.msra.mxu0 0
    %4714 = vmatprep.subr.bf16.mxu0 0
    %4715 = vmatpush1.bf16.msra.mxu0 0
    %4716 = vmatprep.subr.bf16.mxu0 0
    %4717 = vmatpush1.bf16.msra.mxu0 0
    %4718 = vmatprep.subr.bf16.mxu0 0
    %4719 = vmatpush1.bf16.msra.mxu0 0
    %4720 = vmatprep.subr.bf16.mxu0 0
    %4721 = vmatpush1.bf16.msra.mxu0 0
    %4722 = vmatprep.subr.bf16.mxu0 0
    %4723 = vmatpush1.bf16.msra.mxu0 0
    %4724 = vmatprep.subr.bf16.mxu0 0
    %4725 = vmatpush1.bf16.msra.mxu0 0
    %4726 = vmatprep.subr.bf16.mxu0 0
    %4727 = vmatpush1.bf16.msra.mxu0 0
    %4728 = vmatprep.subr.bf16.mxu0 0
    %4729 = vmatpush1.bf16.msra.mxu0 0
    %4730 = vmatprep.subr.bf16.mxu0 0
    %4731 = vmatpush1.bf16.msra.mxu0 0
    %4732 = vmatprep.subr.bf16.mxu0 0
    %4733 = vmatpush1.bf16.msra.mxu0 0
    %4734 = vmatprep.mubr.bf16.mxu0 0
    %4735 = vmatmul.mubr.bf16.gmra.mrb[0].mxu0 %v4691
    %v4736 = vpop.f32.mrb[0].mxu0
    %v4737 = vadd.f32 0.0, %v4736
    %v4738 = vpop.f32.mrb[0].mxu0
    %v4739 = vadd.f32 0.0, %v4738
    %v4740 = vpop.f32.mrb[0].mxu0
    %v4741 = vadd.f32 0.0, %v4740
    %v4742 = vpop.f32.mrb[0].mxu0
    %v4743 = vadd.f32 0.0, %v4742
    %4744 = vmatprep.mubr.bf16.mxu0 0
    %4745 = vmatmul.mubr.bf16.gmra.mrb[0].mxu0 %v4694
    %v4746 = vpop.f32.mrb[0].mxu0
    %v4747 = vadd.f32 0.0, %v4746
    %v4748 = vpop.f32.mrb[0].mxu0
    %v4749 = vadd.f32 0.0, %v4748
    %v4750 = vpop.f32.mrb[0].mxu0
    %v4751 = vadd.f32 0.0, %v4750
    %v4752 = vpop.f32.mrb[0].mxu0
    %v4753 = vadd.f32 0.0, %v4752
    %4754 = vmatprep.mubr.bf16.mxu0 0
    %4755 = vmatmul.mubr.bf16.gmra.mrb[0].mxu0 %v4697
    %v4756 = vpop.f32.mrb[0].mxu0
    %v4757 = vadd.f32 0.0, %v4756
    %v4758 = vpop.f32.mrb[0].mxu0
    %v4759 = vadd.f32 0.0, %v4758
    %v4760 = vpop.f32.mrb[0].mxu0
    %v4761 = vadd.f32 0.0, %v4760
    %v4762 = vpop.f32.mrb[0].mxu0
    %v4763 = vadd.f32 0.0, %v4762
    %4764 = vmatprep.mubr.bf16.mxu0 0
    %4765 = vmatmul.mubr.bf16.gmra.mrb[0].mxu0 %v4700
    %v4766 = vpop.f32.mrb[0].mxu0
    %v4767 = vadd.f32 0.0, %v4766
    %v4768 = vpop.f32.mrb[0].mxu0
    %v4769 = vadd.f32 0.0, %v4768
    %v4770 = vpop.f32.mrb[0].mxu0
    %v4771 = vadd.f32 0.0, %v4770
    %v4772 = vpop.f32.mrb[0].mxu0
    %v4773 = vadd.f32 0.0, %v4772
    %4774 = vdwg.mxu0
    %v4775 = vadd.f32 %v4562, %v4737
    %v4776 = vadd.f32 %v4563, %v4739
    %v4777 = vadd.f32 %v4564, %v4741
    %v4778 = vadd.f32 %v4565, %v4743
    %v4779 = vadd.f32 %v4566, %v4747
    %v4780 = vadd.f32 %v4567, %v4749
    %v4781 = vadd.f32 %v4568, %v4751
    %v4782 = vadd.f32 %v4569, %v4753
    %v4783 = vadd.f32 %v4570, %v4757
    %v4784 = vadd.f32 %v4571, %v4759
    %v4785 = vadd.f32 %v4572, %v4761
    %v4786 = vadd.f32 %v4573, %v4763
    %v4787 = vadd.f32 %v4574, %v4767
    %v4788 = vadd.f32 %v4575, %v4769
    %v4789 = vadd.f32 %v4576, %v4771
    %v4790 = vadd.f32 %v4577, %v4773
    %v4791 = vld [vmem:[%s974] sm:$0xf]
    %v4792 = vld [vmem:[%s974 + $0x4] sm:$0xf]
    %v4793 = vld [vmem:[%s974 + $0x8] sm:$0xf]
    %v4794 = vld [vmem:[%s974 + $0xc] sm:$0xf]
    %v4795 = vld [vmem:[%s974 + $0x10] sm:$0xf]
    %v4796 = vld [vmem:[%s974 + $0x14] sm:$0xf]
    %v4797 = vld [vmem:[%s974 + $0x18] sm:$0xf]
    %v4798 = vld [vmem:[%s974 + $0x1c] sm:$0xf]
    %v4807 = vunpack.c.l.b16 %v4791
    %v4808 = vunpack.c.l.b16 %v4792
    %v4809 = vunpack.c.l.b16 %v4793
    %v4810 = vunpack.c.l.b16 %v4794
    %v4811 = vunpack.c.l.b16 %v4795
    %v4812 = vunpack.c.l.b16 %v4796
    %v4813 = vunpack.c.l.b16 %v4797
    %v4814 = vunpack.c.l.b16 %v4798
    %v4815 = vpack.c.b16 %v4808, %v4807
    %v4816 = vpack.c.b16 %v4810, %v4809
    %v4817 = vpack.c.b16 %v4812, %v4811
    %v4818 = vpack.c.b16 %v4814, %v4813
    %v4820 = vsel %vm269, %v4815, 0
    %v4823 = vsel %vm269, %v4816, 0
    %v4826 = vsel %vm269, %v4817, 0
    %v4829 = vsel %vm269, %v4818, 0
    %4831 = vmatprep.subr.bf16.mxu0 %v4580
    %4832 = vmatpush1.bf16.msra.mxu0 %v4579
    %4833 = vmatprep.subr.bf16.mxu0 %v4583
    %4834 = vmatpush1.bf16.msra.mxu0 %v4582
    %4835 = vmatprep.subr.bf16.mxu0 %v4586
    %4836 = vmatpush1.bf16.msra.mxu0 %v4585
    %4837 = vmatprep.subr.bf16.mxu0 %v4589
    %4838 = vmatpush1.bf16.msra.mxu0 %v4588
    %4839 = vmatprep.subr.bf16.mxu0 0
    %4840 = vmatpush1.bf16.msra.mxu0 0
    %4841 = vmatprep.subr.bf16.mxu0 0
    %4842 = vmatpush1.bf16.msra.mxu0 0
    %4843 = vmatprep.subr.bf16.mxu0 0
    %4844 = vmatpush1.bf16.msra.mxu0 0
    %4845 = vmatprep.subr.bf16.mxu0 0
    %4846 = vmatpush1.bf16.msra.mxu0 0
    %4847 = vmatprep.subr.bf16.mxu0 0
    %4848 = vmatpush1.bf16.msra.mxu0 0
    %4849 = vmatprep.subr.bf16.mxu0 0
    %4850 = vmatpush1.bf16.msra.mxu0 0
    %4851 = vmatprep.subr.bf16.mxu0 0
    %4852 = vmatpush1.bf16.msra.mxu0 0
    %4853 = vmatprep.subr.bf16.mxu0 0
    %4854 = vmatpush1.bf16.msra.mxu0 0
    %4855 = vmatprep.subr.bf16.mxu0 0
    %4856 = vmatpush1.bf16.msra.mxu0 0
    %4857 = vmatprep.subr.bf16.mxu0 0
    %4858 = vmatpush1.bf16.msra.mxu0 0
    %4859 = vmatprep.subr.bf16.mxu0 0
    %4860 = vmatpush1.bf16.msra.mxu0 0
    %4861 = vmatprep.subr.bf16.mxu0 0
    %4862 = vmatpush1.bf16.msra.mxu0 0
    %4863 = vmatprep.mubr.bf16.mxu0 0
    %4864 = vmatmul.mubr.bf16.gmra.mrb[0].mxu0 %v4820
    %v4865 = vpop.f32.mrb[0].mxu0
    %v4866 = vadd.f32 0.0, %v4865
    %v4867 = vpop.f32.mrb[0].mxu0
    %v4868 = vadd.f32 0.0, %v4867
    %v4869 = vpop.f32.mrb[0].mxu0
    %v4870 = vadd.f32 0.0, %v4869
    %v4871 = vpop.f32.mrb[0].mxu0
    %v4872 = vadd.f32 0.0, %v4871
    %4873 = vmatprep.mubr.bf16.mxu0 0
    %4874 = vmatmul.mubr.bf16.gmra.mrb[0].mxu0 %v4823
    %v4875 = vpop.f32.mrb[0].mxu0
    %v4876 = vadd.f32 0.0, %v4875
    %v4877 = vpop.f32.mrb[0].mxu0
    %v4878 = vadd.f32 0.0, %v4877
    %v4879 = vpop.f32.mrb[0].mxu0
    %v4880 = vadd.f32 0.0, %v4879
    %v4881 = vpop.f32.mrb[0].mxu0
    %v4882 = vadd.f32 0.0, %v4881
    %4883 = vmatprep.mubr.bf16.mxu0 0
    %4884 = vmatmul.mubr.bf16.gmra.mrb[0].mxu0 %v4826
    %v4885 = vpop.f32.mrb[0].mxu0
    %v4886 = vadd.f32 0.0, %v4885
    %v4887 = vpop.f32.mrb[0].mxu0
    %v4888 = vadd.f32 0.0, %v4887
    %v4889 = vpop.f32.mrb[0].mxu0
    %v4890 = vadd.f32 0.0, %v4889
    %v4891 = vpop.f32.mrb[0].mxu0
    %v4892 = vadd.f32 0.0, %v4891
    %4893 = vmatprep.mubr.bf16.mxu0 0
    %4894 = vmatmul.mubr.bf16.gmra.mrb[0].mxu0 %v4829
    %v4895 = vpop.f32.mrb[0].mxu0
    %v4896 = vadd.f32 0.0, %v4895
    %v4897 = vpop.f32.mrb[0].mxu0
    %v4898 = vadd.f32 0.0, %v4897
    %v4899 = vpop.f32.mrb[0].mxu0
    %v4900 = vadd.f32 0.0, %v4899
    %v4901 = vpop.f32.mrb[0].mxu0
    %v4902 = vadd.f32 0.0, %v4901
    %4903 = vdwg.mxu0
    %v4904 = vadd.f32 %v4775, %v4866
    %v4905 = vadd.f32 %v4776, %v4868
    %v4906 = vadd.f32 %v4777, %v4870
    %v4907 = vadd.f32 %v4778, %v4872
    %v4908 = vadd.f32 %v4779, %v4876
    %v4909 = vadd.f32 %v4780, %v4878
    %v4910 = vadd.f32 %v4781, %v4880
    %v4911 = vadd.f32 %v4782, %v4882
    %v4912 = vadd.f32 %v4783, %v4886
    %v4913 = vadd.f32 %v4784, %v4888
    %v4914 = vadd.f32 %v4785, %v4890
    %v4915 = vadd.f32 %v4786, %v4892
    %v4916 = vadd.f32 %v4787, %v4896
    %v4917 = vadd.f32 %v4788, %v4898
    %v4918 = vadd.f32 %v4789, %v4900
    %v4919 = vadd.f32 %v4790, %v4902
    %v4920 = vld [vmem:[#allocation2 + $0x8] sm:$0xff]
    %v4921 = vld [vmem:[#allocation2 + $0x10] sm:$0xff]
    %v4922 = vld [vmem:[#allocation2 + $0x18] sm:$0xff]
    %v4923 = vld [vmem:[#allocation2 + $0x28] sm:$0xff]
    %v4924 = vld [vmem:[#allocation2 + $0x30] sm:$0xff]
    %v4925 = vld [vmem:[#allocation2 + $0x38] sm:$0xff]
    %v4926 = vld [vmem:[#allocation2 + $0x48] sm:$0xff]
    %v4927 = vld [vmem:[#allocation2 + $0x50] sm:$0xff]
    %v4928 = vld [vmem:[#allocation2 + $0x58] sm:$0xff]
    %v4929 = vld [vmem:[#allocation2 + $0x68] sm:$0xff]
    %v4930 = vld [vmem:[#allocation2 + $0x70] sm:$0xff]
    %v4931 = vld [vmem:[#allocation2 + $0x78] sm:$0xff]
    %4932 = vrot.lane.b32.xlu0 %v4367, 1
    %v4933 = vpop.permute.xlu0 %4932
    %4934 = vrot.lane.b32.xlu0 %v4374, 1
    %v4935 = vpop.permute.xlu0 %4934
    %v4936 = vsel %vm856, %v4933, %v4935
    %v4940 = vmul.bf16 %v4920, %v4933
    %v4941 = vmul.bf16 %v4921, %v4936
    %v4942 = vmul.bf16 %v4922, %v4935
    %v4943 = vmul.bf16 %v4923, %v4933
    %v4944 = vmul.bf16 %v4924, %v4936
    %v4945 = vmul.bf16 %v4925, %v4935
    %v4946 = vmul.bf16 %v4926, %v4933
    %v4947 = vmul.bf16 %v4927, %v4936
    %v4948 = vmul.bf16 %v4928, %v4935
    %v4949 = vmul.bf16 %v4929, %v4933
    %v4950 = vmul.bf16 %v4930, %v4936
    %v4951 = vmul.bf16 %v4931, %v4935
    %v4952 = vld [vmem:[%s1136] sm:$0xf]
    %v4953 = vld [vmem:[%s1136 + $0x4] sm:$0xf]
    %v4954 = vld [vmem:[%s1136 + $0x8] sm:$0xf]
    %v4955 = vld [vmem:[%s1136 + $0xc] sm:$0xf]
    %v4956 = vld [vmem:[%s1136 + $0x10] sm:$0xf]
    %v4957 = vld [vmem:[%s1136 + $0x14] sm:$0xf]
    %v4958 = vld [vmem:[%s1136 + $0x18] sm:$0xf]
    %v4959 = vld [vmem:[%s1136 + $0x1c] sm:$0xf]
    %v4968 = vunpack.c.l.b16 %v4952
    %v4969 = vunpack.c.l.b16 %v4953
    %v4970 = vunpack.c.l.b16 %v4954
    %v4971 = vunpack.c.l.b16 %v4955
    %v4972 = vunpack.c.l.b16 %v4956
    %v4973 = vunpack.c.l.b16 %v4957
    %v4974 = vunpack.c.l.b16 %v4958
    %v4975 = vunpack.c.l.b16 %v4959
    %v4976 = vpack.c.b16 %v4969, %v4968
    %v4977 = vpack.c.b16 %v4971, %v4970
    %v4978 = vpack.c.b16 %v4973, %v4972
    %v4979 = vpack.c.b16 %v4975, %v4974
    %4992 = vrot.lane.b32.xlu0 %v4940, 127
    %v4993 = vpop.permute.xlu0 %4992
    %4994 = vrot.lane.b32.xlu0 %v4941, 127
    %v4995 = vpop.permute.xlu0 %4994
    %4996 = vrot.lane.b32.xlu0 %v4942, 127
    %v4997 = vpop.permute.xlu0 %4996
    %4998 = vrot.lane.b32.xlu0 %v4943, 127
    %v4999 = vpop.permute.xlu0 %4998
    %5000 = vrot.lane.b32.xlu0 %v4944, 127
    %v5001 = vpop.permute.xlu0 %5000
    %5002 = vrot.lane.b32.xlu0 %v4945, 127
    %v5003 = vpop.permute.xlu0 %5002
    %5004 = vrot.lane.b32.xlu0 %v4946, 127
    %v5005 = vpop.permute.xlu0 %5004
    %5006 = vrot.lane.b32.xlu0 %v4947, 127
    %v5007 = vpop.permute.xlu0 %5006
    %5008 = vrot.lane.b32.xlu0 %v4948, 127
    %v5009 = vpop.permute.xlu0 %5008
    %5010 = vrot.lane.b32.xlu0 %v4949, 127
    %v5011 = vpop.permute.xlu0 %5010
    %5012 = vrot.lane.b32.xlu0 %v4950, 127
    %v5013 = vpop.permute.xlu0 %5012
    %5014 = vrot.lane.b32.xlu0 %v4951, 127
    %v5015 = vpop.permute.xlu0 %5014
    %v5016 = vsel %vm774, %v4993, %v4995
    %v5017 = vsel %vm774, %v4995, %v4997
    %v5018 = vsel %vm774, %v4999, %v5001
    %v5019 = vsel %vm774, %v5001, %v5003
    %v5020 = vsel %vm774, %v5005, %v5007
    %v5021 = vsel %vm774, %v5007, %v5009
    %v5022 = vsel %vm774, %v5011, %v5013
    %v5023 = vsel %vm774, %v5013, %v5015
    %v5033 = vsel %vm269, %v4976, 0
    %v5036 = vsel %vm269, %v4977, 0
    %v5039 = vsel %vm269, %v4978, 0
    %v5042 = vsel %vm269, %v4979, 0
    %5044 = vmatprep.subr.bf16.mxu0 %v5017
    %5045 = vmatpush1.bf16.msra.mxu0 %v5016
    %5046 = vmatprep.subr.bf16.mxu0 %v5019
    %5047 = vmatpush1.bf16.msra.mxu0 %v5018
    %5048 = vmatprep.subr.bf16.mxu0 %v5021
    %5049 = vmatpush1.bf16.msra.mxu0 %v5020
    %5050 = vmatprep.subr.bf16.mxu0 %v5023
    %5051 = vmatpush1.bf16.msra.mxu0 %v5022
    %5052 = vmatprep.subr.bf16.mxu0 0
    %5053 = vmatpush1.bf16.msra.mxu0 0
    %5054 = vmatprep.subr.bf16.mxu0 0
    %5055 = vmatpush1.bf16.msra.mxu0 0
    %5056 = vmatprep.subr.bf16.mxu0 0
    %5057 = vmatpush1.bf16.msra.mxu0 0
    %5058 = vmatprep.subr.bf16.mxu0 0
    %5059 = vmatpush1.bf16.msra.mxu0 0
    %5060 = vmatprep.subr.bf16.mxu0 0
    %5061 = vmatpush1.bf16.msra.mxu0 0
    %5062 = vmatprep.subr.bf16.mxu0 0
    %5063 = vmatpush1.bf16.msra.mxu0 0
    %5064 = vmatprep.subr.bf16.mxu0 0
    %5065 = vmatpush1.bf16.msra.mxu0 0
    %5066 = vmatprep.subr.bf16.mxu0 0
    %5067 = vmatpush1.bf16.msra.mxu0 0
    %5068 = vmatprep.subr.bf16.mxu0 0
    %5069 = vmatpush1.bf16.msra.mxu0 0
    %5070 = vmatprep.subr.bf16.mxu0 0
    %5071 = vmatpush1.bf16.msra.mxu0 0
    %5072 = vmatprep.subr.bf16.mxu0 0
    %5073 = vmatpush1.bf16.msra.mxu0 0
    %5074 = vmatprep.subr.bf16.mxu0 0
    %5075 = vmatpush1.bf16.msra.mxu0 0
    %5076 = vmatprep.mubr.bf16.mxu0 0
    %5077 = vmatmul.mubr.bf16.gmra.mrb[0].mxu0 %v5033
    %v5078 = vpop.f32.mrb[0].mxu0
    %v5079 = vadd.f32 0.0, %v5078
    %v5080 = vpop.f32.mrb[0].mxu0
    %v5081 = vadd.f32 0.0, %v5080
    %v5082 = vpop.f32.mrb[0].mxu0
    %v5083 = vadd.f32 0.0, %v5082
    %v5084 = vpop.f32.mrb[0].mxu0
    %v5085 = vadd.f32 0.0, %v5084
    %5086 = vmatprep.mubr.bf16.mxu0 0
    %5087 = vmatmul.mubr.bf16.gmra.mrb[0].mxu0 %v5036
    %v5088 = vpop.f32.mrb[0].mxu0
    %v5089 = vadd.f32 0.0, %v5088
    %v5090 = vpop.f32.mrb[0].mxu0
    %v5091 = vadd.f32 0.0, %v5090
    %v5092 = vpop.f32.mrb[0].mxu0
    %v5093 = vadd.f32 0.0, %v5092
    %v5094 = vpop.f32.mrb[0].mxu0
    %v5095 = vadd.f32 0.0, %v5094
    %5096 = vmatprep.mubr.bf16.mxu0 0
    %5097 = vmatmul.mubr.bf16.gmra.mrb[0].mxu0 %v5039
    %v5098 = vpop.f32.mrb[0].mxu0
    %v5099 = vadd.f32 0.0, %v5098
    %v5100 = vpop.f32.mrb[0].mxu0
    %v5101 = vadd.f32 0.0, %v5100
    %v5102 = vpop.f32.mrb[0].mxu0
    %v5103 = vadd.f32 0.0, %v5102
    %v5104 = vpop.f32.mrb[0].mxu0
    %v5105 = vadd.f32 0.0, %v5104
    %5106 = vmatprep.mubr.bf16.mxu0 0
    %5107 = vmatmul.mubr.bf16.gmra.mrb[0].mxu0 %v5042
    %v5108 = vpop.f32.mrb[0].mxu0
    %v5109 = vadd.f32 0.0, %v5108
    %v5110 = vpop.f32.mrb[0].mxu0
    %v5111 = vadd.f32 0.0, %v5110
    %v5112 = vpop.f32.mrb[0].mxu0
    %v5113 = vadd.f32 0.0, %v5112
    %v5114 = vpop.f32.mrb[0].mxu0
    %v5115 = vadd.f32 0.0, %v5114
    %5116 = vdwg.mxu0
    %v5117 = vadd.f32 %v4904, %v5079
    %v5118 = vadd.f32 %v4905, %v5081
    %v5119 = vadd.f32 %v4906, %v5083
    %v5120 = vadd.f32 %v4907, %v5085
    %v5121 = vadd.f32 %v4908, %v5089
    %v5122 = vadd.f32 %v4909, %v5091
    %v5123 = vadd.f32 %v4910, %v5093
    %v5124 = vadd.f32 %v4911, %v5095
    %v5125 = vadd.f32 %v4912, %v5099
    %v5126 = vadd.f32 %v4913, %v5101
    %v5127 = vadd.f32 %v4914, %v5103
    %v5128 = vadd.f32 %v4915, %v5105
    %v5129 = vadd.f32 %v4916, %v5109
    %v5130 = vadd.f32 %v4917, %v5111
    %v5131 = vadd.f32 %v4918, %v5113
    %v5132 = vadd.f32 %v4919, %v5115
    %5133 = vrot.lane.b32.xlu0 %v3977, 15
    %v5134 = vpop.permute.xlu0 %5133
    %5135 = vrot.lane.b32.xlu0 %v3984, 15
    %v5136 = vpop.permute.xlu0 %5135
    %v5137 = vsel %vm640, %v5134, %v5136
    %v5141 = vmul.bf16 %v4920, %v5134
    %v5142 = vmul.bf16 %v4921, %v5137
    %v5143 = vmul.bf16 %v4922, %v5136
    %v5144 = vmul.bf16 %v4923, %v5134
    %v5145 = vmul.bf16 %v4924, %v5137
    %v5146 = vmul.bf16 %v4925, %v5136
    %v5147 = vmul.bf16 %v4926, %v5134
    %v5148 = vmul.bf16 %v4927, %v5137
    %v5149 = vmul.bf16 %v4928, %v5136
    %v5150 = vmul.bf16 %v4929, %v5134
    %v5151 = vmul.bf16 %v4930, %v5137
    %v5152 = vmul.bf16 %v4931, %v5136
    %v5153 = vld [vmem:[%s1338] sm:$0xf]
    %v5154 = vld [vmem:[%s1338 + $0x4] sm:$0xf]
    %v5155 = vld [vmem:[%s1338 + $0x8] sm:$0xf]
    %v5156 = vld [vmem:[%s1338 + $0xc] sm:$0xf]
    %v5157 = vld [vmem:[%s1338 + $0x10] sm:$0xf]
    %v5158 = vld [vmem:[%s1338 + $0x14] sm:$0xf]
    %v5159 = vld [vmem:[%s1338 + $0x18] sm:$0xf]
    %v5160 = vld [vmem:[%s1338 + $0x1c] sm:$0xf]
    %v5169 = vunpack.c.l.b16 %v5153
    %v5170 = vunpack.c.l.b16 %v5154
    %v5171 = vunpack.c.l.b16 %v5155
    %v5172 = vunpack.c.l.b16 %v5156
    %v5173 = vunpack.c.l.b16 %v5157
    %v5174 = vunpack.c.l.b16 %v5158
    %v5175 = vunpack.c.l.b16 %v5159
    %v5176 = vunpack.c.l.b16 %v5160
    %v5177 = vpack.c.b16 %v5170, %v5169
    %v5178 = vpack.c.b16 %v5172, %v5171
    %v5179 = vpack.c.b16 %v5174, %v5173
    %v5180 = vpack.c.b16 %v5176, %v5175
    %5193 = vrot.lane.b32.xlu0 %v5141, 113
    %v5194 = vpop.permute.xlu0 %5193
    %5195 = vrot.lane.b32.xlu0 %v5142, 113
    %v5196 = vpop.permute.xlu0 %5195
    %5197 = vrot.lane.b32.xlu0 %v5143, 113
    %v5198 = vpop.permute.xlu0 %5197
    %5199 = vrot.lane.b32.xlu0 %v5144, 113
    %v5200 = vpop.permute.xlu0 %5199
    %5201 = vrot.lane.b32.xlu0 %v5145, 113
    %v5202 = vpop.permute.xlu0 %5201
    %5203 = vrot.lane.b32.xlu0 %v5146, 113
    %v5204 = vpop.permute.xlu0 %5203
    %5205 = vrot.lane.b32.xlu0 %v5147, 113
    %v5206 = vpop.permute.xlu0 %5205
    %5207 = vrot.lane.b32.xlu0 %v5148, 113
    %v5208 = vpop.permute.xlu0 %5207
    %5209 = vrot.lane.b32.xlu0 %v5149, 113
    %v5210 = vpop.permute.xlu0 %5209
    %5211 = vrot.lane.b32.xlu0 %v5150, 113
    %v5212 = vpop.permute.xlu0 %5211
    %5213 = vrot.lane.b32.xlu0 %v5151, 113
    %v5214 = vpop.permute.xlu0 %5213
    %5215 = vrot.lane.b32.xlu0 %v5152, 113
    %v5216 = vpop.permute.xlu0 %5215
    %v5217 = vsel %vm558, %v5194, %v5196
    %v5218 = vsel %vm558, %v5196, %v5198
    %v5219 = vsel %vm558, %v5200, %v5202
    %v5220 = vsel %vm558, %v5202, %v5204
    %v5221 = vsel %vm558, %v5206, %v5208
    %v5222 = vsel %vm558, %v5208, %v5210
    %v5223 = vsel %vm558, %v5212, %v5214
    %v5224 = vsel %vm558, %v5214, %v5216
    %v5234 = vsel %vm269, %v5177, 0
    %v5237 = vsel %vm269, %v5178, 0
    %v5240 = vsel %vm269, %v5179, 0
    %v5243 = vsel %vm269, %v5180, 0
    %5245 = vmatprep.subr.bf16.mxu0 %v5218
    %5246 = vmatpush1.bf16.msra.mxu0 %v5217
    %5247 = vmatprep.subr.bf16.mxu0 %v5220
    %5248 = vmatpush1.bf16.msra.mxu0 %v5219
    %5249 = vmatprep.subr.bf16.mxu0 %v5222
    %5250 = vmatpush1.bf16.msra.mxu0 %v5221
    %5251 = vmatprep.subr.bf16.mxu0 %v5224
    %5252 = vmatpush1.bf16.msra.mxu0 %v5223
    %5253 = vmatprep.subr.bf16.mxu0 0
    %5254 = vmatpush1.bf16.msra.mxu0 0
    %5255 = vmatprep.subr.bf16.mxu0 0
    %5256 = vmatpush1.bf16.msra.mxu0 0
    %5257 = vmatprep.subr.bf16.mxu0 0
    %5258 = vmatpush1.bf16.msra.mxu0 0
    %5259 = vmatprep.subr.bf16.mxu0 0
    %5260 = vmatpush1.bf16.msra.mxu0 0
    %5261 = vmatprep.subr.bf16.mxu0 0
    %5262 = vmatpush1.bf16.msra.mxu0 0
    %5263 = vmatprep.subr.bf16.mxu0 0
    %5264 = vmatpush1.bf16.msra.mxu0 0
    %5265 = vmatprep.subr.bf16.mxu0 0
    %5266 = vmatpush1.bf16.msra.mxu0 0
    %5267 = vmatprep.subr.bf16.mxu0 0
    %5268 = vmatpush1.bf16.msra.mxu0 0
    %5269 = vmatprep.subr.bf16.mxu0 0
    %5270 = vmatpush1.bf16.msra.mxu0 0
    %5271 = vmatprep.subr.bf16.mxu0 0
    %5272 = vmatpush1.bf16.msra.mxu0 0
    %5273 = vmatprep.subr.bf16.mxu0 0
    %5274 = vmatpush1.bf16.msra.mxu0 0
    %5275 = vmatprep.subr.bf16.mxu0 0
    %5276 = vmatpush1.bf16.msra.mxu0 0
    %5277 = vmatprep.mubr.bf16.mxu0 0
    %5278 = vmatmul.mubr.bf16.gmra.mrb[0].mxu0 %v5234
    %v5279 = vpop.f32.mrb[0].mxu0
    %v5280 = vadd.f32 0.0, %v5279
    %v5281 = vpop.f32.mrb[0].mxu0
    %v5282 = vadd.f32 0.0, %v5281
    %v5283 = vpop.f32.mrb[0].mxu0
    %v5284 = vadd.f32 0.0, %v5283
    %v5285 = vpop.f32.mrb[0].mxu0
    %v5286 = vadd.f32 0.0, %v5285
    %5287 = vmatprep.mubr.bf16.mxu0 0
    %5288 = vmatmul.mubr.bf16.gmra.mrb[0].mxu0 %v5237
    %v5289 = vpop.f32.mrb[0].mxu0
    %v5290 = vadd.f32 0.0, %v5289
    %v5291 = vpop.f32.mrb[0].mxu0
    %v5292 = vadd.f32 0.0, %v5291
    %v5293 = vpop.f32.mrb[0].mxu0
    %v5294 = vadd.f32 0.0, %v5293
    %v5295 = vpop.f32.mrb[0].mxu0
    %v5296 = vadd.f32 0.0, %v5295
    %5297 = vmatprep.mubr.bf16.mxu0 0
    %5298 = vmatmul.mubr.bf16.gmra.mrb[0].mxu0 %v5240
    %v5299 = vpop.f32.mrb[0].mxu0
    %v5300 = vadd.f32 0.0, %v5299
    %v5301 = vpop.f32.mrb[0].mxu0
    %v5302 = vadd.f32 0.0, %v5301
    %v5303 = vpop.f32.mrb[0].mxu0
    %v5304 = vadd.f32 0.0, %v5303
    %v5305 = vpop.f32.mrb[0].mxu0
    %v5306 = vadd.f32 0.0, %v5305
    %5307 = vmatprep.mubr.bf16.mxu0 0
    %5308 = vmatmul.mubr.bf16.gmra.mrb[0].mxu0 %v5243
    %v5309 = vpop.f32.mrb[0].mxu0
    %v5310 = vadd.f32 0.0, %v5309
    %v5311 = vpop.f32.mrb[0].mxu0
    %v5312 = vadd.f32 0.0, %v5311
    %v5313 = vpop.f32.mrb[0].mxu0
    %v5314 = vadd.f32 0.0, %v5313
    %v5315 = vpop.f32.mrb[0].mxu0
    %v5316 = vadd.f32 0.0, %v5315
    %5317 = vdwg.mxu0
    %v5318 = vadd.f32 %v5117, %v5280
    %v5319 = vadd.f32 %v5118, %v5282
    %v5320 = vadd.f32 %v5119, %v5284
    %v5321 = vadd.f32 %v5120, %v5286
    %v5322 = vadd.f32 %v5121, %v5290
    %v5323 = vadd.f32 %v5122, %v5292
    %v5324 = vadd.f32 %v5123, %v5294
    %v5325 = vadd.f32 %v5124, %v5296
    %v5326 = vadd.f32 %v5125, %v5300
    %v5327 = vadd.f32 %v5126, %v5302
    %v5328 = vadd.f32 %v5127, %v5304
    %v5329 = vadd.f32 %v5128, %v5306
    %v5330 = vadd.f32 %v5129, %v5310
    %v5331 = vadd.f32 %v5130, %v5312
    %v5332 = vadd.f32 %v5131, %v5314
    %v5333 = vadd.f32 %v5132, %v5316
    %v5334 = vld [vmem:[%s1520] sm:$0xf]
    %v5335 = vld [vmem:[%s1520 + $0x4] sm:$0xf]
    %v5336 = vld [vmem:[%s1520 + $0x8] sm:$0xf]
    %v5337 = vld [vmem:[%s1520 + $0xc] sm:$0xf]
    %v5338 = vld [vmem:[%s1520 + $0x10] sm:$0xf]
    %v5339 = vld [vmem:[%s1520 + $0x14] sm:$0xf]
    %v5340 = vld [vmem:[%s1520 + $0x18] sm:$0xf]
    %v5341 = vld [vmem:[%s1520 + $0x1c] sm:$0xf]
    %v5350 = vunpack.c.l.b16 %v5334
    %v5351 = vunpack.c.l.b16 %v5335
    %v5352 = vunpack.c.l.b16 %v5336
    %v5353 = vunpack.c.l.b16 %v5337
    %v5354 = vunpack.c.l.b16 %v5338
    %v5355 = vunpack.c.l.b16 %v5339
    %v5356 = vunpack.c.l.b16 %v5340
    %v5357 = vunpack.c.l.b16 %v5341
    %v5358 = vpack.c.b16 %v5351, %v5350
    %v5359 = vpack.c.b16 %v5353, %v5352
    %v5360 = vpack.c.b16 %v5355, %v5354
    %v5361 = vpack.c.b16 %v5357, %v5356
    %5374 = vrot.lane.b32.xlu0 %v4920, 112
    %v5375 = vpop.permute.xlu0 %5374
    %5376 = vrot.lane.b32.xlu0 %v4921, 112
    %v5377 = vpop.permute.xlu0 %5376
    %5378 = vrot.lane.b32.xlu0 %v4922, 112
    %v5379 = vpop.permute.xlu0 %5378
    %5380 = vrot.lane.b32.xlu0 %v4923, 112
    %v5381 = vpop.permute.xlu0 %5380
    %5382 = vrot.lane.b32.xlu0 %v4924, 112
    %v5383 = vpop.permute.xlu0 %5382
    %5384 = vrot.lane.b32.xlu0 %v4925, 112
    %v5385 = vpop.permute.xlu0 %5384
    %5386 = vrot.lane.b32.xlu0 %v4926, 112
    %v5387 = vpop.permute.xlu0 %5386
    %5388 = vrot.lane.b32.xlu0 %v4927, 112
    %v5389 = vpop.permute.xlu0 %5388
    %5390 = vrot.lane.b32.xlu0 %v4928, 112
    %v5391 = vpop.permute.xlu0 %5390
    %5392 = vrot.lane.b32.xlu0 %v4929, 112
    %v5393 = vpop.permute.xlu0 %5392
    %5394 = vrot.lane.b32.xlu0 %v4930, 112
    %v5395 = vpop.permute.xlu0 %5394
    %5396 = vrot.lane.b32.xlu0 %v4931, 112
    %v5397 = vpop.permute.xlu0 %5396
    %v5398 = vsel %vm1585, %v5375, %v5377
    %v5399 = vsel %vm1585, %v5377, %v5379
    %v5400 = vsel %vm1585, %v5381, %v5383
    %v5401 = vsel %vm1585, %v5383, %v5385
    %v5402 = vsel %vm1585, %v5387, %v5389
    %v5403 = vsel %vm1585, %v5389, %v5391
    %v5404 = vsel %vm1585, %v5393, %v5395
    %v5405 = vsel %vm1585, %v5395, %v5397
    %v5415 = vsel %vm269, %v5358, 0
    %v5418 = vsel %vm269, %v5359, 0
    %v5421 = vsel %vm269, %v5360, 0
    %v5424 = vsel %vm269, %v5361, 0
    %5426 = vmatprep.subr.bf16.mxu0 %v5399
    %5427 = vmatpush1.bf16.msra.mxu0 %v5398
    %5428 = vmatprep.subr.bf16.mxu0 %v5401
    %5429 = vmatpush1.bf16.msra.mxu0 %v5400
    %5430 = vmatprep.subr.bf16.mxu0 %v5403
    %5431 = vmatpush1.bf16.msra.mxu0 %v5402
    %5432 = vmatprep.subr.bf16.mxu0 %v5405
    %5433 = vmatpush1.bf16.msra.mxu0 %v5404
    %5434 = vmatprep.subr.bf16.mxu0 0
    %5435 = vmatpush1.bf16.msra.mxu0 0
    %5436 = vmatprep.subr.bf16.mxu0 0
    %5437 = vmatpush1.bf16.msra.mxu0 0
    %5438 = vmatprep.subr.bf16.mxu0 0
    %5439 = vmatpush1.bf16.msra.mxu0 0
    %5440 = vmatprep.subr.bf16.mxu0 0
    %5441 = vmatpush1.bf16.msra.mxu0 0
    %5442 = vmatprep.subr.bf16.mxu0 0
    %5443 = vmatpush1.bf16.msra.mxu0 0
    %5444 = vmatprep.subr.bf16.mxu0 0
    %5445 = vmatpush1.bf16.msra.mxu0 0
    %5446 = vmatprep.subr.bf16.mxu0 0
    %5447 = vmatpush1.bf16.msra.mxu0 0
    %5448 = vmatprep.subr.bf16.mxu0 0
    %5449 = vmatpush1.bf16.msra.mxu0 0
    %5450 = vmatprep.subr.bf16.mxu0 0
    %5451 = vmatpush1.bf16.msra.mxu0 0
    %5452 = vmatprep.subr.bf16.mxu0 0
    %5453 = vmatpush1.bf16.msra.mxu0 0
    %5454 = vmatprep.subr.bf16.mxu0 0
    %5455 = vmatpush1.bf16.msra.mxu0 0
    %5456 = vmatprep.subr.bf16.mxu0 0
    %5457 = vmatpush1.bf16.msra.mxu0 0
    %5458 = vmatprep.mubr.bf16.mxu0 0
    %5459 = vmatmul.mubr.bf16.gmra.mrb[0].mxu0 %v5415
    %v5460 = vpop.f32.mrb[0].mxu0
    %v5461 = vadd.f32 0.0, %v5460
    %v5462 = vpop.f32.mrb[0].mxu0
    %v5463 = vadd.f32 0.0, %v5462
    %v5464 = vpop.f32.mrb[0].mxu0
    %v5465 = vadd.f32 0.0, %v5464
    %v5466 = vpop.f32.mrb[0].mxu0
    %v5467 = vadd.f32 0.0, %v5466
    %5468 = vmatprep.mubr.bf16.mxu0 0
    %5469 = vmatmul.mubr.bf16.gmra.mrb[0].mxu0 %v5418
    %v5470 = vpop.f32.mrb[0].mxu0
    %v5471 = vadd.f32 0.0, %v5470
    %v5472 = vpop.f32.mrb[0].mxu0
    %v5473 = vadd.f32 0.0, %v5472
    %v5474 = vpop.f32.mrb[0].mxu0
    %v5475 = vadd.f32 0.0, %v5474
    %v5476 = vpop.f32.mrb[0].mxu0
    %v5477 = vadd.f32 0.0, %v5476
    %5478 = vmatprep.mubr.bf16.mxu0 0
    %5479 = vmatmul.mubr.bf16.gmra.mrb[0].mxu0 %v5421
    %v5480 = vpop.f32.mrb[0].mxu0
    %v5481 = vadd.f32 0.0, %v5480
    %v5482 = vpop.f32.mrb[0].mxu0
    %v5483 = vadd.f32 0.0, %v5482
    %v5484 = vpop.f32.mrb[0].mxu0
    %v5485 = vadd.f32 0.0, %v5484
    %v5486 = vpop.f32.mrb[0].mxu0
    %v5487 = vadd.f32 0.0, %v5486
    %5488 = vmatprep.mubr.bf16.mxu0 0
    %5489 = vmatmul.mubr.bf16.gmra.mrb[0].mxu0 %v5424
    %v5490 = vpop.f32.mrb[0].mxu0
    %v5491 = vadd.f32 0.0, %v5490
    %v5492 = vpop.f32.mrb[0].mxu0
    %v5493 = vadd.f32 0.0, %v5492
    %v5494 = vpop.f32.mrb[0].mxu0
    %v5495 = vadd.f32 0.0, %v5494
    %v5496 = vpop.f32.mrb[0].mxu0
    %v5497 = vadd.f32 0.0, %v5496
    %5498 = vdwg.mxu0
    %v5499 = vadd.f32 %v5318, %v5461
    %v5500 = vadd.f32 %v5319, %v5463
    %v5501 = vadd.f32 %v5320, %v5465
    %v5502 = vadd.f32 %v5321, %v5467
    %v5503 = vadd.f32 %v5322, %v5471
    %v5504 = vadd.f32 %v5323, %v5473
    %v5505 = vadd.f32 %v5324, %v5475
    %v5506 = vadd.f32 %v5325, %v5477
    %v5507 = vadd.f32 %v5326, %v5481
    %v5508 = vadd.f32 %v5327, %v5483
    %v5509 = vadd.f32 %v5328, %v5485
    %v5510 = vadd.f32 %v5329, %v5487
    %v5511 = vadd.f32 %v5330, %v5491
    %v5512 = vadd.f32 %v5331, %v5493
    %v5513 = vadd.f32 %v5332, %v5495
    %v5514 = vadd.f32 %v5333, %v5497
    %5515 = vrot.lane.b32.xlu0 %v4367, 17
    %v5516 = vpop.permute.xlu0 %5515
    %5517 = vrot.lane.b32.xlu0 %v4374, 17
    %v5518 = vpop.permute.xlu0 %5517
    %v5519 = vsel %vm411, %v5516, %v5518
    %v5523 = vmul.bf16 %v4920, %v5516
    %v5524 = vmul.bf16 %v4921, %v5519
    %v5525 = vmul.bf16 %v4922, %v5518
    %v5526 = vmul.bf16 %v4923, %v5516
    %v5527 = vmul.bf16 %v4924, %v5519
    %v5528 = vmul.bf16 %v4925, %v5518
    %v5529 = vmul.bf16 %v4926, %v5516
    %v5530 = vmul.bf16 %v4927, %v5519
    %v5531 = vmul.bf16 %v4928, %v5518
    %v5532 = vmul.bf16 %v4929, %v5516
    %v5533 = vmul.bf16 %v4930, %v5519
    %v5534 = vmul.bf16 %v4931, %v5518
    %v5535 = vld [vmem:[%s1723] sm:$0xf]
    %v5536 = vld [vmem:[%s1723 + $0x4] sm:$0xf]
    %v5537 = vld [vmem:[%s1723 + $0x8] sm:$0xf]
    %v5538 = vld [vmem:[%s1723 + $0xc] sm:$0xf]
    %v5539 = vld [vmem:[%s1723 + $0x10] sm:$0xf]
    %v5540 = vld [vmem:[%s1723 + $0x14] sm:$0xf]
    %v5541 = vld [vmem:[%s1723 + $0x18] sm:$0xf]
    %v5542 = vld [vmem:[%s1723 + $0x1c] sm:$0xf]
    %v5551 = vunpack.c.l.b16 %v5535
    %v5552 = vunpack.c.l.b16 %v5536
    %v5553 = vunpack.c.l.b16 %v5537
    %v5554 = vunpack.c.l.b16 %v5538
    %v5555 = vunpack.c.l.b16 %v5539
    %v5556 = vunpack.c.l.b16 %v5540
    %v5557 = vunpack.c.l.b16 %v5541
    %v5558 = vunpack.c.l.b16 %v5542
    %v5559 = vpack.c.b16 %v5552, %v5551
    %v5560 = vpack.c.b16 %v5554, %v5553
    %v5561 = vpack.c.b16 %v5556, %v5555
    %v5562 = vpack.c.b16 %v5558, %v5557
    %5575 = vrot.lane.b32.xlu0 %v5523, 111
    %v5576 = vpop.permute.xlu0 %5575
    %5577 = vrot.lane.b32.xlu0 %v5524, 111
    %v5578 = vpop.permute.xlu0 %5577
    %5579 = vrot.lane.b32.xlu0 %v5525, 111
    %v5580 = vpop.permute.xlu0 %5579
    %5581 = vrot.lane.b32.xlu0 %v5526, 111
    %v5582 = vpop.permute.xlu0 %5581
    %5583 = vrot.lane.b32.xlu0 %v5527, 111
    %v5584 = vpop.permute.xlu0 %5583
    %5585 = vrot.lane.b32.xlu0 %v5528, 111
    %v5586 = vpop.permute.xlu0 %5585
    %5587 = vrot.lane.b32.xlu0 %v5529, 111
    %v5588 = vpop.permute.xlu0 %5587
    %5589 = vrot.lane.b32.xlu0 %v5530, 111
    %v5590 = vpop.permute.xlu0 %5589
    %5591 = vrot.lane.b32.xlu0 %v5531, 111
    %v5592 = vpop.permute.xlu0 %5591
    %5593 = vrot.lane.b32.xlu0 %v5532, 111
    %v5594 = vpop.permute.xlu0 %5593
    %5595 = vrot.lane.b32.xlu0 %v5533, 111
    %v5596 = vpop.permute.xlu0 %5595
    %5597 = vrot.lane.b32.xlu0 %v5534, 111
    %v5598 = vpop.permute.xlu0 %5597
    %v5599 = vsel %vm162, %v5576, %v5578
    %v5600 = vsel %vm162, %v5578, %v5580
    %v5601 = vsel %vm162, %v5582, %v5584
    %v5602 = vsel %vm162, %v5584, %v5586
    %v5603 = vsel %vm162, %v5588, %v5590
    %v5604 = vsel %vm162, %v5590, %v5592
    %v5605 = vsel %vm162, %v5594, %v5596
    %v5606 = vsel %vm162, %v5596, %v5598
    %v5616 = vsel %vm269, %v5559, 0
    %v5619 = vsel %vm269, %v5560, 0
    %v5622 = vsel %vm269, %v5561, 0
    %v5625 = vsel %vm269, %v5562, 0
    %5627 = vmatprep.subr.bf16.mxu0 %v5600
    %5628 = vmatpush1.bf16.msra.mxu0 %v5599
    %5629 = vmatprep.subr.bf16.mxu0 %v5602
    %5630 = vmatpush1.bf16.msra.mxu0 %v5601
    %5631 = vmatprep.subr.bf16.mxu0 %v5604
    %5632 = vmatpush1.bf16.msra.mxu0 %v5603
    %5633 = vmatprep.subr.bf16.mxu0 %v5606
    %5634 = vmatpush1.bf16.msra.mxu0 %v5605
    %5635 = vmatprep.subr.bf16.mxu0 0
    %5636 = vmatpush1.bf16.msra.mxu0 0
    %5637 = vmatprep.subr.bf16.mxu0 0
    %5638 = vmatpush1.bf16.msra.mxu0 0
    %5639 = vmatprep.subr.bf16.mxu0 0
    %5640 = vmatpush1.bf16.msra.mxu0 0
    %5641 = vmatprep.subr.bf16.mxu0 0
    %5642 = vmatpush1.bf16.msra.mxu0 0
    %5643 = vmatprep.subr.bf16.mxu0 0
    %5644 = vmatpush1.bf16.msra.mxu0 0
    %5645 = vmatprep.subr.bf16.mxu0 0
    %5646 = vmatpush1.bf16.msra.mxu0 0
    %5647 = vmatprep.subr.bf16.mxu0 0
    %5648 = vmatpush1.bf16.msra.mxu0 0
    %5649 = vmatprep.subr.bf16.mxu0 0
    %5650 = vmatpush1.bf16.msra.mxu0 0
    %5651 = vmatprep.subr.bf16.mxu0 0
    %5652 = vmatpush1.bf16.msra.mxu0 0
    %5653 = vmatprep.subr.bf16.mxu0 0
    %5654 = vmatpush1.bf16.msra.mxu0 0
    %5655 = vmatprep.subr.bf16.mxu0 0
    %5656 = vmatpush1.bf16.msra.mxu0 0
    %5657 = vmatprep.subr.bf16.mxu0 0
    %5658 = vmatpush1.bf16.msra.mxu0 0
    %5659 = vmatprep.mubr.bf16.mxu0 0
    %5660 = vmatmul.mubr.bf16.gmra.mrb[0].mxu0 %v5616
    %v5661 = vpop.f32.mrb[0].mxu0
    %v5662 = vadd.f32 0.0, %v5661
    %v5663 = vpop.f32.mrb[0].mxu0
    %v5664 = vadd.f32 0.0, %v5663
    %v5665 = vpop.f32.mrb[0].mxu0
    %v5666 = vadd.f32 0.0, %v5665
    %v5667 = vpop.f32.mrb[0].mxu0
    %v5668 = vadd.f32 0.0, %v5667
    %5669 = vmatprep.mubr.bf16.mxu0 0
    %5670 = vmatmul.mubr.bf16.gmra.mrb[0].mxu0 %v5619
    %v5671 = vpop.f32.mrb[0].mxu0
    %v5672 = vadd.f32 0.0, %v5671
    %v5673 = vpop.f32.mrb[0].mxu0
    %v5674 = vadd.f32 0.0, %v5673
    %v5675 = vpop.f32.mrb[0].mxu0
    %v5676 = vadd.f32 0.0, %v5675
    %v5677 = vpop.f32.mrb[0].mxu0
    %v5678 = vadd.f32 0.0, %v5677
    %5679 = vmatprep.mubr.bf16.mxu0 0
    %5680 = vmatmul.mubr.bf16.gmra.mrb[0].mxu0 %v5622
    %v5681 = vpop.f32.mrb[0].mxu0
    %v5682 = vadd.f32 0.0, %v5681
    %v5683 = vpop.f32.mrb[0].mxu0
    %v5684 = vadd.f32 0.0, %v5683
    %v5685 = vpop.f32.mrb[0].mxu0
    %v5686 = vadd.f32 0.0, %v5685
    %v5687 = vpop.f32.mrb[0].mxu0
    %v5688 = vadd.f32 0.0, %v5687
    %5689 = vmatprep.mubr.bf16.mxu0 0
    %5690 = vmatmul.mubr.bf16.gmra.mrb[0].mxu0 %v5625
    %v5691 = vpop.f32.mrb[0].mxu0
    %v5692 = vadd.f32 0.0, %v5691
    %v5693 = vpop.f32.mrb[0].mxu0
    %v5694 = vadd.f32 0.0, %v5693
    %v5695 = vpop.f32.mrb[0].mxu0
    %v5696 = vadd.f32 0.0, %v5695
    %v5697 = vpop.f32.mrb[0].mxu0
    %v5698 = vadd.f32 0.0, %v5697
    %5699 = vdwg.mxu0
    %v5700 = vadd.f32 %v5499, %v5662
    %v5701 = vadd.f32 %v5500, %v5664
    %v5702 = vadd.f32 %v5501, %v5666
    %v5703 = vadd.f32 %v5502, %v5668
    %v5704 = vadd.f32 %v5503, %v5672
    %v5705 = vadd.f32 %v5504, %v5674
    %v5706 = vadd.f32 %v5505, %v5676
    %v5707 = vadd.f32 %v5506, %v5678
    %v5708 = vadd.f32 %v5507, %v5682
    %v5709 = vadd.f32 %v5508, %v5684
    %v5710 = vadd.f32 %v5509, %v5686
    %v5711 = vadd.f32 %v5510, %v5688
    %v5712 = vadd.f32 %v5511, %v5692
    %v5713 = vadd.f32 %v5512, %v5694
    %v5714 = vadd.f32 %v5513, %v5696
    %v5715 = vadd.f32 %v5514, %v5698
    %v5716 = vld [vmem:[%s2] sm:$0xff]
    %v5717 = vld [vmem:[%s2 + $0x8] sm:$0xff]
    %v5718 = vld [vmem:[%s2 + $0x10] sm:$0xff]
    %v5719 = vld [vmem:[%s2 + $0x18] sm:$0xff]
    %v5720 = vld [vmem:[%s2 + $0x20] sm:$0xff]
    %v5721 = vld [vmem:[%s2 + $0x28] sm:$0xff]
    %v5722 = vld [vmem:[%s2 + $0x30] sm:$0xff]
    %v5723 = vld [vmem:[%s2 + $0x38] sm:$0xff]
    %5725 = vset.pattern.permute.xlu0 0
    %5726 = vperm.xlu0 %5725, %v5716
    %v5727 = vpop.permute.xlu0 %5726
    %5730 = vset.pattern.permute.xlu0 0
    %5731 = vperm.xlu0 %5730, %v5717
    %v5732 = vpop.permute.xlu0 %5731
    %5735 = vset.pattern.permute.xlu0 0
    %5736 = vperm.xlu0 %5735, %v5718
    %v5737 = vpop.permute.xlu0 %5736
    %5740 = vset.pattern.permute.xlu0 0
    %5741 = vperm.xlu0 %5740, %v5719
    %v5742 = vpop.permute.xlu0 %5741
    %5745 = vset.pattern.permute.xlu0 0
    %5746 = vperm.xlu0 %5745, %v5720
    %v5747 = vpop.permute.xlu0 %5746
    %5750 = vset.pattern.permute.xlu0 0
    %5751 = vperm.xlu0 %5750, %v5721
    %v5752 = vpop.permute.xlu0 %5751
    %5755 = vset.pattern.permute.xlu0 0
    %5756 = vperm.xlu0 %5755, %v5722
    %v5757 = vpop.permute.xlu0 %5756
    %5760 = vset.pattern.permute.xlu0 0
    %5761 = vperm.xlu0 %5760, %v5723
    %v5762 = vpop.permute.xlu0 %5761
    %v5764 = vadd.f32 %v5700, %v5727
    %v5765 = vadd.f32 %v5701, %v5727
    %v5766 = vadd.f32 %v5702, %v5732
    %v5767 = vadd.f32 %v5703, %v5732
    %v5768 = vadd.f32 %v5704, %v5737
    %v5769 = vadd.f32 %v5705, %v5737
    %v5770 = vadd.f32 %v5706, %v5742
    %v5771 = vadd.f32 %v5707, %v5742
    %v5772 = vadd.f32 %v5708, %v5747
    %v5773 = vadd.f32 %v5709, %v5747
    %v5774 = vadd.f32 %v5710, %v5752
    %v5775 = vadd.f32 %v5711, %v5752
    %v5776 = vadd.f32 %v5712, %v5757
    %v5777 = vadd.f32 %v5713, %v5757
    %v5778 = vadd.f32 %v5714, %v5762
    %v5779 = vadd.f32 %v5715, %v5762
    %v5780 = vmax.f32 %v5764, 0.0
    %v5781 = vmax.f32 %v5765, 0.0
    %v5782 = vmax.f32 %v5766, 0.0
    %v5783 = vmax.f32 %v5767, 0.0
    %v5784 = vmax.f32 %v5768, 0.0
    %v5785 = vmax.f32 %v5769, 0.0
    %v5786 = vmax.f32 %v5770, 0.0
    %v5787 = vmax.f32 %v5771, 0.0
    %v5788 = vmax.f32 %v5772, 0.0
    %v5789 = vmax.f32 %v5773, 0.0
    %v5790 = vmax.f32 %v5774, 0.0
    %v5791 = vmax.f32 %v5775, 0.0
    %v5792 = vmax.f32 %v5776, 0.0
    %v5793 = vmax.f32 %v5777, 0.0
    %v5794 = vmax.f32 %v5778, 0.0
    %v5795 = vmax.f32 %v5779, 0.0
    %v5796 = vpack.c.bf16 %v5782, %v5780
    %v5797 = vpack.c.bf16 %v5783, %v5781
    %v5798 = vpack.c.bf16 %v5786, %v5784
    %v5799 = vpack.c.bf16 %v5787, %v5785
    %v5800 = vpack.c.bf16 %v5790, %v5788
    %v5801 = vpack.c.bf16 %v5791, %v5789
    %v5802 = vpack.c.bf16 %v5794, %v5792
    %v5803 = vpack.c.bf16 %v5795, %v5793
    %5804 = vst [vmem:[#allocation2 + $0x8] sm:$0xff] %v5796
    %5805 = vst [vmem:[#allocation2 + $0x10] sm:$0xff] %v5797
    %5806 = vst [vmem:[#allocation2 + $0x28] sm:$0xff] %v5798
    %5807 = vst [vmem:[#allocation2 + $0x30] sm:$0xff] %v5799
    %5808 = vst [vmem:[#allocation2 + $0x48] sm:$0xff] %v5800
    %5809 = vst [vmem:[#allocation2 + $0x50] sm:$0xff] %v5801
    %5810 = vst [vmem:[#allocation2 + $0x68] sm:$0xff] %v5802
    %5811 = vst [vmem:[#allocation2 + $0x70] sm:$0xff] %v5803
    %v5812 = vld [vmem:[#allocation2] sm:$0xff]
    %v5813 = vld [vmem:[#allocation2 + $0x8] sm:$0xff]
    %v5814 = vld [vmem:[#allocation2 + $0x10] sm:$0xff]
    %v5815 = vld [vmem:[#allocation2 + $0x20] sm:$0xff]
    %v5816 = vld [vmem:[#allocation2 + $0x28] sm:$0xff]
    %v5817 = vld [vmem:[#allocation2 + $0x30] sm:$0xff]
    %v5818 = vld [vmem:[#allocation2 + $0x40] sm:$0xff]
    %v5819 = vld [vmem:[#allocation2 + $0x48] sm:$0xff]
    %v5820 = vld [vmem:[#allocation2 + $0x50] sm:$0xff]
    %v5821 = vld [vmem:[#allocation2 + $0x60] sm:$0xff]
    %v5822 = vld [vmem:[#allocation2 + $0x68] sm:$0xff]
    %v5823 = vld [vmem:[#allocation2 + $0x70] sm:$0xff]
    %v5824 = vld [vmem:[%s5] sm:$0x3]
    %v5827 = vunpack.c.l.s4 1966171168
    %v5828 = vunpack.c.0.s8 %v5827
    %v5829 = vlaneseq
    %v5830 = vshrl.u32 %v5829, 7
    %v5831 = vsub.s32 %v5828, %v5830
    %v5832 = vrot.slane %v5824, %v5831
    %v5833 = vcombine.high %v5832, %v5832
    %v5835 = vunpack.c.l.s4 1966171168
    %v5836 = vunpack.c.0.s8 %v5835
    %v5837 = vlaneseq
    %v5838 = vshrl.u32 %v5837, 7
    %v5839 = vsub.s32 %v5836, %v5838
    %v5840 = vrot.slane %v5832, %v5839
    %v5842 = vunpack.c.l.s4 1966171168
    %v5843 = vunpack.c.0.s8 %v5842
    %v5844 = vlaneseq
    %v5845 = vshrl.u32 %v5844, 7
    %v5846 = vsub.s32 %v5843, %v5845
    %v5847 = vrot.slane %v5833, %v5846
    %v5849 = vpack.i.b16 %v5840, %v5840
    %v5851 = vlaneseq
    %v5852 = vshrl.u32 %v5851, 7
    %v5853 = vsub.s32 0, %v5852
    %v5854 = vrot.slane %v5849, %v5853
    %v5856 = vpack.i.b16 %v5847, %v5847
    %v5858 = vlaneseq
    %v5859 = vshrl.u32 %v5858, 7
    %v5860 = vsub.s32 0, %v5859
    %v5861 = vrot.slane %v5856, %v5860
    %5864 = vrot.lane.b32.xlu0 %v5854, 111
    %v5865 = vpop.permute.xlu0 %5864
    %5866 = vrot.lane.b32.xlu0 %v5861, 111
    %v5867 = vpop.permute.xlu0 %5866
    %v5868 = vsel %vm162, %v5865, %v5867
    %v5872 = vmul.bf16 %v5812, %v5865
    %v5873 = vmul.bf16 %v5813, %v5868
    %v5874 = vmul.bf16 %v5814, %v5867
    %v5875 = vmul.bf16 %v5815, %v5865
    %v5876 = vmul.bf16 %v5816, %v5868
    %v5877 = vmul.bf16 %v5817, %v5867
    %v5878 = vmul.bf16 %v5818, %v5865
    %v5879 = vmul.bf16 %v5819, %v5868
    %v5880 = vmul.bf16 %v5820, %v5867
    %v5881 = vmul.bf16 %v5821, %v5865
    %v5882 = vmul.bf16 %v5822, %v5868
    %v5883 = vmul.bf16 %v5823, %v5867
    %v5884 = vld [vmem:[#allocation8] sm:$0xf]
    %v5885 = vld [vmem:[#allocation8 + $0x4] sm:$0xf]
    %v5886 = vld [vmem:[#allocation8 + $0x8] sm:$0xf]
    %v5887 = vld [vmem:[#allocation8 + $0xc] sm:$0xf]
    %v5888 = vld [vmem:[#allocation8 + $0x10] sm:$0xf]
    %v5889 = vld [vmem:[#allocation8 + $0x14] sm:$0xf]
    %v5890 = vld [vmem:[#allocation8 + $0x18] sm:$0xf]
    %v5891 = vld [vmem:[#allocation8 + $0x1c] sm:$0xf]
    %v5892 = vld [vmem:[%s2081] sm:$0xf]
    %v5893 = vld [vmem:[%s2081 + $0x4] sm:$0xf]
    %v5894 = vld [vmem:[%s2081 + $0x8] sm:$0xf]
    %v5895 = vld [vmem:[%s2081 + $0xc] sm:$0xf]
    %v5896 = vld [vmem:[%s2081 + $0x10] sm:$0xf]
    %v5897 = vld [vmem:[%s2081 + $0x14] sm:$0xf]
    %v5898 = vld [vmem:[%s2081 + $0x18] sm:$0xf]
    %v5899 = vld [vmem:[%s2081 + $0x1c] sm:$0xf]
    %v5908 = vunpack.c.l.b16 %v5892
    %v5909 = vunpack.c.l.b16 %v5893
    %v5910 = vunpack.c.l.b16 %v5894
    %v5911 = vunpack.c.l.b16 %v5895
    %v5912 = vunpack.c.l.b16 %v5896
    %v5913 = vunpack.c.l.b16 %v5897
    %v5914 = vunpack.c.l.b16 %v5898
    %v5915 = vunpack.c.l.b16 %v5899
    %v5916 = vpack.c.b16 %v5909, %v5908
    %v5917 = vpack.c.b16 %v5911, %v5910
    %v5918 = vpack.c.b16 %v5913, %v5912
    %v5919 = vpack.c.b16 %v5915, %v5914
    %5932 = vrot.lane.b32.xlu0 %v5812, 16
    %v5933 = vpop.permute.xlu0 %5932
    %5934 = vrot.lane.b32.xlu0 %v5813, 16
    %v5935 = vpop.permute.xlu0 %5934
    %5936 = vrot.lane.b32.xlu0 %v5814, 16
    %v5937 = vpop.permute.xlu0 %5936
    %5938 = vrot.lane.b32.xlu0 %v5815, 16
    %v5939 = vpop.permute.xlu0 %5938
    %5940 = vrot.lane.b32.xlu0 %v5816, 16
    %v5941 = vpop.permute.xlu0 %5940
    %5942 = vrot.lane.b32.xlu0 %v5817, 16
    %v5943 = vpop.permute.xlu0 %5942
    %5944 = vrot.lane.b32.xlu0 %v5818, 16
    %v5945 = vpop.permute.xlu0 %5944
    %5946 = vrot.lane.b32.xlu0 %v5819, 16
    %v5947 = vpop.permute.xlu0 %5946
    %5948 = vrot.lane.b32.xlu0 %v5820, 16
    %v5949 = vpop.permute.xlu0 %5948
    %5950 = vrot.lane.b32.xlu0 %v5821, 16
    %v5951 = vpop.permute.xlu0 %5950
    %5952 = vrot.lane.b32.xlu0 %v5822, 16
    %v5953 = vpop.permute.xlu0 %5952
    %5954 = vrot.lane.b32.xlu0 %v5823, 16
    %v5955 = vpop.permute.xlu0 %5954
    %v5956 = vsel %vm252, %v5933, %v5935
    %v5957 = vsel %vm252, %v5935, %v5937
    %v5958 = vsel %vm252, %v5939, %v5941
    %v5959 = vsel %vm252, %v5941, %v5943
    %v5960 = vsel %vm252, %v5945, %v5947
    %v5961 = vsel %vm252, %v5947, %v5949
    %v5962 = vsel %vm252, %v5951, %v5953
    %v5963 = vsel %vm252, %v5953, %v5955
    %v5973 = vsel %vm269, %v5916, 0
    %v5976 = vsel %vm269, %v5917, 0
    %v5979 = vsel %vm269, %v5918, 0
    %v5982 = vsel %vm269, %v5919, 0
    %5984 = vmatprep.subr.bf16.mxu0 %v5957
    %5985 = vmatpush1.bf16.msra.mxu0 %v5956
    %5986 = vmatprep.subr.bf16.mxu0 %v5959
    %5987 = vmatpush1.bf16.msra.mxu0 %v5958
    %5988 = vmatprep.subr.bf16.mxu0 %v5961
    %5989 = vmatpush1.bf16.msra.mxu0 %v5960
    %5990 = vmatprep.subr.bf16.mxu0 %v5963
    %5991 = vmatpush1.bf16.msra.mxu0 %v5962
    %5992 = vmatprep.subr.bf16.mxu0 0
    %5993 = vmatpush1.bf16.msra.mxu0 0
    %5994 = vmatprep.subr.bf16.mxu0 0
    %5995 = vmatpush1.bf16.msra.mxu0 0
    %5996 = vmatprep.subr.bf16.mxu0 0
    %5997 = vmatpush1.bf16.msra.mxu0 0
    %5998 = vmatprep.subr.bf16.mxu0 0
    %5999 = vmatpush1.bf16.msra.mxu0 0
    %6000 = vmatprep.subr.bf16.mxu0 0
    %6001 = vmatpush1.bf16.msra.mxu0 0
    %6002 = vmatprep.subr.bf16.mxu0 0
    %6003 = vmatpush1.bf16.msra.mxu0 0
    %6004 = vmatprep.subr.bf16.mxu0 0
    %6005 = vmatpush1.bf16.msra.mxu0 0
    %6006 = vmatprep.subr.bf16.mxu0 0
    %6007 = vmatpush1.bf16.msra.mxu0 0
    %6008 = vmatprep.subr.bf16.mxu0 0
    %6009 = vmatpush1.bf16.msra.mxu0 0
    %6010 = vmatprep.subr.bf16.mxu0 0
    %6011 = vmatpush1.bf16.msra.mxu0 0
    %6012 = vmatprep.subr.bf16.mxu0 0
    %6013 = vmatpush1.bf16.msra.mxu0 0
    %6014 = vmatprep.subr.bf16.mxu0 0
    %6015 = vmatpush1.bf16.msra.mxu0 0
    %6016 = vmatprep.mubr.bf16.mxu0 0
    %6017 = vmatmul.mubr.bf16.gmra.mrb[0].mxu0 %v5973
    %v6018 = vpop.f32.mrb[0].mxu0
    %v6019 = vadd.f32 0.0, %v6018
    %v6020 = vpop.f32.mrb[0].mxu0
    %v6021 = vadd.f32 0.0, %v6020
    %v6022 = vpop.f32.mrb[0].mxu0
    %v6023 = vadd.f32 0.0, %v6022
    %v6024 = vpop.f32.mrb[0].mxu0
    %v6025 = vadd.f32 0.0, %v6024
    %6026 = vmatprep.mubr.bf16.mxu0 0
    %6027 = vmatmul.mubr.bf16.gmra.mrb[0].mxu0 %v5976
    %v6028 = vpop.f32.mrb[0].mxu0
    %v6029 = vadd.f32 0.0, %v6028
    %v6030 = vpop.f32.mrb[0].mxu0
    %v6031 = vadd.f32 0.0, %v6030
    %v6032 = vpop.f32.mrb[0].mxu0
    %v6033 = vadd.f32 0.0, %v6032
    %v6034 = vpop.f32.mrb[0].mxu0
    %v6035 = vadd.f32 0.0, %v6034
    %6036 = vmatprep.mubr.bf16.mxu0 0
    %6037 = vmatmul.mubr.bf16.gmra.mrb[0].mxu0 %v5979
    %v6038 = vpop.f32.mrb[0].mxu0
    %v6039 = vadd.f32 0.0, %v6038
    %v6040 = vpop.f32.mrb[0].mxu0
    %v6041 = vadd.f32 0.0, %v6040
    %v6042 = vpop.f32.mrb[0].mxu0
    %v6043 = vadd.f32 0.0, %v6042
    %v6044 = vpop.f32.mrb[0].mxu0
    %v6045 = vadd.f32 0.0, %v6044
    %6046 = vmatprep.mubr.bf16.mxu0 0
    %6047 = vmatmul.mubr.bf16.gmra.mrb[0].mxu0 %v5982
    %v6048 = vpop.f32.mrb[0].mxu0
    %v6049 = vadd.f32 0.0, %v6048
    %v6050 = vpop.f32.mrb[0].mxu0
    %v6051 = vadd.f32 0.0, %v6050
    %v6052 = vpop.f32.mrb[0].mxu0
    %v6053 = vadd.f32 0.0, %v6052
    %v6054 = vpop.f32.mrb[0].mxu0
    %v6055 = vadd.f32 0.0, %v6054
    %6056 = vdwg.mxu0
    %v6065 = vunpack.c.l.b16 %v5884
    %v6066 = vunpack.c.l.b16 %v5885
    %v6067 = vunpack.c.l.b16 %v5886
    %v6068 = vunpack.c.l.b16 %v5887
    %v6069 = vunpack.c.l.b16 %v5888
    %v6070 = vunpack.c.l.b16 %v5889
    %v6071 = vunpack.c.l.b16 %v5890
    %v6072 = vunpack.c.l.b16 %v5891
    %v6073 = vpack.c.b16 %v6066, %v6065
    %v6074 = vpack.c.b16 %v6068, %v6067
    %v6075 = vpack.c.b16 %v6070, %v6069
    %v6076 = vpack.c.b16 %v6072, %v6071
    %6089 = vrot.lane.b32.xlu0 %v5872, 17
    %v6090 = vpop.permute.xlu0 %6089
    %6091 = vrot.lane.b32.xlu0 %v5873, 17
    %v6092 = vpop.permute.xlu0 %6091
    %6093 = vrot.lane.b32.xlu0 %v5874, 17
    %v6094 = vpop.permute.xlu0 %6093
    %6095 = vrot.lane.b32.xlu0 %v5875, 17
    %v6096 = vpop.permute.xlu0 %6095
    %6097 = vrot.lane.b32.xlu0 %v5876, 17
    %v6098 = vpop.permute.xlu0 %6097
    %6099 = vrot.lane.b32.xlu0 %v5877, 17
    %v6100 = vpop.permute.xlu0 %6099
    %6101 = vrot.lane.b32.xlu0 %v5878, 17
    %v6102 = vpop.permute.xlu0 %6101
    %6103 = vrot.lane.b32.xlu0 %v5879, 17
    %v6104 = vpop.permute.xlu0 %6103
    %6105 = vrot.lane.b32.xlu0 %v5880, 17
    %v6106 = vpop.permute.xlu0 %6105
    %6107 = vrot.lane.b32.xlu0 %v5881, 17
    %v6108 = vpop.permute.xlu0 %6107
    %6109 = vrot.lane.b32.xlu0 %v5882, 17
    %v6110 = vpop.permute.xlu0 %6109
    %6111 = vrot.lane.b32.xlu0 %v5883, 17
    %v6112 = vpop.permute.xlu0 %6111
    %v6113 = vsel %vm411, %v6090, %v6092
    %v6114 = vsel %vm411, %v6092, %v6094
    %v6115 = vsel %vm411, %v6096, %v6098
    %v6116 = vsel %vm411, %v6098, %v6100
    %v6117 = vsel %vm411, %v6102, %v6104
    %v6118 = vsel %vm411, %v6104, %v6106
    %v6119 = vsel %vm411, %v6108, %v6110
    %v6120 = vsel %vm411, %v6110, %v6112
    %v6130 = vsel %vm269, %v6073, 0
    %v6133 = vsel %vm269, %v6074, 0
    %v6136 = vsel %vm269, %v6075, 0
    %v6139 = vsel %vm269, %v6076, 0
    %6141 = vmatprep.subr.bf16.mxu0 %v6114
    %6142 = vmatpush1.bf16.msra.mxu0 %v6113
    %6143 = vmatprep.subr.bf16.mxu0 %v6116
    %6144 = vmatpush1.bf16.msra.mxu0 %v6115
    %6145 = vmatprep.subr.bf16.mxu0 %v6118
    %6146 = vmatpush1.bf16.msra.mxu0 %v6117
    %6147 = vmatprep.subr.bf16.mxu0 %v6120
    %6148 = vmatpush1.bf16.msra.mxu0 %v6119
    %6149 = vmatprep.subr.bf16.mxu0 0
    %6150 = vmatpush1.bf16.msra.mxu0 0
    %6151 = vmatprep.subr.bf16.mxu0 0
    %6152 = vmatpush1.bf16.msra.mxu0 0
    %6153 = vmatprep.subr.bf16.mxu0 0
    %6154 = vmatpush1.bf16.msra.mxu0 0
    %6155 = vmatprep.subr.bf16.mxu0 0
    %6156 = vmatpush1.bf16.msra.mxu0 0
    %6157 = vmatprep.subr.bf16.mxu0 0
    %6158 = vmatpush1.bf16.msra.mxu0 0
    %6159 = vmatprep.subr.bf16.mxu0 0
    %6160 = vmatpush1.bf16.msra.mxu0 0
    %6161 = vmatprep.subr.bf16.mxu0 0
    %6162 = vmatpush1.bf16.msra.mxu0 0
    %6163 = vmatprep.subr.bf16.mxu0 0
    %6164 = vmatpush1.bf16.msra.mxu0 0
    %6165 = vmatprep.subr.bf16.mxu0 0
    %6166 = vmatpush1.bf16.msra.mxu0 0
    %6167 = vmatprep.subr.bf16.mxu0 0
    %6168 = vmatpush1.bf16.msra.mxu0 0
    %6169 = vmatprep.subr.bf16.mxu0 0
    %6170 = vmatpush1.bf16.msra.mxu0 0
    %6171 = vmatprep.subr.bf16.mxu0 0
    %6172 = vmatpush1.bf16.msra.mxu0 0
    %6173 = vmatprep.mubr.bf16.mxu0 0
    %6174 = vmatmul.mubr.bf16.gmra.mrb[0].mxu0 %v6130
    %v6175 = vpop.f32.mrb[0].mxu0
    %v6176 = vadd.f32 %v6019, %v6175
    %v6177 = vpop.f32.mrb[0].mxu0
    %v6178 = vadd.f32 %v6021, %v6177
    %v6179 = vpop.f32.mrb[0].mxu0
    %v6180 = vadd.f32 %v6023, %v6179
    %v6181 = vpop.f32.mrb[0].mxu0
    %v6182 = vadd.f32 %v6025, %v6181
    %6183 = vmatprep.mubr.bf16.mxu0 0
    %6184 = vmatmul.mubr.bf16.gmra.mrb[0].mxu0 %v6133
    %v6185 = vpop.f32.mrb[0].mxu0
    %v6186 = vadd.f32 %v6029, %v6185
    %v6187 = vpop.f32.mrb[0].mxu0
    %v6188 = vadd.f32 %v6031, %v6187
    %v6189 = vpop.f32.mrb[0].mxu0
    %v6190 = vadd.f32 %v6033, %v6189
    %v6191 = vpop.f32.mrb[0].mxu0
    %v6192 = vadd.f32 %v6035, %v6191
    %6193 = vmatprep.mubr.bf16.mxu0 0
    %6194 = vmatmul.mubr.bf16.gmra.mrb[0].mxu0 %v6136
    %v6195 = vpop.f32.mrb[0].mxu0
    %v6196 = vadd.f32 %v6039, %v6195
    %v6197 = vpop.f32.mrb[0].mxu0
    %v6198 = vadd.f32 %v6041, %v6197
    %v6199 = vpop.f32.mrb[0].mxu0
    %v6200 = vadd.f32 %v6043, %v6199
    %v6201 = vpop.f32.mrb[0].mxu0
    %v6202 = vadd.f32 %v6045, %v6201
    %6203 = vmatprep.mubr.bf16.mxu0 0
    %6204 = vmatmul.mubr.bf16.gmra.mrb[0].mxu0 %v6139
    %v6205 = vpop.f32.mrb[0].mxu0
    %v6206 = vadd.f32 %v6049, %v6205
    %v6207 = vpop.f32.mrb[0].mxu0
    %v6208 = vadd.f32 %v6051, %v6207
    %v6209 = vpop.f32.mrb[0].mxu0
    %v6210 = vadd.f32 %v6053, %v6209
    %v6211 = vpop.f32.mrb[0].mxu0
    %v6212 = vadd.f32 %v6055, %v6211
    %6213 = vdwg.mxu0
    %v6214 = vld [vmem:[%s513] sm:$0x3]
    %v6217 = vunpack.c.l.s4 1966171168
    %v6218 = vunpack.c.0.s8 %v6217
    %v6219 = vlaneseq
    %v6220 = vshrl.u32 %v6219, 7
    %v6221 = vsub.s32 %v6218, %v6220
    %v6222 = vrot.slane %v6214, %v6221
    %v6223 = vcombine.high %v6222, %v6222
    %v6225 = vunpack.c.l.s4 1966171168
    %v6226 = vunpack.c.0.s8 %v6225
    %v6227 = vlaneseq
    %v6228 = vshrl.u32 %v6227, 7
    %v6229 = vsub.s32 %v6226, %v6228
    %v6230 = vrot.slane %v6222, %v6229
    %v6232 = vunpack.c.l.s4 1966171168
    %v6233 = vunpack.c.0.s8 %v6232
    %v6234 = vlaneseq
    %v6235 = vshrl.u32 %v6234, 7
    %v6236 = vsub.s32 %v6233, %v6235
    %v6237 = vrot.slane %v6223, %v6236
    %v6239 = vpack.i.b16 %v6230, %v6230
    %v6241 = vlaneseq
    %v6242 = vshrl.u32 %v6241, 7
    %v6243 = vsub.s32 0, %v6242
    %v6244 = vrot.slane %v6239, %v6243
    %v6246 = vpack.i.b16 %v6237, %v6237
    %v6248 = vlaneseq
    %v6249 = vshrl.u32 %v6248, 7
    %v6250 = vsub.s32 0, %v6249
    %v6251 = vrot.slane %v6246, %v6250
    %6254 = vrot.lane.b32.xlu0 %v6244, 113
    %v6255 = vpop.permute.xlu0 %6254
    %6256 = vrot.lane.b32.xlu0 %v6251, 113
    %v6257 = vpop.permute.xlu0 %6256
    %v6258 = vsel %vm558, %v6255, %v6257
    %v6262 = vmul.bf16 %v5812, %v6255
    %v6263 = vmul.bf16 %v5813, %v6258
    %v6264 = vmul.bf16 %v5814, %v6257
    %v6265 = vmul.bf16 %v5815, %v6255
    %v6266 = vmul.bf16 %v5816, %v6258
    %v6267 = vmul.bf16 %v5817, %v6257
    %v6268 = vmul.bf16 %v5818, %v6255
    %v6269 = vmul.bf16 %v5819, %v6258
    %v6270 = vmul.bf16 %v5820, %v6257
    %v6271 = vmul.bf16 %v5821, %v6255
    %v6272 = vmul.bf16 %v5822, %v6258
    %v6273 = vmul.bf16 %v5823, %v6257
    %v6274 = vld [vmem:[%s2464] sm:$0xf]
    %v6275 = vld [vmem:[%s2464 + $0x4] sm:$0xf]
    %v6276 = vld [vmem:[%s2464 + $0x8] sm:$0xf]
    %v6277 = vld [vmem:[%s2464 + $0xc] sm:$0xf]
    %v6278 = vld [vmem:[%s2464 + $0x10] sm:$0xf]
    %v6279 = vld [vmem:[%s2464 + $0x14] sm:$0xf]
    %v6280 = vld [vmem:[%s2464 + $0x18] sm:$0xf]
    %v6281 = vld [vmem:[%s2464 + $0x1c] sm:$0xf]
    %v6290 = vunpack.c.l.b16 %v6274
    %v6291 = vunpack.c.l.b16 %v6275
    %v6292 = vunpack.c.l.b16 %v6276
    %v6293 = vunpack.c.l.b16 %v6277
    %v6294 = vunpack.c.l.b16 %v6278
    %v6295 = vunpack.c.l.b16 %v6279
    %v6296 = vunpack.c.l.b16 %v6280
    %v6297 = vunpack.c.l.b16 %v6281
    %v6298 = vpack.c.b16 %v6291, %v6290
    %v6299 = vpack.c.b16 %v6293, %v6292
    %v6300 = vpack.c.b16 %v6295, %v6294
    %v6301 = vpack.c.b16 %v6297, %v6296
    %6314 = vrot.lane.b32.xlu0 %v6262, 15
    %v6315 = vpop.permute.xlu0 %6314
    %6316 = vrot.lane.b32.xlu0 %v6263, 15
    %v6317 = vpop.permute.xlu0 %6316
    %6318 = vrot.lane.b32.xlu0 %v6264, 15
    %v6319 = vpop.permute.xlu0 %6318
    %6320 = vrot.lane.b32.xlu0 %v6265, 15
    %v6321 = vpop.permute.xlu0 %6320
    %6322 = vrot.lane.b32.xlu0 %v6266, 15
    %v6323 = vpop.permute.xlu0 %6322
    %6324 = vrot.lane.b32.xlu0 %v6267, 15
    %v6325 = vpop.permute.xlu0 %6324
    %6326 = vrot.lane.b32.xlu0 %v6268, 15
    %v6327 = vpop.permute.xlu0 %6326
    %6328 = vrot.lane.b32.xlu0 %v6269, 15
    %v6329 = vpop.permute.xlu0 %6328
    %6330 = vrot.lane.b32.xlu0 %v6270, 15
    %v6331 = vpop.permute.xlu0 %6330
    %6332 = vrot.lane.b32.xlu0 %v6271, 15
    %v6333 = vpop.permute.xlu0 %6332
    %6334 = vrot.lane.b32.xlu0 %v6272, 15
    %v6335 = vpop.permute.xlu0 %6334
    %6336 = vrot.lane.b32.xlu0 %v6273, 15
    %v6337 = vpop.permute.xlu0 %6336
    %v6338 = vsel %vm640, %v6315, %v6317
    %v6339 = vsel %vm640, %v6317, %v6319
    %v6340 = vsel %vm640, %v6321, %v6323
    %v6341 = vsel %vm640, %v6323, %v6325
    %v6342 = vsel %vm640, %v6327, %v6329
    %v6343 = vsel %vm640, %v6329, %v6331
    %v6344 = vsel %vm640, %v6333, %v6335
    %v6345 = vsel %vm640, %v6335, %v6337
    %v6355 = vsel %vm269, %v6298, 0
    %v6358 = vsel %vm269, %v6299, 0
    %v6361 = vsel %vm269, %v6300, 0
    %v6364 = vsel %vm269, %v6301, 0
    %6366 = vmatprep.subr.bf16.mxu0 %v6339
    %6367 = vmatpush1.bf16.msra.mxu0 %v6338
    %6368 = vmatprep.subr.bf16.mxu0 %v6341
    %6369 = vmatpush1.bf16.msra.mxu0 %v6340
    %6370 = vmatprep.subr.bf16.mxu0 %v6343
    %6371 = vmatpush1.bf16.msra.mxu0 %v6342
    %6372 = vmatprep.subr.bf16.mxu0 %v6345
    %6373 = vmatpush1.bf16.msra.mxu0 %v6344
    %6374 = vmatprep.subr.bf16.mxu0 0
    %6375 = vmatpush1.bf16.msra.mxu0 0
    %6376 = vmatprep.subr.bf16.mxu0 0
    %6377 = vmatpush1.bf16.msra.mxu0 0
    %6378 = vmatprep.subr.bf16.mxu0 0
    %6379 = vmatpush1.bf16.msra.mxu0 0
    %6380 = vmatprep.subr.bf16.mxu0 0
    %6381 = vmatpush1.bf16.msra.mxu0 0
    %6382 = vmatprep.subr.bf16.mxu0 0
    %6383 = vmatpush1.bf16.msra.mxu0 0
    %6384 = vmatprep.subr.bf16.mxu0 0
    %6385 = vmatpush1.bf16.msra.mxu0 0
    %6386 = vmatprep.subr.bf16.mxu0 0
    %6387 = vmatpush1.bf16.msra.mxu0 0
    %6388 = vmatprep.subr.bf16.mxu0 0
    %6389 = vmatpush1.bf16.msra.mxu0 0
    %6390 = vmatprep.subr.bf16.mxu0 0
    %6391 = vmatpush1.bf16.msra.mxu0 0
    %6392 = vmatprep.subr.bf16.mxu0 0
    %6393 = vmatpush1.bf16.msra.mxu0 0
    %6394 = vmatprep.subr.bf16.mxu0 0
    %6395 = vmatpush1.bf16.msra.mxu0 0
    %6396 = vmatprep.subr.bf16.mxu0 0
    %6397 = vmatpush1.bf16.msra.mxu0 0
    %6398 = vmatprep.mubr.bf16.mxu0 0
    %6399 = vmatmul.mubr.bf16.gmra.mrb[0].mxu0 %v6355
    %v6400 = vpop.f32.mrb[0].mxu0
    %v6401 = vadd.f32 0.0, %v6400
    %v6402 = vpop.f32.mrb[0].mxu0
    %v6403 = vadd.f32 0.0, %v6402
    %v6404 = vpop.f32.mrb[0].mxu0
    %v6405 = vadd.f32 0.0, %v6404
    %v6406 = vpop.f32.mrb[0].mxu0
    %v6407 = vadd.f32 0.0, %v6406
    %6408 = vmatprep.mubr.bf16.mxu0 0
    %6409 = vmatmul.mubr.bf16.gmra.mrb[0].mxu0 %v6358
    %v6410 = vpop.f32.mrb[0].mxu0
    %v6411 = vadd.f32 0.0, %v6410
    %v6412 = vpop.f32.mrb[0].mxu0
    %v6413 = vadd.f32 0.0, %v6412
    %v6414 = vpop.f32.mrb[0].mxu0
    %v6415 = vadd.f32 0.0, %v6414
    %v6416 = vpop.f32.mrb[0].mxu0
    %v6417 = vadd.f32 0.0, %v6416
    %6418 = vmatprep.mubr.bf16.mxu0 0
    %6419 = vmatmul.mubr.bf16.gmra.mrb[0].mxu0 %v6361
    %v6420 = vpop.f32.mrb[0].mxu0
    %v6421 = vadd.f32 0.0, %v6420
    %v6422 = vpop.f32.mrb[0].mxu0
    %v6423 = vadd.f32 0.0, %v6422
    %v6424 = vpop.f32.mrb[0].mxu0
    %v6425 = vadd.f32 0.0, %v6424
    %v6426 = vpop.f32.mrb[0].mxu0
    %v6427 = vadd.f32 0.0, %v6426
    %6428 = vmatprep.mubr.bf16.mxu0 0
    %6429 = vmatmul.mubr.bf16.gmra.mrb[0].mxu0 %v6364
    %v6430 = vpop.f32.mrb[0].mxu0
    %v6431 = vadd.f32 0.0, %v6430
    %v6432 = vpop.f32.mrb[0].mxu0
    %v6433 = vadd.f32 0.0, %v6432
    %v6434 = vpop.f32.mrb[0].mxu0
    %v6435 = vadd.f32 0.0, %v6434
    %v6436 = vpop.f32.mrb[0].mxu0
    %v6437 = vadd.f32 0.0, %v6436
    %6438 = vdwg.mxu0
    %v6439 = vadd.f32 %v6176, %v6401
    %v6440 = vadd.f32 %v6178, %v6403
    %v6441 = vadd.f32 %v6180, %v6405
    %v6442 = vadd.f32 %v6182, %v6407
    %v6443 = vadd.f32 %v6186, %v6411
    %v6444 = vadd.f32 %v6188, %v6413
    %v6445 = vadd.f32 %v6190, %v6415
    %v6446 = vadd.f32 %v6192, %v6417
    %v6447 = vadd.f32 %v6196, %v6421
    %v6448 = vadd.f32 %v6198, %v6423
    %v6449 = vadd.f32 %v6200, %v6425
    %v6450 = vadd.f32 %v6202, %v6427
    %v6451 = vadd.f32 %v6206, %v6431
    %v6452 = vadd.f32 %v6208, %v6433
    %v6453 = vadd.f32 %v6210, %v6435
    %v6454 = vadd.f32 %v6212, %v6437
    %v6455 = vld [vmem:[#allocation2] sm:$0xff]
    %v6456 = vld [vmem:[#allocation2 + $0x8] sm:$0xff]
    %v6457 = vld [vmem:[#allocation2 + $0x10] sm:$0xff]
    %v6458 = vld [vmem:[#allocation2 + $0x20] sm:$0xff]
    %v6459 = vld [vmem:[#allocation2 + $0x28] sm:$0xff]
    %v6460 = vld [vmem:[#allocation2 + $0x30] sm:$0xff]
    %v6461 = vld [vmem:[#allocation2 + $0x40] sm:$0xff]
    %v6462 = vld [vmem:[#allocation2 + $0x48] sm:$0xff]
    %v6463 = vld [vmem:[#allocation2 + $0x50] sm:$0xff]
    %v6464 = vld [vmem:[#allocation2 + $0x60] sm:$0xff]
    %v6465 = vld [vmem:[#allocation2 + $0x68] sm:$0xff]
    %v6466 = vld [vmem:[#allocation2 + $0x70] sm:$0xff]
    %6467 = vrot.lane.b32.xlu0 %v5854, 127
    %v6468 = vpop.permute.xlu0 %6467
    %6469 = vrot.lane.b32.xlu0 %v5861, 127
    %v6470 = vpop.permute.xlu0 %6469
    %v6471 = vsel %vm774, %v6468, %v6470
    %v6475 = vmul.bf16 %v6455, %v6468
    %v6476 = vmul.bf16 %v6456, %v6471
    %v6477 = vmul.bf16 %v6457, %v6470
    %v6478 = vmul.bf16 %v6458, %v6468
    %v6479 = vmul.bf16 %v6459, %v6471
    %v6480 = vmul.bf16 %v6460, %v6470
    %v6481 = vmul.bf16 %v6461, %v6468
    %v6482 = vmul.bf16 %v6462, %v6471
    %v6483 = vmul.bf16 %v6463, %v6470
    %v6484 = vmul.bf16 %v6464, %v6468
    %v6485 = vmul.bf16 %v6465, %v6471
    %v6486 = vmul.bf16 %v6466, %v6470
    %v6487 = vld [vmem:[%s2678] sm:$0xf]
    %v6488 = vld [vmem:[%s2678 + $0x4] sm:$0xf]
    %v6489 = vld [vmem:[%s2678 + $0x8] sm:$0xf]
    %v6490 = vld [vmem:[%s2678 + $0xc] sm:$0xf]
    %v6491 = vld [vmem:[%s2678 + $0x10] sm:$0xf]
    %v6492 = vld [vmem:[%s2678 + $0x14] sm:$0xf]
    %v6493 = vld [vmem:[%s2678 + $0x18] sm:$0xf]
    %v6494 = vld [vmem:[%s2678 + $0x1c] sm:$0xf]
    %v6503 = vunpack.c.l.b16 %v6487
    %v6504 = vunpack.c.l.b16 %v6488
    %v6505 = vunpack.c.l.b16 %v6489
    %v6506 = vunpack.c.l.b16 %v6490
    %v6507 = vunpack.c.l.b16 %v6491
    %v6508 = vunpack.c.l.b16 %v6492
    %v6509 = vunpack.c.l.b16 %v6493
    %v6510 = vunpack.c.l.b16 %v6494
    %v6511 = vpack.c.b16 %v6504, %v6503
    %v6512 = vpack.c.b16 %v6506, %v6505
    %v6513 = vpack.c.b16 %v6508, %v6507
    %v6514 = vpack.c.b16 %v6510, %v6509
    %6527 = vrot.lane.b32.xlu0 %v6475, 1
    %v6528 = vpop.permute.xlu0 %6527
    %6529 = vrot.lane.b32.xlu0 %v6476, 1
    %v6530 = vpop.permute.xlu0 %6529
    %6531 = vrot.lane.b32.xlu0 %v6477, 1
    %v6532 = vpop.permute.xlu0 %6531
    %6533 = vrot.lane.b32.xlu0 %v6478, 1
    %v6534 = vpop.permute.xlu0 %6533
    %6535 = vrot.lane.b32.xlu0 %v6479, 1
    %v6536 = vpop.permute.xlu0 %6535
    %6537 = vrot.lane.b32.xlu0 %v6480, 1
    %v6538 = vpop.permute.xlu0 %6537
    %6539 = vrot.lane.b32.xlu0 %v6481, 1
    %v6540 = vpop.permute.xlu0 %6539
    %6541 = vrot.lane.b32.xlu0 %v6482, 1
    %v6542 = vpop.permute.xlu0 %6541
    %6543 = vrot.lane.b32.xlu0 %v6483, 1
    %v6544 = vpop.permute.xlu0 %6543
    %6545 = vrot.lane.b32.xlu0 %v6484, 1
    %v6546 = vpop.permute.xlu0 %6545
    %6547 = vrot.lane.b32.xlu0 %v6485, 1
    %v6548 = vpop.permute.xlu0 %6547
    %6549 = vrot.lane.b32.xlu0 %v6486, 1
    %v6550 = vpop.permute.xlu0 %6549
    %v6551 = vsel %vm856, %v6528, %v6530
    %v6552 = vsel %vm856, %v6530, %v6532
    %v6553 = vsel %vm856, %v6534, %v6536
    %v6554 = vsel %vm856, %v6536, %v6538
    %v6555 = vsel %vm856, %v6540, %v6542
    %v6556 = vsel %vm856, %v6542, %v6544
    %v6557 = vsel %vm856, %v6546, %v6548
    %v6558 = vsel %vm856, %v6548, %v6550
    %v6568 = vsel %vm269, %v6511, 0
    %v6571 = vsel %vm269, %v6512, 0
    %v6574 = vsel %vm269, %v6513, 0
    %v6577 = vsel %vm269, %v6514, 0
    %6579 = vmatprep.subr.bf16.mxu0 %v6552
    %6580 = vmatpush1.bf16.msra.mxu0 %v6551
    %6581 = vmatprep.subr.bf16.mxu0 %v6554
    %6582 = vmatpush1.bf16.msra.mxu0 %v6553
    %6583 = vmatprep.subr.bf16.mxu0 %v6556
    %6584 = vmatpush1.bf16.msra.mxu0 %v6555
    %6585 = vmatprep.subr.bf16.mxu0 %v6558
    %6586 = vmatpush1.bf16.msra.mxu0 %v6557
    %6587 = vmatprep.subr.bf16.mxu0 0
    %6588 = vmatpush1.bf16.msra.mxu0 0
    %6589 = vmatprep.subr.bf16.mxu0 0
    %6590 = vmatpush1.bf16.msra.mxu0 0
    %6591 = vmatprep.subr.bf16.mxu0 0
    %6592 = vmatpush1.bf16.msra.mxu0 0
    %6593 = vmatprep.subr.bf16.mxu0 0
    %6594 = vmatpush1.bf16.msra.mxu0 0
    %6595 = vmatprep.subr.bf16.mxu0 0
    %6596 = vmatpush1.bf16.msra.mxu0 0
    %6597 = vmatprep.subr.bf16.mxu0 0
    %6598 = vmatpush1.bf16.msra.mxu0 0
    %6599 = vmatprep.subr.bf16.mxu0 0
    %6600 = vmatpush1.bf16.msra.mxu0 0
    %6601 = vmatprep.subr.bf16.mxu0 0
    %6602 = vmatpush1.bf16.msra.mxu0 0
    %6603 = vmatprep.subr.bf16.mxu0 0
    %6604 = vmatpush1.bf16.msra.mxu0 0
    %6605 = vmatprep.subr.bf16.mxu0 0
    %6606 = vmatpush1.bf16.msra.mxu0 0
    %6607 = vmatprep.subr.bf16.mxu0 0
    %6608 = vmatpush1.bf16.msra.mxu0 0
    %6609 = vmatprep.subr.bf16.mxu0 0
    %6610 = vmatpush1.bf16.msra.mxu0 0
    %6611 = vmatprep.mubr.bf16.mxu0 0
    %6612 = vmatmul.mubr.bf16.gmra.mrb[0].mxu0 %v6568
    %v6613 = vpop.f32.mrb[0].mxu0
    %v6614 = vadd.f32 0.0, %v6613
    %v6615 = vpop.f32.mrb[0].mxu0
    %v6616 = vadd.f32 0.0, %v6615
    %v6617 = vpop.f32.mrb[0].mxu0
    %v6618 = vadd.f32 0.0, %v6617
    %v6619 = vpop.f32.mrb[0].mxu0
    %v6620 = vadd.f32 0.0, %v6619
    %6621 = vmatprep.mubr.bf16.mxu0 0
    %6622 = vmatmul.mubr.bf16.gmra.mrb[0].mxu0 %v6571
    %v6623 = vpop.f32.mrb[0].mxu0
    %v6624 = vadd.f32 0.0, %v6623
    %v6625 = vpop.f32.mrb[0].mxu0
    %v6626 = vadd.f32 0.0, %v6625
    %v6627 = vpop.f32.mrb[0].mxu0
    %v6628 = vadd.f32 0.0, %v6627
    %v6629 = vpop.f32.mrb[0].mxu0
    %v6630 = vadd.f32 0.0, %v6629
    %6631 = vmatprep.mubr.bf16.mxu0 0
    %6632 = vmatmul.mubr.bf16.gmra.mrb[0].mxu0 %v6574
    %v6633 = vpop.f32.mrb[0].mxu0
    %v6634 = vadd.f32 0.0, %v6633
    %v6635 = vpop.f32.mrb[0].mxu0
    %v6636 = vadd.f32 0.0, %v6635
    %v6637 = vpop.f32.mrb[0].mxu0
    %v6638 = vadd.f32 0.0, %v6637
    %v6639 = vpop.f32.mrb[0].mxu0
    %v6640 = vadd.f32 0.0, %v6639
    %6641 = vmatprep.mubr.bf16.mxu0 0
    %6642 = vmatmul.mubr.bf16.gmra.mrb[0].mxu0 %v6577
    %v6643 = vpop.f32.mrb[0].mxu0
    %v6644 = vadd.f32 0.0, %v6643
    %v6645 = vpop.f32.mrb[0].mxu0
    %v6646 = vadd.f32 0.0, %v6645
    %v6647 = vpop.f32.mrb[0].mxu0
    %v6648 = vadd.f32 0.0, %v6647
    %v6649 = vpop.f32.mrb[0].mxu0
    %v6650 = vadd.f32 0.0, %v6649
    %6651 = vdwg.mxu0
    %v6652 = vadd.f32 %v6439, %v6614
    %v6653 = vadd.f32 %v6440, %v6616
    %v6654 = vadd.f32 %v6441, %v6618
    %v6655 = vadd.f32 %v6442, %v6620
    %v6656 = vadd.f32 %v6443, %v6624
    %v6657 = vadd.f32 %v6444, %v6626
    %v6658 = vadd.f32 %v6445, %v6628
    %v6659 = vadd.f32 %v6446, %v6630
    %v6660 = vadd.f32 %v6447, %v6634
    %v6661 = vadd.f32 %v6448, %v6636
    %v6662 = vadd.f32 %v6449, %v6638
    %v6663 = vadd.f32 %v6450, %v6640
    %v6664 = vadd.f32 %v6451, %v6644
    %v6665 = vadd.f32 %v6452, %v6646
    %v6666 = vadd.f32 %v6453, %v6648
    %v6667 = vadd.f32 %v6454, %v6650
    %v6668 = vld [vmem:[%s2860] sm:$0xf]
    %v6669 = vld [vmem:[%s2860 + $0x4] sm:$0xf]
    %v6670 = vld [vmem:[%s2860 + $0x8] sm:$0xf]
    %v6671 = vld [vmem:[%s2860 + $0xc] sm:$0xf]
    %v6672 = vld [vmem:[%s2860 + $0x10] sm:$0xf]
    %v6673 = vld [vmem:[%s2860 + $0x14] sm:$0xf]
    %v6674 = vld [vmem:[%s2860 + $0x18] sm:$0xf]
    %v6675 = vld [vmem:[%s2860 + $0x1c] sm:$0xf]
    %v6684 = vunpack.c.l.b16 %v6668
    %v6685 = vunpack.c.l.b16 %v6669
    %v6686 = vunpack.c.l.b16 %v6670
    %v6687 = vunpack.c.l.b16 %v6671
    %v6688 = vunpack.c.l.b16 %v6672
    %v6689 = vunpack.c.l.b16 %v6673
    %v6690 = vunpack.c.l.b16 %v6674
    %v6691 = vunpack.c.l.b16 %v6675
    %v6692 = vpack.c.b16 %v6685, %v6684
    %v6693 = vpack.c.b16 %v6687, %v6686
    %v6694 = vpack.c.b16 %v6689, %v6688
    %v6695 = vpack.c.b16 %v6691, %v6690
    %v6697 = vsel %vm269, %v6692, 0
    %v6700 = vsel %vm269, %v6693, 0
    %v6703 = vsel %vm269, %v6694, 0
    %v6706 = vsel %vm269, %v6695, 0
    %6708 = vmatprep.subr.bf16.mxu0 %v6457
    %6709 = vmatpush1.bf16.msra.mxu0 %v6456
    %6710 = vmatprep.subr.bf16.mxu0 %v6460
    %6711 = vmatpush1.bf16.msra.mxu0 %v6459
    %6712 = vmatprep.subr.bf16.mxu0 %v6463
    %6713 = vmatpush1.bf16.msra.mxu0 %v6462
    %6714 = vmatprep.subr.bf16.mxu0 %v6466
    %6715 = vmatpush1.bf16.msra.mxu0 %v6465
    %6716 = vmatprep.subr.bf16.mxu0 0
    %6717 = vmatpush1.bf16.msra.mxu0 0
    %6718 = vmatprep.subr.bf16.mxu0 0
    %6719 = vmatpush1.bf16.msra.mxu0 0
    %6720 = vmatprep.subr.bf16.mxu0 0
    %6721 = vmatpush1.bf16.msra.mxu0 0
    %6722 = vmatprep.subr.bf16.mxu0 0
    %6723 = vmatpush1.bf16.msra.mxu0 0
    %6724 = vmatprep.subr.bf16.mxu0 0
    %6725 = vmatpush1.bf16.msra.mxu0 0
    %6726 = vmatprep.subr.bf16.mxu0 0
    %6727 = vmatpush1.bf16.msra.mxu0 0
    %6728 = vmatprep.subr.bf16.mxu0 0
    %6729 = vmatpush1.bf16.msra.mxu0 0
    %6730 = vmatprep.subr.bf16.mxu0 0
    %6731 = vmatpush1.bf16.msra.mxu0 0
    %6732 = vmatprep.subr.bf16.mxu0 0
    %6733 = vmatpush1.bf16.msra.mxu0 0
    %6734 = vmatprep.subr.bf16.mxu0 0
    %6735 = vmatpush1.bf16.msra.mxu0 0
    %6736 = vmatprep.subr.bf16.mxu0 0
    %6737 = vmatpush1.bf16.msra.mxu0 0
    %6738 = vmatprep.subr.bf16.mxu0 0
    %6739 = vmatpush1.bf16.msra.mxu0 0
    %6740 = vmatprep.mubr.bf16.mxu0 0
    %6741 = vmatmul.mubr.bf16.gmra.mrb[0].mxu0 %v6697
    %v6742 = vpop.f32.mrb[0].mxu0
    %v6743 = vadd.f32 0.0, %v6742
    %v6744 = vpop.f32.mrb[0].mxu0
    %v6745 = vadd.f32 0.0, %v6744
    %v6746 = vpop.f32.mrb[0].mxu0
    %v6747 = vadd.f32 0.0, %v6746
    %v6748 = vpop.f32.mrb[0].mxu0
    %v6749 = vadd.f32 0.0, %v6748
    %6750 = vmatprep.mubr.bf16.mxu0 0
    %6751 = vmatmul.mubr.bf16.gmra.mrb[0].mxu0 %v6700
    %v6752 = vpop.f32.mrb[0].mxu0
    %v6753 = vadd.f32 0.0, %v6752
    %v6754 = vpop.f32.mrb[0].mxu0
    %v6755 = vadd.f32 0.0, %v6754
    %v6756 = vpop.f32.mrb[0].mxu0
    %v6757 = vadd.f32 0.0, %v6756
    %v6758 = vpop.f32.mrb[0].mxu0
    %v6759 = vadd.f32 0.0, %v6758
    %6760 = vmatprep.mubr.bf16.mxu0 0
    %6761 = vmatmul.mubr.bf16.gmra.mrb[0].mxu0 %v6703
    %v6762 = vpop.f32.mrb[0].mxu0
    %v6763 = vadd.f32 0.0, %v6762
    %v6764 = vpop.f32.mrb[0].mxu0
    %v6765 = vadd.f32 0.0, %v6764
    %v6766 = vpop.f32.mrb[0].mxu0
    %v6767 = vadd.f32 0.0, %v6766
    %v6768 = vpop.f32.mrb[0].mxu0
    %v6769 = vadd.f32 0.0, %v6768
    %6770 = vmatprep.mubr.bf16.mxu0 0
    %6771 = vmatmul.mubr.bf16.gmra.mrb[0].mxu0 %v6706
    %v6772 = vpop.f32.mrb[0].mxu0
    %v6773 = vadd.f32 0.0, %v6772
    %v6774 = vpop.f32.mrb[0].mxu0
    %v6775 = vadd.f32 0.0, %v6774
    %v6776 = vpop.f32.mrb[0].mxu0
    %v6777 = vadd.f32 0.0, %v6776
    %v6778 = vpop.f32.mrb[0].mxu0
    %v6779 = vadd.f32 0.0, %v6778
    %6780 = vdwg.mxu0
    %v6781 = vadd.f32 %v6652, %v6743
    %v6782 = vadd.f32 %v6653, %v6745
    %v6783 = vadd.f32 %v6654, %v6747
    %v6784 = vadd.f32 %v6655, %v6749
    %v6785 = vadd.f32 %v6656, %v6753
    %v6786 = vadd.f32 %v6657, %v6755
    %v6787 = vadd.f32 %v6658, %v6757
    %v6788 = vadd.f32 %v6659, %v6759
    %v6789 = vadd.f32 %v6660, %v6763
    %v6790 = vadd.f32 %v6661, %v6765
    %v6791 = vadd.f32 %v6662, %v6767
    %v6792 = vadd.f32 %v6663, %v6769
    %v6793 = vadd.f32 %v6664, %v6773
    %v6794 = vadd.f32 %v6665, %v6775
    %v6795 = vadd.f32 %v6666, %v6777
    %v6796 = vadd.f32 %v6667, %v6779
    %v6797 = vld [vmem:[#allocation2 + $0x8] sm:$0xff]
    %v6798 = vld [vmem:[#allocation2 + $0x10] sm:$0xff]
    %v6799 = vld [vmem:[#allocation2 + $0x18] sm:$0xff]
    %v6800 = vld [vmem:[#allocation2 + $0x28] sm:$0xff]
    %v6801 = vld [vmem:[#allocation2 + $0x30] sm:$0xff]
    %v6802 = vld [vmem:[#allocation2 + $0x38] sm:$0xff]
    %v6803 = vld [vmem:[#allocation2 + $0x48] sm:$0xff]
    %v6804 = vld [vmem:[#allocation2 + $0x50] sm:$0xff]
    %v6805 = vld [vmem:[#allocation2 + $0x58] sm:$0xff]
    %v6806 = vld [vmem:[#allocation2 + $0x68] sm:$0xff]
    %v6807 = vld [vmem:[#allocation2 + $0x70] sm:$0xff]
    %v6808 = vld [vmem:[#allocation2 + $0x78] sm:$0xff]
    %6809 = vrot.lane.b32.xlu0 %v6244, 1
    %v6810 = vpop.permute.xlu0 %6809
    %6811 = vrot.lane.b32.xlu0 %v6251, 1
    %v6812 = vpop.permute.xlu0 %6811
    %v6813 = vsel %vm856, %v6810, %v6812
    %v6817 = vmul.bf16 %v6797, %v6810
    %v6818 = vmul.bf16 %v6798, %v6813
    %v6819 = vmul.bf16 %v6799, %v6812
    %v6820 = vmul.bf16 %v6800, %v6810
    %v6821 = vmul.bf16 %v6801, %v6813
    %v6822 = vmul.bf16 %v6802, %v6812
    %v6823 = vmul.bf16 %v6803, %v6810
    %v6824 = vmul.bf16 %v6804, %v6813
    %v6825 = vmul.bf16 %v6805, %v6812
    %v6826 = vmul.bf16 %v6806, %v6810
    %v6827 = vmul.bf16 %v6807, %v6813
    %v6828 = vmul.bf16 %v6808, %v6812
    %v6829 = vld [vmem:[%s3022] sm:$0xf]
    %v6830 = vld [vmem:[%s3022 + $0x4] sm:$0xf]
    %v6831 = vld [vmem:[%s3022 + $0x8] sm:$0xf]
    %v6832 = vld [vmem:[%s3022 + $0xc] sm:$0xf]
    %v6833 = vld [vmem:[%s3022 + $0x10] sm:$0xf]
    %v6834 = vld [vmem:[%s3022 + $0x14] sm:$0xf]
    %v6835 = vld [vmem:[%s3022 + $0x18] sm:$0xf]
    %v6836 = vld [vmem:[%s3022 + $0x1c] sm:$0xf]
    %v6845 = vunpack.c.l.b16 %v6829
    %v6846 = vunpack.c.l.b16 %v6830
    %v6847 = vunpack.c.l.b16 %v6831
    %v6848 = vunpack.c.l.b16 %v6832
    %v6849 = vunpack.c.l.b16 %v6833
    %v6850 = vunpack.c.l.b16 %v6834
    %v6851 = vunpack.c.l.b16 %v6835
    %v6852 = vunpack.c.l.b16 %v6836
    %v6853 = vpack.c.b16 %v6846, %v6845
    %v6854 = vpack.c.b16 %v6848, %v6847
    %v6855 = vpack.c.b16 %v6850, %v6849
    %v6856 = vpack.c.b16 %v6852, %v6851
    %6869 = vrot.lane.b32.xlu0 %v6817, 127
    %v6870 = vpop.permute.xlu0 %6869
    %6871 = vrot.lane.b32.xlu0 %v6818, 127
    %v6872 = vpop.permute.xlu0 %6871
    %6873 = vrot.lane.b32.xlu0 %v6819, 127
    %v6874 = vpop.permute.xlu0 %6873
    %6875 = vrot.lane.b32.xlu0 %v6820, 127
    %v6876 = vpop.permute.xlu0 %6875
    %6877 = vrot.lane.b32.xlu0 %v6821, 127
    %v6878 = vpop.permute.xlu0 %6877
    %6879 = vrot.lane.b32.xlu0 %v6822, 127
    %v6880 = vpop.permute.xlu0 %6879
    %6881 = vrot.lane.b32.xlu0 %v6823, 127
    %v6882 = vpop.permute.xlu0 %6881
    %6883 = vrot.lane.b32.xlu0 %v6824, 127
    %v6884 = vpop.permute.xlu0 %6883
    %6885 = vrot.lane.b32.xlu0 %v6825, 127
    %v6886 = vpop.permute.xlu0 %6885
    %6887 = vrot.lane.b32.xlu0 %v6826, 127
    %v6888 = vpop.permute.xlu0 %6887
    %6889 = vrot.lane.b32.xlu0 %v6827, 127
    %v6890 = vpop.permute.xlu0 %6889
    %6891 = vrot.lane.b32.xlu0 %v6828, 127
    %v6892 = vpop.permute.xlu0 %6891
    %v6893 = vsel %vm774, %v6870, %v6872
    %v6894 = vsel %vm774, %v6872, %v6874
    %v6895 = vsel %vm774, %v6876, %v6878
    %v6896 = vsel %vm774, %v6878, %v6880
    %v6897 = vsel %vm774, %v6882, %v6884
    %v6898 = vsel %vm774, %v6884, %v6886
    %v6899 = vsel %vm774, %v6888, %v6890
    %v6900 = vsel %vm774, %v6890, %v6892
    %v6910 = vsel %vm269, %v6853, 0
    %v6913 = vsel %vm269, %v6854, 0
    %v6916 = vsel %vm269, %v6855, 0
    %v6919 = vsel %vm269, %v6856, 0
    %6921 = vmatprep.subr.bf16.mxu0 %v6894
    %6922 = vmatpush1.bf16.msra.mxu0 %v6893
    %6923 = vmatprep.subr.bf16.mxu0 %v6896
    %6924 = vmatpush1.bf16.msra.mxu0 %v6895
    %6925 = vmatprep.subr.bf16.mxu0 %v6898
    %6926 = vmatpush1.bf16.msra.mxu0 %v6897
    %6927 = vmatprep.subr.bf16.mxu0 %v6900
    %6928 = vmatpush1.bf16.msra.mxu0 %v6899
    %6929 = vmatprep.subr.bf16.mxu0 0
    %6930 = vmatpush1.bf16.msra.mxu0 0
    %6931 = vmatprep.subr.bf16.mxu0 0
    %6932 = vmatpush1.bf16.msra.mxu0 0
    %6933 = vmatprep.subr.bf16.mxu0 0
    %6934 = vmatpush1.bf16.msra.mxu0 0
    %6935 = vmatprep.subr.bf16.mxu0 0
    %6936 = vmatpush1.bf16.msra.mxu0 0
    %6937 = vmatprep.subr.bf16.mxu0 0
    %6938 = vmatpush1.bf16.msra.mxu0 0
    %6939 = vmatprep.subr.bf16.mxu0 0
    %6940 = vmatpush1.bf16.msra.mxu0 0
    %6941 = vmatprep.subr.bf16.mxu0 0
    %6942 = vmatpush1.bf16.msra.mxu0 0
    %6943 = vmatprep.subr.bf16.mxu0 0
    %6944 = vmatpush1.bf16.msra.mxu0 0
    %6945 = vmatprep.subr.bf16.mxu0 0
    %6946 = vmatpush1.bf16.msra.mxu0 0
    %6947 = vmatprep.subr.bf16.mxu0 0
    %6948 = vmatpush1.bf16.msra.mxu0 0
    %6949 = vmatprep.subr.bf16.mxu0 0
    %6950 = vmatpush1.bf16.msra.mxu0 0
    %6951 = vmatprep.subr.bf16.mxu0 0
    %6952 = vmatpush1.bf16.msra.mxu0 0
    %6953 = vmatprep.mubr.bf16.mxu0 0
    %6954 = vmatmul.mubr.bf16.gmra.mrb[0].mxu0 %v6910
    %v6955 = vpop.f32.mrb[0].mxu0
    %v6956 = vadd.f32 0.0, %v6955
    %v6957 = vpop.f32.mrb[0].mxu0
    %v6958 = vadd.f32 0.0, %v6957
    %v6959 = vpop.f32.mrb[0].mxu0
    %v6960 = vadd.f32 0.0, %v6959
    %v6961 = vpop.f32.mrb[0].mxu0
    %v6962 = vadd.f32 0.0, %v6961
    %6963 = vmatprep.mubr.bf16.mxu0 0
    %6964 = vmatmul.mubr.bf16.gmra.mrb[0].mxu0 %v6913
    %v6965 = vpop.f32.mrb[0].mxu0
    %v6966 = vadd.f32 0.0, %v6965
    %v6967 = vpop.f32.mrb[0].mxu0
    %v6968 = vadd.f32 0.0, %v6967
    %v6969 = vpop.f32.mrb[0].mxu0
    %v6970 = vadd.f32 0.0, %v6969
    %v6971 = vpop.f32.mrb[0].mxu0
    %v6972 = vadd.f32 0.0, %v6971
    %6973 = vmatprep.mubr.bf16.mxu0 0
    %6974 = vmatmul.mubr.bf16.gmra.mrb[0].mxu0 %v6916
    %v6975 = vpop.f32.mrb[0].mxu0
    %v6976 = vadd.f32 0.0, %v6975
    %v6977 = vpop.f32.mrb[0].mxu0
    %v6978 = vadd.f32 0.0, %v6977
    %v6979 = vpop.f32.mrb[0].mxu0
    %v6980 = vadd.f32 0.0, %v6979
    %v6981 = vpop.f32.mrb[0].mxu0
    %v6982 = vadd.f32 0.0, %v6981
    %6983 = vmatprep.mubr.bf16.mxu0 0
    %6984 = vmatmul.mubr.bf16.gmra.mrb[0].mxu0 %v6919
    %v6985 = vpop.f32.mrb[0].mxu0
    %v6986 = vadd.f32 0.0, %v6985
    %v6987 = vpop.f32.mrb[0].mxu0
    %v6988 = vadd.f32 0.0, %v6987
    %v6989 = vpop.f32.mrb[0].mxu0
    %v6990 = vadd.f32 0.0, %v6989
    %v6991 = vpop.f32.mrb[0].mxu0
    %v6992 = vadd.f32 0.0, %v6991
    %6993 = vdwg.mxu0
    %v6994 = vadd.f32 %v6781, %v6956
    %v6995 = vadd.f32 %v6782, %v6958
    %v6996 = vadd.f32 %v6783, %v6960
    %v6997 = vadd.f32 %v6784, %v6962
    %v6998 = vadd.f32 %v6785, %v6966
    %v6999 = vadd.f32 %v6786, %v6968
    %v7000 = vadd.f32 %v6787, %v6970
    %v7001 = vadd.f32 %v6788, %v6972
    %v7002 = vadd.f32 %v6789, %v6976
    %v7003 = vadd.f32 %v6790, %v6978
    %v7004 = vadd.f32 %v6791, %v6980
    %v7005 = vadd.f32 %v6792, %v6982
    %v7006 = vadd.f32 %v6793, %v6986
    %v7007 = vadd.f32 %v6794, %v6988
    %v7008 = vadd.f32 %v6795, %v6990
    %v7009 = vadd.f32 %v6796, %v6992
    %7010 = vrot.lane.b32.xlu0 %v5854, 15
    %v7011 = vpop.permute.xlu0 %7010
    %7012 = vrot.lane.b32.xlu0 %v5861, 15
    %v7013 = vpop.permute.xlu0 %7012
    %v7014 = vsel %vm640, %v7011, %v7013
    %v7018 = vmul.bf16 %v6797, %v7011
    %v7019 = vmul.bf16 %v6798, %v7014
    %v7020 = vmul.bf16 %v6799, %v7013
    %v7021 = vmul.bf16 %v6800, %v7011
    %v7022 = vmul.bf16 %v6801, %v7014
    %v7023 = vmul.bf16 %v6802, %v7013
    %v7024 = vmul.bf16 %v6803, %v7011
    %v7025 = vmul.bf16 %v6804, %v7014
    %v7026 = vmul.bf16 %v6805, %v7013
    %v7027 = vmul.bf16 %v6806, %v7011
    %v7028 = vmul.bf16 %v6807, %v7014
    %v7029 = vmul.bf16 %v6808, %v7013
    %v7030 = vld [vmem:[%s3224] sm:$0xf]
    %v7031 = vld [vmem:[%s3224 + $0x4] sm:$0xf]
    %v7032 = vld [vmem:[%s3224 + $0x8] sm:$0xf]
    %v7033 = vld [vmem:[%s3224 + $0xc] sm:$0xf]
    %v7034 = vld [vmem:[%s3224 + $0x10] sm:$0xf]
    %v7035 = vld [vmem:[%s3224 + $0x14] sm:$0xf]
    %v7036 = vld [vmem:[%s3224 + $0x18] sm:$0xf]
    %v7037 = vld [vmem:[%s3224 + $0x1c] sm:$0xf]
    %v7046 = vunpack.c.l.b16 %v7030
    %v7047 = vunpack.c.l.b16 %v7031
    %v7048 = vunpack.c.l.b16 %v7032
    %v7049 = vunpack.c.l.b16 %v7033
    %v7050 = vunpack.c.l.b16 %v7034
    %v7051 = vunpack.c.l.b16 %v7035
    %v7052 = vunpack.c.l.b16 %v7036
    %v7053 = vunpack.c.l.b16 %v7037
    %v7054 = vpack.c.b16 %v7047, %v7046
    %v7055 = vpack.c.b16 %v7049, %v7048
    %v7056 = vpack.c.b16 %v7051, %v7050
    %v7057 = vpack.c.b16 %v7053, %v7052
    %7070 = vrot.lane.b32.xlu0 %v7018, 113
    %v7071 = vpop.permute.xlu0 %7070
    %7072 = vrot.lane.b32.xlu0 %v7019, 113
    %v7073 = vpop.permute.xlu0 %7072
    %7074 = vrot.lane.b32.xlu0 %v7020, 113
    %v7075 = vpop.permute.xlu0 %7074
    %7076 = vrot.lane.b32.xlu0 %v7021, 113
    %v7077 = vpop.permute.xlu0 %7076
    %7078 = vrot.lane.b32.xlu0 %v7022, 113
    %v7079 = vpop.permute.xlu0 %7078
    %7080 = vrot.lane.b32.xlu0 %v7023, 113
    %v7081 = vpop.permute.xlu0 %7080
    %7082 = vrot.lane.b32.xlu0 %v7024, 113
    %v7083 = vpop.permute.xlu0 %7082
    %7084 = vrot.lane.b32.xlu0 %v7025, 113
    %v7085 = vpop.permute.xlu0 %7084
    %7086 = vrot.lane.b32.xlu0 %v7026, 113
    %v7087 = vpop.permute.xlu0 %7086
    %7088 = vrot.lane.b32.xlu0 %v7027, 113
    %v7089 = vpop.permute.xlu0 %7088
    %7090 = vrot.lane.b32.xlu0 %v7028, 113
    %v7091 = vpop.permute.xlu0 %7090
    %7092 = vrot.lane.b32.xlu0 %v7029, 113
    %v7093 = vpop.permute.xlu0 %7092
    %v7094 = vsel %vm558, %v7071, %v7073
    %v7095 = vsel %vm558, %v7073, %v7075
    %v7096 = vsel %vm558, %v7077, %v7079
    %v7097 = vsel %vm558, %v7079, %v7081
    %v7098 = vsel %vm558, %v7083, %v7085
    %v7099 = vsel %vm558, %v7085, %v7087
    %v7100 = vsel %vm558, %v7089, %v7091
    %v7101 = vsel %vm558, %v7091, %v7093
    %v7111 = vsel %vm269, %v7054, 0
    %v7114 = vsel %vm269, %v7055, 0
    %v7117 = vsel %vm269, %v7056, 0
    %v7120 = vsel %vm269, %v7057, 0
    %7122 = vmatprep.subr.bf16.mxu0 %v7095
    %7123 = vmatpush1.bf16.msra.mxu0 %v7094
    %7124 = vmatprep.subr.bf16.mxu0 %v7097
    %7125 = vmatpush1.bf16.msra.mxu0 %v7096
    %7126 = vmatprep.subr.bf16.mxu0 %v7099
    %7127 = vmatpush1.bf16.msra.mxu0 %v7098
    %7128 = vmatprep.subr.bf16.mxu0 %v7101
    %7129 = vmatpush1.bf16.msra.mxu0 %v7100
    %7130 = vmatprep.subr.bf16.mxu0 0
    %7131 = vmatpush1.bf16.msra.mxu0 0
    %7132 = vmatprep.subr.bf16.mxu0 0
    %7133 = vmatpush1.bf16.msra.mxu0 0
    %7134 = vmatprep.subr.bf16.mxu0 0
    %7135 = vmatpush1.bf16.msra.mxu0 0
    %7136 = vmatprep.subr.bf16.mxu0 0
    %7137 = vmatpush1.bf16.msra.mxu0 0
    %7138 = vmatprep.subr.bf16.mxu0 0
    %7139 = vmatpush1.bf16.msra.mxu0 0
    %7140 = vmatprep.subr.bf16.mxu0 0
    %7141 = vmatpush1.bf16.msra.mxu0 0
    %7142 = vmatprep.subr.bf16.mxu0 0
    %7143 = vmatpush1.bf16.msra.mxu0 0
    %7144 = vmatprep.subr.bf16.mxu0 0
    %7145 = vmatpush1.bf16.msra.mxu0 0
    %7146 = vmatprep.subr.bf16.mxu0 0
    %7147 = vmatpush1.bf16.msra.mxu0 0
    %7148 = vmatprep.subr.bf16.mxu0 0
    %7149 = vmatpush1.bf16.msra.mxu0 0
    %7150 = vmatprep.subr.bf16.mxu0 0
    %7151 = vmatpush1.bf16.msra.mxu0 0
    %7152 = vmatprep.subr.bf16.mxu0 0
    %7153 = vmatpush1.bf16.msra.mxu0 0
    %7154 = vmatprep.mubr.bf16.mxu0 0
    %7155 = vmatmul.mubr.bf16.gmra.mrb[0].mxu0 %v7111
    %v7156 = vpop.f32.mrb[0].mxu0
    %v7157 = vadd.f32 0.0, %v7156
    %v7158 = vpop.f32.mrb[0].mxu0
    %v7159 = vadd.f32 0.0, %v7158
    %v7160 = vpop.f32.mrb[0].mxu0
    %v7161 = vadd.f32 0.0, %v7160
    %v7162 = vpop.f32.mrb[0].mxu0
    %v7163 = vadd.f32 0.0, %v7162
    %7164 = vmatprep.mubr.bf16.mxu0 0
    %7165 = vmatmul.mubr.bf16.gmra.mrb[0].mxu0 %v7114
    %v7166 = vpop.f32.mrb[0].mxu0
    %v7167 = vadd.f32 0.0, %v7166
    %v7168 = vpop.f32.mrb[0].mxu0
    %v7169 = vadd.f32 0.0, %v7168
    %v7170 = vpop.f32.mrb[0].mxu0
    %v7171 = vadd.f32 0.0, %v7170
    %v7172 = vpop.f32.mrb[0].mxu0
    %v7173 = vadd.f32 0.0, %v7172
    %7174 = vmatprep.mubr.bf16.mxu0 0
    %7175 = vmatmul.mubr.bf16.gmra.mrb[0].mxu0 %v7117
    %v7176 = vpop.f32.mrb[0].mxu0
    %v7177 = vadd.f32 0.0, %v7176
    %v7178 = vpop.f32.mrb[0].mxu0
    %v7179 = vadd.f32 0.0, %v7178
    %v7180 = vpop.f32.mrb[0].mxu0
    %v7181 = vadd.f32 0.0, %v7180
    %v7182 = vpop.f32.mrb[0].mxu0
    %v7183 = vadd.f32 0.0, %v7182
    %7184 = vmatprep.mubr.bf16.mxu0 0
    %7185 = vmatmul.mubr.bf16.gmra.mrb[0].mxu0 %v7120
    %v7186 = vpop.f32.mrb[0].mxu0
    %v7187 = vadd.f32 0.0, %v7186
    %v7188 = vpop.f32.mrb[0].mxu0
    %v7189 = vadd.f32 0.0, %v7188
    %v7190 = vpop.f32.mrb[0].mxu0
    %v7191 = vadd.f32 0.0, %v7190
    %v7192 = vpop.f32.mrb[0].mxu0
    %v7193 = vadd.f32 0.0, %v7192
    %7194 = vdwg.mxu0
    %v7195 = vadd.f32 %v6994, %v7157
    %v7196 = vadd.f32 %v6995, %v7159
    %v7197 = vadd.f32 %v6996, %v7161
    %v7198 = vadd.f32 %v6997, %v7163
    %v7199 = vadd.f32 %v6998, %v7167
    %v7200 = vadd.f32 %v6999, %v7169
    %v7201 = vadd.f32 %v7000, %v7171
    %v7202 = vadd.f32 %v7001, %v7173
    %v7203 = vadd.f32 %v7002, %v7177
    %v7204 = vadd.f32 %v7003, %v7179
    %v7205 = vadd.f32 %v7004, %v7181
    %v7206 = vadd.f32 %v7005, %v7183
    %v7207 = vadd.f32 %v7006, %v7187
    %v7208 = vadd.f32 %v7007, %v7189
    %v7209 = vadd.f32 %v7008, %v7191
    %v7210 = vadd.f32 %v7009, %v7193
    %v7211 = vld [vmem:[%s3406] sm:$0xf]
    %v7212 = vld [vmem:[%s3406 + $0x4] sm:$0xf]
    %v7213 = vld [vmem:[%s3406 + $0x8] sm:$0xf]
    %v7214 = vld [vmem:[%s3406 + $0xc] sm:$0xf]
    %v7215 = vld [vmem:[%s3406 + $0x10] sm:$0xf]
    %v7216 = vld [vmem:[%s3406 + $0x14] sm:$0xf]
    %v7217 = vld [vmem:[%s3406 + $0x18] sm:$0xf]
    %v7218 = vld [vmem:[%s3406 + $0x1c] sm:$0xf]
    %v7227 = vunpack.c.l.b16 %v7211
    %v7228 = vunpack.c.l.b16 %v7212
    %v7229 = vunpack.c.l.b16 %v7213
    %v7230 = vunpack.c.l.b16 %v7214
    %v7231 = vunpack.c.l.b16 %v7215
    %v7232 = vunpack.c.l.b16 %v7216
    %v7233 = vunpack.c.l.b16 %v7217
    %v7234 = vunpack.c.l.b16 %v7218
    %v7235 = vpack.c.b16 %v7228, %v7227
    %v7236 = vpack.c.b16 %v7230, %v7229
    %v7237 = vpack.c.b16 %v7232, %v7231
    %v7238 = vpack.c.b16 %v7234, %v7233
    %7251 = vrot.lane.b32.xlu0 %v6797, 112
    %v7252 = vpop.permute.xlu0 %7251
    %7253 = vrot.lane.b32.xlu0 %v6798, 112
    %v7254 = vpop.permute.xlu0 %7253
    %7255 = vrot.lane.b32.xlu0 %v6799, 112
    %v7256 = vpop.permute.xlu0 %7255
    %7257 = vrot.lane.b32.xlu0 %v6800, 112
    %v7258 = vpop.permute.xlu0 %7257
    %7259 = vrot.lane.b32.xlu0 %v6801, 112
    %v7260 = vpop.permute.xlu0 %7259
    %7261 = vrot.lane.b32.xlu0 %v6802, 112
    %v7262 = vpop.permute.xlu0 %7261
    %7263 = vrot.lane.b32.xlu0 %v6803, 112
    %v7264 = vpop.permute.xlu0 %7263
    %7265 = vrot.lane.b32.xlu0 %v6804, 112
    %v7266 = vpop.permute.xlu0 %7265
    %7267 = vrot.lane.b32.xlu0 %v6805, 112
    %v7268 = vpop.permute.xlu0 %7267
    %7269 = vrot.lane.b32.xlu0 %v6806, 112
    %v7270 = vpop.permute.xlu0 %7269
    %7271 = vrot.lane.b32.xlu0 %v6807, 112
    %v7272 = vpop.permute.xlu0 %7271
    %7273 = vrot.lane.b32.xlu0 %v6808, 112
    %v7274 = vpop.permute.xlu0 %7273
    %v7275 = vsel %vm1585, %v7252, %v7254
    %v7276 = vsel %vm1585, %v7254, %v7256
    %v7277 = vsel %vm1585, %v7258, %v7260
    %v7278 = vsel %vm1585, %v7260, %v7262
    %v7279 = vsel %vm1585, %v7264, %v7266
    %v7280 = vsel %vm1585, %v7266, %v7268
    %v7281 = vsel %vm1585, %v7270, %v7272
    %v7282 = vsel %vm1585, %v7272, %v7274
    %v7292 = vsel %vm269, %v7235, 0
    %v7295 = vsel %vm269, %v7236, 0
    %v7298 = vsel %vm269, %v7237, 0
    %v7301 = vsel %vm269, %v7238, 0
    %7303 = vmatprep.subr.bf16.mxu0 %v7276
    %7304 = vmatpush1.bf16.msra.mxu0 %v7275
    %7305 = vmatprep.subr.bf16.mxu0 %v7278
    %7306 = vmatpush1.bf16.msra.mxu0 %v7277
    %7307 = vmatprep.subr.bf16.mxu0 %v7280
    %7308 = vmatpush1.bf16.msra.mxu0 %v7279
    %7309 = vmatprep.subr.bf16.mxu0 %v7282
    %7310 = vmatpush1.bf16.msra.mxu0 %v7281
    %7311 = vmatprep.subr.bf16.mxu0 0
    %7312 = vmatpush1.bf16.msra.mxu0 0
    %7313 = vmatprep.subr.bf16.mxu0 0
    %7314 = vmatpush1.bf16.msra.mxu0 0
    %7315 = vmatprep.subr.bf16.mxu0 0
    %7316 = vmatpush1.bf16.msra.mxu0 0
    %7317 = vmatprep.subr.bf16.mxu0 0
    %7318 = vmatpush1.bf16.msra.mxu0 0
    %7319 = vmatprep.subr.bf16.mxu0 0
    %7320 = vmatpush1.bf16.msra.mxu0 0
    %7321 = vmatprep.subr.bf16.mxu0 0
    %7322 = vmatpush1.bf16.msra.mxu0 0
    %7323 = vmatprep.subr.bf16.mxu0 0
    %7324 = vmatpush1.bf16.msra.mxu0 0
    %7325 = vmatprep.subr.bf16.mxu0 0
    %7326 = vmatpush1.bf16.msra.mxu0 0
    %7327 = vmatprep.subr.bf16.mxu0 0
    %7328 = vmatpush1.bf16.msra.mxu0 0
    %7329 = vmatprep.subr.bf16.mxu0 0
    %7330 = vmatpush1.bf16.msra.mxu0 0
    %7331 = vmatprep.subr.bf16.mxu0 0
    %7332 = vmatpush1.bf16.msra.mxu0 0
    %7333 = vmatprep.subr.bf16.mxu0 0
    %7334 = vmatpush1.bf16.msra.mxu0 0
    %7335 = vmatprep.mubr.bf16.mxu0 0
    %7336 = vmatmul.mubr.bf16.gmra.mrb[0].mxu0 %v7292
    %v7337 = vpop.f32.mrb[0].mxu0
    %v7338 = vadd.f32 0.0, %v7337
    %v7339 = vpop.f32.mrb[0].mxu0
    %v7340 = vadd.f32 0.0, %v7339
    %v7341 = vpop.f32.mrb[0].mxu0
    %v7342 = vadd.f32 0.0, %v7341
    %v7343 = vpop.f32.mrb[0].mxu0
    %v7344 = vadd.f32 0.0, %v7343
    %7345 = vmatprep.mubr.bf16.mxu0 0
    %7346 = vmatmul.mubr.bf16.gmra.mrb[0].mxu0 %v7295
    %v7347 = vpop.f32.mrb[0].mxu0
    %v7348 = vadd.f32 0.0, %v7347
    %v7349 = vpop.f32.mrb[0].mxu0
    %v7350 = vadd.f32 0.0, %v7349
    %v7351 = vpop.f32.mrb[0].mxu0
    %v7352 = vadd.f32 0.0, %v7351
    %v7353 = vpop.f32.mrb[0].mxu0
    %v7354 = vadd.f32 0.0, %v7353
    %7355 = vmatprep.mubr.bf16.mxu0 0
    %7356 = vmatmul.mubr.bf16.gmra.mrb[0].mxu0 %v7298
    %v7357 = vpop.f32.mrb[0].mxu0
    %v7358 = vadd.f32 0.0, %v7357
    %v7359 = vpop.f32.mrb[0].mxu0
    %v7360 = vadd.f32 0.0, %v7359
    %v7361 = vpop.f32.mrb[0].mxu0
    %v7362 = vadd.f32 0.0, %v7361
    %v7363 = vpop.f32.mrb[0].mxu0
    %v7364 = vadd.f32 0.0, %v7363
    %7365 = vmatprep.mubr.bf16.mxu0 0
    %7366 = vmatmul.mubr.bf16.gmra.mrb[0].mxu0 %v7301
    %v7367 = vpop.f32.mrb[0].mxu0
    %v7368 = vadd.f32 0.0, %v7367
    %v7369 = vpop.f32.mrb[0].mxu0
    %v7370 = vadd.f32 0.0, %v7369
    %v7371 = vpop.f32.mrb[0].mxu0
    %v7372 = vadd.f32 0.0, %v7371
    %v7373 = vpop.f32.mrb[0].mxu0
    %v7374 = vadd.f32 0.0, %v7373
    %7375 = vdwg.mxu0
    %v7376 = vadd.f32 %v7195, %v7338
    %v7377 = vadd.f32 %v7196, %v7340
    %v7378 = vadd.f32 %v7197, %v7342
    %v7379 = vadd.f32 %v7198, %v7344
    %v7380 = vadd.f32 %v7199, %v7348
    %v7381 = vadd.f32 %v7200, %v7350
    %v7382 = vadd.f32 %v7201, %v7352
    %v7383 = vadd.f32 %v7202, %v7354
    %v7384 = vadd.f32 %v7203, %v7358
    %v7385 = vadd.f32 %v7204, %v7360
    %v7386 = vadd.f32 %v7205, %v7362
    %v7387 = vadd.f32 %v7206, %v7364
    %v7388 = vadd.f32 %v7207, %v7368
    %v7389 = vadd.f32 %v7208, %v7370
    %v7390 = vadd.f32 %v7209, %v7372
    %v7391 = vadd.f32 %v7210, %v7374
    %7392 = vrot.lane.b32.xlu0 %v6244, 17
    %v7393 = vpop.permute.xlu0 %7392
    %7394 = vrot.lane.b32.xlu0 %v6251, 17
    %v7395 = vpop.permute.xlu0 %7394
    %v7396 = vsel %vm411, %v7393, %v7395
    %v7400 = vmul.bf16 %v6797, %v7393
    %v7401 = vmul.bf16 %v6798, %v7396
    %v7402 = vmul.bf16 %v6799, %v7395
    %v7403 = vmul.bf16 %v6800, %v7393
    %v7404 = vmul.bf16 %v6801, %v7396
    %v7405 = vmul.bf16 %v6802, %v7395
    %v7406 = vmul.bf16 %v6803, %v7393
    %v7407 = vmul.bf16 %v6804, %v7396
    %v7408 = vmul.bf16 %v6805, %v7395
    %v7409 = vmul.bf16 %v6806, %v7393
    %v7410 = vmul.bf16 %v6807, %v7396
    %v7411 = vmul.bf16 %v6808, %v7395
    %v7412 = vld [vmem:[%s3608] sm:$0xf]
    %v7413 = vld [vmem:[%s3608 + $0x4] sm:$0xf]
    %v7414 = vld [vmem:[%s3608 + $0x8] sm:$0xf]
    %v7415 = vld [vmem:[%s3608 + $0xc] sm:$0xf]
    %v7416 = vld [vmem:[%s3608 + $0x10] sm:$0xf]
    %v7417 = vld [vmem:[%s3608 + $0x14] sm:$0xf]
    %v7418 = vld [vmem:[%s3608 + $0x18] sm:$0xf]
    %v7419 = vld [vmem:[%s3608 + $0x1c] sm:$0xf]
    %v7428 = vunpack.c.l.b16 %v7412
    %v7429 = vunpack.c.l.b16 %v7413
    %v7430 = vunpack.c.l.b16 %v7414
    %v7431 = vunpack.c.l.b16 %v7415
    %v7432 = vunpack.c.l.b16 %v7416
    %v7433 = vunpack.c.l.b16 %v7417
    %v7434 = vunpack.c.l.b16 %v7418
    %v7435 = vunpack.c.l.b16 %v7419
    %v7436 = vpack.c.b16 %v7429, %v7428
    %v7437 = vpack.c.b16 %v7431, %v7430
    %v7438 = vpack.c.b16 %v7433, %v7432
    %v7439 = vpack.c.b16 %v7435, %v7434
    %7452 = vrot.lane.b32.xlu0 %v7400, 111
    %v7453 = vpop.permute.xlu0 %7452
    %7454 = vrot.lane.b32.xlu0 %v7401, 111
    %v7455 = vpop.permute.xlu0 %7454
    %7456 = vrot.lane.b32.xlu0 %v7402, 111
    %v7457 = vpop.permute.xlu0 %7456
    %7458 = vrot.lane.b32.xlu0 %v7403, 111
    %v7459 = vpop.permute.xlu0 %7458
    %7460 = vrot.lane.b32.xlu0 %v7404, 111
    %v7461 = vpop.permute.xlu0 %7460
    %7462 = vrot.lane.b32.xlu0 %v7405, 111
    %v7463 = vpop.permute.xlu0 %7462
    %7464 = vrot.lane.b32.xlu0 %v7406, 111
    %v7465 = vpop.permute.xlu0 %7464
    %7466 = vrot.lane.b32.xlu0 %v7407, 111
    %v7467 = vpop.permute.xlu0 %7466
    %7468 = vrot.lane.b32.xlu0 %v7408, 111
    %v7469 = vpop.permute.xlu0 %7468
    %7470 = vrot.lane.b32.xlu0 %v7409, 111
    %v7471 = vpop.permute.xlu0 %7470
    %7472 = vrot.lane.b32.xlu0 %v7410, 111
    %v7473 = vpop.permute.xlu0 %7472
    %7474 = vrot.lane.b32.xlu0 %v7411, 111
    %v7475 = vpop.permute.xlu0 %7474
    %v7476 = vsel %vm162, %v7453, %v7455
    %v7477 = vsel %vm162, %v7455, %v7457
    %v7478 = vsel %vm162, %v7459, %v7461
    %v7479 = vsel %vm162, %v7461, %v7463
    %v7480 = vsel %vm162, %v7465, %v7467
    %v7481 = vsel %vm162, %v7467, %v7469
    %v7482 = vsel %vm162, %v7471, %v7473
    %v7483 = vsel %vm162, %v7473, %v7475
    %v7493 = vsel %vm269, %v7436, 0
    %v7496 = vsel %vm269, %v7437, 0
    %v7499 = vsel %vm269, %v7438, 0
    %v7502 = vsel %vm269, %v7439, 0
    %7504 = vmatprep.subr.bf16.mxu0 %v7477
    %7505 = vmatpush1.bf16.msra.mxu0 %v7476
    %7506 = vmatprep.subr.bf16.mxu0 %v7479
    %7507 = vmatpush1.bf16.msra.mxu0 %v7478
    %7508 = vmatprep.subr.bf16.mxu0 %v7481
    %7509 = vmatpush1.bf16.msra.mxu0 %v7480
    %7510 = vmatprep.subr.bf16.mxu0 %v7483
    %7511 = vmatpush1.bf16.msra.mxu0 %v7482
    %7512 = vmatprep.subr.bf16.mxu0 0
    %7513 = vmatpush1.bf16.msra.mxu0 0
    %7514 = vmatprep.subr.bf16.mxu0 0
    %7515 = vmatpush1.bf16.msra.mxu0 0
    %7516 = vmatprep.subr.bf16.mxu0 0
    %7517 = vmatpush1.bf16.msra.mxu0 0
    %7518 = vmatprep.subr.bf16.mxu0 0
    %7519 = vmatpush1.bf16.msra.mxu0 0
    %7520 = vmatprep.subr.bf16.mxu0 0
    %7521 = vmatpush1.bf16.msra.mxu0 0
    %7522 = vmatprep.subr.bf16.mxu0 0
    %7523 = vmatpush1.bf16.msra.mxu0 0
    %7524 = vmatprep.subr.bf16.mxu0 0
    %7525 = vmatpush1.bf16.msra.mxu0 0
    %7526 = vmatprep.subr.bf16.mxu0 0
    %7527 = vmatpush1.bf16.msra.mxu0 0
    %7528 = vmatprep.subr.bf16.mxu0 0
    %7529 = vmatpush1.bf16.msra.mxu0 0
    %7530 = vmatprep.subr.bf16.mxu0 0
    %7531 = vmatpush1.bf16.msra.mxu0 0
    %7532 = vmatprep.subr.bf16.mxu0 0
    %7533 = vmatpush1.bf16.msra.mxu0 0
    %7534 = vmatprep.subr.bf16.mxu0 0
    %7535 = vmatpush1.bf16.msra.mxu0 0
    %7536 = vmatprep.mubr.bf16.mxu0 0
    %7537 = vmatmul.mubr.bf16.gmra.mrb[0].mxu0 %v7493
    %v7538 = vpop.f32.mrb[0].mxu0
    %v7539 = vadd.f32 0.0, %v7538
    %v7540 = vpop.f32.mrb[0].mxu0
    %v7541 = vadd.f32 0.0, %v7540
    %v7542 = vpop.f32.mrb[0].mxu0
    %v7543 = vadd.f32 0.0, %v7542
    %v7544 = vpop.f32.mrb[0].mxu0
    %v7545 = vadd.f32 0.0, %v7544
    %7546 = vmatprep.mubr.bf16.mxu0 0
    %7547 = vmatmul.mubr.bf16.gmra.mrb[0].mxu0 %v7496
    %v7548 = vpop.f32.mrb[0].mxu0
    %v7549 = vadd.f32 0.0, %v7548
    %v7550 = vpop.f32.mrb[0].mxu0
    %v7551 = vadd.f32 0.0, %v7550
    %v7552 = vpop.f32.mrb[0].mxu0
    %v7553 = vadd.f32 0.0, %v7552
    %v7554 = vpop.f32.mrb[0].mxu0
    %v7555 = vadd.f32 0.0, %v7554
    %7556 = vmatprep.mubr.bf16.mxu0 0
    %7557 = vmatmul.mubr.bf16.gmra.mrb[0].mxu0 %v7499
    %v7558 = vpop.f32.mrb[0].mxu0
    %v7559 = vadd.f32 0.0, %v7558
    %v7560 = vpop.f32.mrb[0].mxu0
    %v7561 = vadd.f32 0.0, %v7560
    %v7562 = vpop.f32.mrb[0].mxu0
    %v7563 = vadd.f32 0.0, %v7562
    %v7564 = vpop.f32.mrb[0].mxu0
    %v7565 = vadd.f32 0.0, %v7564
    %7566 = vmatprep.mubr.bf16.mxu0 0
    %7567 = vmatmul.mubr.bf16.gmra.mrb[0].mxu0 %v7502
    %v7568 = vpop.f32.mrb[0].mxu0
    %v7569 = vadd.f32 0.0, %v7568
    %v7570 = vpop.f32.mrb[0].mxu0
    %v7571 = vadd.f32 0.0, %v7570
    %v7572 = vpop.f32.mrb[0].mxu0
    %v7573 = vadd.f32 0.0, %v7572
    %v7574 = vpop.f32.mrb[0].mxu0
    %v7575 = vadd.f32 0.0, %v7574
    %7576 = vdwg.mxu0
    %v7577 = vadd.f32 %v7376, %v7539
    %v7578 = vadd.f32 %v7377, %v7541
    %v7579 = vadd.f32 %v7378, %v7543
    %v7580 = vadd.f32 %v7379, %v7545
    %v7581 = vadd.f32 %v7380, %v7549
    %v7582 = vadd.f32 %v7381, %v7551
    %v7583 = vadd.f32 %v7382, %v7553
    %v7584 = vadd.f32 %v7383, %v7555
    %v7585 = vadd.f32 %v7384, %v7559
    %v7586 = vadd.f32 %v7385, %v7561
    %v7587 = vadd.f32 %v7386, %v7563
    %v7588 = vadd.f32 %v7387, %v7565
    %v7589 = vadd.f32 %v7388, %v7569
    %v7590 = vadd.f32 %v7389, %v7571
    %v7591 = vadd.f32 %v7390, %v7573
    %v7592 = vadd.f32 %v7391, %v7575
    %v7593 = vld [vmem:[%s4] sm:$0xff]
    %v7594 = vld [vmem:[%s4 + $0x8] sm:$0xff]
    %v7595 = vld [vmem:[%s4 + $0x10] sm:$0xff]
    %v7596 = vld [vmem:[%s4 + $0x18] sm:$0xff]
    %v7597 = vld [vmem:[%s4 + $0x20] sm:$0xff]
    %v7598 = vld [vmem:[%s4 + $0x28] sm:$0xff]
    %v7599 = vld [vmem:[%s4 + $0x30] sm:$0xff]
    %v7600 = vld [vmem:[%s4 + $0x38] sm:$0xff]
    %7602 = vset.pattern.permute.xlu0 0
    %7603 = vperm.xlu0 %7602, %v7593
    %v7604 = vpop.permute.xlu0 %7603
    %7607 = vset.pattern.permute.xlu0 0
    %7608 = vperm.xlu0 %7607, %v7594
    %v7609 = vpop.permute.xlu0 %7608
    %7612 = vset.pattern.permute.xlu0 0
    %7613 = vperm.xlu0 %7612, %v7595
    %v7614 = vpop.permute.xlu0 %7613
    %7617 = vset.pattern.permute.xlu0 0
    %7618 = vperm.xlu0 %7617, %v7596
    %v7619 = vpop.permute.xlu0 %7618
    %7622 = vset.pattern.permute.xlu0 0
    %7623 = vperm.xlu0 %7622, %v7597
    %v7624 = vpop.permute.xlu0 %7623
    %7627 = vset.pattern.permute.xlu0 0
    %7628 = vperm.xlu0 %7627, %v7598
    %v7629 = vpop.permute.xlu0 %7628
    %7632 = vset.pattern.permute.xlu0 0
    %7633 = vperm.xlu0 %7632, %v7599
    %v7634 = vpop.permute.xlu0 %7633
    %7637 = vset.pattern.permute.xlu0 0
    %7638 = vperm.xlu0 %7637, %v7600
    %v7639 = vpop.permute.xlu0 %7638
    %v7641 = vadd.f32 %v7577, %v7604
    %v7642 = vadd.f32 %v7578, %v7604
    %v7643 = vadd.f32 %v7579, %v7609
    %v7644 = vadd.f32 %v7580, %v7609
    %v7645 = vadd.f32 %v7581, %v7614
    %v7646 = vadd.f32 %v7582, %v7614
    %v7647 = vadd.f32 %v7583, %v7619
    %v7648 = vadd.f32 %v7584, %v7619
    %v7649 = vadd.f32 %v7585, %v7624
    %v7650 = vadd.f32 %v7586, %v7624
    %v7651 = vadd.f32 %v7587, %v7629
    %v7652 = vadd.f32 %v7588, %v7629
    %v7653 = vadd.f32 %v7589, %v7634
    %v7654 = vadd.f32 %v7590, %v7634
    %v7655 = vadd.f32 %v7591, %v7639
    %v7656 = vadd.f32 %v7592, %v7639
    %v7657 = vld [vmem:[%s3902] sm:$0xff]
    %v7658 = vld [vmem:[%s3902 + $0x8] sm:$0xff]
    %v7659 = vld [vmem:[%s3902 + $0x10] sm:$0xff]
    %v7660 = vld [vmem:[%s3902 + $0x18] sm:$0xff]
    %v7661 = vld [vmem:[%s3902 + $0x20] sm:$0xff]
    %v7662 = vld [vmem:[%s3902 + $0x28] sm:$0xff]
    %v7663 = vld [vmem:[%s3902 + $0x30] sm:$0xff]
    %v7664 = vld [vmem:[%s3902 + $0x38] sm:$0xff]
    %v7665 = vld [vmem:[%s3902 + $0x40] sm:$0xff]
    %v7666 = vld [vmem:[%s3902 + $0x48] sm:$0xff]
    %v7667 = vld [vmem:[%s3902 + $0x50] sm:$0xff]
    %v7668 = vld [vmem:[%s3902 + $0x58] sm:$0xff]
    %v7669 = vld [vmem:[%s3902 + $0x60] sm:$0xff]
    %v7670 = vld [vmem:[%s3902 + $0x68] sm:$0xff]
    %v7671 = vld [vmem:[%s3902 + $0x70] sm:$0xff]
    %v7672 = vld [vmem:[%s3902 + $0x78] sm:$0xff]
    %v7673 = vadd.f32 %v7657, %v7641
    %v7674 = vadd.f32 %v7658, %v7642
    %v7675 = vadd.f32 %v7659, %v7643
    %v7676 = vadd.f32 %v7660, %v7644
    %v7677 = vadd.f32 %v7661, %v7645
    %v7678 = vadd.f32 %v7662, %v7646
    %v7679 = vadd.f32 %v7663, %v7647
    %v7680 = vadd.f32 %v7664, %v7648
    %v7681 = vadd.f32 %v7665, %v7649
    %v7682 = vadd.f32 %v7666, %v7650
    %v7683 = vadd.f32 %v7667, %v7651
    %v7684 = vadd.f32 %v7668, %v7652
    %v7685 = vadd.f32 %v7669, %v7653
    %v7686 = vadd.f32 %v7670, %v7654
    %v7687 = vadd.f32 %v7671, %v7655
    %v7688 = vadd.f32 %v7672, %v7656
    %s7689 = scalar_lea.vmem [#allocation9], 128
    %7690 = vst [vmem:[%s7689] sm:$0xff] %v7673
    %7691 = vst [vmem:[%s7689 + $0x8] sm:$0xff] %v7674
    %7692 = vst [vmem:[%s7689 + $0x10] sm:$0xff] %v7675
    %7693 = vst [vmem:[%s7689 + $0x18] sm:$0xff] %v7676
    %7694 = vst [vmem:[%s7689 + $0x20] sm:$0xff] %v7677
    %7695 = vst [vmem:[%s7689 + $0x28] sm:$0xff] %v7678
    %7696 = vst [vmem:[%s7689 + $0x30] sm:$0xff] %v7679
    %7697 = vst [vmem:[%s7689 + $0x38] sm:$0xff] %v7680
    %7698 = vst [vmem:[%s7689 + $0x40] sm:$0xff] %v7681
    %7699 = vst [vmem:[%s7689 + $0x48] sm:$0xff] %v7682
    %7700 = vst [vmem:[%s7689 + $0x50] sm:$0xff] %v7683
    %7701 = vst [vmem:[%s7689 + $0x58] sm:$0xff] %v7684
    %7702 = vst [vmem:[%s7689 + $0x60] sm:$0xff] %v7685
    %7703 = vst [vmem:[%s7689 + $0x68] sm:$0xff] %v7686
    %7704 = vst [vmem:[%s7689 + $0x70] sm:$0xff] %v7687
    %7705 = vst [vmem:[%s7689 + $0x78] sm:$0xff] %v7688
    // Predicated region
    $region38: #{tpu_custom_call.1} parent=1 // pred_check
      _
    $region39: #{tpu_custom_call.1} parent=1 // pred_check_branch
      %7707 = sbr.rel (0) target = $region41
    $region40: #{tpu_custom_call.1} parent=1 // pred_region
      %s7709 = ssub.s32 4096, 4096
      %7710 = vsyncadd [#allocation5], %s7709
      %s7711 = sshll.u32 [#allocation9], 4
      %s7712 = int_to_ptr.vmem [resolvable:$true] %s7711
      %7717 = dma.vmem_to_hbm [thread:$0]  %s7712, 4096, %s6, [#allocation5], 256, 256, 16
    $region41: #{tpu_custom_call.1} parent=1 // pred_fallthru
      _
    // Predicated region
    $region42: #{tpu_custom_call.1} parent=1 // pred_check
      _
    $region43: #{tpu_custom_call.1} parent=1 // pred_check_branch
      %7719 = sbr.rel (0) target = $region45
    $region44: #{tpu_custom_call.1} parent=1 // pred_region
      %7720 = dma.done [#allocation5], 4096
    $region45: #{tpu_custom_call.1} parent=1 // pred_fallthru
      _
    %7721 = vsyncpa [#allocation4], 1
    %7722 = vsyncpa [#allocation7], 1
    %7723 = vsyncpa [#allocation5], 1

</llo_original>
